<compile_context>
chip_gen: v6e
topology: v6e:2x2x1
jax: 0.10.0
libtpu: 0.0.40
codegen_flags: <defaults>
</compile_context>

<pallas_src>
import functools

import jax
import jax.numpy as jnp
from jax.experimental import pallas as pl
from jax.experimental.pallas import tpu as pltpu

# ----------------------------- model dims -----------------------------------
N_MELS = 16      # (real Whisper: 80)
T_IN = 16        # input mel frames
D_MODEL = 32
N_HEADS = 4
D_HEAD = D_MODEL // N_HEADS
D_FF = 64
VOCAB = 64
L_DEC = 8        # max generated sequence length (incl. start token)

_VMEM = pl.BlockSpec(memory_space=pltpu.MemorySpace.VMEM)
_SMEM = pl.BlockSpec(memory_space=pltpu.MemorySpace.SMEM)


# --------------------------- in-kernel helpers --------------------------------
def _layernorm(v, g, b, eps=1e-5):
    mu = jnp.mean(v, axis=-1, keepdims=True)
    vc = v - mu
    var = jnp.mean(vc * vc, axis=-1, keepdims=True)
    return vc * jax.lax.rsqrt(var + eps) * g + b


def _proj_heads(h_bf16, w_h, b_h):
    """(R, D) x (H, D, dh) -> (H, R, dh). Batched MXU matmul, no per-head loop."""
    n_h = w_h.shape[0]
    r = h_bf16.shape[0]
    hb = jnp.broadcast_to(h_bf16[None], (n_h, r, h_bf16.shape[1]))
    return jnp.einsum('hrd,hdk->hrk', hb, w_h,
                      preferred_element_type=jnp.float32) + b_h


def _sdpa(qh, kh, vh, mask, scale):
    """Heads-leading batched SDPA; softmax in f32, matmul operands bf16."""
    s = jnp.einsum('hqd,hkd->hqk', qh.astype(jnp.bfloat16),
                   kh.astype(jnp.bfloat16),
                   preferred_element_type=jnp.float32) * scale
    if mask is not None:
        s = jnp.where(mask, s, -1e30)              # NaN/overflow-safe masking
    mx = jnp.max(s, axis=-1, keepdims=True)
    p = jnp.exp(s - mx)
    r = pl.reciprocal(jnp.sum(p, axis=-1, keepdims=True), approx=True)
    return jnp.einsum('hqk,hkd->hqd', (p * r).astype(jnp.bfloat16),
                      vh.astype(jnp.bfloat16),
                      preferred_element_type=jnp.float32)


def _merge_heads(attn_h, wo_h, bo):
    """(H, R, dh) x (H, dh, D) -> (R, D): per-head partials summed over heads."""
    parts = jnp.einsum('hrd,hdk->hrk', attn_h.astype(jnp.bfloat16), wo_h,
                       preferred_element_type=jnp.float32)
    return jnp.sum(parts, axis=0) + bo


# ----------------------------- Pallas kernels ---------------------------------
def _conv3_s1_kernel(xp_ref, w_ref, b_ref, o_ref):
    """3-tap stride-1 conv: padded input passed once, taps sliced in-kernel."""
    t_out = o_ref.shape[0]
    c_in = xp_ref.shape[1]
    w = w_ref[...]
    acc = jnp.zeros(o_ref.shape, jnp.float32) + b_ref[...]
    for k in range(3):
        tap = xp_ref[pl.ds(k, t_out), :].astype(jnp.bfloat16)
        acc = acc + jnp.dot(tap, w[k * c_in:(k + 1) * c_in, :],
                            preferred_element_type=jnp.float32)
    o_ref[...] = jax.nn.gelu(acc)


def _conv3_s2_kernel(xe_ref, xo_ref, w_ref, b_ref, o_ref):
    """3-tap stride-2 conv via even/odd de-interleaved taps: only output rows
    are computed (no post-hoc y[::2] discard)."""
    t_out = o_ref.shape[0]
    c_in = xe_ref.shape[1]
    w = w_ref[...]
    taps = (xe_ref[pl.ds(0, t_out), :],     # padded rows 2i
            xo_ref[pl.ds(0, t_out), :],     # padded rows 2i+1
            xe_ref[pl.ds(1, t_out), :])     # padded rows 2i+2
    acc = jnp.zeros(o_ref.shape, jnp.float32) + b_ref[...]
    for k in range(3):
        acc = acc + jnp.dot(taps[k].astype(jnp.bfloat16),
                            w[k * c_in:(k + 1) * c_in, :],
                            preferred_element_type=jnp.float32)
    o_ref[...] = jax.nn.gelu(acc)


def _linear_kernel(x_ref, w_ref, b_ref, o_ref):
    o_ref[...] = (jnp.dot(x_ref[...], w_ref[...],
                          preferred_element_type=jnp.float32) + b_ref[...])


def _encoder_layer_kernel(x_ref, ln1g, ln1b, wq, bq, wk, bk, wv, bv, wo, bo,
                          ln2g, ln2b, w1, b1, w2, b2, lnfg, lnfb, o_ref,
                          *, n_heads):
    """Fused pre-LN encoder layer + final encoder LayerNorm (bf16 matmuls)."""
    del n_heads
    x = x_ref[...]                                    # (L_enc, D) f32
    dh = wq.shape[2]
    scale = dh ** -0.5

    h = _layernorm(x, ln1g[...], ln1b[...]).astype(jnp.bfloat16)
    qh = _proj_heads(h, wq[...], bq[...])
    kh = _proj_heads(h, wk[...], bk[...])
    vh = _proj_heads(h, wv[...], bv[...])
    attn = _sdpa(qh, kh, vh, None, scale)
    x = x + _merge_heads(attn, wo[...], bo[...])

    h = _layernorm(x, ln2g[...], ln2b[...]).astype(jnp.bfloat16)
    ffh = jax.nn.gelu(jnp.dot(h, w1[...],
                              preferred_element_type=jnp.float32) + b1[...])
    x = x + (jnp.dot(ffh.astype(jnp.bfloat16), w2[...],
                     preferred_element_type=jnp.float32) + b2[...])

    o_ref[...] = _layernorm(x, lnfg[...], lnfb[...])
    # TODO(synk): at real L_enc=1500 give this kernel a row-tiled grid
    # ("parallel") with constant weight index_maps + explicit vmem_limit_bytes.


def _decode_loop_kernel(pos_ref, embf_ref, embb_ref, ck_ref, cv_ref,
                        ln1g, ln1b, wqs, bqs, wks, bks, wvs, bvs, wos, bos,
                        ln2g, ln2b, wqc, bqc, woc, boc,
                        ln3g, ln3b, w1, b1, w2, b2, lnfg, lnfb,
                        tok_ref, kc_ref, vc_ref, *, n_heads):
    """Whole greedy decode loop: one grid step == one generated token.
    Weights / cross-KV / embedding stay resident in VMEM across all steps;
    the self-attn KV cache lives in VMEM scratch (single-row update/step)."""
    t = pl.program_id(0)
    seq = kc_ref.shape[1]
    dh = kc_ref.shape[2]
    scale = dh ** -0.5

    @pl.when(t == 0)
    def _():
        tok_ref[0] = jnp.int32(0)                     # start-of-transcript token
        kc_ref[...] = jnp.zeros_like(kc_ref)
        vc_ref[...] = jnp.zeros_like(vc_ref)

    # ---- embed current token (dynamic row gather, pos row for this step) ----
    cur = tok_ref[t]
    x = embf_ref[pl.ds(cur, 1), :] + pos_ref[pl.ds(t, 1), :]      # (1, D) f32

    # ---- self-attention with incremental KV cache ---------------------------
    h = _layernorm(x, ln1g[...], ln1b[...]).astype(jnp.bfloat16)
    qh = _proj_heads(h, wqs[...], bqs[...])           # (H, 1, dh)
    kh = _proj_heads(h, wks[...], bks[...])
    vh = _proj_heads(h, wvs[...], bvs[...])
    for hd in range(n_heads):                         # static loop: 1-row stores
        kc_ref[hd, pl.ds(t, 1), :] = kh[hd]
        vc_ref[hd, pl.ds(t, 1), :] = vh[hd]
    col = jax.lax.broadcasted_iota(jnp.int32, (1, 1, seq), 2)
    attn = _sdpa(qh, kc_ref[...], vc_ref[...], col <= t, scale)
    x = x + _merge_heads(attn, wos[...], bos[...])

    # ---- cross-attention (K/V precomputed once, resident) -------------------
    h = _layernorm(x, ln2g[...], ln2b[...]).astype(jnp.bfloat16)
    qh = _proj_heads(h, wqc[...], bqc[...])
    attn = _sdpa(qh, ck_ref[...], cv_ref[...], None, scale)
    x = x + _merge_heads(attn, woc[...], boc[...])

    # ---- MLP -----------------------------------------------------------------
    h = _layernorm(x, ln3g[...], ln3b[...]).astype(jnp.bfloat16)
    ffh = jax.nn.gelu(jnp.dot(h, w1[...],
                              preferred_element_type=jnp.float32) + b1[...])
    x = x + (jnp.dot(ffh.astype(jnp.bfloat16), w2[...],
                     preferred_element_type=jnp.float32) + b2[...])

    # ---- final LN + tied-embedding logits (contract last dim, no transpose) -
    y = _layernorm(x, lnfg[...], lnfb[...]).astype(jnp.bfloat16)
    logits = jax.lax.dot_general(y, embb_ref[...], (((1,), (1,)), ((), ())),
                                 preferred_element_type=jnp.float32)  # (1, V)
    # TODO(synk): at real VOCAB~51865 tile this matmul over the vocab axis
    # (bf16 tiles via BlockSpec, running max/argmax carry, "parallel" on v7x).
    vocab = logits.shape[-1]
    ids = jax.lax.broadcasted_iota(jnp.int32, (1, vocab), 1)
    mmax = jnp.max(logits, axis=-1, keepdims=True)
    nxt = jnp.min(jnp.where(logits == mmax, ids, vocab))             # greedy
    tok_ref[t + 1] = nxt.astype(jnp.int32)


# ----------------------------- kernel wrappers --------------------------------
def conv3_gelu_s1(x, w_flat, b):
    t_in = x.shape[0]
    c_out = w_flat.shape[1]
    xp = jnp.pad(x, ((1, 1), (0, 0)))
    return pl.pallas_call(
        _conv3_s1_kernel,
        in_specs=[_VMEM] * 3, out_specs=_VMEM,
        out_shape=jax.ShapeDtypeStruct((t_in, c_out), jnp.float32),
    )(xp, w_flat, b.reshape(1, c_out).astype(jnp.float32))


def conv3_gelu_s2(x, w_flat, b):
    t_in = x.shape[0]
    t_out = t_in // 2
    c_out = w_flat.shape[1]
    xp = jnp.pad(x, ((1, 1), (0, 0)))
    xe, xo = xp[0::2], xp[1::2]          # one-time XLA de-interleave (no dup reads)
    return pl.pallas_call(
        _conv3_s2_kernel,
        in_specs=[_VMEM] * 4, out_specs=_VMEM,
        out_shape=jax.ShapeDtypeStruct((t_out, c_out), jnp.float32),
    )(xe, xo, w_flat, b.reshape(1, c_out).astype(jnp.float32))


def linear(x_bf16, w_bf16, b):
    m = x_bf16.shape[0]
    n = w_bf16.shape[1]
    return pl.pallas_call(
        _linear_kernel,
        in_specs=[_VMEM] * 3, out_specs=_VMEM,
        out_shape=jax.ShapeDtypeStruct((m, n), jnp.float32),
    )(x_bf16, w_bf16, b.reshape(1, n).astype(jnp.float32))


def _split_heads_w(w):        # (D, D) -> (H, D, dh) bf16
    return w.reshape(D_MODEL, N_HEADS, D_HEAD).transpose(1, 0, 2).astype(jnp.bfloat16)


def _split_heads_b(b):        # (D,) -> (H, 1, dh) f32
    return b.reshape(N_HEADS, 1, D_HEAD).astype(jnp.float32)


def _merge_heads_w(w):        # (D, D) -> (H, dh, D) bf16
    return w.reshape(N_HEADS, D_HEAD, D_MODEL).astype(jnp.bfloat16)


def encoder_layer_fused(x, e, enc_ln_g, enc_ln_b):
    a, m = e["attn"], e["mlp"]
    l, d = x.shape
    kernel = functools.partial(_encoder_layer_kernel, n_heads=N_HEADS)
    args = (x,
            e["ln1_g"].reshape(1, d), e["ln1_b"].reshape(1, d),
            _split_heads_w(a["wq"]), _split_heads_b(a["bq"]),
            _split_heads_w(a["wk"]), _split_heads_b(a["bk"]),
            _split_heads_w(a["wv"]), _split_heads_b(a["bv"]),
            _merge_heads_w(a["wo"]), a["bo"].reshape(1, d),
            e["ln2_g"].reshape(1, d), e["ln2_b"].reshape(1, d),
            m["w1"].astype(jnp.bfloat16), m["b1"].reshape(1, D_FF),
            m["w2"].astype(jnp.bfloat16), m["b2"].reshape(1, d),
            enc_ln_g.reshape(1, d), enc_ln_b.reshape(1, d))
    return pl.pallas_call(
        kernel,
        in_specs=[_VMEM] * len(args), out_specs=_VMEM,
        out_shape=jax.ShapeDtypeStruct((l, d), jnp.float32),
    )(*args)


def _pack_decoder_inputs(params):
    d = D_MODEL
    p = params["dec_layer"]
    sa, ca, m = p["self_attn"], p["cross_attn"], p["mlp"]
    return (
        p["ln1_g"].reshape(1, d), p["ln1_b"].reshape(1, d),
        _split_heads_w(sa["wq"]), _split_heads_b(sa["bq"]),
        _split_heads_w(sa["wk"]), _split_heads_b(sa["bk"]),
        _split_heads_w(sa["wv"]), _split_heads_b(sa["bv"]),
        _merge_heads_w(sa["wo"]), sa["bo"].reshape(1, d),
        p["ln2_g"].reshape(1, d), p["ln2_b"].reshape(1, d),
        _split_heads_w(ca["wq"]), _split_heads_b(ca["bq"]),
        _merge_heads_w(ca["wo"]), ca["bo"].reshape(1, d),
        p["ln3_g"].reshape(1, d), p["ln3_b"].reshape(1, d),
        m["w1"].astype(jnp.bfloat16), m["b1"].reshape(1, D_FF),
        m["w2"].astype(jnp.bfloat16), m["b2"].reshape(1, d),
        params["dec_ln_g"].reshape(1, d), params["dec_ln_b"].reshape(1, d),
    )


def decode_loop(pos_dec, tok_emb, ck, cv, dec_w):
    kernel = functools.partial(_decode_loop_kernel, n_heads=N_HEADS)
    n_in = 5 + len(dec_w)
    return pl.pallas_call(
        kernel,
        grid=(L_DEC - 1,),
        in_specs=[_VMEM] * n_in,            # full arrays resident in VMEM
        out_specs=_SMEM,                    # token ids carried/emitted in SMEM
        out_shape=jax.ShapeDtypeStruct((L_DEC,), jnp.int32),
        scratch_shapes=[pltpu.VMEM((N_HEADS, L_DEC, D_HEAD), jnp.float32),
                        pltpu.VMEM((N_HEADS, L_DEC, D_HEAD), jnp.float32)],
        compiler_params=pltpu.CompilerParams(
            dimension_semantics=("arbitrary",)),
    )(pos_dec.astype(jnp.float32),
      tok_emb.astype(jnp.float32),          # f32 copy for the row gather
      tok_emb.astype(jnp.bfloat16),         # bf16 copy for tied-embedding logits
      ck, cv, *dec_w)


# ----------------------------- generation -------------------------------------
def generate(params, input_features):
    d = D_MODEL
    feats = input_features[0].T                                   # (T_IN, n_mels)

    # ---------------- encoder (runs once) ------------------------------------
    w1 = jnp.transpose(params["conv1_w"], (2, 1, 0)).reshape(3 * N_MELS, d)
    w2 = jnp.transpose(params["conv2_w"], (2, 1, 0)).reshape(3 * d, d)
    x = conv3_gelu_s1(feats, w1.astype(jnp.bfloat16), params["conv1_b"])
    x = conv3_gelu_s2(x, w2.astype(jnp.bfloat16), params["conv2_b"])
    x = x + params["pos_enc"]

    enc = encoder_layer_fused(x, params["enc_layer"],
                              params["enc_ln_g"], params["enc_ln_b"])

    # ---------------- cross-attention K/V (hoisted out of the loop) ----------
    ca = params["dec_layer"]["cross_attn"]
    ckv = linear(enc.astype(jnp.bfloat16),
                 jnp.concatenate([ca["wk"], ca["wv"]], axis=1).astype(jnp.bfloat16),
                 jnp.concatenate([ca["bk"], ca["bv"]]))            # (L_enc, 2D)
    l_enc = enc.shape[0]
    ck = ckv[:, :d].reshape(l_enc, N_HEADS, D_HEAD).transpose(1, 0, 2)
    cv = ckv[:, d:].reshape(l_enc, N_HEADS, D_HEAD).transpose(1, 0, 2)

    dec_w = _pack_decoder_inputs(params)
    tokens = decode_loop(params["pos_dec"], params["tok_emb"],
                         ck.astype(jnp.bfloat16), cv.astype(jnp.bfloat16), dec_w)
    return tokens[None, :]


# ----------------------------- params ------------------------------------------
def init_params(key):
    keys = iter(jax.random.split(key, 128))

    def rnd(shape, scale=0.05):
        return (scale * jax.random.normal(next(keys), shape)).astype(jnp.float32)

    def attn_params():
        return {"wq": rnd((D_MODEL, D_MODEL)), "bq": rnd((D_MODEL,)),
                "wk": rnd((D_MODEL, D_MODEL)), "bk": rnd((D_MODEL,)),
                "wv": rnd((D_MODEL, D_MODEL)), "bv": rnd((D_MODEL,)),
                "wo": rnd((D_MODEL, D_MODEL)), "bo": rnd((D_MODEL,))}

    def mlp_params():
        return {"w1": rnd((D_MODEL, D_FF)), "b1": rnd((D_FF,)),
                "w2": rnd((D_FF, D_MODEL)), "b2": rnd((D_MODEL,))}

    ones = jnp.ones((D_MODEL,), jnp.float32)
    zeros = jnp.zeros((D_MODEL,), jnp.float32)

    return {
        "conv1_w": rnd((D_MODEL, N_MELS, 3)), "conv1_b": rnd((D_MODEL,)),
        "conv2_w": rnd((D_MODEL, D_MODEL, 3)), "conv2_b": rnd((D_MODEL,)),
        "pos_enc": rnd((T_IN // 2, D_MODEL)),
        "enc_layer": {"attn": attn_params(), "mlp": mlp_params(),
                      "ln1_g": ones, "ln1_b": zeros,
                      "ln2_g": ones, "ln2_b": zeros},
        "enc_ln_g": ones, "enc_ln_b": zeros,
        "tok_emb": rnd((VOCAB, D_MODEL)),
        "pos_dec": rnd((L_DEC, D_MODEL)),
        "dec_layer": {"self_attn": attn_params(), "cross_attn": attn_params(),
                      "mlp": mlp_params(),
                      "ln1_g": ones, "ln1_b": zeros,
                      "ln2_g": ones, "ln2_b": zeros,
                      "ln3_g": ones, "ln3_b": zeros},
        "dec_ln_g": ones, "dec_ln_b": zeros,
    }


# ----------------------------- main --------------------------------------------
if __name__ == "__main__":
    key = jax.random.PRNGKey(0)
    k_feat, k_params = jax.random.split(key)
    # synthetic log-mel "input_features": (batch=1, n_mels, frames)
    input_features = jax.random.normal(k_feat, (1, N_MELS, T_IN), jnp.float32)
    params = init_params(k_params)

    generate_jit = jax.jit(generate)
    token_ids = jax.block_until_ready(generate_jit(params, input_features))
    assert token_ids.shape == (1, L_DEC)
    assert token_ids.dtype == jnp.int32
    print("KERNEL_OK")
</pallas_src>

<mosaic_0001>
module attributes {stable_mosaic.version = 11 : i64} {
  func.func @_conv3_s1_kernel(%arg0: memref<18x16xf32, #tpu.memory_space<vmem>>, %arg1: memref<48x32xbf16, #tpu.memory_space<vmem>>, %arg2: memref<1x32xf32, #tpu.memory_space<vmem>>, %arg3: memref<16x32xf32, #tpu.memory_space<vmem>>) attributes {dimension_semantics = [], scalar_prefetch = 0 : i64, scratch_operands = 0 : i64, tpu.core_type = #tpu.core_type<tc>} {
    %c0 = arith.constant 0 : index
    %c0_0 = arith.constant 0 : index
    %0 = vector.load %arg1[%c0, %c0_0] : memref<48x32xbf16, #tpu.memory_space<vmem>>, vector<48x32xbf16>
    %cst = arith.constant 0.000000e+00 : f32
    %1 = vector.broadcast %cst : f32 to vector<16x32xf32>
    %c0_1 = arith.constant 0 : index
    %c0_2 = arith.constant 0 : index
    %2 = vector.load %arg2[%c0_1, %c0_2] : memref<1x32xf32, #tpu.memory_space<vmem>>, vector<1x32xf32>
    %3 = vector.broadcast %2 : vector<1x32xf32> to vector<16x32xf32>
    %4 = arith.addf %1, %3 : vector<16x32xf32>
    %c0_3 = arith.constant 0 : index
    %c0_4 = arith.constant 0 : index
    %5 = vector.load %arg0[%c0_3, %c0_4] : memref<18x16xf32, #tpu.memory_space<vmem>>, vector<16x16xf32>
    %6 = arith.truncf %5 : vector<16x16xf32> to vector<16x16xbf16>
    %7 = vector.extract_strided_slice %0 {offsets = [0, 0], sizes = [16, 32], strides = [1, 1]} : vector<48x32xbf16> to vector<16x32xbf16>
    %cst_5 = arith.constant dense<0.000000e+00> : vector<16x32xf32>
    %8 = tpu.matmul %6, %7, %cst_5 {dimension_numbers = #tpu.dot_dimension_numbers<[1], [0], [0], [1], [0, 0, 1, 1], [], []>} : vector<16x16xbf16>, vector<16x32xbf16>, vector<16x32xf32> -> vector<16x32xf32>
    %9 = arith.addf %4, %8 : vector<16x32xf32>
    %c1 = arith.constant 1 : index
    %c0_6 = arith.constant 0 : index
    %10 = vector.load %arg0[%c1, %c0_6] : memref<18x16xf32, #tpu.memory_space<vmem>>, vector<16x16xf32>
    %11 = arith.truncf %10 : vector<16x16xf32> to vector<16x16xbf16>
    %12 = vector.extract_strided_slice %0 {offsets = [16, 0], sizes = [16, 32], strides = [1, 1]} : vector<48x32xbf16> to vector<16x32xbf16>
    %cst_7 = arith.constant dense<0.000000e+00> : vector<16x32xf32>
    %13 = tpu.matmul %11, %12, %cst_7 {dimension_numbers = #tpu.dot_dimension_numbers<[1], [0], [0], [1], [0, 0, 1, 1], [], []>} : vector<16x16xbf16>, vector<16x32xbf16>, vector<16x32xf32> -> vector<16x32xf32>
    %14 = arith.addf %9, %13 : vector<16x32xf32>
    %c2 = arith.constant 2 : index
    %c0_8 = arith.constant 0 : index
    %15 = vector.load %arg0[%c2, %c0_8] : memref<18x16xf32, #tpu.memory_space<vmem>>, vector<16x16xf32>
    %16 = arith.truncf %15 : vector<16x16xf32> to vector<16x16xbf16>
    %17 = vector.extract_strided_slice %0 {offsets = [32, 0], sizes = [16, 32], strides = [1, 1]} : vector<48x32xbf16> to vector<16x32xbf16>
    %cst_9 = arith.constant dense<0.000000e+00> : vector<16x32xf32>
    %18 = tpu.matmul %16, %17, %cst_9 {dimension_numbers = #tpu.dot_dimension_numbers<[1], [0], [0], [1], [0, 0, 1, 1], [], []>} : vector<16x16xbf16>, vector<16x32xbf16>, vector<16x32xf32> -> vector<16x32xf32>
    %19 = arith.addf %14, %18 : vector<16x32xf32>
    %20 = arith.mulf %19, %19 : vector<16x32xf32>
    %21 = arith.mulf %19, %20 : vector<16x32xf32>
    %cst_10 = arith.constant 4.471500e-02 : f32
    %22 = vector.broadcast %cst_10 : f32 to vector<16x32xf32>
    %23 = arith.mulf %22, %21 : vector<16x32xf32>
    %24 = arith.addf %19, %23 : vector<16x32xf32>
    %cst_11 = arith.constant 0.797884583 : f32
    %25 = vector.broadcast %cst_11 : f32 to vector<16x32xf32>
    %26 = arith.mulf %25, %24 : vector<16x32xf32>
    %27 = math.tanh %26 : vector<16x32xf32>
    %cst_12 = arith.constant 1.000000e+00 : f32
    %28 = vector.broadcast %cst_12 : f32 to vector<16x32xf32>
    %29 = arith.addf %28, %27 : vector<16x32xf32>
    %cst_13 = arith.constant 5.000000e-01 : f32
    %30 = vector.broadcast %cst_13 : f32 to vector<16x32xf32>
    %31 = arith.mulf %30, %29 : vector<16x32xf32>
    %32 = arith.mulf %19, %31 : vector<16x32xf32>
    %c0_14 = arith.constant 0 : index
    %c0_15 = arith.constant 0 : index
    %33 = vector.load %arg3[%c0_14, %c0_15] : memref<16x32xf32, #tpu.memory_space<vmem>>, vector<16x32xf32>
    tpu.vector_store %arg3[%c0_14, %c0_15], %32 {strides = array<i32>} : memref<16x32xf32, #tpu.memory_space<vmem>>, vector<16x32xf32>,
    return
  }
}

module attributes {stable_mosaic.version = 11 : i64} {
  func.func @_conv3_s2_kernel(%arg0: memref<9x32xf32, #tpu.memory_space<vmem>>, %arg1: memref<9x32xf32, #tpu.memory_space<vmem>>, %arg2: memref<96x32xbf16, #tpu.memory_space<vmem>>, %arg3: memref<1x32xf32, #tpu.memory_space<vmem>>, %arg4: memref<8x32xf32, #tpu.memory_space<vmem>>) attributes {dimension_semantics = [], scalar_prefetch = 0 : i64, scratch_operands = 0 : i64, tpu.core_type = #tpu.core_type<tc>} {
    %c0 = arith.constant 0 : index
    %c0_0 = arith.constant 0 : index
    %0 = vector.load %arg2[%c0, %c0_0] : memref<96x32xbf16, #tpu.memory_space<vmem>>, vector<96x32xbf16>
    %c0_1 = arith.constant 0 : index
    %c0_2 = arith.constant 0 : index
    %1 = vector.load %arg0[%c0_1, %c0_2] : memref<9x32xf32, #tpu.memory_space<vmem>>, vector<8x32xf32>
    %c0_3 = arith.constant 0 : index
    %c0_4 = arith.constant 0 : index
    %2 = vector.load %arg1[%c0_3, %c0_4] : memref<9x32xf32, #tpu.memory_space<vmem>>, vector<8x32xf32>
    %c1 = arith.constant 1 : index
    %c0_5 = arith.constant 0 : index
    %3 = vector.load %arg0[%c1, %c0_5] : memref<9x32xf32, #tpu.memory_space<vmem>>, vector<8x32xf32>
    %cst = arith.constant 0.000000e+00 : f32
    %4 = vector.broadcast %cst : f32 to vector<8x32xf32>
    %c0_6 = arith.constant 0 : index
    %c0_7 = arith.constant 0 : index
    %5 = vector.load %arg3[%c0_6, %c0_7] : memref<1x32xf32, #tpu.memory_space<vmem>>, vector<1x32xf32>
    %6 = vector.broadcast %5 : vector<1x32xf32> to vector<8x32xf32>
    %7 = arith.addf %4, %6 : vector<8x32xf32>
    %8 = arith.truncf %1 : vector<8x32xf32> to vector<8x32xbf16>
    %9 = vector.extract_strided_slice %0 {offsets = [0, 0], sizes = [32, 32], strides = [1, 1]} : vector<96x32xbf16> to vector<32x32xbf16>
    %cst_8 = arith.constant dense<0.000000e+00> : vector<8x32xf32>
    %10 = tpu.matmul %8, %9, %cst_8 {dimension_numbers = #tpu.dot_dimension_numbers<[1], [0], [0], [1], [0, 0, 1, 1], [], []>} : vector<8x32xbf16>, vector<32x32xbf16>, vector<8x32xf32> -> vector<8x32xf32>
    %11 = arith.addf %7, %10 : vector<8x32xf32>
    %12 = arith.truncf %2 : vector<8x32xf32> to vector<8x32xbf16>
    %13 = vector.extract_strided_slice %0 {offsets = [32, 0], sizes = [32, 32], strides = [1, 1]} : vector<96x32xbf16> to vector<32x32xbf16>
    %cst_9 = arith.constant dense<0.000000e+00> : vector<8x32xf32>
    %14 = tpu.matmul %12, %13, %cst_9 {dimension_numbers = #tpu.dot_dimension_numbers<[1], [0], [0], [1], [0, 0, 1, 1], [], []>} : vector<8x32xbf16>, vector<32x32xbf16>, vector<8x32xf32> -> vector<8x32xf32>
    %15 = arith.addf %11, %14 : vector<8x32xf32>
    %16 = arith.truncf %3 : vector<8x32xf32> to vector<8x32xbf16>
    %17 = vector.extract_strided_slice %0 {offsets = [64, 0], sizes = [32, 32], strides = [1, 1]} : vector<96x32xbf16> to vector<32x32xbf16>
    %cst_10 = arith.constant dense<0.000000e+00> : vector<8x32xf32>
    %18 = tpu.matmul %16, %17, %cst_10 {dimension_numbers = #tpu.dot_dimension_numbers<[1], [0], [0], [1], [0, 0, 1, 1], [], []>} : vector<8x32xbf16>, vector<32x32xbf16>, vector<8x32xf32> -> vector<8x32xf32>
    %19 = arith.addf %15, %18 : vector<8x32xf32>
    %20 = arith.mulf %19, %19 : vector<8x32xf32>
    %21 = arith.mulf %19, %20 : vector<8x32xf32>
    %cst_11 = arith.constant 4.471500e-02 : f32
    %22 = vector.broadcast %cst_11 : f32 to vector<8x32xf32>
    %23 = arith.mulf %22, %21 : vector<8x32xf32>
    %24 = arith.addf %19, %23 : vector<8x32xf32>
    %cst_12 = arith.constant 0.797884583 : f32
    %25 = vector.broadcast %cst_12 : f32 to vector<8x32xf32>
    %26 = arith.mulf %25, %24 : vector<8x32xf32>
    %27 = math.tanh %26 : vector<8x32xf32>
    %cst_13 = arith.constant 1.000000e+00 : f32
    %28 = vector.broadcast %cst_13 : f32 to vector<8x32xf32>
    %29 = arith.addf %28, %27 : vector<8x32xf32>
    %cst_14 = arith.constant 5.000000e-01 : f32
    %30 = vector.broadcast %cst_14 : f32 to vector<8x32xf32>
    %31 = arith.mulf %30, %29 : vector<8x32xf32>
    %32 = arith.mulf %19, %31 : vector<8x32xf32>
    %c0_15 = arith.constant 0 : index
    %c0_16 = arith.constant 0 : index
    %33 = vector.load %arg4[%c0_15, %c0_16] : memref<8x32xf32, #tpu.memory_space<vmem>>, vector<8x32xf32>
    tpu.vector_store %arg4[%c0_15, %c0_16], %32 {strides = array<i32>} : memref<8x32xf32, #tpu.memory_space<vmem>>, vector<8x32xf32>,
    return
  }
}

module attributes {stable_mosaic.version = 11 : i64} {
  func.func @_encoder_layer_kernel(%arg0: memref<8x32xf32, #tpu.memory_space<vmem>>, %arg1: memref<1x32xf32, #tpu.memory_space<vmem>>, %arg2: memref<1x32xf32, #tpu.memory_space<vmem>>, %arg3: memref<4x32x8xbf16, #tpu.memory_space<vmem>>, %arg4: memref<4x1x8xf32, #tpu.memory_space<vmem>>, %arg5: memref<4x32x8xbf16, #tpu.memory_space<vmem>>, %arg6: memref<4x1x8xf32, #tpu.memory_space<vmem>>, %arg7: memref<4x32x8xbf16, #tpu.memory_space<vmem>>, %arg8: memref<4x1x8xf32, #tpu.memory_space<vmem>>, %arg9: memref<4x8x32xbf16, #tpu.memory_space<vmem>>, %arg10: memref<1x32xf32, #tpu.memory_space<vmem>>, %arg11: memref<1x32xf32, #tpu.memory_space<vmem>>, %arg12: memref<1x32xf32, #tpu.memory_space<vmem>>, %arg13: memref<32x64xbf16, #tpu.memory_space<vmem>>, %arg14: memref<1x64xf32, #tpu.memory_space<vmem>>, %arg15: memref<64x32xbf16, #tpu.memory_space<vmem>>, %arg16: memref<1x32xf32, #tpu.memory_space<vmem>>, %arg17: memref<1x32xf32, #tpu.memory_space<vmem>>, %arg18: memref<1x32xf32, #tpu.memory_space<vmem>>, %arg19: memref<8x32xf32, #tpu.memory_space<vmem>>) attributes {dimension_semantics = [], scalar_prefetch = 0 : i64, scratch_operands = 0 : i64, tpu.core_type = #tpu.core_type<tc>} {
    %c0 = arith.constant 0 : index
    %c0_0 = arith.constant 0 : index
    %0 = vector.load %arg0[%c0, %c0_0] : memref<8x32xf32, #tpu.memory_space<vmem>>, vector<8x32xf32>
    %c0_1 = arith.constant 0 : index
    %c0_2 = arith.constant 0 : index
    %1 = vector.load %arg1[%c0_1, %c0_2] : memref<1x32xf32, #tpu.memory_space<vmem>>, vector<1x32xf32>
    %c0_3 = arith.constant 0 : index
    %c0_4 = arith.constant 0 : index
    %2 = vector.load %arg2[%c0_3, %c0_4] : memref<1x32xf32, #tpu.memory_space<vmem>>, vector<1x32xf32>
    %cst = arith.constant dense<0.000000e+00> : vector<8xf32>
    %3 = vector.multi_reduction <add>, %0, %cst [1] : vector<8x32xf32> to vector<8xf32>
    %4 = vector.shape_cast %3 : vector<8xf32> to vector<8x1xf32>
    %cst_5 = arith.constant 3.200000e+01 : f32
    %5 = vector.broadcast %cst_5 : f32 to vector<8x1xf32>
    %6 = arith.divf %4, %5 : vector<8x1xf32>
    %7 = vector.broadcast %6 : vector<8x1xf32> to vector<8x32xf32>
    %8 = arith.subf %0, %7 : vector<8x32xf32>
    %9 = arith.mulf %8, %8 : vector<8x32xf32>
    %cst_6 = arith.constant dense<0.000000e+00> : vector<8xf32>
    %10 = vector.multi_reduction <add>, %9, %cst_6 [1] : vector<8x32xf32> to vector<8xf32>
    %11 = vector.shape_cast %10 : vector<8xf32> to vector<8x1xf32>
    %cst_7 = arith.constant 3.200000e+01 : f32
    %12 = vector.broadcast %cst_7 : f32 to vector<8x1xf32>
    %13 = arith.divf %11, %12 : vector<8x1xf32>
    %cst_8 = arith.constant 9.99999974E-6 : f32
    %14 = vector.broadcast %cst_8 : f32 to vector<8x1xf32>
    %15 = arith.addf %13, %14 : vector<8x1xf32>
    %16 = math.rsqrt %15 : vector<8x1xf32>
    %17 = vector.broadcast %16 : vector<8x1xf32> to vector<8x32xf32>
    %18 = arith.mulf %8, %17 : vector<8x32xf32>
    %19 = vector.broadcast %1 : vector<1x32xf32> to vector<8x32xf32>
    %20 = arith.mulf %18, %19 : vector<8x32xf32>
    %21 = vector.broadcast %2 : vector<1x32xf32> to vector<8x32xf32>
    %22 = arith.addf %20, %21 : vector<8x32xf32>
    %23 = arith.truncf %22 : vector<8x32xf32> to vector<8x32xbf16>
    %c0_9 = arith.constant 0 : index
    %c0_10 = arith.constant 0 : index
    %c0_11 = arith.constant 0 : index
    %24 = vector.load %arg3[%c0_9, %c0_10, %c0_11] : memref<4x32x8xbf16, #tpu.memory_space<vmem>>, vector<4x32x8xbf16>
    %c0_12 = arith.constant 0 : index
    %c0_13 = arith.constant 0 : index
    %c0_14 = arith.constant 0 : index
    %25 = vector.load %arg4[%c0_12, %c0_13, %c0_14] : memref<4x1x8xf32, #tpu.memory_space<vmem>>, vector<4x1x8xf32>
    %26 = vector.shape_cast %23 : vector<8x32xbf16> to vector<1x8x32xbf16>
    %27 = vector.shape_cast %26 : vector<1x8x32xbf16> to vector<1x8x32xbf16>
    %28 = vector.broadcast %27 : vector<1x8x32xbf16> to vector<4x8x32xbf16>
    "tpu.trace_start"() <{level = 10 : i32, message = "hrd,hdk->hrk"}> : () -> ()
    %cst_15 = arith.constant dense<0.000000e+00> : vector<4x8x8xf32>
    %29 = tpu.matmul %28, %24, %cst_15 {dimension_numbers = #tpu.dot_dimension_numbers<[2], [1], [1], [2], [0, 0, 0, 1, 1, 2], [0], [0]>} : vector<4x8x32xbf16>, vector<4x32x8xbf16>, vector<4x8x8xf32> -> vector<4x8x8xf32>
    "tpu.trace_stop"() : () -> ()
    %30 = vector.broadcast %25 : vector<4x1x8xf32> to vector<4x8x8xf32>
    %31 = arith.addf %29, %30 : vector<4x8x8xf32>
    %c0_16 = arith.constant 0 : index
    %c0_17 = arith.constant 0 : index
    %c0_18 = arith.constant 0 : index
    %32 = vector.load %arg5[%c0_16, %c0_17, %c0_18] : memref<4x32x8xbf16, #tpu.memory_space<vmem>>, vector<4x32x8xbf16>
    %c0_19 = arith.constant 0 : index
    %c0_20 = arith.constant 0 : index
    %c0_21 = arith.constant 0 : index
    %33 = vector.load %arg6[%c0_19, %c0_20, %c0_21] : memref<4x1x8xf32, #tpu.memory_space<vmem>>, vector<4x1x8xf32>
    %34 = vector.shape_cast %23 : vector<8x32xbf16> to vector<1x8x32xbf16>
    %35 = vector.shape_cast %34 : vector<1x8x32xbf16> to vector<1x8x32xbf16>
    %36 = vector.broadcast %35 : vector<1x8x32xbf16> to vector<4x8x32xbf16>
    "tpu.trace_start"() <{level = 10 : i32, message = "hrd,hdk->hrk"}> : () -> ()
    %cst_22 = arith.constant dense<0.000000e+00> : vector<4x8x8xf32>
    %37 = tpu.matmul %36, %32, %cst_22 {dimension_numbers = #tpu.dot_dimension_numbers<[2], [1], [1], [2], [0, 0, 0, 1, 1, 2], [0], [0]>} : vector<4x8x32xbf16>, vector<4x32x8xbf16>, vector<4x8x8xf32> -> vector<4x8x8xf32>
    "tpu.trace_stop"() : () -> ()
    %38 = vector.broadcast %33 : vector<4x1x8xf32> to vector<4x8x8xf32>
    %39 = arith.addf %37, %38 : vector<4x8x8xf32>
    %c0_23 = arith.constant 0 : index
    %c0_24 = arith.constant 0 : index
    %c0_25 = arith.constant 0 : index
    %40 = vector.load %arg7[%c0_23, %c0_24, %c0_25] : memref<4x32x8xbf16, #tpu.memory_space<vmem>>, vector<4x32x8xbf16>
    %c0_26 = arith.constant 0 : index
    %c0_27 = arith.constant 0 : index
    %c0_28 = arith.constant 0 : index
    %41 = vector.load %arg8[%c0_26, %c0_27, %c0_28] : memref<4x1x8xf32, #tpu.memory_space<vmem>>, vector<4x1x8xf32>
    %42 = vector.shape_cast %23 : vector<8x32xbf16> to vector<1x8x32xbf16>
    %43 = vector.shape_cast %42 : vector<1x8x32xbf16> to vector<1x8x32xbf16>
    %44 = vector.broadcast %43 : vector<1x8x32xbf16> to vector<4x8x32xbf16>
    "tpu.trace_start"() <{level = 10 : i32, message = "hrd,hdk->hrk"}> : () -> ()
    %cst_29 = arith.constant dense<0.000000e+00> : vector<4x8x8xf32>
    %45 = tpu.matmul %44, %40, %cst_29 {dimension_numbers = #tpu.dot_dimension_numbers<[2], [1], [1], [2], [0, 0, 0, 1, 1, 2], [0], [0]>} : vector<4x8x32xbf16>, vector<4x32x8xbf16>, vector<4x8x8xf32> -> vector<4x8x8xf32>
    "tpu.trace_stop"() : () -> ()
    %46 = vector.broadcast %41 : vector<4x1x8xf32> to vector<4x8x8xf32>
    %47 = arith.addf %45, %46 : vector<4x8x8xf32>
    %48 = arith.truncf %31 : vector<4x8x8xf32> to vector<4x8x8xbf16>
    %49 = arith.truncf %39 : vector<4x8x8xf32> to vector<4x8x8xbf16>
    "tpu.trace_start"() <{level = 10 : i32, message = "hqd,hkd->hqk"}> : () -> ()
    %cst_30 = arith.constant dense<0.000000e+00> : vector<4x8x8xf32>
    %50 = tpu.matmul %48, %49, %cst_30 {dimension_numbers = #tpu.dot_dimension_numbers<[2], [2], [1], [1], [0, 0, 0, 1, 1, 1], [0], [0]>} : vector<4x8x8xbf16>, vector<4x8x8xbf16>, vector<4x8x8xf32> -> vector<4x8x8xf32>
    "tpu.trace_stop"() : () -> ()
    %cst_31 = arith.constant 0.353553385 : f32
    %51 = vector.broadcast %cst_31 : f32 to vector<4x8x8xf32>
    %52 = arith.mulf %50, %51 : vector<4x8x8xf32>
    %cst_32 = arith.constant dense<0xFF800000> : vector<4x8xf32>
    %53 = vector.multi_reduction <maximumf>, %52, %cst_32 [2] : vector<4x8x8xf32> to vector<4x8xf32>
    %54 = vector.shape_cast %53 : vector<4x8xf32> to vector<4x8x1xf32>
    %55 = vector.broadcast %54 : vector<4x8x1xf32> to vector<4x8x8xf32>
    %56 = arith.subf %52, %55 : vector<4x8x8xf32>
    %57 = math.exp %56 : vector<4x8x8xf32>
    %cst_33 = arith.constant dense<0.000000e+00> : vector<4x8xf32>
    %58 = vector.multi_reduction <add>, %57, %cst_33 [2] : vector<4x8x8xf32> to vector<4x8xf32>
    %59 = vector.shape_cast %58 : vector<4x8xf32> to vector<4x8x1xf32>
    %60 = tpu.reciprocal %59 {approx = true} : vector<4x8x1xf32> -> vector<4x8x1xf32>
    %61 = vector.broadcast %60 : vector<4x8x1xf32> to vector<4x8x8xf32>
    %62 = arith.mulf %57, %61 : vector<4x8x8xf32>
    %63 = arith.truncf %62 : vector<4x8x8xf32> to vector<4x8x8xbf16>
    %64 = arith.truncf %47 : vector<4x8x8xf32> to vector<4x8x8xbf16>
    "tpu.trace_start"() <{level = 10 : i32, message = "hqk,hkd->hqd"}> : () -> ()
    %cst_34 = arith.constant dense<0.000000e+00> : vector<4x8x8xf32>
    %65 = tpu.matmul %63, %64, %cst_34 {dimension_numbers = #tpu.dot_dimension_numbers<[2], [1], [1], [2], [0, 0, 0, 1, 1, 2], [0], [0]>} : vector<4x8x8xbf16>, vector<4x8x8xbf16>, vector<4x8x8xf32> -> vector<4x8x8xf32>
    "tpu.trace_stop"() : () -> ()
    %c0_35 = arith.constant 0 : index
    %c0_36 = arith.constant 0 : index
    %c0_37 = arith.constant 0 : index
    %66 = vector.load %arg9[%c0_35, %c0_36, %c0_37] : memref<4x8x32xbf16, #tpu.memory_space<vmem>>, vector<4x8x32xbf16>
    %c0_38 = arith.constant 0 : index
    %c0_39 = arith.constant 0 : index
    %67 = vector.load %arg10[%c0_38, %c0_39] : memref<1x32xf32, #tpu.memory_space<vmem>>, vector<1x32xf32>
    %68 = arith.truncf %65 : vector<4x8x8xf32> to vector<4x8x8xbf16>
    "tpu.trace_start"() <{level = 10 : i32, message = "hrd,hdk->hrk"}> : () -> ()
    %cst_40 = arith.constant dense<0.000000e+00> : vector<4x8x32xf32>
    %69 = tpu.matmul %68, %66, %cst_40 {dimension_numbers = #tpu.dot_dimension_numbers<[2], [1], [1], [2], [0, 0, 0, 1, 1, 2], [0], [0]>} : vector<4x8x8xbf16>, vector<4x8x32xbf16>, vector<4x8x32xf32> -> vector<4x8x32xf32>
    "tpu.trace_stop"() : () -> ()
    %cst_41 = arith.constant dense<0.000000e+00> : vector<8x32xf32>
    %70 = vector.multi_reduction <add>, %69, %cst_41 [0] : vector<4x8x32xf32> to vector<8x32xf32>
    %71 = vector.broadcast %67 : vector<1x32xf32> to vector<8x32xf32>
    %72 = arith.addf %70, %71 : vector<8x32xf32>
    %73 = arith.addf %0, %72 : vector<8x32xf32>
    %c0_42 = arith.constant 0 : index
    %c0_43 = arith.constant 0 : index
    %74 = vector.load %arg11[%c0_42, %c0_43] : memref<1x32xf32, #tpu.memory_space<vmem>>, vector<1x32xf32>
    %c0_44 = arith.constant 0 : index
    %c0_45 = arith.constant 0 : index
    %75 = vector.load %arg12[%c0_44, %c0_45] : memref<1x32xf32, #tpu.memory_space<vmem>>, vector<1x32xf32>
    %cst_46 = arith.constant dense<0.000000e+00> : vector<8xf32>
    %76 = vector.multi_reduction <add>, %73, %cst_46 [1] : vector<8x32xf32> to vector<8xf32>
    %77 = vector.shape_cast %76 : vector<8xf32> to vector<8x1xf32>
    %cst_47 = arith.constant 3.200000e+01 : f32
    %78 = vector.broadcast %cst_47 : f32 to vector<8x1xf32>
    %79 = arith.divf %77, %78 : vector<8x1xf32>
    %80 = vector.broadcast %79 : vector<8x1xf32> to vector<8x32xf32>
    %81 = arith.subf %73, %80 : vector<8x32xf32>
    %82 = arith.mulf %81, %81 : vector<8x32xf32>
    %cst_48 = arith.constant dense<0.000000e+00> : vector<8xf32>
    %83 = vector.multi_reduction <add>, %82, %cst_48 [1] : vector<8x32xf32> to vector<8xf32>
    %84 = vector.shape_cast %83 : vector<8xf32> to vector<8x1xf32>
    %cst_49 = arith.constant 3.200000e+01 : f32
    %85 = vector.broadcast %cst_49 : f32 to vector<8x1xf32>
    %86 = arith.divf %84, %85 : vector<8x1xf32>
    %cst_50 = arith.constant 9.99999974E-6 : f32
    %87 = vector.broadcast %cst_50 : f32 to vector<8x1xf32>
    %88 = arith.addf %86, %87 : vector<8x1xf32>
    %89 = math.rsqrt %88 : vector<8x1xf32>
    %90 = vector.broadcast %89 : vector<8x1xf32> to vector<8x32xf32>
    %91 = arith.mulf %81, %90 : vector<8x32xf32>
    %92 = vector.broadcast %74 : vector<1x32xf32> to vector<8x32xf32>
    %93 = arith.mulf %91, %92 : vector<8x32xf32>
    %94 = vector.broadcast %75 : vector<1x32xf32> to vector<8x32xf32>
    %95 = arith.addf %93, %94 : vector<8x32xf32>
    %96 = arith.truncf %95 : vector<8x32xf32> to vector<8x32xbf16>
    %c0_51 = arith.constant 0 : index
    %c0_52 = arith.constant 0 : index
    %97 = vector.load %arg13[%c0_51, %c0_52] : memref<32x64xbf16, #tpu.memory_space<vmem>>, vector<32x64xbf16>
    %cst_53 = arith.constant dense<0.000000e+00> : vector<8x64xf32>
    %98 = tpu.matmul %96, %97, %cst_53 {dimension_numbers = #tpu.dot_dimension_numbers<[1], [0], [0], [1], [0, 0, 1, 1], [], []>} : vector<8x32xbf16>, vector<32x64xbf16>, vector<8x64xf32> -> vector<8x64xf32>
    %c0_54 = arith.constant 0 : index
    %c0_55 = arith.constant 0 : index
    %99 = vector.load %arg14[%c0_54, %c0_55] : memref<1x64xf32, #tpu.memory_space<vmem>>, vector<1x64xf32>
    %100 = vector.broadcast %99 : vector<1x64xf32> to vector<8x64xf32>
    %101 = arith.addf %98, %100 : vector<8x64xf32>
    %102 = arith.mulf %101, %101 : vector<8x64xf32>
    %103 = arith.mulf %101, %102 : vector<8x64xf32>
    %cst_56 = arith.constant 4.471500e-02 : f32
    %104 = vector.broadcast %cst_56 : f32 to vector<8x64xf32>
    %105 = arith.mulf %104, %103 : vector<8x64xf32>
    %106 = arith.addf %101, %105 : vector<8x64xf32>
    %cst_57 = arith.constant 0.797884583 : f32
    %107 = vector.broadcast %cst_57 : f32 to vector<8x64xf32>
    %108 = arith.mulf %107, %106 : vector<8x64xf32>
    %109 = math.tanh %108 : vector<8x64xf32>
    %cst_58 = arith.constant 1.000000e+00 : f32
    %110 = vector.broadcast %cst_58 : f32 to vector<8x64xf32>
    %111 = arith.addf %110, %109 : vector<8x64xf32>
    %cst_59 = arith.constant 5.000000e-01 : f32
    %112 = vector.broadcast %cst_59 : f32 to vector<8x64xf32>
    %113 = arith.mulf %112, %111 : vector<8x64xf32>
    %114 = arith.mulf %101, %113 : vector<8x64xf32>
    %115 = arith.truncf %114 : vector<8x64xf32> to vector<8x64xbf16>
    %c0_60 = arith.constant 0 : index
    %c0_61 = arith.constant 0 : index
    %116 = vector.load %arg15[%c0_60, %c0_61] : memref<64x32xbf16, #tpu.memory_space<vmem>>, vector<64x32xbf16>
    %cst_62 = arith.constant dense<0.000000e+00> : vector<8x32xf32>
    %117 = tpu.matmul %115, %116, %cst_62 {dimension_numbers = #tpu.dot_dimension_numbers<[1], [0], [0], [1], [0, 0, 1, 1], [], []>} : vector<8x64xbf16>, vector<64x32xbf16>, vector<8x32xf32> -> vector<8x32xf32>
    %c0_63 = arith.constant 0 : index
    %c0_64 = arith.constant 0 : index
    %118 = vector.load %arg16[%c0_63, %c0_64] : memref<1x32xf32, #tpu.memory_space<vmem>>, vector<1x32xf32>
    %119 = vector.broadcast %118 : vector<1x32xf32> to vector<8x32xf32>
    %120 = arith.addf %117, %119 : vector<8x32xf32>
    %121 = arith.addf %73, %120 : vector<8x32xf32>
    %c0_65 = arith.constant 0 : index
    %c0_66 = arith.constant 0 : index
    %122 = vector.load %arg17[%c0_65, %c0_66] : memref<1x32xf32, #tpu.memory_space<vmem>>, vector<1x32xf32>
    %c0_67 = arith.constant 0 : index
    %c0_68 = arith.constant 0 : index
    %123 = vector.load %arg18[%c0_67, %c0_68] : memref<1x32xf32, #tpu.memory_space<vmem>>, vector<1x32xf32>
    %cst_69 = arith.constant dense<0.000000e+00> : vector<8xf32>
    %124 = vector.multi_reduction <add>, %121, %cst_69 [1] : vector<8x32xf32> to vector<8xf32>
    %125 = vector.shape_cast %124 : vector<8xf32> to vector<8x1xf32>
    %cst_70 = arith.constant 3.200000e+01 : f32
    %126 = vector.broadcast %cst_70 : f32 to vector<8x1xf32>
    %127 = arith.divf %125, %126 : vector<8x1xf32>
    %128 = vector.broadcast %127 : vector<8x1xf32> to vector<8x32xf32>
    %129 = arith.subf %121, %128 : vector<8x32xf32>
    %130 = arith.mulf %129, %129 : vector<8x32xf32>
    %cst_71 = arith.constant dense<0.000000e+00> : vector<8xf32>
    %131 = vector.multi_reduction <add>, %130, %cst_71 [1] : vector<8x32xf32> to vector<8xf32>
    %132 = vector.shape_cast %131 : vector<8xf32> to vector<8x1xf32>
    %cst_72 = arith.constant 3.200000e+01 : f32
    %133 = vector.broadcast %cst_72 : f32 to vector<8x1xf32>
    %134 = arith.divf %132, %133 : vector<8x1xf32>
    %cst_73 = arith.constant 9.99999974E-6 : f32
    %135 = vector.broadcast %cst_73 : f32 to vector<8x1xf32>
    %136 = arith.addf %134, %135 : vector<8x1xf32>
    %137 = math.rsqrt %136 : vector<8x1xf32>
    %138 = vector.broadcast %137 : vector<8x1xf32> to vector<8x32xf32>
    %139 = arith.mulf %129, %138 : vector<8x32xf32>
    %140 = vector.broadcast %122 : vector<1x32xf32> to vector<8x32xf32>
    %141 = arith.mulf %139, %140 : vector<8x32xf32>
    %142 = vector.broadcast %123 : vector<1x32xf32> to vector<8x32xf32>
    %143 = arith.addf %141, %142 : vector<8x32xf32>
    %c0_74 = arith.constant 0 : index
    %c0_75 = arith.constant 0 : index
    %144 = vector.load %arg19[%c0_74, %c0_75] : memref<8x32xf32, #tpu.memory_space<vmem>>, vector<8x32xf32>
    tpu.vector_store %arg19[%c0_74, %c0_75], %143 {strides = array<i32>} : memref<8x32xf32, #tpu.memory_space<vmem>>, vector<8x32xf32>,
    return
  }
}

module attributes {stable_mosaic.version = 11 : i64} {
  func.func @_linear_kernel(%arg0: memref<8x32xbf16, #tpu.memory_space<vmem>>, %arg1: memref<32x64xbf16, #tpu.memory_space<vmem>>, %arg2: memref<1x64xf32, #tpu.memory_space<vmem>>, %arg3: memref<8x64xf32, #tpu.memory_space<vmem>>) attributes {dimension_semantics = [], scalar_prefetch = 0 : i64, scratch_operands = 0 : i64, tpu.core_type = #tpu.core_type<tc>} {
    %c0 = arith.constant 0 : index
    %c0_0 = arith.constant 0 : index
    %0 = vector.load %arg0[%c0, %c0_0] : memref<8x32xbf16, #tpu.memory_space<vmem>>, vector<8x32xbf16>
    %c0_1 = arith.constant 0 : index
    %c0_2 = arith.constant 0 : index
    %1 = vector.load %arg1[%c0_1, %c0_2] : memref<32x64xbf16, #tpu.memory_space<vmem>>, vector<32x64xbf16>
    %cst = arith.constant dense<0.000000e+00> : vector<8x64xf32>
    %2 = tpu.matmul %0, %1, %cst {dimension_numbers = #tpu.dot_dimension_numbers<[1], [0], [0], [1], [0, 0, 1, 1], [], []>} : vector<8x32xbf16>, vector<32x64xbf16>, vector<8x64xf32> -> vector<8x64xf32>
    %c0_3 = arith.constant 0 : index
    %c0_4 = arith.constant 0 : index
    %3 = vector.load %arg2[%c0_3, %c0_4] : memref<1x64xf32, #tpu.memory_space<vmem>>, vector<1x64xf32>
    %4 = vector.broadcast %3 : vector<1x64xf32> to vector<8x64xf32>
    %5 = arith.addf %2, %4 : vector<8x64xf32>
    %c0_5 = arith.constant 0 : index
    %c0_6 = arith.constant 0 : index
    %6 = vector.load %arg3[%c0_5, %c0_6] : memref<8x64xf32, #tpu.memory_space<vmem>>, vector<8x64xf32>
    tpu.vector_store %arg3[%c0_5, %c0_6], %5 {strides = array<i32>} : memref<8x64xf32, #tpu.memory_space<vmem>>, vector<8x64xf32>,
    return
  }
}

module attributes {stable_mosaic.version = 11 : i64} {
  func.func @_decode_loop_kernel(%arg0: i32, %arg1: memref<8x32xf32, #tpu.memory_space<vmem>>, %arg2: memref<64x32xf32, #tpu.memory_space<vmem>>, %arg3: memref<64x32xbf16, #tpu.memory_space<vmem>>, %arg4: memref<4x8x8xbf16, #tpu.memory_space<vmem>>, %arg5: memref<4x8x8xbf16, #tpu.memory_space<vmem>>, %arg6: memref<1x32xf32, #tpu.memory_space<vmem>>, %arg7: memref<1x32xf32, #tpu.memory_space<vmem>>, %arg8: memref<4x32x8xbf16, #tpu.memory_space<vmem>>, %arg9: memref<4x1x8xf32, #tpu.memory_space<vmem>>, %arg10: memref<4x32x8xbf16, #tpu.memory_space<vmem>>, %arg11: memref<4x1x8xf32, #tpu.memory_space<vmem>>, %arg12: memref<4x32x8xbf16, #tpu.memory_space<vmem>>, %arg13: memref<4x1x8xf32, #tpu.memory_space<vmem>>, %arg14: memref<4x8x32xbf16, #tpu.memory_space<vmem>>, %arg15: memref<1x32xf32, #tpu.memory_space<vmem>>, %arg16: memref<1x32xf32, #tpu.memory_space<vmem>>, %arg17: memref<1x32xf32, #tpu.memory_space<vmem>>, %arg18: memref<4x32x8xbf16, #tpu.memory_space<vmem>>, %arg19: memref<4x1x8xf32, #tpu.memory_space<vmem>>, %arg20: memref<4x8x32xbf16, #tpu.memory_space<vmem>>, %arg21: memref<1x32xf32, #tpu.memory_space<vmem>>, %arg22: memref<1x32xf32, #tpu.memory_space<vmem>>, %arg23: memref<1x32xf32, #tpu.memory_space<vmem>>, %arg24: memref<32x64xbf16, #tpu.memory_space<vmem>>, %arg25: memref<1x64xf32, #tpu.memory_space<vmem>>, %arg26: memref<64x32xbf16, #tpu.memory_space<vmem>>, %arg27: memref<1x32xf32, #tpu.memory_space<vmem>>, %arg28: memref<1x32xf32, #tpu.memory_space<vmem>>, %arg29: memref<1x32xf32, #tpu.memory_space<vmem>>, %arg30: memref<8xi32, #tpu.memory_space<smem>>, %arg31: memref<4x8x8xf32, #tpu.memory_space<vmem>>, %arg32: memref<4x8x8xf32, #tpu.memory_space<vmem>>) attributes {dimension_semantics = [#tpu.dimension_semantics<arbitrary>], iteration_bounds = array<i64: 7>, scalar_prefetch = 0 : i64, scratch_operands = 2 : i64, tpu.core_type = #tpu.core_type<tc>, window_params = [{pipeline_mode = #tpu.pipeline_mode<synchronous>, transform_indices = @transform_0, window_bounds = array<i64: 8, 32>}, {pipeline_mode = #tpu.pipeline_mode<synchronous>, transform_indices = @transform_1, window_bounds = array<i64: 64, 32>}, {pipeline_mode = #tpu.pipeline_mode<synchronous>, transform_indices = @transform_2, window_bounds = array<i64: 64, 32>}, {pipeline_mode = #tpu.pipeline_mode<synchronous>, transform_indices = @transform_3, window_bounds = array<i64: 4, 8, 8>}, {pipeline_mode = #tpu.pipeline_mode<synchronous>, transform_indices = @transform_4, window_bounds = array<i64: 4, 8, 8>}, {pipeline_mode = #tpu.pipeline_mode<synchronous>, transform_indices = @transform_5, window_bounds = array<i64: 1, 32>}, {pipeline_mode = #tpu.pipeline_mode<synchronous>, transform_indices = @transform_6, window_bounds = array<i64: 1, 32>}, {pipeline_mode = #tpu.pipeline_mode<synchronous>, transform_indices = @transform_7, window_bounds = array<i64: 4, 32, 8>}, {pipeline_mode = #tpu.pipeline_mode<synchronous>, transform_indices = @transform_8, window_bounds = array<i64: 4, 1, 8>}, {pipeline_mode = #tpu.pipeline_mode<synchronous>, transform_indices = @transform_9, window_bounds = array<i64: 4, 32, 8>}, {pipeline_mode = #tpu.pipeline_mode<synchronous>, transform_indices = @transform_10, window_bounds = array<i64: 4, 1, 8>}, {pipeline_mode = #tpu.pipeline_mode<synchronous>, transform_indices = @transform_11, window_bounds = array<i64: 4, 32, 8>}, {pipeline_mode = #tpu.pipeline_mode<synchronous>, transform_indices = @transform_12, window_bounds = array<i64: 4, 1, 8>}, {pipeline_mode = #tpu.pipeline_mode<synchronous>, transform_indices = @transform_13, window_bounds = array<i64: 4, 8, 32>}, {pipeline_mode = #tpu.pipeline_mode<synchronous>, transform_indices = @transform_14, window_bounds = array<i64: 1, 32>}, {pipeline_mode = #tpu.pipeline_mode<synchronous>, transform_indices = @transform_15, window_bounds = array<i64: 1, 32>}, {pipeline_mode = #tpu.pipeline_mode<synchronous>, transform_indices = @transform_16, window_bounds = array<i64: 1, 32>}, {pipeline_mode = #tpu.pipeline_mode<synchronous>, transform_indices = @transform_17, window_bounds = array<i64: 4, 32, 8>}, {pipeline_mode = #tpu.pipeline_mode<synchronous>, transform_indices = @transform_18, window_bounds = array<i64: 4, 1, 8>}, {pipeline_mode = #tpu.pipeline_mode<synchronous>, transform_indices = @transform_19, window_bounds = array<i64: 4, 8, 32>}, {pipeline_mode = #tpu.pipeline_mode<synchronous>, transform_indices = @transform_20, window_bounds = array<i64: 1, 32>}, {pipeline_mode = #tpu.pipeline_mode<synchronous>, transform_indices = @transform_21, window_bounds = array<i64: 1, 32>}, {pipeline_mode = #tpu.pipeline_mode<synchronous>, transform_indices = @transform_22, window_bounds = array<i64: 1, 32>}, {pipeline_mode = #tpu.pipeline_mode<synchronous>, transform_indices = @transform_23, window_bounds = array<i64: 32, 64>}, {pipeline_mode = #tpu.pipeline_mode<synchronous>, transform_indices = @transform_24, window_bounds = array<i64: 1, 64>}, {pipeline_mode = #tpu.pipeline_mode<synchronous>, transform_indices = @transform_25, window_bounds = array<i64: 64, 32>}, {pipeline_mode = #tpu.pipeline_mode<synchronous>, transform_indices = @transform_26, window_bounds = array<i64: 1, 32>}, {pipeline_mode = #tpu.pipeline_mode<synchronous>, transform_indices = @transform_27, window_bounds = array<i64: 1, 32>}, {pipeline_mode = #tpu.pipeline_mode<synchronous>, transform_indices = @transform_28, window_bounds = array<i64: 1, 32>}, {transform_indices = @transform_29, window_bounds = array<i64: 8>}]} {
    %c0_i32 = arith.constant 0 : i32
    %0 = arith.cmpi eq, %arg0, %c0_i32 : i32
    %1 = arith.extui %0 : i1 to i32
    %c0_i32_0 = arith.constant 0 : i32
    %2 = arith.cmpi ne, %1, %c0_i32_0 : i32
    scf.if %2 {
      %c0_i32_134 = arith.constant 0 : i32
      %c0_135 = arith.constant 0 : index
      %268 = memref.load %arg30[%c0_135] : memref<8xi32, #tpu.memory_space<smem>>
      memref.store %c0_i32_134, %arg30[%c0_135] : memref<8xi32, #tpu.memory_space<smem>>
      %cst_136 = arith.constant 0.000000e+00 : f32
      %269 = vector.broadcast %cst_136 : f32 to vector<4x8x8xf32>
      %c0_137 = arith.constant 0 : index
      %c0_138 = arith.constant 0 : index
      %c0_139 = arith.constant 0 : index
      %270 = vector.load %arg31[%c0_137, %c0_138, %c0_139] : memref<4x8x8xf32, #tpu.memory_space<vmem>>, vector<4x8x8xf32>
      tpu.vector_store %arg31[%c0_137, %c0_138, %c0_139], %269 {strides = array<i32>} : memref<4x8x8xf32, #tpu.memory_space<vmem>>, vector<4x8x8xf32>,
      %cst_140 = arith.constant 0.000000e+00 : f32
      %271 = vector.broadcast %cst_140 : f32 to vector<4x8x8xf32>
      %c0_141 = arith.constant 0 : index
      %c0_142 = arith.constant 0 : index
      %c0_143 = arith.constant 0 : index
      %272 = vector.load %arg32[%c0_141, %c0_142, %c0_143] : memref<4x8x8xf32, #tpu.memory_space<vmem>>, vector<4x8x8xf32>
      tpu.vector_store %arg32[%c0_141, %c0_142, %c0_143], %271 {strides = array<i32>} : memref<4x8x8xf32, #tpu.memory_space<vmem>>, vector<4x8x8xf32>,
    } else {
    }
    %3 = arith.index_cast %arg0 : i32 to index
    %4 = memref.load %arg30[%3] : memref<8xi32, #tpu.memory_space<smem>>
    %5 = arith.index_cast %4 : i32 to index
    %c0 = arith.constant 0 : index
    %6 = vector.load %arg2[%5, %c0] : memref<64x32xf32, #tpu.memory_space<vmem>>, vector<1x32xf32>
    %7 = arith.index_cast %arg0 : i32 to index
    %c0_1 = arith.constant 0 : index
    %8 = vector.load %arg1[%7, %c0_1] : memref<8x32xf32, #tpu.memory_space<vmem>>, vector<1x32xf32>
    %9 = arith.addf %6, %8 : vector<1x32xf32>
    %c0_2 = arith.constant 0 : index
    %c0_3 = arith.constant 0 : index
    %10 = vector.load %arg6[%c0_2, %c0_3] : memref<1x32xf32, #tpu.memory_space<vmem>>, vector<1x32xf32>
    %c0_4 = arith.constant 0 : index
    %c0_5 = arith.constant 0 : index
    %11 = vector.load %arg7[%c0_4, %c0_5] : memref<1x32xf32, #tpu.memory_space<vmem>>, vector<1x32xf32>
    %cst = arith.constant dense<0.000000e+00> : vector<1xf32>
    %12 = vector.multi_reduction <add>, %9, %cst [1] : vector<1x32xf32> to vector<1xf32>
    %13 = vector.shape_cast %12 : vector<1xf32> to vector<1x1xf32>
    %cst_6 = arith.constant 3.200000e+01 : f32
    %14 = vector.broadcast %cst_6 : f32 to vector<1x1xf32>
    %15 = arith.divf %13, %14 : vector<1x1xf32>
    %16 = vector.broadcast %15 : vector<1x1xf32> to vector<1x32xf32>
    %17 = arith.subf %9, %16 : vector<1x32xf32>
    %18 = arith.mulf %17, %17 : vector<1x32xf32>
    %cst_7 = arith.constant dense<0.000000e+00> : vector<1xf32>
    %19 = vector.multi_reduction <add>, %18, %cst_7 [1] : vector<1x32xf32> to vector<1xf32>
    %20 = vector.shape_cast %19 : vector<1xf32> to vector<1x1xf32>
    %cst_8 = arith.constant 3.200000e+01 : f32
    %21 = vector.broadcast %cst_8 : f32 to vector<1x1xf32>
    %22 = arith.divf %20, %21 : vector<1x1xf32>
    %cst_9 = arith.constant 9.99999974E-6 : f32
    %23 = vector.broadcast %cst_9 : f32 to vector<1x1xf32>
    %24 = arith.addf %22, %23 : vector<1x1xf32>
    %25 = math.rsqrt %24 : vector<1x1xf32>
    %26 = vector.broadcast %25 : vector<1x1xf32> to vector<1x32xf32>
    %27 = arith.mulf %17, %26 : vector<1x32xf32>
    %28 = arith.mulf %27, %10 : vector<1x32xf32>
    %29 = arith.addf %28, %11 : vector<1x32xf32>
    %30 = arith.truncf %29 : vector<1x32xf32> to vector<1x32xbf16>
    %c0_10 = arith.constant 0 : index
    %c0_11 = arith.constant 0 : index
    %c0_12 = arith.constant 0 : index
    %31 = vector.load %arg8[%c0_10, %c0_11, %c0_12] : memref<4x32x8xbf16, #tpu.memory_space<vmem>>, vector<4x32x8xbf16>
    %c0_13 = arith.constant 0 : index
    %c0_14 = arith.constant 0 : index
    %c0_15 = arith.constant 0 : index
    %32 = vector.load %arg9[%c0_13, %c0_14, %c0_15] : memref<4x1x8xf32, #tpu.memory_space<vmem>>, vector<4x1x8xf32>
    %33 = vector.shape_cast %30 : vector<1x32xbf16> to vector<1x1x32xbf16>
    %34 = vector.shape_cast %33 : vector<1x1x32xbf16> to vector<1x1x32xbf16>
    %35 = vector.broadcast %34 : vector<1x1x32xbf16> to vector<4x1x32xbf16>
    "tpu.trace_start"() <{level = 10 : i32, message = "hrd,hdk->hrk"}> : () -> ()
    %cst_16 = arith.constant dense<0.000000e+00> : vector<4x1x8xf32>
    %36 = tpu.matmul %35, %31, %cst_16 {dimension_numbers = #tpu.dot_dimension_numbers<[2], [1], [1], [2], [0, 0, 0, 1, 1, 2], [0], [0]>} : vector<4x1x32xbf16>, vector<4x32x8xbf16>, vector<4x1x8xf32> -> vector<4x1x8xf32>
    "tpu.trace_stop"() : () -> ()
    %37 = arith.addf %36, %32 : vector<4x1x8xf32>
    %c0_17 = arith.constant 0 : index
    %c0_18 = arith.constant 0 : index
    %c0_19 = arith.constant 0 : index
    %38 = vector.load %arg10[%c0_17, %c0_18, %c0_19] : memref<4x32x8xbf16, #tpu.memory_space<vmem>>, vector<4x32x8xbf16>
    %c0_20 = arith.constant 0 : index
    %c0_21 = arith.constant 0 : index
    %c0_22 = arith.constant 0 : index
    %39 = vector.load %arg11[%c0_20, %c0_21, %c0_22] : memref<4x1x8xf32, #tpu.memory_space<vmem>>, vector<4x1x8xf32>
    %40 = vector.shape_cast %30 : vector<1x32xbf16> to vector<1x1x32xbf16>
    %41 = vector.shape_cast %40 : vector<1x1x32xbf16> to vector<1x1x32xbf16>
    %42 = vector.broadcast %41 : vector<1x1x32xbf16> to vector<4x1x32xbf16>
    "tpu.trace_start"() <{level = 10 : i32, message = "hrd,hdk->hrk"}> : () -> ()
    %cst_23 = arith.constant dense<0.000000e+00> : vector<4x1x8xf32>
    %43 = tpu.matmul %42, %38, %cst_23 {dimension_numbers = #tpu.dot_dimension_numbers<[2], [1], [1], [2], [0, 0, 0, 1, 1, 2], [0], [0]>} : vector<4x1x32xbf16>, vector<4x32x8xbf16>, vector<4x1x8xf32> -> vector<4x1x8xf32>
    "tpu.trace_stop"() : () -> ()
    %44 = arith.addf %43, %39 : vector<4x1x8xf32>
    %c0_24 = arith.constant 0 : index
    %c0_25 = arith.constant 0 : index
    %c0_26 = arith.constant 0 : index
    %45 = vector.load %arg12[%c0_24, %c0_25, %c0_26] : memref<4x32x8xbf16, #tpu.memory_space<vmem>>, vector<4x32x8xbf16>
    %c0_27 = arith.constant 0 : index
    %c0_28 = arith.constant 0 : index
    %c0_29 = arith.constant 0 : index
    %46 = vector.load %arg13[%c0_27, %c0_28, %c0_29] : memref<4x1x8xf32, #tpu.memory_space<vmem>>, vector<4x1x8xf32>
    %47 = vector.shape_cast %30 : vector<1x32xbf16> to vector<1x1x32xbf16>
    %48 = vector.shape_cast %47 : vector<1x1x32xbf16> to vector<1x1x32xbf16>
    %49 = vector.broadcast %48 : vector<1x1x32xbf16> to vector<4x1x32xbf16>
    "tpu.trace_start"() <{level = 10 : i32, message = "hrd,hdk->hrk"}> : () -> ()
    %cst_30 = arith.constant dense<0.000000e+00> : vector<4x1x8xf32>
    %50 = tpu.matmul %49, %45, %cst_30 {dimension_numbers = #tpu.dot_dimension_numbers<[2], [1], [1], [2], [0, 0, 0, 1, 1, 2], [0], [0]>} : vector<4x1x32xbf16>, vector<4x32x8xbf16>, vector<4x1x8xf32> -> vector<4x1x8xf32>
    "tpu.trace_stop"() : () -> ()
    %51 = arith.addf %50, %46 : vector<4x1x8xf32>
    %52 = vector.extract_strided_slice %44 {offsets = [0, 0, 0], sizes = [1, 1, 8], strides = [1, 1, 1]} : vector<4x1x8xf32> to vector<1x1x8xf32>
    %53 = vector.shape_cast %52 : vector<1x1x8xf32> to vector<1x8xf32>
    %c0_31 = arith.constant 0 : index
    %54 = arith.index_cast %arg0 : i32 to index
    %c0_32 = arith.constant 0 : index
    %55 = vector.load %arg31[%c0_31, %54, %c0_32] : memref<4x8x8xf32, #tpu.memory_space<vmem>>, vector<1x1x8xf32>
    %56 = vector.shape_cast %55 : vector<1x1x8xf32> to vector<1x8xf32>
    %57 = vector.shape_cast %53 : vector<1x8xf32> to vector<1x1x8xf32>
    tpu.vector_store %arg31[%c0_31, %54, %c0_32], %57 {strides = array<i32>} : memref<4x8x8xf32, #tpu.memory_space<vmem>>, vector<1x1x8xf32>,
    %58 = vector.extract_strided_slice %51 {offsets = [0, 0, 0], sizes = [1, 1, 8], strides = [1, 1, 1]} : vector<4x1x8xf32> to vector<1x1x8xf32>
    %59 = vector.shape_cast %58 : vector<1x1x8xf32> to vector<1x8xf32>
    %c0_33 = arith.constant 0 : index
    %60 = arith.index_cast %arg0 : i32 to index
    %c0_34 = arith.constant 0 : index
    %61 = vector.load %arg32[%c0_33, %60, %c0_34] : memref<4x8x8xf32, #tpu.memory_space<vmem>>, vector<1x1x8xf32>
    %62 = vector.shape_cast %61 : vector<1x1x8xf32> to vector<1x8xf32>
    %63 = vector.shape_cast %59 : vector<1x8xf32> to vector<1x1x8xf32>
    tpu.vector_store %arg32[%c0_33, %60, %c0_34], %63 {strides = array<i32>} : memref<4x8x8xf32, #tpu.memory_space<vmem>>, vector<1x1x8xf32>,
    %64 = vector.extract_strided_slice %44 {offsets = [1, 0, 0], sizes = [1, 1, 8], strides = [1, 1, 1]} : vector<4x1x8xf32> to vector<1x1x8xf32>
    %65 = vector.shape_cast %64 : vector<1x1x8xf32> to vector<1x8xf32>
    %c1 = arith.constant 1 : index
    %66 = arith.index_cast %arg0 : i32 to index
    %c0_35 = arith.constant 0 : index
    %67 = vector.load %arg31[%c1, %66, %c0_35] : memref<4x8x8xf32, #tpu.memory_space<vmem>>, vector<1x1x8xf32>
    %68 = vector.shape_cast %67 : vector<1x1x8xf32> to vector<1x8xf32>
    %69 = vector.shape_cast %65 : vector<1x8xf32> to vector<1x1x8xf32>
    tpu.vector_store %arg31[%c1, %66, %c0_35], %69 {strides = array<i32>} : memref<4x8x8xf32, #tpu.memory_space<vmem>>, vector<1x1x8xf32>,
    %70 = vector.extract_strided_slice %51 {offsets = [1, 0, 0], sizes = [1, 1, 8], strides = [1, 1, 1]} : vector<4x1x8xf32> to vector<1x1x8xf32>
    %71 = vector.shape_cast %70 : vector<1x1x8xf32> to vector<1x8xf32>
    %c1_36 = arith.constant 1 : index
    %72 = arith.index_cast %arg0 : i32 to index
    %c0_37 = arith.constant 0 : index
    %73 = vector.load %arg32[%c1_36, %72, %c0_37] : memref<4x8x8xf32, #tpu.memory_space<vmem>>, vector<1x1x8xf32>
    %74 = vector.shape_cast %73 : vector<1x1x8xf32> to vector<1x8xf32>
    %75 = vector.shape_cast %71 : vector<1x8xf32> to vector<1x1x8xf32>
    tpu.vector_store %arg32[%c1_36, %72, %c0_37], %75 {strides = array<i32>} : memref<4x8x8xf32, #tpu.memory_space<vmem>>, vector<1x1x8xf32>,
    %76 = vector.extract_strided_slice %44 {offsets = [2, 0, 0], sizes = [1, 1, 8], strides = [1, 1, 1]} : vector<4x1x8xf32> to vector<1x1x8xf32>
    %77 = vector.shape_cast %76 : vector<1x1x8xf32> to vector<1x8xf32>
    %c2 = arith.constant 2 : index
    %78 = arith.index_cast %arg0 : i32 to index
    %c0_38 = arith.constant 0 : index
    %79 = vector.load %arg31[%c2, %78, %c0_38] : memref<4x8x8xf32, #tpu.memory_space<vmem>>, vector<1x1x8xf32>
    %80 = vector.shape_cast %79 : vector<1x1x8xf32> to vector<1x8xf32>
    %81 = vector.shape_cast %77 : vector<1x8xf32> to vector<1x1x8xf32>
    tpu.vector_store %arg31[%c2, %78, %c0_38], %81 {strides = array<i32>} : memref<4x8x8xf32, #tpu.memory_space<vmem>>, vector<1x1x8xf32>,
    %82 = vector.extract_strided_slice %51 {offsets = [2, 0, 0], sizes = [1, 1, 8], strides = [1, 1, 1]} : vector<4x1x8xf32> to vector<1x1x8xf32>
    %83 = vector.shape_cast %82 : vector<1x1x8xf32> to vector<1x8xf32>
    %c2_39 = arith.constant 2 : index
    %84 = arith.index_cast %arg0 : i32 to index
    %c0_40 = arith.constant 0 : index
    %85 = vector.load %arg32[%c2_39, %84, %c0_40] : memref<4x8x8xf32, #tpu.memory_space<vmem>>, vector<1x1x8xf32>
    %86 = vector.shape_cast %85 : vector<1x1x8xf32> to vector<1x8xf32>
    %87 = vector.shape_cast %83 : vector<1x8xf32> to vector<1x1x8xf32>
    tpu.vector_store %arg32[%c2_39, %84, %c0_40], %87 {strides = array<i32>} : memref<4x8x8xf32, #tpu.memory_space<vmem>>, vector<1x1x8xf32>,
    %88 = vector.extract_strided_slice %44 {offsets = [3, 0, 0], sizes = [1, 1, 8], strides = [1, 1, 1]} : vector<4x1x8xf32> to vector<1x1x8xf32>
    %89 = vector.shape_cast %88 : vector<1x1x8xf32> to vector<1x8xf32>
    %c3 = arith.constant 3 : index
    %90 = arith.index_cast %arg0 : i32 to index
    %c0_41 = arith.constant 0 : index
    %91 = vector.load %arg31[%c3, %90, %c0_41] : memref<4x8x8xf32, #tpu.memory_space<vmem>>, vector<1x1x8xf32>
    %92 = vector.shape_cast %91 : vector<1x1x8xf32> to vector<1x8xf32>
    %93 = vector.shape_cast %89 : vector<1x8xf32> to vector<1x1x8xf32>
    tpu.vector_store %arg31[%c3, %90, %c0_41], %93 {strides = array<i32>} : memref<4x8x8xf32, #tpu.memory_space<vmem>>, vector<1x1x8xf32>,
    %94 = vector.extract_strided_slice %51 {offsets = [3, 0, 0], sizes = [1, 1, 8], strides = [1, 1, 1]} : vector<4x1x8xf32> to vector<1x1x8xf32>
    %95 = vector.shape_cast %94 : vector<1x1x8xf32> to vector<1x8xf32>
    %c3_42 = arith.constant 3 : index
    %96 = arith.index_cast %arg0 : i32 to index
    %c0_43 = arith.constant 0 : index
    %97 = vector.load %arg32[%c3_42, %96, %c0_43] : memref<4x8x8xf32, #tpu.memory_space<vmem>>, vector<1x1x8xf32>
    %98 = vector.shape_cast %97 : vector<1x1x8xf32> to vector<1x8xf32>
    %99 = vector.shape_cast %95 : vector<1x8xf32> to vector<1x1x8xf32>
    tpu.vector_store %arg32[%c3_42, %96, %c0_43], %99 {strides = array<i32>} : memref<4x8x8xf32, #tpu.memory_space<vmem>>, vector<1x1x8xf32>,
    %100 = tpu.iota {dimensions = array<i32: 2>} : vector<1x1x8xi32>
    %c0_44 = arith.constant 0 : index
    %c0_45 = arith.constant 0 : index
    %c0_46 = arith.constant 0 : index
    %101 = vector.load %arg31[%c0_44, %c0_45, %c0_46] : memref<4x8x8xf32, #tpu.memory_space<vmem>>, vector<4x8x8xf32>
    %c0_47 = arith.constant 0 : index
    %c0_48 = arith.constant 0 : index
    %c0_49 = arith.constant 0 : index
    %102 = vector.load %arg32[%c0_47, %c0_48, %c0_49] : memref<4x8x8xf32, #tpu.memory_space<vmem>>, vector<4x8x8xf32>
    %103 = vector.broadcast %arg0 : i32 to vector<1x1x8xi32>
    %104 = arith.cmpi sle, %100, %103 : vector<1x1x8xi32>
    %105 = arith.truncf %37 : vector<4x1x8xf32> to vector<4x1x8xbf16>
    %106 = arith.truncf %101 : vector<4x8x8xf32> to vector<4x8x8xbf16>
    "tpu.trace_start"() <{level = 10 : i32, message = "hqd,hkd->hqk"}> : () -> ()
    %cst_50 = arith.constant dense<0.000000e+00> : vector<4x1x8xf32>
    %107 = tpu.matmul %105, %106, %cst_50 {dimension_numbers = #tpu.dot_dimension_numbers<[2], [2], [1], [1], [0, 0, 0, 1, 1, 1], [0], [0]>} : vector<4x1x8xbf16>, vector<4x8x8xbf16>, vector<4x1x8xf32> -> vector<4x1x8xf32>
    "tpu.trace_stop"() : () -> ()
    %cst_51 = arith.constant 0.353553385 : f32
    %108 = vector.broadcast %cst_51 : f32 to vector<4x1x8xf32>
    %109 = arith.mulf %107, %108 : vector<4x1x8xf32>
    %cst_52 = arith.constant -1.000000e+30 : f32
    %110 = vector.shape_cast %104 : vector<1x1x8xi1> to vector<1x1x8xi1>
    %111 = vector.broadcast %110 : vector<1x1x8xi1> to vector<4x1x8xi1>
    %112 = vector.broadcast %cst_52 : f32 to vector<4x1x8xf32>
    %113 = arith.select %111, %109, %112 : vector<4x1x8xi1>, vector<4x1x8xf32>
    %cst_53 = arith.constant dense<0xFF800000> : vector<4x1xf32>
    %114 = vector.multi_reduction <maximumf>, %113, %cst_53 [2] : vector<4x1x8xf32> to vector<4x1xf32>
    %115 = vector.shape_cast %114 : vector<4x1xf32> to vector<4x1x1xf32>
    %116 = vector.broadcast %115 : vector<4x1x1xf32> to vector<4x1x8xf32>
    %117 = arith.subf %113, %116 : vector<4x1x8xf32>
    %118 = math.exp %117 : vector<4x1x8xf32>
    %cst_54 = arith.constant dense<0.000000e+00> : vector<4x1xf32>
    %119 = vector.multi_reduction <add>, %118, %cst_54 [2] : vector<4x1x8xf32> to vector<4x1xf32>
    %120 = vector.shape_cast %119 : vector<4x1xf32> to vector<4x1x1xf32>
    %121 = tpu.reciprocal %120 {approx = true} : vector<4x1x1xf32> -> vector<4x1x1xf32>
    %122 = vector.broadcast %121 : vector<4x1x1xf32> to vector<4x1x8xf32>
    %123 = arith.mulf %118, %122 : vector<4x1x8xf32>
    %124 = arith.truncf %123 : vector<4x1x8xf32> to vector<4x1x8xbf16>
    %125 = arith.truncf %102 : vector<4x8x8xf32> to vector<4x8x8xbf16>
    "tpu.trace_start"() <{level = 10 : i32, message = "hqk,hkd->hqd"}> : () -> ()
    %cst_55 = arith.constant dense<0.000000e+00> : vector<4x1x8xf32>
    %126 = tpu.matmul %124, %125, %cst_55 {dimension_numbers = #tpu.dot_dimension_numbers<[2], [1], [1], [2], [0, 0, 0, 1, 1, 2], [0], [0]>} : vector<4x1x8xbf16>, vector<4x8x8xbf16>, vector<4x1x8xf32> -> vector<4x1x8xf32>
    "tpu.trace_stop"() : () -> ()
    %c0_56 = arith.constant 0 : index
    %c0_57 = arith.constant 0 : index
    %c0_58 = arith.constant 0 : index
    %127 = vector.load %arg14[%c0_56, %c0_57, %c0_58] : memref<4x8x32xbf16, #tpu.memory_space<vmem>>, vector<4x8x32xbf16>
    %c0_59 = arith.constant 0 : index
    %c0_60 = arith.constant 0 : index
    %128 = vector.load %arg15[%c0_59, %c0_60] : memref<1x32xf32, #tpu.memory_space<vmem>>, vector<1x32xf32>
    %129 = arith.truncf %126 : vector<4x1x8xf32> to vector<4x1x8xbf16>
    "tpu.trace_start"() <{level = 10 : i32, message = "hrd,hdk->hrk"}> : () -> ()
    %cst_61 = arith.constant dense<0.000000e+00> : vector<4x1x32xf32>
    %130 = tpu.matmul %129, %127, %cst_61 {dimension_numbers = #tpu.dot_dimension_numbers<[2], [1], [1], [2], [0, 0, 0, 1, 1, 2], [0], [0]>} : vector<4x1x8xbf16>, vector<4x8x32xbf16>, vector<4x1x32xf32> -> vector<4x1x32xf32>
    "tpu.trace_stop"() : () -> ()
    %cst_62 = arith.constant dense<0.000000e+00> : vector<1x32xf32>
    %131 = vector.multi_reduction <add>, %130, %cst_62 [0] : vector<4x1x32xf32> to vector<1x32xf32>
    %132 = arith.addf %131, %128 : vector<1x32xf32>
    %133 = arith.addf %9, %132 : vector<1x32xf32>
    %c0_63 = arith.constant 0 : index
    %c0_64 = arith.constant 0 : index
    %134 = vector.load %arg16[%c0_63, %c0_64] : memref<1x32xf32, #tpu.memory_space<vmem>>, vector<1x32xf32>
    %c0_65 = arith.constant 0 : index
    %c0_66 = arith.constant 0 : index
    %135 = vector.load %arg17[%c0_65, %c0_66] : memref<1x32xf32, #tpu.memory_space<vmem>>, vector<1x32xf32>
    %cst_67 = arith.constant dense<0.000000e+00> : vector<1xf32>
    %136 = vector.multi_reduction <add>, %133, %cst_67 [1] : vector<1x32xf32> to vector<1xf32>
    %137 = vector.shape_cast %136 : vector<1xf32> to vector<1x1xf32>
    %cst_68 = arith.constant 3.200000e+01 : f32
    %138 = vector.broadcast %cst_68 : f32 to vector<1x1xf32>
    %139 = arith.divf %137, %138 : vector<1x1xf32>
    %140 = vector.broadcast %139 : vector<1x1xf32> to vector<1x32xf32>
    %141 = arith.subf %133, %140 : vector<1x32xf32>
    %142 = arith.mulf %141, %141 : vector<1x32xf32>
    %cst_69 = arith.constant dense<0.000000e+00> : vector<1xf32>
    %143 = vector.multi_reduction <add>, %142, %cst_69 [1] : vector<1x32xf32> to vector<1xf32>
    %144 = vector.shape_cast %143 : vector<1xf32> to vector<1x1xf32>
    %cst_70 = arith.constant 3.200000e+01 : f32
    %145 = vector.broadcast %cst_70 : f32 to vector<1x1xf32>
    %146 = arith.divf %144, %145 : vector<1x1xf32>
    %cst_71 = arith.constant 9.99999974E-6 : f32
    %147 = vector.broadcast %cst_71 : f32 to vector<1x1xf32>
    %148 = arith.addf %146, %147 : vector<1x1xf32>
    %149 = math.rsqrt %148 : vector<1x1xf32>
    %150 = vector.broadcast %149 : vector<1x1xf32> to vector<1x32xf32>
    %151 = arith.mulf %141, %150 : vector<1x32xf32>
    %152 = arith.mulf %151, %134 : vector<1x32xf32>
    %153 = arith.addf %152, %135 : vector<1x32xf32>
    %154 = arith.truncf %153 : vector<1x32xf32> to vector<1x32xbf16>
    %c0_72 = arith.constant 0 : index
    %c0_73 = arith.constant 0 : index
    %c0_74 = arith.constant 0 : index
    %155 = vector.load %arg18[%c0_72, %c0_73, %c0_74] : memref<4x32x8xbf16, #tpu.memory_space<vmem>>, vector<4x32x8xbf16>
    %c0_75 = arith.constant 0 : index
    %c0_76 = arith.constant 0 : index
    %c0_77 = arith.constant 0 : index
    %156 = vector.load %arg19[%c0_75, %c0_76, %c0_77] : memref<4x1x8xf32, #tpu.memory_space<vmem>>, vector<4x1x8xf32>
    %157 = vector.shape_cast %154 : vector<1x32xbf16> to vector<1x1x32xbf16>
    %158 = vector.shape_cast %157 : vector<1x1x32xbf16> to vector<1x1x32xbf16>
    %159 = vector.broadcast %158 : vector<1x1x32xbf16> to vector<4x1x32xbf16>
    "tpu.trace_start"() <{level = 10 : i32, message = "hrd,hdk->hrk"}> : () -> ()
    %cst_78 = arith.constant dense<0.000000e+00> : vector<4x1x8xf32>
    %160 = tpu.matmul %159, %155, %cst_78 {dimension_numbers = #tpu.dot_dimension_numbers<[2], [1], [1], [2], [0, 0, 0, 1, 1, 2], [0], [0]>} : vector<4x1x32xbf16>, vector<4x32x8xbf16>, vector<4x1x8xf32> -> vector<4x1x8xf32>
    "tpu.trace_stop"() : () -> ()
    %161 = arith.addf %160, %156 : vector<4x1x8xf32>
    %c0_79 = arith.constant 0 : index
    %c0_80 = arith.constant 0 : index
    %c0_81 = arith.constant 0 : index
    %162 = vector.load %arg4[%c0_79, %c0_80, %c0_81] : memref<4x8x8xbf16, #tpu.memory_space<vmem>>, vector<4x8x8xbf16>
    %c0_82 = arith.constant 0 : index
    %c0_83 = arith.constant 0 : index
    %c0_84 = arith.constant 0 : index
    %163 = vector.load %arg5[%c0_82, %c0_83, %c0_84] : memref<4x8x8xbf16, #tpu.memory_space<vmem>>, vector<4x8x8xbf16>
    %164 = arith.truncf %161 : vector<4x1x8xf32> to vector<4x1x8xbf16>
    "tpu.trace_start"() <{level = 10 : i32, message = "hqd,hkd->hqk"}> : () -> ()
    %cst_85 = arith.constant dense<0.000000e+00> : vector<4x1x8xf32>
    %165 = tpu.matmul %164, %162, %cst_85 {dimension_numbers = #tpu.dot_dimension_numbers<[2], [2], [1], [1], [0, 0, 0, 1, 1, 1], [0], [0]>} : vector<4x1x8xbf16>, vector<4x8x8xbf16>, vector<4x1x8xf32> -> vector<4x1x8xf32>
    "tpu.trace_stop"() : () -> ()
    %cst_86 = arith.constant 0.353553385 : f32
    %166 = vector.broadcast %cst_86 : f32 to vector<4x1x8xf32>
    %167 = arith.mulf %165, %166 : vector<4x1x8xf32>
    %cst_87 = arith.constant dense<0xFF800000> : vector<4x1xf32>
    %168 = vector.multi_reduction <maximumf>, %167, %cst_87 [2] : vector<4x1x8xf32> to vector<4x1xf32>
    %169 = vector.shape_cast %168 : vector<4x1xf32> to vector<4x1x1xf32>
    %170 = vector.broadcast %169 : vector<4x1x1xf32> to vector<4x1x8xf32>
    %171 = arith.subf %167, %170 : vector<4x1x8xf32>
    %172 = math.exp %171 : vector<4x1x8xf32>
    %cst_88 = arith.constant dense<0.000000e+00> : vector<4x1xf32>
    %173 = vector.multi_reduction <add>, %172, %cst_88 [2] : vector<4x1x8xf32> to vector<4x1xf32>
    %174 = vector.shape_cast %173 : vector<4x1xf32> to vector<4x1x1xf32>
    %175 = tpu.reciprocal %174 {approx = true} : vector<4x1x1xf32> -> vector<4x1x1xf32>
    %176 = vector.broadcast %175 : vector<4x1x1xf32> to vector<4x1x8xf32>
    %177 = arith.mulf %172, %176 : vector<4x1x8xf32>
    %178 = arith.truncf %177 : vector<4x1x8xf32> to vector<4x1x8xbf16>
    "tpu.trace_start"() <{level = 10 : i32, message = "hqk,hkd->hqd"}> : () -> ()
    %cst_89 = arith.constant dense<0.000000e+00> : vector<4x1x8xf32>
    %179 = tpu.matmul %178, %163, %cst_89 {dimension_numbers = #tpu.dot_dimension_numbers<[2], [1], [1], [2], [0, 0, 0, 1, 1, 2], [0], [0]>} : vector<4x1x8xbf16>, vector<4x8x8xbf16>, vector<4x1x8xf32> -> vector<4x1x8xf32>
    "tpu.trace_stop"() : () -> ()
    %c0_90 = arith.constant 0 : index
    %c0_91 = arith.constant 0 : index
    %c0_92 = arith.constant 0 : index
    %180 = vector.load %arg20[%c0_90, %c0_91, %c0_92] : memref<4x8x32xbf16, #tpu.memory_space<vmem>>, vector<4x8x32xbf16>
    %c0_93 = arith.constant 0 : index
    %c0_94 = arith.constant 0 : index
    %181 = vector.load %arg21[%c0_93, %c0_94] : memref<1x32xf32, #tpu.memory_space<vmem>>, vector<1x32xf32>
    %182 = arith.truncf %179 : vector<4x1x8xf32> to vector<4x1x8xbf16>
    "tpu.trace_start"() <{level = 10 : i32, message = "hrd,hdk->hrk"}> : () -> ()
    %cst_95 = arith.constant dense<0.000000e+00> : vector<4x1x32xf32>
    %183 = tpu.matmul %182, %180, %cst_95 {dimension_numbers = #tpu.dot_dimension_numbers<[2], [1], [1], [2], [0, 0, 0, 1, 1, 2], [0], [0]>} : vector<4x1x8xbf16>, vector<4x8x32xbf16>, vector<4x1x32xf32> -> vector<4x1x32xf32>
    "tpu.trace_stop"() : () -> ()
    %cst_96 = arith.constant dense<0.000000e+00> : vector<1x32xf32>
    %184 = vector.multi_reduction <add>, %183, %cst_96 [0] : vector<4x1x32xf32> to vector<1x32xf32>
    %185 = arith.addf %184, %181 : vector<1x32xf32>
    %186 = arith.addf %133, %185 : vector<1x32xf32>
    %c0_97 = arith.constant 0 : index
    %c0_98 = arith.constant 0 : index
    %187 = vector.load %arg22[%c0_97, %c0_98] : memref<1x32xf32, #tpu.memory_space<vmem>>, vector<1x32xf32>
    %c0_99 = arith.constant 0 : index
    %c0_100 = arith.constant 0 : index
    %188 = vector.load %arg23[%c0_99, %c0_100] : memref<1x32xf32, #tpu.memory_space<vmem>>, vector<1x32xf32>
    %cst_101 = arith.constant dense<0.000000e+00> : vector<1xf32>
    %189 = vector.multi_reduction <add>, %186, %cst_101 [1] : vector<1x32xf32> to vector<1xf32>
    %190 = vector.shape_cast %189 : vector<1xf32> to vector<1x1xf32>
    %cst_102 = arith.constant 3.200000e+01 : f32
    %191 = vector.broadcast %cst_102 : f32 to vector<1x1xf32>
    %192 = arith.divf %190, %191 : vector<1x1xf32>
    %193 = vector.broadcast %192 : vector<1x1xf32> to vector<1x32xf32>
    %194 = arith.subf %186, %193 : vector<1x32xf32>
    %195 = arith.mulf %194, %194 : vector<1x32xf32>
    %cst_103 = arith.constant dense<0.000000e+00> : vector<1xf32>
    %196 = vector.multi_reduction <add>, %195, %cst_103 [1] : vector<1x32xf32> to vector<1xf32>
    %197 = vector.shape_cast %196 : vector<1xf32> to vector<1x1xf32>
    %cst_104 = arith.constant 3.200000e+01 : f32
    %198 = vector.broadcast %cst_104 : f32 to vector<1x1xf32>
    %199 = arith.divf %197, %198 : vector<1x1xf32>
    %cst_105 = arith.constant 9.99999974E-6 : f32
    %200 = vector.broadcast %cst_105 : f32 to vector<1x1xf32>
    %201 = arith.addf %199, %200 : vector<1x1xf32>
    %202 = math.rsqrt %201 : vector<1x1xf32>
    %203 = vector.broadcast %202 : vector<1x1xf32> to vector<1x32xf32>
    %204 = arith.mulf %194, %203 : vector<1x32xf32>
    %205 = arith.mulf %204, %187 : vector<1x32xf32>
    %206 = arith.addf %205, %188 : vector<1x32xf32>
    %207 = arith.truncf %206 : vector<1x32xf32> to vector<1x32xbf16>
    %c0_106 = arith.constant 0 : index
    %c0_107 = arith.constant 0 : index
    %208 = vector.load %arg24[%c0_106, %c0_107] : memref<32x64xbf16, #tpu.memory_space<vmem>>, vector<32x64xbf16>
    %cst_108 = arith.constant dense<0.000000e+00> : vector<1x64xf32>
    %209 = tpu.matmul %207, %208, %cst_108 {dimension_numbers = #tpu.dot_dimension_numbers<[1], [0], [0], [1], [0, 0, 1, 1], [], []>} : vector<1x32xbf16>, vector<32x64xbf16>, vector<1x64xf32> -> vector<1x64xf32>
    %c0_109 = arith.constant 0 : index
    %c0_110 = arith.constant 0 : index
    %210 = vector.load %arg25[%c0_109, %c0_110] : memref<1x64xf32, #tpu.memory_space<vmem>>, vector<1x64xf32>
    %211 = arith.addf %209, %210 : vector<1x64xf32>
    %212 = arith.mulf %211, %211 : vector<1x64xf32>
    %213 = arith.mulf %211, %212 : vector<1x64xf32>
    %cst_111 = arith.constant 4.471500e-02 : f32
    %214 = vector.broadcast %cst_111 : f32 to vector<1x64xf32>
    %215 = arith.mulf %214, %213 : vector<1x64xf32>
    %216 = arith.addf %211, %215 : vector<1x64xf32>
    %cst_112 = arith.constant 0.797884583 : f32
    %217 = vector.broadcast %cst_112 : f32 to vector<1x64xf32>
    %218 = arith.mulf %217, %216 : vector<1x64xf32>
    %219 = math.tanh %218 : vector<1x64xf32>
    %cst_113 = arith.constant 1.000000e+00 : f32
    %220 = vector.broadcast %cst_113 : f32 to vector<1x64xf32>
    %221 = arith.addf %220, %219 : vector<1x64xf32>
    %cst_114 = arith.constant 5.000000e-01 : f32
    %222 = vector.broadcast %cst_114 : f32 to vector<1x64xf32>
    %223 = arith.mulf %222, %221 : vector<1x64xf32>
    %224 = arith.mulf %211, %223 : vector<1x64xf32>
    %225 = arith.truncf %224 : vector<1x64xf32> to vector<1x64xbf16>
    %c0_115 = arith.constant 0 : index
    %c0_116 = arith.constant 0 : index
    %226 = vector.load %arg26[%c0_115, %c0_116] : memref<64x32xbf16, #tpu.memory_space<vmem>>, vector<64x32xbf16>
    %cst_117 = arith.constant dense<0.000000e+00> : vector<1x32xf32>
    %227 = tpu.matmul %225, %226, %cst_117 {dimension_numbers = #tpu.dot_dimension_numbers<[1], [0], [0], [1], [0, 0, 1, 1], [], []>} : vector<1x64xbf16>, vector<64x32xbf16>, vector<1x32xf32> -> vector<1x32xf32>
    %c0_118 = arith.constant 0 : index
    %c0_119 = arith.constant 0 : index
    %228 = vector.load %arg27[%c0_118, %c0_119] : memref<1x32xf32, #tpu.memory_space<vmem>>, vector<1x32xf32>
    %229 = arith.addf %227, %228 : vector<1x32xf32>
    %230 = arith.addf %186, %229 : vector<1x32xf32>
    %c0_120 = arith.constant 0 : index
    %c0_121 = arith.constant 0 : index
    %231 = vector.load %arg28[%c0_120, %c0_121] : memref<1x32xf32, #tpu.memory_space<vmem>>, vector<1x32xf32>
    %c0_122 = arith.constant 0 : index
    %c0_123 = arith.constant 0 : index
    %232 = vector.load %arg29[%c0_122, %c0_123] : memref<1x32xf32, #tpu.memory_space<vmem>>, vector<1x32xf32>
    %cst_124 = arith.constant dense<0.000000e+00> : vector<1xf32>
    %233 = vector.multi_reduction <add>, %230, %cst_124 [1] : vector<1x32xf32> to vector<1xf32>
    %234 = vector.shape_cast %233 : vector<1xf32> to vector<1x1xf32>
    %cst_125 = arith.constant 3.200000e+01 : f32
    %235 = vector.broadcast %cst_125 : f32 to vector<1x1xf32>
    %236 = arith.divf %234, %235 : vector<1x1xf32>
    %237 = vector.broadcast %236 : vector<1x1xf32> to vector<1x32xf32>
    %238 = arith.subf %230, %237 : vector<1x32xf32>
    %239 = arith.mulf %238, %238 : vector<1x32xf32>
    %cst_126 = arith.constant dense<0.000000e+00> : vector<1xf32>
    %240 = vector.multi_reduction <add>, %239, %cst_126 [1] : vector<1x32xf32> to vector<1xf32>
    %241 = vector.shape_cast %240 : vector<1xf32> to vector<1x1xf32>
    %cst_127 = arith.constant 3.200000e+01 : f32
    %242 = vector.broadcast %cst_127 : f32 to vector<1x1xf32>
    %243 = arith.divf %241, %242 : vector<1x1xf32>
    %cst_128 = arith.constant 9.99999974E-6 : f32
    %244 = vector.broadcast %cst_128 : f32 to vector<1x1xf32>
    %245 = arith.addf %243, %244 : vector<1x1xf32>
    %246 = math.rsqrt %245 : vector<1x1xf32>
    %247 = vector.broadcast %246 : vector<1x1xf32> to vector<1x32xf32>
    %248 = arith.mulf %238, %247 : vector<1x32xf32>
    %249 = arith.mulf %248, %231 : vector<1x32xf32>
    %250 = arith.addf %249, %232 : vector<1x32xf32>
    %251 = arith.truncf %250 : vector<1x32xf32> to vector<1x32xbf16>
    %c0_129 = arith.constant 0 : index
    %c0_130 = arith.constant 0 : index
    %252 = vector.load %arg3[%c0_129, %c0_130] : memref<64x32xbf16, #tpu.memory_space<vmem>>, vector<64x32xbf16>
    %cst_131 = arith.constant dense<0.000000e+00> : vector<1x64xf32>
    %253 = tpu.matmul %251, %252, %cst_131 {dimension_numbers = #tpu.dot_dimension_numbers<[1], [1], [0], [0], [0, 0, 1, 0], [], []>} : vector<1x32xbf16>, vector<64x32xbf16>, vector<1x64xf32> -> vector<1x64xf32>
    %254 = tpu.iota {dimensions = array<i32: 1>} : vector<1x64xi32>
    %cst_132 = arith.constant dense<0xFF800000> : vector<1xf32>
    %255 = vector.multi_reduction <maximumf>, %253, %cst_132 [1] : vector<1x64xf32> to vector<1xf32>
    %256 = vector.shape_cast %255 : vector<1xf32> to vector<1x1xf32>
    %257 = vector.broadcast %256 : vector<1x1xf32> to vector<1x64xf32>
    %258 = arith.cmpf oeq, %253, %257 : vector<1x64xf32>
    %c64_i32 = arith.constant 64 : i32
    %259 = vector.broadcast %c64_i32 : i32 to vector<1x64xi32>
    %260 = arith.select %258, %254, %259 : vector<1x64xi1>, vector<1x64xi32>
    %261 = vector.shape_cast %260 : vector<1x64xi32> to vector<1x1x64xi32>
    %cst_133 = arith.constant dense<2147483647> : vector<1xi32>
    %262 = vector.multi_reduction <minsi>, %261, %cst_133 [1, 2] : vector<1x1x64xi32> to vector<1xi32>
    %263 = vector.shape_cast %262 : vector<1xi32> to vector<1x1x1xi32>
    %264 = vector.extract %263[0, 0, 0] : i32 from vector<1x1x1xi32>
    %c1_i32 = arith.constant 1 : i32
    %265 = arith.addi %arg0, %c1_i32 : i32
    %266 = arith.index_cast %265 : i32 to index
    %267 = memref.load %arg30[%266] : memref<8xi32, #tpu.memory_space<smem>>
    memref.store %264, %arg30[%266] : memref<8xi32, #tpu.memory_space<smem>>
    return
  }
  func.func @transform_0(%arg0: i32) -> (i32, i32) {
    %c0_i32 = arith.constant 0 : i32
    %c0_i32_0 = arith.constant 0 : i32
    %c0_i32_1 = arith.constant 0 : i32
    return %c0_i32, %c0_i32_0 : i32, i32
  }
  func.func @transform_1(%arg0: i32) -> (i32, i32) {
    %c0_i32 = arith.constant 0 : i32
    %c0_i32_0 = arith.constant 0 : i32
    %c0_i32_1 = arith.constant 0 : i32
    return %c0_i32, %c0_i32_0 : i32, i32
  }
  func.func @transform_2(%arg0: i32) -> (i32, i32) {
    %c0_i32 = arith.constant 0 : i32
    %c0_i32_0 = arith.constant 0 : i32
    %c0_i32_1 = arith.constant 0 : i32
    return %c0_i32, %c0_i32_0 : i32, i32
  }
  func.func @transform_3(%arg0: i32) -> (i32, i32, i32) {
    %c0_i32 = arith.constant 0 : i32
    %c0_i32_0 = arith.constant 0 : i32
    %c0_i32_1 = arith.constant 0 : i32
    %c0_i32_2 = arith.constant 0 : i32
    return %c0_i32, %c0_i32_0, %c0_i32_1 : i32, i32, i32
  }
  func.func @transform_4(%arg0: i32) -> (i32, i32, i32) {
    %c0_i32 = arith.constant 0 : i32
    %c0_i32_0 = arith.constant 0 : i32
    %c0_i32_1 = arith.constant 0 : i32
    %c0_i32_2 = arith.constant 0 : i32
    return %c0_i32, %c0_i32_0, %c0_i32_1 : i32, i32, i32
  }
  func.func @transform_5(%arg0: i32) -> (i32, i32) {
    %c0_i32 = arith.constant 0 : i32
    %c0_i32_0 = arith.constant 0 : i32
    %c0_i32_1 = arith.constant 0 : i32
    return %c0_i32, %c0_i32_0 : i32, i32
  }
  func.func @transform_6(%arg0: i32) -> (i32, i32) {
    %c0_i32 = arith.constant 0 : i32
    %c0_i32_0 = arith.constant 0 : i32
    %c0_i32_1 = arith.constant 0 : i32
    return %c0_i32, %c0_i32_0 : i32, i32
  }
  func.func @transform_7(%arg0: i32) -> (i32, i32, i32) {
    %c0_i32 = arith.constant 0 : i32
    %c0_i32_0 = arith.constant 0 : i32
    %c0_i32_1 = arith.constant 0 : i32
    %c0_i32_2 = arith.constant 0 : i32
    return %c0_i32, %c0_i32_0, %c0_i32_1 : i32, i32, i32
  }
  func.func @transform_8(%arg0: i32) -> (i32, i32, i32) {
    %c0_i32 = arith.constant 0 : i32
    %c0_i32_0 = arith.constant 0 : i32
    %c0_i32_1 = arith.constant 0 : i32
    %c0_i32_2 = arith.constant 0 : i32
    return %c0_i32, %c0_i32_0, %c0_i32_1 : i32, i32, i32
  }
  func.func @transform_9(%arg0: i32) -> (i32, i32, i32) {
    %c0_i32 = arith.constant 0 : i32
    %c0_i32_0 = arith.constant 0 : i32
    %c0_i32_1 = arith.constant 0 : i32
    %c0_i32_2 = arith.constant 0 : i32
    return %c0_i32, %c0_i32_0, %c0_i32_1 : i32, i32, i32
  }
  func.func @transform_10(%arg0: i32) -> (i32, i32, i32) {
    %c0_i32 = arith.constant 0 : i32
    %c0_i32_0 = arith.constant 0 : i32
    %c0_i32_1 = arith.constant 0 : i32
    %c0_i32_2 = arith.constant 0 : i32
    return %c0_i32, %c0_i32_0, %c0_i32_1 : i32, i32, i32
  }
  func.func @transform_11(%arg0: i32) -> (i32, i32, i32) {
    %c0_i32 = arith.constant 0 : i32
    %c0_i32_0 = arith.constant 0 : i32
    %c0_i32_1 = arith.constant 0 : i32
    %c0_i32_2 = arith.constant 0 : i32
    return %c0_i32, %c0_i32_0, %c0_i32_1 : i32, i32, i32
  }
  func.func @transform_12(%arg0: i32) -> (i32, i32, i32) {
    %c0_i32 = arith.constant 0 : i32
    %c0_i32_0 = arith.constant 0 : i32
    %c0_i32_1 = arith.constant 0 : i32
    %c0_i32_2 = arith.constant 0 : i32
    return %c0_i32, %c0_i32_0, %c0_i32_1 : i32, i32, i32
  }
  func.func @transform_13(%arg0: i32) -> (i32, i32, i32) {
    %c0_i32 = arith.constant 0 : i32
    %c0_i32_0 = arith.constant 0 : i32
    %c0_i32_1 = arith.constant 0 : i32
    %c0_i32_2 = arith.constant 0 : i32
    return %c0_i32, %c0_i32_0, %c0_i32_1 : i32, i32, i32
  }
  func.func @transform_14(%arg0: i32) -> (i32, i32) {
    %c0_i32 = arith.constant 0 : i32
    %c0_i32_0 = arith.constant 0 : i32
    %c0_i32_1 = arith.constant 0 : i32
    return %c0_i32, %c0_i32_0 : i32, i32
  }
  func.func @transform_15(%arg0: i32) -> (i32, i32) {
    %c0_i32 = arith.constant 0 : i32
    %c0_i32_0 = arith.constant 0 : i32
    %c0_i32_1 = arith.constant 0 : i32
    return %c0_i32, %c0_i32_0 : i32, i32
  }
  func.func @transform_16(%arg0: i32) -> (i32, i32) {
    %c0_i32 = arith.constant 0 : i32
    %c0_i32_0 = arith.constant 0 : i32
    %c0_i32_1 = arith.constant 0 : i32
    return %c0_i32, %c0_i32_0 : i32, i32
  }
  func.func @transform_17(%arg0: i32) -> (i32, i32, i32) {
    %c0_i32 = arith.constant 0 : i32
    %c0_i32_0 = arith.constant 0 : i32
    %c0_i32_1 = arith.constant 0 : i32
    %c0_i32_2 = arith.constant 0 : i32
    return %c0_i32, %c0_i32_0, %c0_i32_1 : i32, i32, i32
  }
  func.func @transform_18(%arg0: i32) -> (i32, i32, i32) {
    %c0_i32 = arith.constant 0 : i32
    %c0_i32_0 = arith.constant 0 : i32
    %c0_i32_1 = arith.constant 0 : i32
    %c0_i32_2 = arith.constant 0 : i32
    return %c0_i32, %c0_i32_0, %c0_i32_1 : i32, i32, i32
  }
  func.func @transform_19(%arg0: i32) -> (i32, i32, i32) {
    %c0_i32 = arith.constant 0 : i32
    %c0_i32_0 = arith.constant 0 : i32
    %c0_i32_1 = arith.constant 0 : i32
    %c0_i32_2 = arith.constant 0 : i32
    return %c0_i32, %c0_i32_0, %c0_i32_1 : i32, i32, i32
  }
  func.func @transform_20(%arg0: i32) -> (i32, i32) {
    %c0_i32 = arith.constant 0 : i32
    %c0_i32_0 = arith.constant 0 : i32
    %c0_i32_1 = arith.constant 0 : i32
    return %c0_i32, %c0_i32_0 : i32, i32
  }
  func.func @transform_21(%arg0: i32) -> (i32, i32) {
    %c0_i32 = arith.constant 0 : i32
    %c0_i32_0 = arith.constant 0 : i32
    %c0_i32_1 = arith.constant 0 : i32
    return %c0_i32, %c0_i32_0 : i32, i32
  }
  func.func @transform_22(%arg0: i32) -> (i32, i32) {
    %c0_i32 = arith.constant 0 : i32
    %c0_i32_0 = arith.constant 0 : i32
    %c0_i32_1 = arith.constant 0 : i32
    return %c0_i32, %c0_i32_0 : i32, i32
  }
  func.func @transform_23(%arg0: i32) -> (i32, i32) {
    %c0_i32 = arith.constant 0 : i32
    %c0_i32_0 = arith.constant 0 : i32
    %c0_i32_1 = arith.constant 0 : i32
    return %c0_i32, %c0_i32_0 : i32, i32
  }
  func.func @transform_24(%arg0: i32) -> (i32, i32) {
    %c0_i32 = arith.constant 0 : i32
    %c0_i32_0 = arith.constant 0 : i32
    %c0_i32_1 = arith.constant 0 : i32
    return %c0_i32, %c0_i32_0 : i32, i32
  }
  func.func @transform_25(%arg0: i32) -> (i32, i32) {
    %c0_i32 = arith.constant 0 : i32
    %c0_i32_0 = arith.constant 0 : i32
    %c0_i32_1 = arith.constant 0 : i32
    return %c0_i32, %c0_i32_0 : i32, i32
  }
  func.func @transform_26(%arg0: i32) -> (i32, i32) {
    %c0_i32 = arith.constant 0 : i32
    %c0_i32_0 = arith.constant 0 : i32
    %c0_i32_1 = arith.constant 0 : i32
    return %c0_i32, %c0_i32_0 : i32, i32
  }
  func.func @transform_27(%arg0: i32) -> (i32, i32) {
    %c0_i32 = arith.constant 0 : i32
    %c0_i32_0 = arith.constant 0 : i32
    %c0_i32_1 = arith.constant 0 : i32
    return %c0_i32, %c0_i32_0 : i32, i32
  }
  func.func @transform_28(%arg0: i32) -> (i32, i32) {
    %c0_i32 = arith.constant 0 : i32
    %c0_i32_0 = arith.constant 0 : i32
    %c0_i32_1 = arith.constant 0 : i32
    return %c0_i32, %c0_i32_0 : i32, i32
  }
  func.func @transform_29(%arg0: i32) -> i32 {
    %c0_i32 = arith.constant 0 : i32
    %c0_i32_0 = arith.constant 0 : i32
    return %c0_i32 : i32
  }
}

</mosaic_0001>

<llo_original>
// kernel: generate.6
$region0: #{generate.6}
  #allocation0 [shape = 'u32[]', space=smem, size = 0x4, offset = 0x4, fixed_abs, tag = 'smem constant byte address 0x4 - core index']
  #allocation1 [shape = 'u32[144,128]{1,0:T(1,128)}', space=vmem, size = 0x12000, scoped, tag = 'internal scratch']
  %s0 = inlined_call_operand.vmem [shape: f32[9,32], index: 0, kind: input, shape index: {}]
  %s1 = inlined_call_operand.vmem [shape: f32[9,32], index: 1, kind: input, shape index: {}]
  %s2 = inlined_call_operand.vmem [shape: bf16[96,32], index: 2, kind: input, shape index: {}]
  %s3 = inlined_call_operand.vmem [shape: f32[1,32], index: 3, kind: input, shape index: {}]
  %s4 = inlined_call_operand.vmem [shape: f32[8,32], index: 4, kind: output, shape index: {}]
  %s5 = sld [smem:[#allocation0]]
  $region26: #{generate.6} parent=0
    _
  %s7 = ssub.s32 1, %s5
  %s8 = scalar_select 0, %s7, %s5
  // Predicated region
  $region2: #{generate.6} parent=0 // pred_check
    _
  $region3: #{generate.6} parent=0 // pred_check_branch
    %10 = sbr.rel (0) target = $region5
  $region4: #{generate.6} parent=0 // pred_region
    _
  $region5: #{generate.6} parent=0 // pred_fallthru
    _
  // Predicated region
  $region6: #{generate.6} parent=0 // pred_check
    _
  $region7: #{generate.6} parent=0 // pred_check_branch
    %12 = sbr.rel (0) target = $region9
  $region8: #{generate.6} parent=0 // pred_region
    _
  $region9: #{generate.6} parent=0 // pred_fallthru
    _
  // Predicated region
  $region10: #{generate.6} parent=0 // pred_check
    _
  $region11: #{generate.6} parent=0 // pred_check_branch
    %14 = sbr.rel (0) target = $region13
  $region12: #{generate.6} parent=0 // pred_region
    _
  $region13: #{generate.6} parent=0 // pred_fallthru
    _
  // Predicated region
  $region14: #{generate.6} parent=0 // pred_check
    _
  $region15: #{generate.6} parent=0 // pred_check_branch
    %16 = sbr.rel (0) target = $region17
  $region16: #{generate.6} parent=0 // pred_region
    _
  $region17: #{generate.6} parent=0 // pred_fallthru
    _
  %v18 = vld [vmem:[%s2] sm:$0xf]
  %v19 = vld [vmem:[%s2 + $0x4] sm:$0xf]
  %v20 = vld [vmem:[%s2 + $0x8] sm:$0xf]
  %v21 = vld [vmem:[%s2 + $0xc] sm:$0xf]
  %v22 = vld [vmem:[%s2 + $0x10] sm:$0xf]
  %v23 = vld [vmem:[%s2 + $0x14] sm:$0xf]
  %v24 = vld [vmem:[%s2 + $0x18] sm:$0xf]
  %v25 = vld [vmem:[%s2 + $0x1c] sm:$0xf]
  %v26 = vld [vmem:[%s2 + $0x20] sm:$0xf]
  %v27 = vld [vmem:[%s2 + $0x24] sm:$0xf]
  %v28 = vld [vmem:[%s2 + $0x28] sm:$0xf]
  %v29 = vld [vmem:[%s2 + $0x2c] sm:$0xf]
  %v30 = vld [vmem:[%s0] sm:$0xff]
  %v31 = vld [vmem:[%s1] sm:$0xff]
  %v32 = vld [vmem:[%s0 + $0x1] sm:$0xff]
  %v33 = vld [vmem:[%s3] sm:$0x1]
  %v35 = vlaneseq
  %v36 = vshrl.u32 %v35, 7
  %v37 = vsub.s32 0, %v36
  %v38 = vrot.slane %v33, %v37
  %v40 = vadd.f32 %v38, 0.0
  %v41 = vpack.c.bf16 %v30, %v30
  %v46 = vunpack.c.l.b16 %v18
  %v47 = vunpack.c.l.b16 %v19
  %v48 = vunpack.c.l.b16 %v20
  %v49 = vunpack.c.l.b16 %v21
  %v50 = vpack.c.b16 %v47, %v46
  %v51 = vpack.c.b16 %v49, %v48
  %vm54 = vcmask 261120
  %v56 = vsel %vm54, %v41, 0
  %58 = vmatprep.subr.bf16.mxu0 0
  %59 = vmatpush1.bf16.msra.mxu0 0
  %60 = vmatprep.subr.bf16.mxu0 0
  %61 = vmatpush1.bf16.msra.mxu0 0
  %62 = vmatprep.subr.bf16.mxu0 0
  %63 = vmatpush1.bf16.msra.mxu0 0
  %64 = vmatprep.subr.bf16.mxu0 0
  %65 = vmatpush1.bf16.msra.mxu0 0
  %66 = vmatprep.subr.bf16.mxu0 0
  %67 = vmatpush1.bf16.msra.mxu0 0
  %68 = vmatprep.subr.bf16.mxu0 0
  %69 = vmatpush1.bf16.msra.mxu0 0
  %70 = vmatprep.subr.bf16.mxu0 0
  %71 = vmatpush1.bf16.msra.mxu0 %v51
  %72 = vmatprep.subr.bf16.mxu0 0
  %73 = vmatpush1.bf16.msra.mxu0 %v50
  %74 = vmatprep.subr.bf16.mxu0 0
  %75 = vmatpush2.bf16.msra.mxu0 0
  %76 = vmatprep.subr.bf16.mxu0 0
  %77 = vmatpush2.bf16.msra.mxu0 0
  %78 = vmatprep.subr.bf16.mxu0 0
  %79 = vmatpush2.bf16.msra.mxu0 0
  %80 = vmatprep.subr.bf16.mxu0 0
  %81 = vmatpush2.bf16.msra.mxu0 0
  %82 = vmatprep.subr.bf16.mxu0 0
  %83 = vmatpush2.bf16.msra.mxu0 0
  %84 = vmatprep.subr.bf16.mxu0 0
  %85 = vmatpush2.bf16.msra.mxu0 0
  %86 = vmatprep.subr.bf16.mxu0 0
  %87 = vmatpush2.bf16.msra.mxu0 0
  %88 = vmatprep.subr.bf16.mxu0 0
  %89 = vmatpush2.bf16.msra.mxu0 0
  %90 = vmatprep.mubr.bf16.mxu0 0
  %91 = vmatmul.mubr.bf16.gmra.mxu0 %v56
  %v92 = vpop.f32.mrf.mxu0
  %v93 = vadd.f32 0.0, %v92
  %v94 = vpop.f32.mrf.mxu0
  %v95 = vpop.f32.mrf.mxu0
  %v96 = vpop.f32.mrf.mxu0
  %97 = vdwg.mxu0
  %v98 = vadd.f32 %v40, %v93
  %v99 = vpack.c.bf16 %v31, %v31
  %v104 = vunpack.c.l.b16 %v22
  %v105 = vunpack.c.l.b16 %v23
  %v106 = vunpack.c.l.b16 %v24
  %v107 = vunpack.c.l.b16 %v25
  %v108 = vpack.c.b16 %v105, %v104
  %v109 = vpack.c.b16 %v107, %v106
  %v113 = vsel %vm54, %v99, 0
  %115 = vmatprep.subr.bf16.mxu0 0
  %116 = vmatpush1.bf16.msra.mxu0 0
  %117 = vmatprep.subr.bf16.mxu0 0
  %118 = vmatpush1.bf16.msra.mxu0 0
  %119 = vmatprep.subr.bf16.mxu0 0
  %120 = vmatpush1.bf16.msra.mxu0 0
  %121 = vmatprep.subr.bf16.mxu0 0
  %122 = vmatpush1.bf16.msra.mxu0 0
  %123 = vmatprep.subr.bf16.mxu0 0
  %124 = vmatpush1.bf16.msra.mxu0 0
  %125 = vmatprep.subr.bf16.mxu0 0
  %126 = vmatpush1.bf16.msra.mxu0 0
  %127 = vmatprep.subr.bf16.mxu0 0
  %128 = vmatpush1.bf16.msra.mxu0 %v109
  %129 = vmatprep.subr.bf16.mxu0 0
  %130 = vmatpush1.bf16.msra.mxu0 %v108
  %131 = vmatprep.subr.bf16.mxu0 0
  %132 = vmatpush2.bf16.msra.mxu0 0
  %133 = vmatprep.subr.bf16.mxu0 0
  %134 = vmatpush2.bf16.msra.mxu0 0
  %135 = vmatprep.subr.bf16.mxu0 0
  %136 = vmatpush2.bf16.msra.mxu0 0
  %137 = vmatprep.subr.bf16.mxu0 0
  %138 = vmatpush2.bf16.msra.mxu0 0
  %139 = vmatprep.subr.bf16.mxu0 0
  %140 = vmatpush2.bf16.msra.mxu0 0
  %141 = vmatprep.subr.bf16.mxu0 0
  %142 = vmatpush2.bf16.msra.mxu0 0
  %143 = vmatprep.subr.bf16.mxu0 0
  %144 = vmatpush2.bf16.msra.mxu0 0
  %145 = vmatprep.subr.bf16.mxu0 0
  %146 = vmatpush2.bf16.msra.mxu0 0
  %147 = vmatprep.mubr.bf16.mxu0 0
  %148 = vmatmul.mubr.bf16.gmra.mxu0 %v113
  %v149 = vpop.f32.mrf.mxu0
  %v150 = vadd.f32 0.0, %v149
  %v151 = vpop.f32.mrf.mxu0
  %v152 = vpop.f32.mrf.mxu0
  %v153 = vpop.f32.mrf.mxu0
  %154 = vdwg.mxu0
  %v155 = vadd.f32 %v98, %v150
  %v156 = vpack.c.bf16 %v32, %v32
  %v161 = vunpack.c.l.b16 %v26
  %v162 = vunpack.c.l.b16 %v27
  %v163 = vunpack.c.l.b16 %v28
  %v164 = vunpack.c.l.b16 %v29
  %v165 = vpack.c.b16 %v162, %v161
  %v166 = vpack.c.b16 %v164, %v163
  %v170 = vsel %vm54, %v156, 0
  %172 = vmatprep.subr.bf16.mxu0 0
  %173 = vmatpush1.bf16.msra.mxu0 0
  %174 = vmatprep.subr.bf16.mxu0 0
  %175 = vmatpush1.bf16.msra.mxu0 0
  %176 = vmatprep.subr.bf16.mxu0 0
  %177 = vmatpush1.bf16.msra.mxu0 0
  %178 = vmatprep.subr.bf16.mxu0 0
  %179 = vmatpush1.bf16.msra.mxu0 0
  %180 = vmatprep.subr.bf16.mxu0 0
  %181 = vmatpush1.bf16.msra.mxu0 0
  %182 = vmatprep.subr.bf16.mxu0 0
  %183 = vmatpush1.bf16.msra.mxu0 0
  %184 = vmatprep.subr.bf16.mxu0 0
  %185 = vmatpush1.bf16.msra.mxu0 %v166
  %186 = vmatprep.subr.bf16.mxu0 0
  %187 = vmatpush1.bf16.msra.mxu0 %v165
  %188 = vmatprep.subr.bf16.mxu0 0
  %189 = vmatpush2.bf16.msra.mxu0 0
  %190 = vmatprep.subr.bf16.mxu0 0
  %191 = vmatpush2.bf16.msra.mxu0 0
  %192 = vmatprep.subr.bf16.mxu0 0
  %193 = vmatpush2.bf16.msra.mxu0 0
  %194 = vmatprep.subr.bf16.mxu0 0
  %195 = vmatpush2.bf16.msra.mxu0 0
  %196 = vmatprep.subr.bf16.mxu0 0
  %197 = vmatpush2.bf16.msra.mxu0 0
  %198 = vmatprep.subr.bf16.mxu0 0
  %199 = vmatpush2.bf16.msra.mxu0 0
  %200 = vmatprep.subr.bf16.mxu0 0
  %201 = vmatpush2.bf16.msra.mxu0 0
  %202 = vmatprep.subr.bf16.mxu0 0
  %203 = vmatpush2.bf16.msra.mxu0 0
  %204 = vmatprep.mubr.bf16.mxu0 0
  %205 = vmatmul.mubr.bf16.gmra.mxu0 %v170
  %v206 = vpop.f32.mrf.mxu0
  %v207 = vadd.f32 0.0, %v206
  %v208 = vpop.f32.mrf.mxu0
  %v209 = vpop.f32.mrf.mxu0
  %v210 = vpop.f32.mrf.mxu0
  %211 = vdwg.mxu0
  %v212 = vadd.f32 %v155, %v207
  %v213 = vmul.f32 %v212, %v212
  %v214 = vmul.f32 %v212, %v213
  %v215 = vmul.f32 %v214, 0.044715
  %v216 = vadd.f32 %v212, %v215
  %v217 = vmul.f32 %v216, 0.7978846
  %v218 = vtanh.pop %v217
  %v219 = vadd.f32 %v218, 1.0
  %v220 = vmul.f32 %v219, 0.5
  %v221 = vmul.f32 %v212, %v220
  %222 = vst.msk [vmem:[%s4] sm:$0xff] %vm54, %v221
  // Predicated region
  $region18: #{generate.6} parent=0 // pred_check
    _
  $region19: #{generate.6} parent=0 // pred_check_branch
    %224 = sbr.rel (0) target = $region21
  $region20: #{generate.6} parent=0 // pred_region
    _
  $region21: #{generate.6} parent=0 // pred_fallthru
    _
  // Predicated region
  $region22: #{generate.6} parent=0 // pred_check
    _
  $region23: #{generate.6} parent=0 // pred_check_branch
    %226 = sbr.rel (0) target = $region25
  $region24: #{generate.6} parent=0 // pred_region
    _
  $region25: #{generate.6} parent=0 // pred_fallthru
    _

// kernel: generate.5
$region0: #{generate.5}
  #allocation0 [shape = 'u32[]', space=smem, size = 0x4, offset = 0x4, fixed_abs, tag = 'smem constant byte address 0x4 - core index']
  #allocation1 [shape = 'u32[144,128]{1,0:T(1,128)}', space=vmem, size = 0x12000, scoped, tag = 'internal scratch']
  %s0 = inlined_call_operand.vmem [shape: f32[18,16], index: 0, kind: input, shape index: {}]
  %s1 = inlined_call_operand.vmem [shape: bf16[48,32], index: 1, kind: input, shape index: {}]
  %s2 = inlined_call_operand.vmem [shape: f32[1,32], index: 2, kind: input, shape index: {}]
  %s3 = inlined_call_operand.vmem [shape: f32[16,32], index: 3, kind: output, shape index: {}]
  %s4 = sld [smem:[#allocation0]]
  $region22: #{generate.5} parent=0
    _
  %s6 = ssub.s32 1, %s4
  %s7 = scalar_select 0, %s6, %s4
  // Predicated region
  $region2: #{generate.5} parent=0 // pred_check
    _
  $region3: #{generate.5} parent=0 // pred_check_branch
    %9 = sbr.rel (0) target = $region5
  $region4: #{generate.5} parent=0 // pred_region
    _
  $region5: #{generate.5} parent=0 // pred_fallthru
    _
  // Predicated region
  $region6: #{generate.5} parent=0 // pred_check
    _
  $region7: #{generate.5} parent=0 // pred_check_branch
    %11 = sbr.rel (0) target = $region9
  $region8: #{generate.5} parent=0 // pred_region
    _
  $region9: #{generate.5} parent=0 // pred_fallthru
    _
  // Predicated region
  $region10: #{generate.5} parent=0 // pred_check
    _
  $region11: #{generate.5} parent=0 // pred_check_branch
    %13 = sbr.rel (0) target = $region13
  $region12: #{generate.5} parent=0 // pred_region
    _
  $region13: #{generate.5} parent=0 // pred_fallthru
    _
  %v15 = vld [vmem:[%s1] sm:$0xf]
  %v16 = vld [vmem:[%s1 + $0x4] sm:$0xf]
  %v17 = vld [vmem:[%s1 + $0x8] sm:$0xf]
  %v18 = vld [vmem:[%s1 + $0xc] sm:$0xf]
  %v19 = vld [vmem:[%s1 + $0x10] sm:$0xf]
  %v20 = vld [vmem:[%s1 + $0x14] sm:$0xf]
  %v21 = vld [vmem:[%s2] sm:$0x1]
  %v23 = vlaneseq
  %v24 = vshrl.u32 %v23, 7
  %v25 = vsub.s32 0, %v24
  %v26 = vrot.slane %v21, %v25
  %v28 = vadd.f32 %v26, 0.0
  %v29 = vld [vmem:[%s0] sm:$0xff]
  %v30 = vld [vmem:[%s0 + $0x8] sm:$0xff]
  %v31 = vpack.c.bf16 %v30, %v29
  %v34 = vunpack.c.l.b16 %v15
  %v35 = vunpack.c.l.b16 %v16
  %v36 = vpack.c.b16 %v35, %v34
  %vm38 = vcmask 130048
  %v40 = vsel %vm38, %v31, 0
  %42 = vmatprep.subr.bf16.mxu0 0
  %43 = vmatpush1.bf16.msra.mxu0 0
  %44 = vmatprep.subr.bf16.mxu0 0
  %45 = vmatpush1.bf16.msra.mxu0 0
  %46 = vmatprep.subr.bf16.mxu0 0
  %47 = vmatpush1.bf16.msra.mxu0 0
  %48 = vmatprep.subr.bf16.mxu0 0
  %49 = vmatpush1.bf16.msra.mxu0 0
  %50 = vmatprep.subr.bf16.mxu0 0
  %51 = vmatpush1.bf16.msra.mxu0 0
  %52 = vmatprep.subr.bf16.mxu0 0
  %53 = vmatpush1.bf16.msra.mxu0 0
  %54 = vmatprep.subr.bf16.mxu0 0
  %55 = vmatpush1.bf16.msra.mxu0 0
  %56 = vmatprep.subr.bf16.mxu0 0
  %57 = vmatpush1.bf16.msra.mxu0 %v36
  %58 = vmatprep.subr.bf16.mxu0 0
  %59 = vmatpush2.bf16.msra.mxu0 0
  %60 = vmatprep.subr.bf16.mxu0 0
  %61 = vmatpush2.bf16.msra.mxu0 0
  %62 = vmatprep.subr.bf16.mxu0 0
  %63 = vmatpush2.bf16.msra.mxu0 0
  %64 = vmatprep.subr.bf16.mxu0 0
  %65 = vmatpush2.bf16.msra.mxu0 0
  %66 = vmatprep.subr.bf16.mxu0 0
  %67 = vmatpush2.bf16.msra.mxu0 0
  %68 = vmatprep.subr.bf16.mxu0 0
  %69 = vmatpush2.bf16.msra.mxu0 0
  %70 = vmatprep.subr.bf16.mxu0 0
  %71 = vmatpush2.bf16.msra.mxu0 0
  %72 = vmatprep.subr.bf16.mxu0 0
  %73 = vmatpush2.bf16.msra.mxu0 0
  %74 = vmatprep.mubr.bf16.mxu0 0
  %75 = vmatmul.mubr.bf16.gmra.mxu0 %v40
  %v76 = vpop.f32.mrf.mxu0
  %v77 = vadd.f32 0.0, %v76
  %v78 = vpop.f32.mrf.mxu0
  %v79 = vpop.f32.mrf.mxu0
  %v80 = vadd.f32 0.0, %v79
  %v81 = vpop.f32.mrf.mxu0
  %82 = vdwg.mxu0
  %v83 = vadd.f32 %v28, %v77
  %v84 = vadd.f32 %v28, %v80
  %v85 = vld [vmem:[%s0 + $0x1] sm:$0xff]
  %v86 = vld [vmem:[%s0 + $0x9] sm:$0xff]
  %v87 = vpack.c.bf16 %v86, %v85
  %v90 = vunpack.c.l.b16 %v17
  %v91 = vunpack.c.l.b16 %v18
  %v92 = vpack.c.b16 %v91, %v90
  %v95 = vsel %vm38, %v87, 0
  %97 = vmatprep.subr.bf16.mxu0 0
  %98 = vmatpush1.bf16.msra.mxu0 0
  %99 = vmatprep.subr.bf16.mxu0 0
  %100 = vmatpush1.bf16.msra.mxu0 0
  %101 = vmatprep.subr.bf16.mxu0 0
  %102 = vmatpush1.bf16.msra.mxu0 0
  %103 = vmatprep.subr.bf16.mxu0 0
  %104 = vmatpush1.bf16.msra.mxu0 0
  %105 = vmatprep.subr.bf16.mxu0 0
  %106 = vmatpush1.bf16.msra.mxu0 0
  %107 = vmatprep.subr.bf16.mxu0 0
  %108 = vmatpush1.bf16.msra.mxu0 0
  %109 = vmatprep.subr.bf16.mxu0 0
  %110 = vmatpush1.bf16.msra.mxu0 0
  %111 = vmatprep.subr.bf16.mxu0 0
  %112 = vmatpush1.bf16.msra.mxu0 %v92
  %113 = vmatprep.subr.bf16.mxu0 0
  %114 = vmatpush2.bf16.msra.mxu0 0
  %115 = vmatprep.subr.bf16.mxu0 0
  %116 = vmatpush2.bf16.msra.mxu0 0
  %117 = vmatprep.subr.bf16.mxu0 0
  %118 = vmatpush2.bf16.msra.mxu0 0
  %119 = vmatprep.subr.bf16.mxu0 0
  %120 = vmatpush2.bf16.msra.mxu0 0
  %121 = vmatprep.subr.bf16.mxu0 0
  %122 = vmatpush2.bf16.msra.mxu0 0
  %123 = vmatprep.subr.bf16.mxu0 0
  %124 = vmatpush2.bf16.msra.mxu0 0
  %125 = vmatprep.subr.bf16.mxu0 0
  %126 = vmatpush2.bf16.msra.mxu0 0
  %127 = vmatprep.subr.bf16.mxu0 0
  %128 = vmatpush2.bf16.msra.mxu0 0
  %129 = vmatprep.mubr.bf16.mxu0 0
  %130 = vmatmul.mubr.bf16.gmra.mxu0 %v95
  %v131 = vpop.f32.mrf.mxu0
  %v132 = vadd.f32 0.0, %v131
  %v133 = vpop.f32.mrf.mxu0
  %v134 = vpop.f32.mrf.mxu0
  %v135 = vadd.f32 0.0, %v134
  %v136 = vpop.f32.mrf.mxu0
  %137 = vdwg.mxu0
  %v138 = vadd.f32 %v83, %v132
  %v139 = vadd.f32 %v84, %v135
  %v140 = vld [vmem:[%s0 + $0x2] sm:$0xff]
  %v141 = vld [vmem:[%s0 + $0xa] sm:$0xff]
  %v142 = vpack.c.bf16 %v141, %v140
  %v145 = vunpack.c.l.b16 %v19
  %v146 = vunpack.c.l.b16 %v20
  %v147 = vpack.c.b16 %v146, %v145
  %v150 = vsel %vm38, %v142, 0
  %152 = vmatprep.subr.bf16.mxu0 0
  %153 = vmatpush1.bf16.msra.mxu0 0
  %154 = vmatprep.subr.bf16.mxu0 0
  %155 = vmatpush1.bf16.msra.mxu0 0
  %156 = vmatprep.subr.bf16.mxu0 0
  %157 = vmatpush1.bf16.msra.mxu0 0
  %158 = vmatprep.subr.bf16.mxu0 0
  %159 = vmatpush1.bf16.msra.mxu0 0
  %160 = vmatprep.subr.bf16.mxu0 0
  %161 = vmatpush1.bf16.msra.mxu0 0
  %162 = vmatprep.subr.bf16.mxu0 0
  %163 = vmatpush1.bf16.msra.mxu0 0
  %164 = vmatprep.subr.bf16.mxu0 0
  %165 = vmatpush1.bf16.msra.mxu0 0
  %166 = vmatprep.subr.bf16.mxu0 0
  %167 = vmatpush1.bf16.msra.mxu0 %v147
  %168 = vmatprep.subr.bf16.mxu0 0
  %169 = vmatpush2.bf16.msra.mxu0 0
  %170 = vmatprep.subr.bf16.mxu0 0
  %171 = vmatpush2.bf16.msra.mxu0 0
  %172 = vmatprep.subr.bf16.mxu0 0
  %173 = vmatpush2.bf16.msra.mxu0 0
  %174 = vmatprep.subr.bf16.mxu0 0
  %175 = vmatpush2.bf16.msra.mxu0 0
  %176 = vmatprep.subr.bf16.mxu0 0
  %177 = vmatpush2.bf16.msra.mxu0 0
  %178 = vmatprep.subr.bf16.mxu0 0
  %179 = vmatpush2.bf16.msra.mxu0 0
  %180 = vmatprep.subr.bf16.mxu0 0
  %181 = vmatpush2.bf16.msra.mxu0 0
  %182 = vmatprep.subr.bf16.mxu0 0
  %183 = vmatpush2.bf16.msra.mxu0 0
  %184 = vmatprep.mubr.bf16.mxu0 0
  %185 = vmatmul.mubr.bf16.gmra.mxu0 %v150
  %v186 = vpop.f32.mrf.mxu0
  %v187 = vadd.f32 0.0, %v186
  %v188 = vpop.f32.mrf.mxu0
  %v189 = vpop.f32.mrf.mxu0
  %v190 = vadd.f32 0.0, %v189
  %v191 = vpop.f32.mrf.mxu0
  %192 = vdwg.mxu0
  %v193 = vadd.f32 %v138, %v187
  %v194 = vadd.f32 %v139, %v190
  %v195 = vmul.f32 %v193, %v193
  %v196 = vmul.f32 %v194, %v194
  %v197 = vmul.f32 %v193, %v195
  %v198 = vmul.f32 %v194, %v196
  %v199 = vmul.f32 %v197, 0.044715
  %v200 = vmul.f32 %v198, 0.044715
  %v201 = vadd.f32 %v193, %v199
  %v202 = vadd.f32 %v194, %v200
  %v203 = vmul.f32 %v201, 0.7978846
  %v204 = vmul.f32 %v202, 0.7978846
  %v205 = vtanh.pop %v203
  %v206 = vtanh.pop %v204
  %v207 = vadd.f32 %v205, 1.0
  %v208 = vadd.f32 %v206, 1.0
  %v209 = vmul.f32 %v207, 0.5
  %v210 = vmul.f32 %v208, 0.5
  %v211 = vmul.f32 %v193, %v209
  %v212 = vmul.f32 %v194, %v210
  %vm213 = vcmask 261120
  %214 = vst.msk [vmem:[%s3] sm:$0xff] %vm213, %v211
  %215 = vst.msk [vmem:[%s3 + $0x8] sm:$0xff] %vm213, %v212
  // Predicated region
  $region14: #{generate.5} parent=0 // pred_check
    _
  $region15: #{generate.5} parent=0 // pred_check_branch
    %217 = sbr.rel (0) target = $region17
  $region16: #{generate.5} parent=0 // pred_region
    _
  $region17: #{generate.5} parent=0 // pred_fallthru
    _
  // Predicated region
  $region18: #{generate.5} parent=0 // pred_check
    _
  $region19: #{generate.5} parent=0 // pred_check_branch
    %219 = sbr.rel (0) target = $region21
  $region20: #{generate.5} parent=0 // pred_region
    _
  $region21: #{generate.5} parent=0 // pred_fallthru
    _

// kernel: generate.8
$region0: #{generate.8}
  #allocation0 [shape = 'u32[]', space=smem, size = 0x4, offset = 0x4, fixed_abs, tag = 'smem constant byte address 0x4 - core index']
  #allocation1 [shape = 'u32[144,128]{1,0:T(1,128)}', space=vmem, size = 0x12000, scoped, tag = 'internal scratch']
  %s0 = inlined_call_operand.vmem [shape: bf16[8,32], index: 0, kind: input, shape index: {}]
  %s1 = inlined_call_operand.vmem [shape: bf16[32,64], index: 1, kind: input, shape index: {}]
  %s2 = inlined_call_operand.vmem [shape: f32[1,64], index: 2, kind: input, shape index: {}]
  %s3 = inlined_call_operand.vmem [shape: f32[8,64], index: 3, kind: output, shape index: {}]
  %s4 = sld [smem:[#allocation0]]
  $region22: #{generate.8} parent=0
    _
  %s6 = ssub.s32 1, %s4
  %s7 = scalar_select 0, %s6, %s4
  // Predicated region
  $region2: #{generate.8} parent=0 // pred_check
    _
  $region3: #{generate.8} parent=0 // pred_check_branch
    %9 = sbr.rel (0) target = $region5
  $region4: #{generate.8} parent=0 // pred_region
    _
  $region5: #{generate.8} parent=0 // pred_fallthru
    _
  // Predicated region
  $region6: #{generate.8} parent=0 // pred_check
    _
  $region7: #{generate.8} parent=0 // pred_check_branch
    %11 = sbr.rel (0) target = $region9
  $region8: #{generate.8} parent=0 // pred_region
    _
  $region9: #{generate.8} parent=0 // pred_fallthru
    _
  // Predicated region
  $region10: #{generate.8} parent=0 // pred_check
    _
  $region11: #{generate.8} parent=0 // pred_check_branch
    %13 = sbr.rel (0) target = $region13
  $region12: #{generate.8} parent=0 // pred_region
    _
  $region13: #{generate.8} parent=0 // pred_fallthru
    _
  %v15 = vld [vmem:[%s0] sm:$0xf]
  %v16 = vld [vmem:[%s1] sm:$0xf]
  %v17 = vld [vmem:[%s1 + $0x4] sm:$0xf]
  %v18 = vld [vmem:[%s1 + $0x8] sm:$0xf]
  %v19 = vld [vmem:[%s1 + $0xc] sm:$0xf]
  %v20 = vld [vmem:[%s2] sm:$0x1]
  %v22 = vlaneseq
  %v23 = vshrl.u32 %v22, 7
  %v24 = vsub.s32 0, %v23
  %v25 = vrot.slane %v20, %v24
  %v31 = vunpack.c.l.b16 %v16
  %v32 = vunpack.c.l.b16 %v17
  %v33 = vunpack.c.l.b16 %v18
  %v34 = vunpack.c.l.b16 %v19
  %v35 = vpack.c.b16 %v32, %v31
  %v36 = vpack.c.b16 %v34, %v33
  %vm39 = vcmask 261120
  %v41 = vsel %vm39, %v15, 0
  %43 = vmatprep.subr.bf16.mxu0 0
  %44 = vmatpush1.bf16.msra.mxu0 0
  %45 = vmatprep.subr.bf16.mxu0 0
  %46 = vmatpush1.bf16.msra.mxu0 0
  %47 = vmatprep.subr.bf16.mxu0 0
  %48 = vmatpush1.bf16.msra.mxu0 0
  %49 = vmatprep.subr.bf16.mxu0 0
  %50 = vmatpush1.bf16.msra.mxu0 0
  %51 = vmatprep.subr.bf16.mxu0 0
  %52 = vmatpush1.bf16.msra.mxu0 0
  %53 = vmatprep.subr.bf16.mxu0 0
  %54 = vmatpush1.bf16.msra.mxu0 0
  %55 = vmatprep.subr.bf16.mxu0 0
  %56 = vmatpush1.bf16.msra.mxu0 %v36
  %57 = vmatprep.subr.bf16.mxu0 0
  %58 = vmatpush1.bf16.msra.mxu0 %v35
  %59 = vmatprep.subr.bf16.mxu0 0
  %60 = vmatpush2.bf16.msra.mxu0 0
  %61 = vmatprep.subr.bf16.mxu0 0
  %62 = vmatpush2.bf16.msra.mxu0 0
  %63 = vmatprep.subr.bf16.mxu0 0
  %64 = vmatpush2.bf16.msra.mxu0 0
  %65 = vmatprep.subr.bf16.mxu0 0
  %66 = vmatpush2.bf16.msra.mxu0 0
  %67 = vmatprep.subr.bf16.mxu0 0
  %68 = vmatpush2.bf16.msra.mxu0 0
  %69 = vmatprep.subr.bf16.mxu0 0
  %70 = vmatpush2.bf16.msra.mxu0 0
  %71 = vmatprep.subr.bf16.mxu0 0
  %72 = vmatpush2.bf16.msra.mxu0 0
  %73 = vmatprep.subr.bf16.mxu0 0
  %74 = vmatpush2.bf16.msra.mxu0 0
  %75 = vmatprep.mubr.bf16.mxu0 0
  %76 = vmatmul.mubr.bf16.gmra.mxu0 %v41
  %v77 = vpop.f32.mrf.mxu0
  %v78 = vadd.f32 %v25, %v77
  %v79 = vpop.f32.mrf.mxu0
  %v80 = vpop.f32.mrf.mxu0
  %v81 = vpop.f32.mrf.mxu0
  %82 = vdwg.mxu0
  %vm83 = vcmask 523264
  %84 = vst.msk [vmem:[%s3] sm:$0xff] %vm83, %v78
  // Predicated region
  $region14: #{generate.8} parent=0 // pred_check
    _
  $region15: #{generate.8} parent=0 // pred_check_branch
    %86 = sbr.rel (0) target = $region17
  $region16: #{generate.8} parent=0 // pred_region
    _
  $region17: #{generate.8} parent=0 // pred_fallthru
    _
  // Predicated region
  $region18: #{generate.8} parent=0 // pred_check
    _
  $region19: #{generate.8} parent=0 // pred_check_branch
    %88 = sbr.rel (0) target = $region21
  $region20: #{generate.8} parent=0 // pred_region
    _
  $region21: #{generate.8} parent=0 // pred_fallthru
    _

// kernel: generate.7
$region0: #{generate.7}
  #allocation0 [shape = 'u32[]', space=smem, size = 0x4, offset = 0x4, fixed_abs, tag = 'smem constant byte address 0x4 - core index']
  #allocation1 [shape = 'u32[144,128]{1,0:T(1,128)}', space=vmem, size = 0x12000, scoped, tag = 'internal scratch']
  %s0 = inlined_call_operand.vmem [shape: f32[8,32], index: 0, kind: input, shape index: {}]
  %s1 = inlined_call_operand.vmem [shape: f32[1,32], index: 1, kind: input, shape index: {}]
  %s2 = inlined_call_operand.vmem [shape: f32[1,32], index: 2, kind: input, shape index: {}]
  %s3 = inlined_call_operand.vmem [shape: bf16[4,32,8], index: 3, kind: input, shape index: {}]
  %s4 = inlined_call_operand.vmem [shape: f32[4,1,8], index: 4, kind: input, shape index: {}]
  %s5 = inlined_call_operand.vmem [shape: bf16[4,32,8], index: 5, kind: input, shape index: {}]
  %s6 = inlined_call_operand.vmem [shape: f32[4,1,8], index: 6, kind: input, shape index: {}]
  %s7 = inlined_call_operand.vmem [shape: bf16[4,32,8], index: 7, kind: input, shape index: {}]
  %s8 = inlined_call_operand.vmem [shape: f32[4,1,8], index: 8, kind: input, shape index: {}]
  %s9 = inlined_call_operand.vmem [shape: bf16[4,8,32], index: 9, kind: input, shape index: {}]
  %s10 = inlined_call_operand.vmem [shape: f32[1,32], index: 10, kind: input, shape index: {}]
  %s11 = inlined_call_operand.vmem [shape: f32[1,32], index: 11, kind: input, shape index: {}]
  %s12 = inlined_call_operand.vmem [shape: f32[1,32], index: 12, kind: input, shape index: {}]
  %s13 = inlined_call_operand.vmem [shape: bf16[32,64], index: 13, kind: input, shape index: {}]
  %s14 = inlined_call_operand.vmem [shape: f32[1,64], index: 14, kind: input, shape index: {}]
  %s15 = inlined_call_operand.vmem [shape: bf16[64,32], index: 15, kind: input, shape index: {}]
  %s16 = inlined_call_operand.vmem [shape: f32[1,32], index: 16, kind: input, shape index: {}]
  %s17 = inlined_call_operand.vmem [shape: f32[1,32], index: 17, kind: input, shape index: {}]
  %s18 = inlined_call_operand.vmem [shape: f32[1,32], index: 18, kind: input, shape index: {}]
  %s19 = inlined_call_operand.vmem [shape: f32[8,32], index: 19, kind: output, shape index: {}]
  %s20 = sld [smem:[#allocation0]]
  $region86: #{generate.7} parent=0
    _
  %s22 = ssub.s32 1, %s20
  %s23 = scalar_select 0, %s22, %s20
  // Predicated region
  $region2: #{generate.7} parent=0 // pred_check
    _
  $region3: #{generate.7} parent=0 // pred_check_branch
    %25 = sbr.rel (0) target = $region5
  $region4: #{generate.7} parent=0 // pred_region
    _
  $region5: #{generate.7} parent=0 // pred_fallthru
    _
  // Predicated region
  $region6: #{generate.7} parent=0 // pred_check
    _
  $region7: #{generate.7} parent=0 // pred_check_branch
    %27 = sbr.rel (0) target = $region9
  $region8: #{generate.7} parent=0 // pred_region
    _
  $region9: #{generate.7} parent=0 // pred_fallthru
    _
  // Predicated region
  $region10: #{generate.7} parent=0 // pred_check
    _
  $region11: #{generate.7} parent=0 // pred_check_branch
    %29 = sbr.rel (0) target = $region13
  $region12: #{generate.7} parent=0 // pred_region
    _
  $region13: #{generate.7} parent=0 // pred_fallthru
    _
  // Predicated region
  $region14: #{generate.7} parent=0 // pred_check
    _
  $region15: #{generate.7} parent=0 // pred_check_branch
    %31 = sbr.rel (0) target = $region17
  $region16: #{generate.7} parent=0 // pred_region
    _
  $region17: #{generate.7} parent=0 // pred_fallthru
    _
  // Predicated region
  $region18: #{generate.7} parent=0 // pred_check
    _
  $region19: #{generate.7} parent=0 // pred_check_branch
    %33 = sbr.rel (0) target = $region21
  $region20: #{generate.7} parent=0 // pred_region
    _
  $region21: #{generate.7} parent=0 // pred_fallthru
    _
  // Predicated region
  $region22: #{generate.7} parent=0 // pred_check
    _
  $region23: #{generate.7} parent=0 // pred_check_branch
    %35 = sbr.rel (0) target = $region25
  $region24: #{generate.7} parent=0 // pred_region
    _
  $region25: #{generate.7} parent=0 // pred_fallthru
    _
  // Predicated region
  $region26: #{generate.7} parent=0 // pred_check
    _
  $region27: #{generate.7} parent=0 // pred_check_branch
    %37 = sbr.rel (0) target = $region29
  $region28: #{generate.7} parent=0 // pred_region
    _
  $region29: #{generate.7} parent=0 // pred_fallthru
    _
  // Predicated region
  $region30: #{generate.7} parent=0 // pred_check
    _
  $region31: #{generate.7} parent=0 // pred_check_branch
    %39 = sbr.rel (0) target = $region33
  $region32: #{generate.7} parent=0 // pred_region
    _
  $region33: #{generate.7} parent=0 // pred_fallthru
    _
  // Predicated region
  $region34: #{generate.7} parent=0 // pred_check
    _
  $region35: #{generate.7} parent=0 // pred_check_branch
    %41 = sbr.rel (0) target = $region37
  $region36: #{generate.7} parent=0 // pred_region
    _
  $region37: #{generate.7} parent=0 // pred_fallthru
    _
  // Predicated region
  $region38: #{generate.7} parent=0 // pred_check
    _
  $region39: #{generate.7} parent=0 // pred_check_branch
    %43 = sbr.rel (0) target = $region41
  $region40: #{generate.7} parent=0 // pred_region
    _
  $region41: #{generate.7} parent=0 // pred_fallthru
    _
  // Predicated region
  $region42: #{generate.7} parent=0 // pred_check
    _
  $region43: #{generate.7} parent=0 // pred_check_branch
    %45 = sbr.rel (0) target = $region45
  $region44: #{generate.7} parent=0 // pred_region
    _
  $region45: #{generate.7} parent=0 // pred_fallthru
    _
  // Predicated region
  $region46: #{generate.7} parent=0 // pred_check
    _
  $region47: #{generate.7} parent=0 // pred_check_branch
    %47 = sbr.rel (0) target = $region49
  $region48: #{generate.7} parent=0 // pred_region
    _
  $region49: #{generate.7} parent=0 // pred_fallthru
    _
  // Predicated region
  $region50: #{generate.7} parent=0 // pred_check
    _
  $region51: #{generate.7} parent=0 // pred_check_branch
    %49 = sbr.rel (0) target = $region53
  $region52: #{generate.7} parent=0 // pred_region
    _
  $region53: #{generate.7} parent=0 // pred_fallthru
    _
  // Predicated region
  $region54: #{generate.7} parent=0 // pred_check
    _
  $region55: #{generate.7} parent=0 // pred_check_branch
    %51 = sbr.rel (0) target = $region57
  $region56: #{generate.7} parent=0 // pred_region
    _
  $region57: #{generate.7} parent=0 // pred_fallthru
    _
  // Predicated region
  $region58: #{generate.7} parent=0 // pred_check
    _
  $region59: #{generate.7} parent=0 // pred_check_branch
    %53 = sbr.rel (0) target = $region61
  $region60: #{generate.7} parent=0 // pred_region
    _
  $region61: #{generate.7} parent=0 // pred_fallthru
    _
  // Predicated region
  $region62: #{generate.7} parent=0 // pred_check
    _
  $region63: #{generate.7} parent=0 // pred_check_branch
    %55 = sbr.rel (0) target = $region65
  $region64: #{generate.7} parent=0 // pred_region
    _
  $region65: #{generate.7} parent=0 // pred_fallthru
    _
  // Predicated region
  $region66: #{generate.7} parent=0 // pred_check
    _
  $region67: #{generate.7} parent=0 // pred_check_branch
    %57 = sbr.rel (0) target = $region69
  $region68: #{generate.7} parent=0 // pred_region
    _
  $region69: #{generate.7} parent=0 // pred_fallthru
    _
  // Predicated region
  $region70: #{generate.7} parent=0 // pred_check
    _
  $region71: #{generate.7} parent=0 // pred_check_branch
    %59 = sbr.rel (0) target = $region73
  $region72: #{generate.7} parent=0 // pred_region
    _
  $region73: #{generate.7} parent=0 // pred_fallthru
    _
  // Predicated region
  $region74: #{generate.7} parent=0 // pred_check
    _
  $region75: #{generate.7} parent=0 // pred_check_branch
    %61 = sbr.rel (0) target = $region77
  $region76: #{generate.7} parent=0 // pred_region
    _
  $region77: #{generate.7} parent=0 // pred_fallthru
    _
  %v63 = vld [vmem:[%s0] sm:$0xff]
  %v64 = vld [vmem:[%s1] sm:$0x1]
  %v65 = vld [vmem:[%s2] sm:$0x1]
  %vm66 = vcmask 261120
  %v67 = vsel %vm66, %v63, 0.0
  %68 = vadd.xlane.f32.xlu0 %v67
  %v69 = vpop.xlane.xlu0 %68
  %v70 = vrcp.pop 32.0
  %v71 = vmul.f32 %v69, %v70
  %v72 = vsub.f32 %v63, %v71
  %v73 = vmul.f32 %v72, %v72
  %v74 = vsel %vm66, %v73, 0.0
  %75 = vadd.xlane.f32.xlu0 %v74
  %v76 = vpop.xlane.xlu0 %75
  %v77 = vmul.f32 %v76, %v70
  %v78 = vadd.f32 %v77, 1e-05
  %v79 = vrsqrt.pop %v78
  %v80 = vmul.f32 %v72, %v79
  %v82 = vlaneseq
  %v83 = vshrl.u32 %v82, 7
  %v84 = vsub.s32 0, %v83
  %v85 = vrot.slane %v64, %v84
  %v87 = vmul.f32 %v80, %v85
  %v89 = vlaneseq
  %v90 = vshrl.u32 %v89, 7
  %v91 = vsub.s32 0, %v90
  %v92 = vrot.slane %v65, %v91
  %v94 = vadd.f32 %v87, %v92
  %v95 = vpack.c.bf16 %v94, %v94
  %v96 = vld [vmem:[%s3] sm:$0xf]
  %v97 = vld [vmem:[%s3 + $0x4] sm:$0xf]
  %v98 = vld [vmem:[%s3 + $0x8] sm:$0xf]
  %v99 = vld [vmem:[%s3 + $0xc] sm:$0xf]
  %v100 = vld [vmem:[%s3 + $0x10] sm:$0xf]
  %v101 = vld [vmem:[%s3 + $0x14] sm:$0xf]
  %v102 = vld [vmem:[%s3 + $0x18] sm:$0xf]
  %v103 = vld [vmem:[%s3 + $0x1c] sm:$0xf]
  %v104 = vld [vmem:[%s3 + $0x20] sm:$0xf]
  %v105 = vld [vmem:[%s3 + $0x24] sm:$0xf]
  %v106 = vld [vmem:[%s3 + $0x28] sm:$0xf]
  %v107 = vld [vmem:[%s3 + $0x2c] sm:$0xf]
  %v108 = vld [vmem:[%s3 + $0x30] sm:$0xf]
  %v109 = vld [vmem:[%s3 + $0x34] sm:$0xf]
  %v110 = vld [vmem:[%s3 + $0x38] sm:$0xf]
  %v111 = vld [vmem:[%s3 + $0x3c] sm:$0xf]
  %v112 = vld [vmem:[%s4] sm:$0x1]
  %v113 = vld [vmem:[%s4 + $0x1] sm:$0x1]
  %v114 = vld [vmem:[%s4 + $0x2] sm:$0x1]
  %v115 = vld [vmem:[%s4 + $0x3] sm:$0x1]
  %v120 = vlaneseq
  %v121 = vshrl.u32 %v120, 7
  %v122 = vsub.s32 0, %v121
  %v123 = vrot.slane %v112, %v122
  %v124 = vlaneseq
  %v125 = vshrl.u32 %v124, 7
  %v126 = vsub.s32 0, %v125
  %v127 = vrot.slane %v113, %v126
  %v128 = vlaneseq
  %v129 = vshrl.u32 %v128, 7
  %v130 = vsub.s32 0, %v129
  %v131 = vrot.slane %v114, %v130
  %v132 = vlaneseq
  %v133 = vshrl.u32 %v132, 7
  %v134 = vsub.s32 0, %v133
  %v135 = vrot.slane %v115, %v134
  %v144 = vunpack.c.l.b16 %v96
  %v145 = vunpack.c.l.b16 %v97
  %v146 = vunpack.c.l.b16 %v98
  %v147 = vunpack.c.l.b16 %v99
  %v148 = vpack.c.b16 %v145, %v144
  %v149 = vpack.c.b16 %v147, %v146
  %v153 = vsel %vm66, %v95, 0
  %155 = vmatprep.subr.bf16.mxu0 0
  %156 = vmatpush1.bf16.msra.mxu0 0
  %157 = vmatprep.subr.bf16.mxu0 0
  %158 = vmatpush1.bf16.msra.mxu0 0
  %159 = vmatprep.subr.bf16.mxu0 0
  %160 = vmatpush1.bf16.msra.mxu0 0
  %161 = vmatprep.subr.bf16.mxu0 0
  %162 = vmatpush1.bf16.msra.mxu0 0
  %163 = vmatprep.subr.bf16.mxu0 0
  %164 = vmatpush1.bf16.msra.mxu0 0
  %165 = vmatprep.subr.bf16.mxu0 0
  %166 = vmatpush1.bf16.msra.mxu0 0
  %167 = vmatprep.subr.bf16.mxu0 0
  %168 = vmatpush1.bf16.msra.mxu0 %v149
  %169 = vmatprep.subr.bf16.mxu0 0
  %170 = vmatpush1.bf16.msra.mxu0 %v148
  %171 = vmatprep.subr.bf16.mxu0 0
  %172 = vmatpush2.bf16.msra.mxu0 0
  %173 = vmatprep.subr.bf16.mxu0 0
  %174 = vmatpush2.bf16.msra.mxu0 0
  %175 = vmatprep.subr.bf16.mxu0 0
  %176 = vmatpush2.bf16.msra.mxu0 0
  %177 = vmatprep.subr.bf16.mxu0 0
  %178 = vmatpush2.bf16.msra.mxu0 0
  %179 = vmatprep.subr.bf16.mxu0 0
  %180 = vmatpush2.bf16.msra.mxu0 0
  %181 = vmatprep.subr.bf16.mxu0 0
  %182 = vmatpush2.bf16.msra.mxu0 0
  %183 = vmatprep.subr.bf16.mxu0 0
  %184 = vmatpush2.bf16.msra.mxu0 0
  %185 = vmatprep.subr.bf16.mxu0 0
  %186 = vmatpush2.bf16.msra.mxu0 0
  %187 = vmatprep.mubr.bf16.mxu0 0
  %188 = vmatmul.mubr.bf16.gmra.mxu0 %v153
  %v189 = vpop.f32.mrf.mxu0
  %v190 = vadd.f32 %v123, %v189
  %v191 = vpop.f32.mrf.mxu0
  %v192 = vpop.f32.mrf.mxu0
  %v193 = vpop.f32.mrf.mxu0
  %194 = vdwg.mxu0
  %v199 = vunpack.c.l.b16 %v100
  %v200 = vunpack.c.l.b16 %v101
  %v201 = vunpack.c.l.b16 %v102
  %v202 = vunpack.c.l.b16 %v103
  %v203 = vpack.c.b16 %v200, %v199
  %v204 = vpack.c.b16 %v202, %v201
  %207 = vmatprep.subr.bf16.mxu0 0
  %208 = vmatpush1.bf16.msra.mxu0 0
  %209 = vmatprep.subr.bf16.mxu0 0
  %210 = vmatpush1.bf16.msra.mxu0 0
  %211 = vmatprep.subr.bf16.mxu0 0
  %212 = vmatpush1.bf16.msra.mxu0 0
  %213 = vmatprep.subr.bf16.mxu0 0
  %214 = vmatpush1.bf16.msra.mxu0 0
  %215 = vmatprep.subr.bf16.mxu0 0
  %216 = vmatpush1.bf16.msra.mxu0 0
  %217 = vmatprep.subr.bf16.mxu0 0
  %218 = vmatpush1.bf16.msra.mxu0 0
  %219 = vmatprep.subr.bf16.mxu0 0
  %220 = vmatpush1.bf16.msra.mxu0 %v204
  %221 = vmatprep.subr.bf16.mxu0 0
  %222 = vmatpush1.bf16.msra.mxu0 %v203
  %223 = vmatprep.subr.bf16.mxu0 0
  %224 = vmatpush2.bf16.msra.mxu0 0
  %225 = vmatprep.subr.bf16.mxu0 0
  %226 = vmatpush2.bf16.msra.mxu0 0
  %227 = vmatprep.subr.bf16.mxu0 0
  %228 = vmatpush2.bf16.msra.mxu0 0
  %229 = vmatprep.subr.bf16.mxu0 0
  %230 = vmatpush2.bf16.msra.mxu0 0
  %231 = vmatprep.subr.bf16.mxu0 0
  %232 = vmatpush2.bf16.msra.mxu0 0
  %233 = vmatprep.subr.bf16.mxu0 0
  %234 = vmatpush2.bf16.msra.mxu0 0
  %235 = vmatprep.subr.bf16.mxu0 0
  %236 = vmatpush2.bf16.msra.mxu0 0
  %237 = vmatprep.subr.bf16.mxu0 0
  %238 = vmatpush2.bf16.msra.mxu0 0
  %239 = vmatprep.mubr.bf16.mxu0 0
  %240 = vmatmul.mubr.bf16.gmra.mxu0 %v153
  %v241 = vpop.f32.mrf.mxu0
  %v242 = vadd.f32 %v127, %v241
  %v243 = vpop.f32.mrf.mxu0
  %v244 = vpop.f32.mrf.mxu0
  %v245 = vpop.f32.mrf.mxu0
  %246 = vdwg.mxu0
  %v251 = vunpack.c.l.b16 %v104
  %v252 = vunpack.c.l.b16 %v105
  %v253 = vunpack.c.l.b16 %v106
  %v254 = vunpack.c.l.b16 %v107
  %v255 = vpack.c.b16 %v252, %v251
  %v256 = vpack.c.b16 %v254, %v253
  %259 = vmatprep.subr.bf16.mxu0 0
  %260 = vmatpush1.bf16.msra.mxu0 0
  %261 = vmatprep.subr.bf16.mxu0 0
  %262 = vmatpush1.bf16.msra.mxu0 0
  %263 = vmatprep.subr.bf16.mxu0 0
  %264 = vmatpush1.bf16.msra.mxu0 0
  %265 = vmatprep.subr.bf16.mxu0 0
  %266 = vmatpush1.bf16.msra.mxu0 0
  %267 = vmatprep.subr.bf16.mxu0 0
  %268 = vmatpush1.bf16.msra.mxu0 0
  %269 = vmatprep.subr.bf16.mxu0 0
  %270 = vmatpush1.bf16.msra.mxu0 0
  %271 = vmatprep.subr.bf16.mxu0 0
  %272 = vmatpush1.bf16.msra.mxu0 %v256
  %273 = vmatprep.subr.bf16.mxu0 0
  %274 = vmatpush1.bf16.msra.mxu0 %v255
  %275 = vmatprep.subr.bf16.mxu0 0
  %276 = vmatpush2.bf16.msra.mxu0 0
  %277 = vmatprep.subr.bf16.mxu0 0
  %278 = vmatpush2.bf16.msra.mxu0 0
  %279 = vmatprep.subr.bf16.mxu0 0
  %280 = vmatpush2.bf16.msra.mxu0 0
  %281 = vmatprep.subr.bf16.mxu0 0
  %282 = vmatpush2.bf16.msra.mxu0 0
  %283 = vmatprep.subr.bf16.mxu0 0
  %284 = vmatpush2.bf16.msra.mxu0 0
  %285 = vmatprep.subr.bf16.mxu0 0
  %286 = vmatpush2.bf16.msra.mxu0 0
  %287 = vmatprep.subr.bf16.mxu0 0
  %288 = vmatpush2.bf16.msra.mxu0 0
  %289 = vmatprep.subr.bf16.mxu0 0
  %290 = vmatpush2.bf16.msra.mxu0 0
  %291 = vmatprep.mubr.bf16.mxu0 0
  %292 = vmatmul.mubr.bf16.gmra.mxu0 %v153
  %v293 = vpop.f32.mrf.mxu0
  %v294 = vadd.f32 %v131, %v293
  %v295 = vpop.f32.mrf.mxu0
  %v296 = vpop.f32.mrf.mxu0
  %v297 = vpop.f32.mrf.mxu0
  %298 = vdwg.mxu0
  %v303 = vunpack.c.l.b16 %v108
  %v304 = vunpack.c.l.b16 %v109
  %v305 = vunpack.c.l.b16 %v110
  %v306 = vunpack.c.l.b16 %v111
  %v307 = vpack.c.b16 %v304, %v303
  %v308 = vpack.c.b16 %v306, %v305
  %311 = vmatprep.subr.bf16.mxu0 0
  %312 = vmatpush1.bf16.msra.mxu0 0
  %313 = vmatprep.subr.bf16.mxu0 0
  %314 = vmatpush1.bf16.msra.mxu0 0
  %315 = vmatprep.subr.bf16.mxu0 0
  %316 = vmatpush1.bf16.msra.mxu0 0
  %317 = vmatprep.subr.bf16.mxu0 0
  %318 = vmatpush1.bf16.msra.mxu0 0
  %319 = vmatprep.subr.bf16.mxu0 0
  %320 = vmatpush1.bf16.msra.mxu0 0
  %321 = vmatprep.subr.bf16.mxu0 0
  %322 = vmatpush1.bf16.msra.mxu0 0
  %323 = vmatprep.subr.bf16.mxu0 0
  %324 = vmatpush1.bf16.msra.mxu0 %v308
  %325 = vmatprep.subr.bf16.mxu0 0
  %326 = vmatpush1.bf16.msra.mxu0 %v307
  %327 = vmatprep.subr.bf16.mxu0 0
  %328 = vmatpush2.bf16.msra.mxu0 0
  %329 = vmatprep.subr.bf16.mxu0 0
  %330 = vmatpush2.bf16.msra.mxu0 0
  %331 = vmatprep.subr.bf16.mxu0 0
  %332 = vmatpush2.bf16.msra.mxu0 0
  %333 = vmatprep.subr.bf16.mxu0 0
  %334 = vmatpush2.bf16.msra.mxu0 0
  %335 = vmatprep.subr.bf16.mxu0 0
  %336 = vmatpush2.bf16.msra.mxu0 0
  %337 = vmatprep.subr.bf16.mxu0 0
  %338 = vmatpush2.bf16.msra.mxu0 0
  %339 = vmatprep.subr.bf16.mxu0 0
  %340 = vmatpush2.bf16.msra.mxu0 0
  %341 = vmatprep.subr.bf16.mxu0 0
  %342 = vmatpush2.bf16.msra.mxu0 0
  %343 = vmatprep.mubr.bf16.mxu0 0
  %344 = vmatmul.mubr.bf16.gmra.mxu0 %v153
  %v345 = vpop.f32.mrf.mxu0
  %v346 = vadd.f32 %v135, %v345
  %v347 = vpop.f32.mrf.mxu0
  %v348 = vpop.f32.mrf.mxu0
  %v349 = vpop.f32.mrf.mxu0
  %350 = vdwg.mxu0
  %v351 = vld [vmem:[%s5] sm:$0xf]
  %v352 = vld [vmem:[%s5 + $0x4] sm:$0xf]
  %v353 = vld [vmem:[%s5 + $0x8] sm:$0xf]
  %v354 = vld [vmem:[%s5 + $0xc] sm:$0xf]
  %v355 = vld [vmem:[%s5 + $0x10] sm:$0xf]
  %v356 = vld [vmem:[%s5 + $0x14] sm:$0xf]
  %v357 = vld [vmem:[%s5 + $0x18] sm:$0xf]
  %v358 = vld [vmem:[%s5 + $0x1c] sm:$0xf]
  %v359 = vld [vmem:[%s5 + $0x20] sm:$0xf]
  %v360 = vld [vmem:[%s5 + $0x24] sm:$0xf]
  %v361 = vld [vmem:[%s5 + $0x28] sm:$0xf]
  %v362 = vld [vmem:[%s5 + $0x2c] sm:$0xf]
  %v363 = vld [vmem:[%s5 + $0x30] sm:$0xf]
  %v364 = vld [vmem:[%s5 + $0x34] sm:$0xf]
  %v365 = vld [vmem:[%s5 + $0x38] sm:$0xf]
  %v366 = vld [vmem:[%s5 + $0x3c] sm:$0xf]
  %v367 = vld [vmem:[%s6] sm:$0x1]
  %v368 = vld [vmem:[%s6 + $0x1] sm:$0x1]
  %v369 = vld [vmem:[%s6 + $0x2] sm:$0x1]
  %v370 = vld [vmem:[%s6 + $0x3] sm:$0x1]
  %v375 = vlaneseq
  %v376 = vshrl.u32 %v375, 7
  %v377 = vsub.s32 0, %v376
  %v378 = vrot.slane %v367, %v377
  %v379 = vlaneseq
  %v380 = vshrl.u32 %v379, 7
  %v381 = vsub.s32 0, %v380
  %v382 = vrot.slane %v368, %v381
  %v383 = vlaneseq
  %v384 = vshrl.u32 %v383, 7
  %v385 = vsub.s32 0, %v384
  %v386 = vrot.slane %v369, %v385
  %v387 = vlaneseq
  %v388 = vshrl.u32 %v387, 7
  %v389 = vsub.s32 0, %v388
  %v390 = vrot.slane %v370, %v389
  %v399 = vunpack.c.l.b16 %v351
  %v400 = vunpack.c.l.b16 %v352
  %v401 = vunpack.c.l.b16 %v353
  %v402 = vunpack.c.l.b16 %v354
  %v403 = vpack.c.b16 %v400, %v399
  %v404 = vpack.c.b16 %v402, %v401
  %407 = vmatprep.subr.bf16.mxu0 0
  %408 = vmatpush1.bf16.msra.mxu0 0
  %409 = vmatprep.subr.bf16.mxu0 0
  %410 = vmatpush1.bf16.msra.mxu0 0
  %411 = vmatprep.subr.bf16.mxu0 0
  %412 = vmatpush1.bf16.msra.mxu0 0
  %413 = vmatprep.subr.bf16.mxu0 0
  %414 = vmatpush1.bf16.msra.mxu0 0
  %415 = vmatprep.subr.bf16.mxu0 0
  %416 = vmatpush1.bf16.msra.mxu0 0
  %417 = vmatprep.subr.bf16.mxu0 0
  %418 = vmatpush1.bf16.msra.mxu0 0
  %419 = vmatprep.subr.bf16.mxu0 0
  %420 = vmatpush1.bf16.msra.mxu0 %v404
  %421 = vmatprep.subr.bf16.mxu0 0
  %422 = vmatpush1.bf16.msra.mxu0 %v403
  %423 = vmatprep.subr.bf16.mxu0 0
  %424 = vmatpush2.bf16.msra.mxu0 0
  %425 = vmatprep.subr.bf16.mxu0 0
  %426 = vmatpush2.bf16.msra.mxu0 0
  %427 = vmatprep.subr.bf16.mxu0 0
  %428 = vmatpush2.bf16.msra.mxu0 0
  %429 = vmatprep.subr.bf16.mxu0 0
  %430 = vmatpush2.bf16.msra.mxu0 0
  %431 = vmatprep.subr.bf16.mxu0 0
  %432 = vmatpush2.bf16.msra.mxu0 0
  %433 = vmatprep.subr.bf16.mxu0 0
  %434 = vmatpush2.bf16.msra.mxu0 0
  %435 = vmatprep.subr.bf16.mxu0 0
  %436 = vmatpush2.bf16.msra.mxu0 0
  %437 = vmatprep.subr.bf16.mxu0 0
  %438 = vmatpush2.bf16.msra.mxu0 0
  %439 = vmatprep.mubr.bf16.mxu0 0
  %440 = vmatmul.mubr.bf16.gmra.mxu0 %v153
  %v441 = vpop.f32.mrf.mxu0
  %v442 = vadd.f32 %v378, %v441
  %v443 = vpop.f32.mrf.mxu0
  %v444 = vpop.f32.mrf.mxu0
  %v445 = vpop.f32.mrf.mxu0
  %446 = vdwg.mxu0
  %v451 = vunpack.c.l.b16 %v355
  %v452 = vunpack.c.l.b16 %v356
  %v453 = vunpack.c.l.b16 %v357
  %v454 = vunpack.c.l.b16 %v358
  %v455 = vpack.c.b16 %v452, %v451
  %v456 = vpack.c.b16 %v454, %v453
  %459 = vmatprep.subr.bf16.mxu0 0
  %460 = vmatpush1.bf16.msra.mxu0 0
  %461 = vmatprep.subr.bf16.mxu0 0
  %462 = vmatpush1.bf16.msra.mxu0 0
  %463 = vmatprep.subr.bf16.mxu0 0
  %464 = vmatpush1.bf16.msra.mxu0 0
  %465 = vmatprep.subr.bf16.mxu0 0
  %466 = vmatpush1.bf16.msra.mxu0 0
  %467 = vmatprep.subr.bf16.mxu0 0
  %468 = vmatpush1.bf16.msra.mxu0 0
  %469 = vmatprep.subr.bf16.mxu0 0
  %470 = vmatpush1.bf16.msra.mxu0 0
  %471 = vmatprep.subr.bf16.mxu0 0
  %472 = vmatpush1.bf16.msra.mxu0 %v456
  %473 = vmatprep.subr.bf16.mxu0 0
  %474 = vmatpush1.bf16.msra.mxu0 %v455
  %475 = vmatprep.subr.bf16.mxu0 0
  %476 = vmatpush2.bf16.msra.mxu0 0
  %477 = vmatprep.subr.bf16.mxu0 0
  %478 = vmatpush2.bf16.msra.mxu0 0
  %479 = vmatprep.subr.bf16.mxu0 0
  %480 = vmatpush2.bf16.msra.mxu0 0
  %481 = vmatprep.subr.bf16.mxu0 0
  %482 = vmatpush2.bf16.msra.mxu0 0
  %483 = vmatprep.subr.bf16.mxu0 0
  %484 = vmatpush2.bf16.msra.mxu0 0
  %485 = vmatprep.subr.bf16.mxu0 0
  %486 = vmatpush2.bf16.msra.mxu0 0
  %487 = vmatprep.subr.bf16.mxu0 0
  %488 = vmatpush2.bf16.msra.mxu0 0
  %489 = vmatprep.subr.bf16.mxu0 0
  %490 = vmatpush2.bf16.msra.mxu0 0
  %491 = vmatprep.mubr.bf16.mxu0 0
  %492 = vmatmul.mubr.bf16.gmra.mxu0 %v153
  %v493 = vpop.f32.mrf.mxu0
  %v494 = vadd.f32 %v382, %v493
  %v495 = vpop.f32.mrf.mxu0
  %v496 = vpop.f32.mrf.mxu0
  %v497 = vpop.f32.mrf.mxu0
  %498 = vdwg.mxu0
  %v503 = vunpack.c.l.b16 %v359
  %v504 = vunpack.c.l.b16 %v360
  %v505 = vunpack.c.l.b16 %v361
  %v506 = vunpack.c.l.b16 %v362
  %v507 = vpack.c.b16 %v504, %v503
  %v508 = vpack.c.b16 %v506, %v505
  %511 = vmatprep.subr.bf16.mxu0 0
  %512 = vmatpush1.bf16.msra.mxu0 0
  %513 = vmatprep.subr.bf16.mxu0 0
  %514 = vmatpush1.bf16.msra.mxu0 0
  %515 = vmatprep.subr.bf16.mxu0 0
  %516 = vmatpush1.bf16.msra.mxu0 0
  %517 = vmatprep.subr.bf16.mxu0 0
  %518 = vmatpush1.bf16.msra.mxu0 0
  %519 = vmatprep.subr.bf16.mxu0 0
  %520 = vmatpush1.bf16.msra.mxu0 0
  %521 = vmatprep.subr.bf16.mxu0 0
  %522 = vmatpush1.bf16.msra.mxu0 0
  %523 = vmatprep.subr.bf16.mxu0 0
  %524 = vmatpush1.bf16.msra.mxu0 %v508
  %525 = vmatprep.subr.bf16.mxu0 0
  %526 = vmatpush1.bf16.msra.mxu0 %v507
  %527 = vmatprep.subr.bf16.mxu0 0
  %528 = vmatpush2.bf16.msra.mxu0 0
  %529 = vmatprep.subr.bf16.mxu0 0
  %530 = vmatpush2.bf16.msra.mxu0 0
  %531 = vmatprep.subr.bf16.mxu0 0
  %532 = vmatpush2.bf16.msra.mxu0 0
  %533 = vmatprep.subr.bf16.mxu0 0
  %534 = vmatpush2.bf16.msra.mxu0 0
  %535 = vmatprep.subr.bf16.mxu0 0
  %536 = vmatpush2.bf16.msra.mxu0 0
  %537 = vmatprep.subr.bf16.mxu0 0
  %538 = vmatpush2.bf16.msra.mxu0 0
  %539 = vmatprep.subr.bf16.mxu0 0
  %540 = vmatpush2.bf16.msra.mxu0 0
  %541 = vmatprep.subr.bf16.mxu0 0
  %542 = vmatpush2.bf16.msra.mxu0 0
  %543 = vmatprep.mubr.bf16.mxu0 0
  %544 = vmatmul.mubr.bf16.gmra.mxu0 %v153
  %v545 = vpop.f32.mrf.mxu0
  %v546 = vadd.f32 %v386, %v545
  %v547 = vpop.f32.mrf.mxu0
  %v548 = vpop.f32.mrf.mxu0
  %v549 = vpop.f32.mrf.mxu0
  %550 = vdwg.mxu0
  %v555 = vunpack.c.l.b16 %v363
  %v556 = vunpack.c.l.b16 %v364
  %v557 = vunpack.c.l.b16 %v365
  %v558 = vunpack.c.l.b16 %v366
  %v559 = vpack.c.b16 %v556, %v555
  %v560 = vpack.c.b16 %v558, %v557
  %563 = vmatprep.subr.bf16.mxu0 0
  %564 = vmatpush1.bf16.msra.mxu0 0
  %565 = vmatprep.subr.bf16.mxu0 0
  %566 = vmatpush1.bf16.msra.mxu0 0
  %567 = vmatprep.subr.bf16.mxu0 0
  %568 = vmatpush1.bf16.msra.mxu0 0
  %569 = vmatprep.subr.bf16.mxu0 0
  %570 = vmatpush1.bf16.msra.mxu0 0
  %571 = vmatprep.subr.bf16.mxu0 0
  %572 = vmatpush1.bf16.msra.mxu0 0
  %573 = vmatprep.subr.bf16.mxu0 0
  %574 = vmatpush1.bf16.msra.mxu0 0
  %575 = vmatprep.subr.bf16.mxu0 0
  %576 = vmatpush1.bf16.msra.mxu0 %v560
  %577 = vmatprep.subr.bf16.mxu0 0
  %578 = vmatpush1.bf16.msra.mxu0 %v559
  %579 = vmatprep.subr.bf16.mxu0 0
  %580 = vmatpush2.bf16.msra.mxu0 0
  %581 = vmatprep.subr.bf16.mxu0 0
  %582 = vmatpush2.bf16.msra.mxu0 0
  %583 = vmatprep.subr.bf16.mxu0 0
  %584 = vmatpush2.bf16.msra.mxu0 0
  %585 = vmatprep.subr.bf16.mxu0 0
  %586 = vmatpush2.bf16.msra.mxu0 0
  %587 = vmatprep.subr.bf16.mxu0 0
  %588 = vmatpush2.bf16.msra.mxu0 0
  %589 = vmatprep.subr.bf16.mxu0 0
  %590 = vmatpush2.bf16.msra.mxu0 0
  %591 = vmatprep.subr.bf16.mxu0 0
  %592 = vmatpush2.bf16.msra.mxu0 0
  %593 = vmatprep.subr.bf16.mxu0 0
  %594 = vmatpush2.bf16.msra.mxu0 0
  %595 = vmatprep.mubr.bf16.mxu0 0
  %596 = vmatmul.mubr.bf16.gmra.mxu0 %v153
  %v597 = vpop.f32.mrf.mxu0
  %v598 = vadd.f32 %v390, %v597
  %v599 = vpop.f32.mrf.mxu0
  %v600 = vpop.f32.mrf.mxu0
  %v601 = vpop.f32.mrf.mxu0
  %602 = vdwg.mxu0
  %v603 = vld [vmem:[%s7] sm:$0xf]
  %v604 = vld [vmem:[%s7 + $0x4] sm:$0xf]
  %v605 = vld [vmem:[%s7 + $0x8] sm:$0xf]
  %v606 = vld [vmem:[%s7 + $0xc] sm:$0xf]
  %v607 = vld [vmem:[%s7 + $0x10] sm:$0xf]
  %v608 = vld [vmem:[%s7 + $0x14] sm:$0xf]
  %v609 = vld [vmem:[%s7 + $0x18] sm:$0xf]
  %v610 = vld [vmem:[%s7 + $0x1c] sm:$0xf]
  %v611 = vld [vmem:[%s7 + $0x20] sm:$0xf]
  %v612 = vld [vmem:[%s7 + $0x24] sm:$0xf]
  %v613 = vld [vmem:[%s7 + $0x28] sm:$0xf]
  %v614 = vld [vmem:[%s7 + $0x2c] sm:$0xf]
  %v615 = vld [vmem:[%s7 + $0x30] sm:$0xf]
  %v616 = vld [vmem:[%s7 + $0x34] sm:$0xf]
  %v617 = vld [vmem:[%s7 + $0x38] sm:$0xf]
  %v618 = vld [vmem:[%s7 + $0x3c] sm:$0xf]
  %v619 = vld [vmem:[%s8] sm:$0x1]
  %v620 = vld [vmem:[%s8 + $0x1] sm:$0x1]
  %v621 = vld [vmem:[%s8 + $0x2] sm:$0x1]
  %v622 = vld [vmem:[%s8 + $0x3] sm:$0x1]
  %v627 = vlaneseq
  %v628 = vshrl.u32 %v627, 7
  %v629 = vsub.s32 0, %v628
  %v630 = vrot.slane %v619, %v629
  %v631 = vlaneseq
  %v632 = vshrl.u32 %v631, 7
  %v633 = vsub.s32 0, %v632
  %v634 = vrot.slane %v620, %v633
  %v635 = vlaneseq
  %v636 = vshrl.u32 %v635, 7
  %v637 = vsub.s32 0, %v636
  %v638 = vrot.slane %v621, %v637
  %v639 = vlaneseq
  %v640 = vshrl.u32 %v639, 7
  %v641 = vsub.s32 0, %v640
  %v642 = vrot.slane %v622, %v641
  %v651 = vunpack.c.l.b16 %v603
  %v652 = vunpack.c.l.b16 %v604
  %v653 = vunpack.c.l.b16 %v605
  %v654 = vunpack.c.l.b16 %v606
  %v655 = vpack.c.b16 %v652, %v651
  %v656 = vpack.c.b16 %v654, %v653
  %659 = vmatprep.subr.bf16.mxu0 0
  %660 = vmatpush1.bf16.msra.mxu0 0
  %661 = vmatprep.subr.bf16.mxu0 0
  %662 = vmatpush1.bf16.msra.mxu0 0
  %663 = vmatprep.subr.bf16.mxu0 0
  %664 = vmatpush1.bf16.msra.mxu0 0
  %665 = vmatprep.subr.bf16.mxu0 0
  %666 = vmatpush1.bf16.msra.mxu0 0
  %667 = vmatprep.subr.bf16.mxu0 0
  %668 = vmatpush1.bf16.msra.mxu0 0
  %669 = vmatprep.subr.bf16.mxu0 0
  %670 = vmatpush1.bf16.msra.mxu0 0
  %671 = vmatprep.subr.bf16.mxu0 0
  %672 = vmatpush1.bf16.msra.mxu0 %v656
  %673 = vmatprep.subr.bf16.mxu0 0
  %674 = vmatpush1.bf16.msra.mxu0 %v655
  %675 = vmatprep.subr.bf16.mxu0 0
  %676 = vmatpush2.bf16.msra.mxu0 0
  %677 = vmatprep.subr.bf16.mxu0 0
  %678 = vmatpush2.bf16.msra.mxu0 0
  %679 = vmatprep.subr.bf16.mxu0 0
  %680 = vmatpush2.bf16.msra.mxu0 0
  %681 = vmatprep.subr.bf16.mxu0 0
  %682 = vmatpush2.bf16.msra.mxu0 0
  %683 = vmatprep.subr.bf16.mxu0 0
  %684 = vmatpush2.bf16.msra.mxu0 0
  %685 = vmatprep.subr.bf16.mxu0 0
  %686 = vmatpush2.bf16.msra.mxu0 0
  %687 = vmatprep.subr.bf16.mxu0 0
  %688 = vmatpush2.bf16.msra.mxu0 0
  %689 = vmatprep.subr.bf16.mxu0 0
  %690 = vmatpush2.bf16.msra.mxu0 0
  %691 = vmatprep.mubr.bf16.mxu0 0
  %692 = vmatmul.mubr.bf16.gmra.mxu0 %v153
  %v693 = vpop.f32.mrf.mxu0
  %v694 = vadd.f32 %v630, %v693
  %v695 = vpop.f32.mrf.mxu0
  %v696 = vpop.f32.mrf.mxu0
  %v697 = vpop.f32.mrf.mxu0
  %698 = vdwg.mxu0
  %v703 = vunpack.c.l.b16 %v607
  %v704 = vunpack.c.l.b16 %v608
  %v705 = vunpack.c.l.b16 %v609
  %v706 = vunpack.c.l.b16 %v610
  %v707 = vpack.c.b16 %v704, %v703
  %v708 = vpack.c.b16 %v706, %v705
  %711 = vmatprep.subr.bf16.mxu0 0
  %712 = vmatpush1.bf16.msra.mxu0 0
  %713 = vmatprep.subr.bf16.mxu0 0
  %714 = vmatpush1.bf16.msra.mxu0 0
  %715 = vmatprep.subr.bf16.mxu0 0
  %716 = vmatpush1.bf16.msra.mxu0 0
  %717 = vmatprep.subr.bf16.mxu0 0
  %718 = vmatpush1.bf16.msra.mxu0 0
  %719 = vmatprep.subr.bf16.mxu0 0
  %720 = vmatpush1.bf16.msra.mxu0 0
  %721 = vmatprep.subr.bf16.mxu0 0
  %722 = vmatpush1.bf16.msra.mxu0 0
  %723 = vmatprep.subr.bf16.mxu0 0
  %724 = vmatpush1.bf16.msra.mxu0 %v708
  %725 = vmatprep.subr.bf16.mxu0 0
  %726 = vmatpush1.bf16.msra.mxu0 %v707
  %727 = vmatprep.subr.bf16.mxu0 0
  %728 = vmatpush2.bf16.msra.mxu0 0
  %729 = vmatprep.subr.bf16.mxu0 0
  %730 = vmatpush2.bf16.msra.mxu0 0
  %731 = vmatprep.subr.bf16.mxu0 0
  %732 = vmatpush2.bf16.msra.mxu0 0
  %733 = vmatprep.subr.bf16.mxu0 0
  %734 = vmatpush2.bf16.msra.mxu0 0
  %735 = vmatprep.subr.bf16.mxu0 0
  %736 = vmatpush2.bf16.msra.mxu0 0
  %737 = vmatprep.subr.bf16.mxu0 0
  %738 = vmatpush2.bf16.msra.mxu0 0
  %739 = vmatprep.subr.bf16.mxu0 0
  %740 = vmatpush2.bf16.msra.mxu0 0
  %741 = vmatprep.subr.bf16.mxu0 0
  %742 = vmatpush2.bf16.msra.mxu0 0
  %743 = vmatprep.mubr.bf16.mxu0 0
  %744 = vmatmul.mubr.bf16.gmra.mxu0 %v153
  %v745 = vpop.f32.mrf.mxu0
  %v746 = vadd.f32 %v634, %v745
  %v747 = vpop.f32.mrf.mxu0
  %v748 = vpop.f32.mrf.mxu0
  %v749 = vpop.f32.mrf.mxu0
  %750 = vdwg.mxu0
  %v755 = vunpack.c.l.b16 %v611
  %v756 = vunpack.c.l.b16 %v612
  %v757 = vunpack.c.l.b16 %v613
  %v758 = vunpack.c.l.b16 %v614
  %v759 = vpack.c.b16 %v756, %v755
  %v760 = vpack.c.b16 %v758, %v757
  %763 = vmatprep.subr.bf16.mxu0 0
  %764 = vmatpush1.bf16.msra.mxu0 0
  %765 = vmatprep.subr.bf16.mxu0 0
  %766 = vmatpush1.bf16.msra.mxu0 0
  %767 = vmatprep.subr.bf16.mxu0 0
  %768 = vmatpush1.bf16.msra.mxu0 0
  %769 = vmatprep.subr.bf16.mxu0 0
  %770 = vmatpush1.bf16.msra.mxu0 0
  %771 = vmatprep.subr.bf16.mxu0 0
  %772 = vmatpush1.bf16.msra.mxu0 0
  %773 = vmatprep.subr.bf16.mxu0 0
  %774 = vmatpush1.bf16.msra.mxu0 0
  %775 = vmatprep.subr.bf16.mxu0 0
  %776 = vmatpush1.bf16.msra.mxu0 %v760
  %777 = vmatprep.subr.bf16.mxu0 0
  %778 = vmatpush1.bf16.msra.mxu0 %v759
  %779 = vmatprep.subr.bf16.mxu0 0
  %780 = vmatpush2.bf16.msra.mxu0 0
  %781 = vmatprep.subr.bf16.mxu0 0
  %782 = vmatpush2.bf16.msra.mxu0 0
  %783 = vmatprep.subr.bf16.mxu0 0
  %784 = vmatpush2.bf16.msra.mxu0 0
  %785 = vmatprep.subr.bf16.mxu0 0
  %786 = vmatpush2.bf16.msra.mxu0 0
  %787 = vmatprep.subr.bf16.mxu0 0
  %788 = vmatpush2.bf16.msra.mxu0 0
  %789 = vmatprep.subr.bf16.mxu0 0
  %790 = vmatpush2.bf16.msra.mxu0 0
  %791 = vmatprep.subr.bf16.mxu0 0
  %792 = vmatpush2.bf16.msra.mxu0 0
  %793 = vmatprep.subr.bf16.mxu0 0
  %794 = vmatpush2.bf16.msra.mxu0 0
  %795 = vmatprep.mubr.bf16.mxu0 0
  %796 = vmatmul.mubr.bf16.gmra.mxu0 %v153
  %v797 = vpop.f32.mrf.mxu0
  %v798 = vadd.f32 %v638, %v797
  %v799 = vpop.f32.mrf.mxu0
  %v800 = vpop.f32.mrf.mxu0
  %v801 = vpop.f32.mrf.mxu0
  %802 = vdwg.mxu0
  %v807 = vunpack.c.l.b16 %v615
  %v808 = vunpack.c.l.b16 %v616
  %v809 = vunpack.c.l.b16 %v617
  %v810 = vunpack.c.l.b16 %v618
  %v811 = vpack.c.b16 %v808, %v807
  %v812 = vpack.c.b16 %v810, %v809
  %815 = vmatprep.subr.bf16.mxu0 0
  %816 = vmatpush1.bf16.msra.mxu0 0
  %817 = vmatprep.subr.bf16.mxu0 0
  %818 = vmatpush1.bf16.msra.mxu0 0
  %819 = vmatprep.subr.bf16.mxu0 0
  %820 = vmatpush1.bf16.msra.mxu0 0
  %821 = vmatprep.subr.bf16.mxu0 0
  %822 = vmatpush1.bf16.msra.mxu0 0
  %823 = vmatprep.subr.bf16.mxu0 0
  %824 = vmatpush1.bf16.msra.mxu0 0
  %825 = vmatprep.subr.bf16.mxu0 0
  %826 = vmatpush1.bf16.msra.mxu0 0
  %827 = vmatprep.subr.bf16.mxu0 0
  %828 = vmatpush1.bf16.msra.mxu0 %v812
  %829 = vmatprep.subr.bf16.mxu0 0
  %830 = vmatpush1.bf16.msra.mxu0 %v811
  %831 = vmatprep.subr.bf16.mxu0 0
  %832 = vmatpush2.bf16.msra.mxu0 0
  %833 = vmatprep.subr.bf16.mxu0 0
  %834 = vmatpush2.bf16.msra.mxu0 0
  %835 = vmatprep.subr.bf16.mxu0 0
  %836 = vmatpush2.bf16.msra.mxu0 0
  %837 = vmatprep.subr.bf16.mxu0 0
  %838 = vmatpush2.bf16.msra.mxu0 0
  %839 = vmatprep.subr.bf16.mxu0 0
  %840 = vmatpush2.bf16.msra.mxu0 0
  %841 = vmatprep.subr.bf16.mxu0 0
  %842 = vmatpush2.bf16.msra.mxu0 0
  %843 = vmatprep.subr.bf16.mxu0 0
  %844 = vmatpush2.bf16.msra.mxu0 0
  %845 = vmatprep.subr.bf16.mxu0 0
  %846 = vmatpush2.bf16.msra.mxu0 0
  %847 = vmatprep.mubr.bf16.mxu0 0
  %848 = vmatmul.mubr.bf16.gmra.mxu0 %v153
  %v849 = vpop.f32.mrf.mxu0
  %v850 = vadd.f32 %v642, %v849
  %v851 = vpop.f32.mrf.mxu0
  %v852 = vpop.f32.mrf.mxu0
  %v853 = vpop.f32.mrf.mxu0
  %854 = vdwg.mxu0
  %v855 = vpack.c.bf16 %v190, %v190
  %v856 = vpack.c.bf16 %v242, %v242
  %v857 = vpack.c.bf16 %v294, %v294
  %v858 = vpack.c.bf16 %v346, %v346
  %v859 = vpack.c.bf16 %v442, %v442
  %v860 = vpack.c.bf16 %v494, %v494
  %v861 = vpack.c.bf16 %v546, %v546
  %v862 = vpack.c.bf16 %v598, %v598
  %vm863 = vcmask 64512
  %v865 = vsel %vm863, %v855, 0
  %v868 = vsel %vm863, %v859, 0
  %870 = vmatprep.subr.bf16.mxu0 0
  %871 = vmatpush1.bf16.xpose.msra.mxu0 0
  %872 = vmatprep.subr.bf16.mxu0 0
  %873 = vmatpush1.bf16.xpose.msra.mxu0 0
  %874 = vmatprep.subr.bf16.mxu0 0
  %875 = vmatpush1.bf16.xpose.msra.mxu0 0
  %876 = vmatprep.subr.bf16.mxu0 0
  %877 = vmatpush1.bf16.xpose.msra.mxu0 0
  %878 = vmatprep.subr.bf16.mxu0 0
  %879 = vmatpush1.bf16.xpose.msra.mxu0 0
  %880 = vmatprep.subr.bf16.mxu0 0
  %881 = vmatpush1.bf16.xpose.msra.mxu0 0
  %882 = vmatprep.subr.bf16.mxu0 0
  %883 = vmatpush1.bf16.xpose.msra.mxu0 0
  %884 = vmatprep.subr.bf16.mxu0 0
  %885 = vmatpush1.bf16.xpose.msra.mxu0 %v868
  %886 = vmatprep.subr.bf16.mxu0 0
  %887 = vmatpush2.bf16.xpose.msra.mxu0 0
  %888 = vmatprep.subr.bf16.mxu0 0
  %889 = vmatpush2.bf16.xpose.msra.mxu0 0
  %890 = vmatprep.subr.bf16.mxu0 0
  %891 = vmatpush2.bf16.xpose.msra.mxu0 0
  %892 = vmatprep.subr.bf16.mxu0 0
  %893 = vmatpush2.bf16.xpose.msra.mxu0 0
  %894 = vmatprep.subr.bf16.mxu0 0
  %895 = vmatpush2.bf16.xpose.msra.mxu0 0
  %896 = vmatprep.subr.bf16.mxu0 0
  %897 = vmatpush2.bf16.xpose.msra.mxu0 0
  %898 = vmatprep.subr.bf16.mxu0 0
  %899 = vmatpush2.bf16.xpose.msra.mxu0 0
  %900 = vmatprep.subr.bf16.mxu0 0
  %901 = vmatpush2.bf16.xpose.msra.mxu0 0
  %902 = vmatprep.mubr.bf16.mxu0 0
  %903 = vmatmul.mubr.bf16.gmra.mxu0 %v865
  %v904 = vpop.f32.mrf.mxu0
  %v905 = vadd.f32 0.0, %v904
  %v906 = vpop.f32.mrf.mxu0
  %v907 = vpop.f32.mrf.mxu0
  %v908 = vpop.f32.mrf.mxu0
  %909 = vdwg.mxu0
  %v911 = vsel %vm863, %v856, 0
  %v914 = vsel %vm863, %v860, 0
  %916 = vmatprep.subr.bf16.mxu0 0
  %917 = vmatpush1.bf16.xpose.msra.mxu0 0
  %918 = vmatprep.subr.bf16.mxu0 0
  %919 = vmatpush1.bf16.xpose.msra.mxu0 0
  %920 = vmatprep.subr.bf16.mxu0 0
  %921 = vmatpush1.bf16.xpose.msra.mxu0 0
  %922 = vmatprep.subr.bf16.mxu0 0
  %923 = vmatpush1.bf16.xpose.msra.mxu0 0
  %924 = vmatprep.subr.bf16.mxu0 0
  %925 = vmatpush1.bf16.xpose.msra.mxu0 0
  %926 = vmatprep.subr.bf16.mxu0 0
  %927 = vmatpush1.bf16.xpose.msra.mxu0 0
  %928 = vmatprep.subr.bf16.mxu0 0
  %929 = vmatpush1.bf16.xpose.msra.mxu0 0
  %930 = vmatprep.subr.bf16.mxu0 0
  %931 = vmatpush1.bf16.xpose.msra.mxu0 %v914
  %932 = vmatprep.subr.bf16.mxu0 0
  %933 = vmatpush2.bf16.xpose.msra.mxu0 0
  %934 = vmatprep.subr.bf16.mxu0 0
  %935 = vmatpush2.bf16.xpose.msra.mxu0 0
  %936 = vmatprep.subr.bf16.mxu0 0
  %937 = vmatpush2.bf16.xpose.msra.mxu0 0
  %938 = vmatprep.subr.bf16.mxu0 0
  %939 = vmatpush2.bf16.xpose.msra.mxu0 0
  %940 = vmatprep.subr.bf16.mxu0 0
  %941 = vmatpush2.bf16.xpose.msra.mxu0 0
  %942 = vmatprep.subr.bf16.mxu0 0
  %943 = vmatpush2.bf16.xpose.msra.mxu0 0
  %944 = vmatprep.subr.bf16.mxu0 0
  %945 = vmatpush2.bf16.xpose.msra.mxu0 0
  %946 = vmatprep.subr.bf16.mxu0 0
  %947 = vmatpush2.bf16.xpose.msra.mxu0 0
  %948 = vmatprep.mubr.bf16.mxu0 0
  %949 = vmatmul.mubr.bf16.gmra.mxu0 %v911
  %v950 = vpop.f32.mrf.mxu0
  %v951 = vadd.f32 0.0, %v950
  %v952 = vpop.f32.mrf.mxu0
  %v953 = vpop.f32.mrf.mxu0
  %v954 = vpop.f32.mrf.mxu0
  %955 = vdwg.mxu0
  %v957 = vsel %vm863, %v857, 0
  %v960 = vsel %vm863, %v861, 0
  %962 = vmatprep.subr.bf16.mxu0 0
  %963 = vmatpush1.bf16.xpose.msra.mxu0 0
  %964 = vmatprep.subr.bf16.mxu0 0
  %965 = vmatpush1.bf16.xpose.msra.mxu0 0
  %966 = vmatprep.subr.bf16.mxu0 0
  %967 = vmatpush1.bf16.xpose.msra.mxu0 0
  %968 = vmatprep.subr.bf16.mxu0 0
  %969 = vmatpush1.bf16.xpose.msra.mxu0 0
  %970 = vmatprep.subr.bf16.mxu0 0
  %971 = vmatpush1.bf16.xpose.msra.mxu0 0
  %972 = vmatprep.subr.bf16.mxu0 0
  %973 = vmatpush1.bf16.xpose.msra.mxu0 0
  %974 = vmatprep.subr.bf16.mxu0 0
  %975 = vmatpush1.bf16.xpose.msra.mxu0 0
  %976 = vmatprep.subr.bf16.mxu0 0
  %977 = vmatpush1.bf16.xpose.msra.mxu0 %v960
  %978 = vmatprep.subr.bf16.mxu0 0
  %979 = vmatpush2.bf16.xpose.msra.mxu0 0
  %980 = vmatprep.subr.bf16.mxu0 0
  %981 = vmatpush2.bf16.xpose.msra.mxu0 0
  %982 = vmatprep.subr.bf16.mxu0 0
  %983 = vmatpush2.bf16.xpose.msra.mxu0 0
  %984 = vmatprep.subr.bf16.mxu0 0
  %985 = vmatpush2.bf16.xpose.msra.mxu0 0
  %986 = vmatprep.subr.bf16.mxu0 0
  %987 = vmatpush2.bf16.xpose.msra.mxu0 0
  %988 = vmatprep.subr.bf16.mxu0 0
  %989 = vmatpush2.bf16.xpose.msra.mxu0 0
  %990 = vmatprep.subr.bf16.mxu0 0
  %991 = vmatpush2.bf16.xpose.msra.mxu0 0
  %992 = vmatprep.subr.bf16.mxu0 0
  %993 = vmatpush2.bf16.xpose.msra.mxu0 0
  %994 = vmatprep.mubr.bf16.mxu0 0
  %995 = vmatmul.mubr.bf16.gmra.mxu0 %v957
  %v996 = vpop.f32.mrf.mxu0
  %v997 = vadd.f32 0.0, %v996
  %v998 = vpop.f32.mrf.mxu0
  %v999 = vpop.f32.mrf.mxu0
  %v1000 = vpop.f32.mrf.mxu0
  %1001 = vdwg.mxu0
  %v1003 = vsel %vm863, %v858, 0
  %v1006 = vsel %vm863, %v862, 0
  %1008 = vmatprep.subr.bf16.mxu0 0
  %1009 = vmatpush1.bf16.xpose.msra.mxu0 0
  %1010 = vmatprep.subr.bf16.mxu0 0
  %1011 = vmatpush1.bf16.xpose.msra.mxu0 0
  %1012 = vmatprep.subr.bf16.mxu0 0
  %1013 = vmatpush1.bf16.xpose.msra.mxu0 0
  %1014 = vmatprep.subr.bf16.mxu0 0
  %1015 = vmatpush1.bf16.xpose.msra.mxu0 0
  %1016 = vmatprep.subr.bf16.mxu0 0
  %1017 = vmatpush1.bf16.xpose.msra.mxu0 0
  %1018 = vmatprep.subr.bf16.mxu0 0
  %1019 = vmatpush1.bf16.xpose.msra.mxu0 0
  %1020 = vmatprep.subr.bf16.mxu0 0
  %1021 = vmatpush1.bf16.xpose.msra.mxu0 0
  %1022 = vmatprep.subr.bf16.mxu0 0
  %1023 = vmatpush1.bf16.xpose.msra.mxu0 %v1006
  %1024 = vmatprep.subr.bf16.mxu0 0
  %1025 = vmatpush2.bf16.xpose.msra.mxu0 0
  %1026 = vmatprep.subr.bf16.mxu0 0
  %1027 = vmatpush2.bf16.xpose.msra.mxu0 0
  %1028 = vmatprep.subr.bf16.mxu0 0
  %1029 = vmatpush2.bf16.xpose.msra.mxu0 0
  %1030 = vmatprep.subr.bf16.mxu0 0
  %1031 = vmatpush2.bf16.xpose.msra.mxu0 0
  %1032 = vmatprep.subr.bf16.mxu0 0
  %1033 = vmatpush2.bf16.xpose.msra.mxu0 0
  %1034 = vmatprep.subr.bf16.mxu0 0
  %1035 = vmatpush2.bf16.xpose.msra.mxu0 0
  %1036 = vmatprep.subr.bf16.mxu0 0
  %1037 = vmatpush2.bf16.xpose.msra.mxu0 0
  %1038 = vmatprep.subr.bf16.mxu0 0
  %1039 = vmatpush2.bf16.xpose.msra.mxu0 0
  %1040 = vmatprep.mubr.bf16.mxu0 0
  %1041 = vmatmul.mubr.bf16.gmra.mxu0 %v1003
  %v1042 = vpop.f32.mrf.mxu0
  %v1043 = vadd.f32 0.0, %v1042
  %v1044 = vpop.f32.mrf.mxu0
  %v1045 = vpop.f32.mrf.mxu0
  %v1046 = vpop.f32.mrf.mxu0
  %1047 = vdwg.mxu0
  %v1048 = vmul.f32 %v905, 0.35355338
  %v1049 = vmul.f32 %v951, 0.35355338
  %v1050 = vmul.f32 %v997, 0.35355338
  %v1051 = vmul.f32 %v1043, 0.35355338
  %v1052 = vsel %vm863, %v1048, -inf
  %1053 = vmax.xlane.f32.xlu0 %v1052
  %v1054 = vpop.xlane.xlu0 %1053
  %v1055 = vsel %vm863, %v1049, -inf
  %1056 = vmax.xlane.f32.xlu0 %v1055
  %v1057 = vpop.xlane.xlu0 %1056
  %v1058 = vsel %vm863, %v1050, -inf
  %1059 = vmax.xlane.f32.xlu0 %v1058
  %v1060 = vpop.xlane.xlu0 %1059
  %v1061 = vsel %vm863, %v1051, -inf
  %1062 = vmax.xlane.f32.xlu0 %v1061
  %v1063 = vpop.xlane.xlu0 %1062
  %v1064 = vsub.f32 %v1048, %v1054
  %v1065 = vsub.f32 %v1049, %v1057
  %v1066 = vsub.f32 %v1050, %v1060
  %v1067 = vsub.f32 %v1051, %v1063
  %v1068 = vmul.f32 %v1064, 1.442695
  %v1069 = vpow.pop %v1068
  %v1070 = vmul.f32 %v1065, 1.442695
  %v1071 = vpow.pop %v1070
  %v1072 = vmul.f32 %v1066, 1.442695
  %v1073 = vpow.pop %v1072
  %v1074 = vmul.f32 %v1067, 1.442695
  %v1075 = vpow.pop %v1074
  %v1076 = vsel %vm863, %v1069, 0.0
  %1077 = vadd.xlane.f32.xlu0 %v1076
  %v1078 = vpop.xlane.xlu0 %1077
  %v1079 = vsel %vm863, %v1071, 0.0
  %1080 = vadd.xlane.f32.xlu0 %v1079
  %v1081 = vpop.xlane.xlu0 %1080
  %v1082 = vsel %vm863, %v1073, 0.0
  %1083 = vadd.xlane.f32.xlu0 %v1082
  %v1084 = vpop.xlane.xlu0 %1083
  %v1085 = vsel %vm863, %v1075, 0.0
  %1086 = vadd.xlane.f32.xlu0 %v1085
  %v1087 = vpop.xlane.xlu0 %1086
  %v1088 = vrcp.pop %v1078
  %v1089 = vrcp.pop %v1081
  %v1090 = vrcp.pop %v1084
  %v1091 = vrcp.pop %v1087
  %v1092 = vmul.f32 %v1069, %v1088
  %v1093 = vmul.f32 %v1071, %v1089
  %v1094 = vmul.f32 %v1073, %v1090
  %v1095 = vmul.f32 %v1075, %v1091
  %v1096 = vpack.c.bf16 %v1092, %v1092
  %v1097 = vpack.c.bf16 %v1093, %v1093
  %v1098 = vpack.c.bf16 %v1094, %v1094
  %v1099 = vpack.c.bf16 %v1095, %v1095
  %v1100 = vpack.c.bf16 %v694, %v694
  %v1101 = vpack.c.bf16 %v746, %v746
  %v1102 = vpack.c.bf16 %v798, %v798
  %v1103 = vpack.c.bf16 %v850, %v850
  %v1105 = vsel %vm863, %v1096, 0
  %vm1107 = vcmask 1043456
  %v1109 = vsel %vm1107, %v1100, 0
  %1111 = vmatprep.subr.bf16.mxu0 0
  %1112 = vmatpush1.bf16.msra.mxu0 0
  %1113 = vmatprep.subr.bf16.mxu0 0
  %1114 = vmatpush1.bf16.msra.mxu0 0
  %1115 = vmatprep.subr.bf16.mxu0 0
  %1116 = vmatpush1.bf16.msra.mxu0 0
  %1117 = vmatprep.subr.bf16.mxu0 0
  %1118 = vmatpush1.bf16.msra.mxu0 0
  %1119 = vmatprep.subr.bf16.mxu0 0
  %1120 = vmatpush1.bf16.msra.mxu0 0
  %1121 = vmatprep.subr.bf16.mxu0 0
  %1122 = vmatpush1.bf16.msra.mxu0 0
  %1123 = vmatprep.subr.bf16.mxu0 0
  %1124 = vmatpush1.bf16.msra.mxu0 0
  %1125 = vmatprep.subr.bf16.mxu0 0
  %1126 = vmatpush1.bf16.msra.mxu0 %v1109
  %1127 = vmatprep.subr.bf16.mxu0 0
  %1128 = vmatpush2.bf16.msra.mxu0 0
  %1129 = vmatprep.subr.bf16.mxu0 0
  %1130 = vmatpush2.bf16.msra.mxu0 0
  %1131 = vmatprep.subr.bf16.mxu0 0
  %1132 = vmatpush2.bf16.msra.mxu0 0
  %1133 = vmatprep.subr.bf16.mxu0 0
  %1134 = vmatpush2.bf16.msra.mxu0 0
  %1135 = vmatprep.subr.bf16.mxu0 0
  %1136 = vmatpush2.bf16.msra.mxu0 0
  %1137 = vmatprep.subr.bf16.mxu0 0
  %1138 = vmatpush2.bf16.msra.mxu0 0
  %1139 = vmatprep.subr.bf16.mxu0 0
  %1140 = vmatpush2.bf16.msra.mxu0 0
  %1141 = vmatprep.subr.bf16.mxu0 0
  %1142 = vmatpush2.bf16.msra.mxu0 0
  %1143 = vmatprep.mubr.bf16.mxu0 0
  %1144 = vmatmul.mubr.bf16.gmra.mxu0 %v1105
  %v1145 = vpop.f32.mrf.mxu0
  %v1146 = vadd.f32 0.0, %v1145
  %v1147 = vpop.f32.mrf.mxu0
  %v1148 = vpop.f32.mrf.mxu0
  %v1149 = vpop.f32.mrf.mxu0
  %1150 = vdwg.mxu0
  %v1152 = vsel %vm863, %v1097, 0
  %v1155 = vsel %vm1107, %v1101, 0
  %1157 = vmatprep.subr.bf16.mxu0 0
  %1158 = vmatpush1.bf16.msra.mxu0 0
  %1159 = vmatprep.subr.bf16.mxu0 0
  %1160 = vmatpush1.bf16.msra.mxu0 0
  %1161 = vmatprep.subr.bf16.mxu0 0
  %1162 = vmatpush1.bf16.msra.mxu0 0
  %1163 = vmatprep.subr.bf16.mxu0 0
  %1164 = vmatpush1.bf16.msra.mxu0 0
  %1165 = vmatprep.subr.bf16.mxu0 0
  %1166 = vmatpush1.bf16.msra.mxu0 0
  %1167 = vmatprep.subr.bf16.mxu0 0
  %1168 = vmatpush1.bf16.msra.mxu0 0
  %1169 = vmatprep.subr.bf16.mxu0 0
  %1170 = vmatpush1.bf16.msra.mxu0 0
  %1171 = vmatprep.subr.bf16.mxu0 0
  %1172 = vmatpush1.bf16.msra.mxu0 %v1155
  %1173 = vmatprep.subr.bf16.mxu0 0
  %1174 = vmatpush2.bf16.msra.mxu0 0
  %1175 = vmatprep.subr.bf16.mxu0 0
  %1176 = vmatpush2.bf16.msra.mxu0 0
  %1177 = vmatprep.subr.bf16.mxu0 0
  %1178 = vmatpush2.bf16.msra.mxu0 0
  %1179 = vmatprep.subr.bf16.mxu0 0
  %1180 = vmatpush2.bf16.msra.mxu0 0
  %1181 = vmatprep.subr.bf16.mxu0 0
  %1182 = vmatpush2.bf16.msra.mxu0 0
  %1183 = vmatprep.subr.bf16.mxu0 0
  %1184 = vmatpush2.bf16.msra.mxu0 0
  %1185 = vmatprep.subr.bf16.mxu0 0
  %1186 = vmatpush2.bf16.msra.mxu0 0
  %1187 = vmatprep.subr.bf16.mxu0 0
  %1188 = vmatpush2.bf16.msra.mxu0 0
  %1189 = vmatprep.mubr.bf16.mxu0 0
  %1190 = vmatmul.mubr.bf16.gmra.mxu0 %v1152
  %v1191 = vpop.f32.mrf.mxu0
  %v1192 = vadd.f32 0.0, %v1191
  %v1193 = vpop.f32.mrf.mxu0
  %v1194 = vpop.f32.mrf.mxu0
  %v1195 = vpop.f32.mrf.mxu0
  %1196 = vdwg.mxu0
  %v1198 = vsel %vm863, %v1098, 0
  %v1201 = vsel %vm1107, %v1102, 0
  %1203 = vmatprep.subr.bf16.mxu0 0
  %1204 = vmatpush1.bf16.msra.mxu0 0
  %1205 = vmatprep.subr.bf16.mxu0 0
  %1206 = vmatpush1.bf16.msra.mxu0 0
  %1207 = vmatprep.subr.bf16.mxu0 0
  %1208 = vmatpush1.bf16.msra.mxu0 0
  %1209 = vmatprep.subr.bf16.mxu0 0
  %1210 = vmatpush1.bf16.msra.mxu0 0
  %1211 = vmatprep.subr.bf16.mxu0 0
  %1212 = vmatpush1.bf16.msra.mxu0 0
  %1213 = vmatprep.subr.bf16.mxu0 0
  %1214 = vmatpush1.bf16.msra.mxu0 0
  %1215 = vmatprep.subr.bf16.mxu0 0
  %1216 = vmatpush1.bf16.msra.mxu0 0
  %1217 = vmatprep.subr.bf16.mxu0 0
  %1218 = vmatpush1.bf16.msra.mxu0 %v1201
  %1219 = vmatprep.subr.bf16.mxu0 0
  %1220 = vmatpush2.bf16.msra.mxu0 0
  %1221 = vmatprep.subr.bf16.mxu0 0
  %1222 = vmatpush2.bf16.msra.mxu0 0
  %1223 = vmatprep.subr.bf16.mxu0 0
  %1224 = vmatpush2.bf16.msra.mxu0 0
  %1225 = vmatprep.subr.bf16.mxu0 0
  %1226 = vmatpush2.bf16.msra.mxu0 0
  %1227 = vmatprep.subr.bf16.mxu0 0
  %1228 = vmatpush2.bf16.msra.mxu0 0
  %1229 = vmatprep.subr.bf16.mxu0 0
  %1230 = vmatpush2.bf16.msra.mxu0 0
  %1231 = vmatprep.subr.bf16.mxu0 0
  %1232 = vmatpush2.bf16.msra.mxu0 0
  %1233 = vmatprep.subr.bf16.mxu0 0
  %1234 = vmatpush2.bf16.msra.mxu0 0
  %1235 = vmatprep.mubr.bf16.mxu0 0
  %1236 = vmatmul.mubr.bf16.gmra.mxu0 %v1198
  %v1237 = vpop.f32.mrf.mxu0
  %v1238 = vadd.f32 0.0, %v1237
  %v1239 = vpop.f32.mrf.mxu0
  %v1240 = vpop.f32.mrf.mxu0
  %v1241 = vpop.f32.mrf.mxu0
  %1242 = vdwg.mxu0
  %v1244 = vsel %vm863, %v1099, 0
  %v1247 = vsel %vm1107, %v1103, 0
  %1249 = vmatprep.subr.bf16.mxu0 0
  %1250 = vmatpush1.bf16.msra.mxu0 0
  %1251 = vmatprep.subr.bf16.mxu0 0
  %1252 = vmatpush1.bf16.msra.mxu0 0
  %1253 = vmatprep.subr.bf16.mxu0 0
  %1254 = vmatpush1.bf16.msra.mxu0 0
  %1255 = vmatprep.subr.bf16.mxu0 0
  %1256 = vmatpush1.bf16.msra.mxu0 0
  %1257 = vmatprep.subr.bf16.mxu0 0
  %1258 = vmatpush1.bf16.msra.mxu0 0
  %1259 = vmatprep.subr.bf16.mxu0 0
  %1260 = vmatpush1.bf16.msra.mxu0 0
  %1261 = vmatprep.subr.bf16.mxu0 0
  %1262 = vmatpush1.bf16.msra.mxu0 0
  %1263 = vmatprep.subr.bf16.mxu0 0
  %1264 = vmatpush1.bf16.msra.mxu0 %v1247
  %1265 = vmatprep.subr.bf16.mxu0 0
  %1266 = vmatpush2.bf16.msra.mxu0 0
  %1267 = vmatprep.subr.bf16.mxu0 0
  %1268 = vmatpush2.bf16.msra.mxu0 0
  %1269 = vmatprep.subr.bf16.mxu0 0
  %1270 = vmatpush2.bf16.msra.mxu0 0
  %1271 = vmatprep.subr.bf16.mxu0 0
  %1272 = vmatpush2.bf16.msra.mxu0 0
  %1273 = vmatprep.subr.bf16.mxu0 0
  %1274 = vmatpush2.bf16.msra.mxu0 0
  %1275 = vmatprep.subr.bf16.mxu0 0
  %1276 = vmatpush2.bf16.msra.mxu0 0
  %1277 = vmatprep.subr.bf16.mxu0 0
  %1278 = vmatpush2.bf16.msra.mxu0 0
  %1279 = vmatprep.subr.bf16.mxu0 0
  %1280 = vmatpush2.bf16.msra.mxu0 0
  %1281 = vmatprep.mubr.bf16.mxu0 0
  %1282 = vmatmul.mubr.bf16.gmra.mxu0 %v1244
  %v1283 = vpop.f32.mrf.mxu0
  %v1284 = vadd.f32 0.0, %v1283
  %v1285 = vpop.f32.mrf.mxu0
  %v1286 = vpop.f32.mrf.mxu0
  %v1287 = vpop.f32.mrf.mxu0
  %1288 = vdwg.mxu0
  %v1289 = vld [vmem:[%s9] sm:$0xf]
  %v1290 = vld [vmem:[%s9 + $0x4] sm:$0xf]
  %v1291 = vld [vmem:[%s9 + $0x8] sm:$0xf]
  %v1292 = vld [vmem:[%s9 + $0xc] sm:$0xf]
  %v1293 = vld [vmem:[%s10] sm:$0x1]
  %v1294 = vpack.c.bf16 %v1146, %v1146
  %v1295 = vpack.c.bf16 %v1192, %v1192
  %v1296 = vpack.c.bf16 %v1238, %v1238
  %v1297 = vpack.c.bf16 %v1284, %v1284
  %v1299 = vsel %vm863, %v1294, 0
  %v1302 = vsel %vm1107, %v1289, 0
  %1304 = vmatprep.subr.bf16.mxu0 0
  %1305 = vmatpush1.bf16.msra.mxu0 0
  %1306 = vmatprep.subr.bf16.mxu0 0
  %1307 = vmatpush1.bf16.msra.mxu0 0
  %1308 = vmatprep.subr.bf16.mxu0 0
  %1309 = vmatpush1.bf16.msra.mxu0 0
  %1310 = vmatprep.subr.bf16.mxu0 0
  %1311 = vmatpush1.bf16.msra.mxu0 0
  %1312 = vmatprep.subr.bf16.mxu0 0
  %1313 = vmatpush1.bf16.msra.mxu0 0
  %1314 = vmatprep.subr.bf16.mxu0 0
  %1315 = vmatpush1.bf16.msra.mxu0 0
  %1316 = vmatprep.subr.bf16.mxu0 0
  %1317 = vmatpush1.bf16.msra.mxu0 0
  %1318 = vmatprep.subr.bf16.mxu0 0
  %1319 = vmatpush1.bf16.msra.mxu0 %v1302
  %1320 = vmatprep.subr.bf16.mxu0 0
  %1321 = vmatpush2.bf16.msra.mxu0 0
  %1322 = vmatprep.subr.bf16.mxu0 0
  %1323 = vmatpush2.bf16.msra.mxu0 0
  %1324 = vmatprep.subr.bf16.mxu0 0
  %1325 = vmatpush2.bf16.msra.mxu0 0
  %1326 = vmatprep.subr.bf16.mxu0 0
  %1327 = vmatpush2.bf16.msra.mxu0 0
  %1328 = vmatprep.subr.bf16.mxu0 0
  %1329 = vmatpush2.bf16.msra.mxu0 0
  %1330 = vmatprep.subr.bf16.mxu0 0
  %1331 = vmatpush2.bf16.msra.mxu0 0
  %1332 = vmatprep.subr.bf16.mxu0 0
  %1333 = vmatpush2.bf16.msra.mxu0 0
  %1334 = vmatprep.subr.bf16.mxu0 0
  %1335 = vmatpush2.bf16.msra.mxu0 0
  %1336 = vmatprep.mubr.bf16.mxu0 0
  %1337 = vmatmul.mubr.bf16.gmra.mxu0 %v1299
  %v1338 = vpop.f32.mrf.mxu0
  %v1339 = vadd.f32 0.0, %v1338
  %v1340 = vpop.f32.mrf.mxu0
  %v1341 = vpop.f32.mrf.mxu0
  %v1342 = vpop.f32.mrf.mxu0
  %1343 = vdwg.mxu0
  %v1345 = vsel %vm863, %v1295, 0
  %v1348 = vsel %vm1107, %v1290, 0
  %1350 = vmatprep.subr.bf16.mxu0 0
  %1351 = vmatpush1.bf16.msra.mxu0 0
  %1352 = vmatprep.subr.bf16.mxu0 0
  %1353 = vmatpush1.bf16.msra.mxu0 0
  %1354 = vmatprep.subr.bf16.mxu0 0
  %1355 = vmatpush1.bf16.msra.mxu0 0
  %1356 = vmatprep.subr.bf16.mxu0 0
  %1357 = vmatpush1.bf16.msra.mxu0 0
  %1358 = vmatprep.subr.bf16.mxu0 0
  %1359 = vmatpush1.bf16.msra.mxu0 0
  %1360 = vmatprep.subr.bf16.mxu0 0
  %1361 = vmatpush1.bf16.msra.mxu0 0
  %1362 = vmatprep.subr.bf16.mxu0 0
  %1363 = vmatpush1.bf16.msra.mxu0 0
  %1364 = vmatprep.subr.bf16.mxu0 0
  %1365 = vmatpush1.bf16.msra.mxu0 %v1348
  %1366 = vmatprep.subr.bf16.mxu0 0
  %1367 = vmatpush2.bf16.msra.mxu0 0
  %1368 = vmatprep.subr.bf16.mxu0 0
  %1369 = vmatpush2.bf16.msra.mxu0 0
  %1370 = vmatprep.subr.bf16.mxu0 0
  %1371 = vmatpush2.bf16.msra.mxu0 0
  %1372 = vmatprep.subr.bf16.mxu0 0
  %1373 = vmatpush2.bf16.msra.mxu0 0
  %1374 = vmatprep.subr.bf16.mxu0 0
  %1375 = vmatpush2.bf16.msra.mxu0 0
  %1376 = vmatprep.subr.bf16.mxu0 0
  %1377 = vmatpush2.bf16.msra.mxu0 0
  %1378 = vmatprep.subr.bf16.mxu0 0
  %1379 = vmatpush2.bf16.msra.mxu0 0
  %1380 = vmatprep.subr.bf16.mxu0 0
  %1381 = vmatpush2.bf16.msra.mxu0 0
  %1382 = vmatprep.mubr.bf16.mxu0 0
  %1383 = vmatmul.mubr.bf16.gmra.mxu0 %v1345
  %v1384 = vpop.f32.mrf.mxu0
  %v1385 = vadd.f32 0.0, %v1384
  %v1386 = vpop.f32.mrf.mxu0
  %v1387 = vpop.f32.mrf.mxu0
  %v1388 = vpop.f32.mrf.mxu0
  %1389 = vdwg.mxu0
  %v1391 = vsel %vm863, %v1296, 0
  %v1394 = vsel %vm1107, %v1291, 0
  %1396 = vmatprep.subr.bf16.mxu0 0
  %1397 = vmatpush1.bf16.msra.mxu0 0
  %1398 = vmatprep.subr.bf16.mxu0 0
  %1399 = vmatpush1.bf16.msra.mxu0 0
  %1400 = vmatprep.subr.bf16.mxu0 0
  %1401 = vmatpush1.bf16.msra.mxu0 0
  %1402 = vmatprep.subr.bf16.mxu0 0
  %1403 = vmatpush1.bf16.msra.mxu0 0
  %1404 = vmatprep.subr.bf16.mxu0 0
  %1405 = vmatpush1.bf16.msra.mxu0 0
  %1406 = vmatprep.subr.bf16.mxu0 0
  %1407 = vmatpush1.bf16.msra.mxu0 0
  %1408 = vmatprep.subr.bf16.mxu0 0
  %1409 = vmatpush1.bf16.msra.mxu0 0
  %1410 = vmatprep.subr.bf16.mxu0 0
  %1411 = vmatpush1.bf16.msra.mxu0 %v1394
  %1412 = vmatprep.subr.bf16.mxu0 0
  %1413 = vmatpush2.bf16.msra.mxu0 0
  %1414 = vmatprep.subr.bf16.mxu0 0
  %1415 = vmatpush2.bf16.msra.mxu0 0
  %1416 = vmatprep.subr.bf16.mxu0 0
  %1417 = vmatpush2.bf16.msra.mxu0 0
  %1418 = vmatprep.subr.bf16.mxu0 0
  %1419 = vmatpush2.bf16.msra.mxu0 0
  %1420 = vmatprep.subr.bf16.mxu0 0
  %1421 = vmatpush2.bf16.msra.mxu0 0
  %1422 = vmatprep.subr.bf16.mxu0 0
  %1423 = vmatpush2.bf16.msra.mxu0 0
  %1424 = vmatprep.subr.bf16.mxu0 0
  %1425 = vmatpush2.bf16.msra.mxu0 0
  %1426 = vmatprep.subr.bf16.mxu0 0
  %1427 = vmatpush2.bf16.msra.mxu0 0
  %1428 = vmatprep.mubr.bf16.mxu0 0
  %1429 = vmatmul.mubr.bf16.gmra.mxu0 %v1391
  %v1430 = vpop.f32.mrf.mxu0
  %v1431 = vadd.f32 0.0, %v1430
  %v1432 = vpop.f32.mrf.mxu0
  %v1433 = vpop.f32.mrf.mxu0
  %v1434 = vpop.f32.mrf.mxu0
  %1435 = vdwg.mxu0
  %v1437 = vsel %vm863, %v1297, 0
  %v1440 = vsel %vm1107, %v1292, 0
  %1442 = vmatprep.subr.bf16.mxu0 0
  %1443 = vmatpush1.bf16.msra.mxu0 0
  %1444 = vmatprep.subr.bf16.mxu0 0
  %1445 = vmatpush1.bf16.msra.mxu0 0
  %1446 = vmatprep.subr.bf16.mxu0 0
  %1447 = vmatpush1.bf16.msra.mxu0 0
  %1448 = vmatprep.subr.bf16.mxu0 0
  %1449 = vmatpush1.bf16.msra.mxu0 0
  %1450 = vmatprep.subr.bf16.mxu0 0
  %1451 = vmatpush1.bf16.msra.mxu0 0
  %1452 = vmatprep.subr.bf16.mxu0 0
  %1453 = vmatpush1.bf16.msra.mxu0 0
  %1454 = vmatprep.subr.bf16.mxu0 0
  %1455 = vmatpush1.bf16.msra.mxu0 0
  %1456 = vmatprep.subr.bf16.mxu0 0
  %1457 = vmatpush1.bf16.msra.mxu0 %v1440
  %1458 = vmatprep.subr.bf16.mxu0 0
  %1459 = vmatpush2.bf16.msra.mxu0 0
  %1460 = vmatprep.subr.bf16.mxu0 0
  %1461 = vmatpush2.bf16.msra.mxu0 0
  %1462 = vmatprep.subr.bf16.mxu0 0
  %1463 = vmatpush2.bf16.msra.mxu0 0
  %1464 = vmatprep.subr.bf16.mxu0 0
  %1465 = vmatpush2.bf16.msra.mxu0 0
  %1466 = vmatprep.subr.bf16.mxu0 0
  %1467 = vmatpush2.bf16.msra.mxu0 0
  %1468 = vmatprep.subr.bf16.mxu0 0
  %1469 = vmatpush2.bf16.msra.mxu0 0
  %1470 = vmatprep.subr.bf16.mxu0 0
  %1471 = vmatpush2.bf16.msra.mxu0 0
  %1472 = vmatprep.subr.bf16.mxu0 0
  %1473 = vmatpush2.bf16.msra.mxu0 0
  %1474 = vmatprep.mubr.bf16.mxu0 0
  %1475 = vmatmul.mubr.bf16.gmra.mxu0 %v1437
  %v1476 = vpop.f32.mrf.mxu0
  %v1477 = vadd.f32 0.0, %v1476
  %v1478 = vpop.f32.mrf.mxu0
  %v1479 = vpop.f32.mrf.mxu0
  %v1480 = vpop.f32.mrf.mxu0
  %1481 = vdwg.mxu0
  %v1482 = vsel %vm66, %v1339, 0.0
  %v1483 = vsel %vm66, %v1385, 0.0
  %v1484 = vadd.f32 %v1482, %v1483
  %v1485 = vsel %vm66, %v1431, 0.0
  %v1486 = vadd.f32 %v1484, %v1485
  %v1487 = vsel %vm66, %v1477, 0.0
  %v1488 = vadd.f32 %v1486, %v1487
  %v1490 = vlaneseq
  %v1491 = vshrl.u32 %v1490, 7
  %v1492 = vsub.s32 0, %v1491
  %v1493 = vrot.slane %v1293, %v1492
  %v1495 = vadd.f32 %v1488, %v1493
  %v1496 = vadd.f32 %v63, %v1495
  %v1497 = vld [vmem:[%s11] sm:$0x1]
  %v1498 = vld [vmem:[%s12] sm:$0x1]
  %v1499 = vsel %vm66, %v1496, 0.0
  %1500 = vadd.xlane.f32.xlu0 %v1499
  %v1501 = vpop.xlane.xlu0 %1500
  %v1502 = vmul.f32 %v1501, %v70
  %v1503 = vsub.f32 %v1496, %v1502
  %v1504 = vmul.f32 %v1503, %v1503
  %v1505 = vsel %vm66, %v1504, 0.0
  %1506 = vadd.xlane.f32.xlu0 %v1505
  %v1507 = vpop.xlane.xlu0 %1506
  %v1508 = vmul.f32 %v1507, %v70
  %v1509 = vadd.f32 %v1508, 1e-05
  %v1510 = vrsqrt.pop %v1509
  %v1511 = vmul.f32 %v1503, %v1510
  %v1513 = vlaneseq
  %v1514 = vshrl.u32 %v1513, 7
  %v1515 = vsub.s32 0, %v1514
  %v1516 = vrot.slane %v1497, %v1515
  %v1518 = vmul.f32 %v1511, %v1516
  %v1520 = vlaneseq
  %v1521 = vshrl.u32 %v1520, 7
  %v1522 = vsub.s32 0, %v1521
  %v1523 = vrot.slane %v1498, %v1522
  %v1525 = vadd.f32 %v1518, %v1523
  %v1526 = vpack.c.bf16 %v1525, %v1525
  %v1527 = vld [vmem:[%s13] sm:$0xf]
  %v1528 = vld [vmem:[%s13 + $0x4] sm:$0xf]
  %v1529 = vld [vmem:[%s13 + $0x8] sm:$0xf]
  %v1530 = vld [vmem:[%s13 + $0xc] sm:$0xf]
  %v1531 = vld [vmem:[%s14] sm:$0x1]
  %v1533 = vlaneseq
  %v1534 = vshrl.u32 %v1533, 7
  %v1535 = vsub.s32 0, %v1534
  %v1536 = vrot.slane %v1531, %v1535
  %v1542 = vunpack.c.l.b16 %v1527
  %v1543 = vunpack.c.l.b16 %v1528
  %v1544 = vunpack.c.l.b16 %v1529
  %v1545 = vunpack.c.l.b16 %v1530
  %v1546 = vpack.c.b16 %v1543, %v1542
  %v1547 = vpack.c.b16 %v1545, %v1544
  %v1551 = vsel %vm66, %v1526, 0
  %1553 = vmatprep.subr.bf16.mxu0 0
  %1554 = vmatpush1.bf16.msra.mxu0 0
  %1555 = vmatprep.subr.bf16.mxu0 0
  %1556 = vmatpush1.bf16.msra.mxu0 0
  %1557 = vmatprep.subr.bf16.mxu0 0
  %1558 = vmatpush1.bf16.msra.mxu0 0
  %1559 = vmatprep.subr.bf16.mxu0 0
  %1560 = vmatpush1.bf16.msra.mxu0 0
  %1561 = vmatprep.subr.bf16.mxu0 0
  %1562 = vmatpush1.bf16.msra.mxu0 0
  %1563 = vmatprep.subr.bf16.mxu0 0
  %1564 = vmatpush1.bf16.msra.mxu0 0
  %1565 = vmatprep.subr.bf16.mxu0 0
  %1566 = vmatpush1.bf16.msra.mxu0 %v1547
  %1567 = vmatprep.subr.bf16.mxu0 0
  %1568 = vmatpush1.bf16.msra.mxu0 %v1546
  %1569 = vmatprep.subr.bf16.mxu0 0
  %1570 = vmatpush2.bf16.msra.mxu0 0
  %1571 = vmatprep.subr.bf16.mxu0 0
  %1572 = vmatpush2.bf16.msra.mxu0 0
  %1573 = vmatprep.subr.bf16.mxu0 0
  %1574 = vmatpush2.bf16.msra.mxu0 0
  %1575 = vmatprep.subr.bf16.mxu0 0
  %1576 = vmatpush2.bf16.msra.mxu0 0
  %1577 = vmatprep.subr.bf16.mxu0 0
  %1578 = vmatpush2.bf16.msra.mxu0 0
  %1579 = vmatprep.subr.bf16.mxu0 0
  %1580 = vmatpush2.bf16.msra.mxu0 0
  %1581 = vmatprep.subr.bf16.mxu0 0
  %1582 = vmatpush2.bf16.msra.mxu0 0
  %1583 = vmatprep.subr.bf16.mxu0 0
  %1584 = vmatpush2.bf16.msra.mxu0 0
  %1585 = vmatprep.mubr.bf16.mxu0 0
  %1586 = vmatmul.mubr.bf16.gmra.mxu0 %v1551
  %v1587 = vpop.f32.mrf.mxu0
  %v1588 = vadd.f32 %v1536, %v1587
  %v1589 = vpop.f32.mrf.mxu0
  %v1590 = vpop.f32.mrf.mxu0
  %v1591 = vpop.f32.mrf.mxu0
  %1592 = vdwg.mxu0
  %v1593 = vmul.f32 %v1588, %v1588
  %v1594 = vmul.f32 %v1588, %v1593
  %v1595 = vmul.f32 %v1594, 0.044715
  %v1596 = vadd.f32 %v1588, %v1595
  %v1597 = vmul.f32 %v1596, 0.7978846
  %v1598 = vtanh.pop %v1597
  %v1599 = vadd.f32 %v1598, 1.0
  %v1600 = vmul.f32 %v1599, 0.5
  %v1601 = vmul.f32 %v1588, %v1600
  %v1602 = vpack.c.bf16 %v1601, %v1601
  %v1603 = vld [vmem:[%s15] sm:$0xf]
  %v1604 = vld [vmem:[%s15 + $0x4] sm:$0xf]
  %v1605 = vld [vmem:[%s15 + $0x8] sm:$0xf]
  %v1606 = vld [vmem:[%s15 + $0xc] sm:$0xf]
  %v1607 = vld [vmem:[%s15 + $0x10] sm:$0xf]
  %v1608 = vld [vmem:[%s15 + $0x14] sm:$0xf]
  %v1609 = vld [vmem:[%s15 + $0x18] sm:$0xf]
  %v1610 = vld [vmem:[%s15 + $0x1c] sm:$0xf]
  %v1611 = vld [vmem:[%s16] sm:$0x1]
  %v1613 = vlaneseq
  %v1614 = vshrl.u32 %v1613, 7
  %v1615 = vsub.s32 0, %v1614
  %v1616 = vrot.slane %v1611, %v1615
  %v1626 = vunpack.c.l.b16 %v1603
  %v1627 = vunpack.c.l.b16 %v1604
  %v1628 = vunpack.c.l.b16 %v1605
  %v1629 = vunpack.c.l.b16 %v1606
  %v1630 = vunpack.c.l.b16 %v1607
  %v1631 = vunpack.c.l.b16 %v1608
  %v1632 = vunpack.c.l.b16 %v1609
  %v1633 = vunpack.c.l.b16 %v1610
  %v1634 = vpack.c.b16 %v1627, %v1626
  %v1635 = vpack.c.b16 %v1629, %v1628
  %v1636 = vpack.c.b16 %v1631, %v1630
  %v1637 = vpack.c.b16 %v1633, %v1632
  %vm1642 = vcmask 523264
  %v1644 = vsel %vm1642, %v1602, 0
  %1646 = vmatprep.subr.bf16.mxu0 0
  %1647 = vmatpush1.bf16.msra.mxu0 0
  %1648 = vmatprep.subr.bf16.mxu0 0
  %1649 = vmatpush1.bf16.msra.mxu0 0
  %1650 = vmatprep.subr.bf16.mxu0 0
  %1651 = vmatpush1.bf16.msra.mxu0 0
  %1652 = vmatprep.subr.bf16.mxu0 0
  %1653 = vmatpush1.bf16.msra.mxu0 0
  %1654 = vmatprep.subr.bf16.mxu0 0
  %1655 = vmatpush1.bf16.msra.mxu0 %v1637
  %1656 = vmatprep.subr.bf16.mxu0 0
  %1657 = vmatpush1.bf16.msra.mxu0 %v1636
  %1658 = vmatprep.subr.bf16.mxu0 0
  %1659 = vmatpush1.bf16.msra.mxu0 %v1635
  %1660 = vmatprep.subr.bf16.mxu0 0
  %1661 = vmatpush1.bf16.msra.mxu0 %v1634
  %1662 = vmatprep.subr.bf16.mxu0 0
  %1663 = vmatpush2.bf16.msra.mxu0 0
  %1664 = vmatprep.subr.bf16.mxu0 0
  %1665 = vmatpush2.bf16.msra.mxu0 0
  %1666 = vmatprep.subr.bf16.mxu0 0
  %1667 = vmatpush2.bf16.msra.mxu0 0
  %1668 = vmatprep.subr.bf16.mxu0 0
  %1669 = vmatpush2.bf16.msra.mxu0 0
  %1670 = vmatprep.subr.bf16.mxu0 0
  %1671 = vmatpush2.bf16.msra.mxu0 0
  %1672 = vmatprep.subr.bf16.mxu0 0
  %1673 = vmatpush2.bf16.msra.mxu0 0
  %1674 = vmatprep.subr.bf16.mxu0 0
  %1675 = vmatpush2.bf16.msra.mxu0 0
  %1676 = vmatprep.subr.bf16.mxu0 0
  %1677 = vmatpush2.bf16.msra.mxu0 0
  %1678 = vmatprep.mubr.bf16.mxu0 0
  %1679 = vmatmul.mubr.bf16.gmra.mxu0 %v1644
  %v1680 = vpop.f32.mrf.mxu0
  %v1681 = vadd.f32 %v1616, %v1680
  %v1682 = vpop.f32.mrf.mxu0
  %v1683 = vpop.f32.mrf.mxu0
  %v1684 = vpop.f32.mrf.mxu0
  %1685 = vdwg.mxu0
  %v1686 = vadd.f32 %v1496, %v1681
  %v1687 = vld [vmem:[%s17] sm:$0x1]
  %v1688 = vld [vmem:[%s18] sm:$0x1]
  %v1689 = vsel %vm66, %v1686, 0.0
  %1690 = vadd.xlane.f32.xlu0 %v1689
  %v1691 = vpop.xlane.xlu0 %1690
  %v1692 = vmul.f32 %v1691, %v70
  %v1693 = vsub.f32 %v1686, %v1692
  %v1694 = vmul.f32 %v1693, %v1693
  %v1695 = vsel %vm66, %v1694, 0.0
  %1696 = vadd.xlane.f32.xlu0 %v1695
  %v1697 = vpop.xlane.xlu0 %1696
  %v1698 = vmul.f32 %v1697, %v70
  %v1699 = vadd.f32 %v1698, 1e-05
  %v1700 = vrsqrt.pop %v1699
  %v1701 = vmul.f32 %v1693, %v1700
  %v1703 = vlaneseq
  %v1704 = vshrl.u32 %v1703, 7
  %v1705 = vsub.s32 0, %v1704
  %v1706 = vrot.slane %v1687, %v1705
  %v1708 = vmul.f32 %v1701, %v1706
  %v1710 = vlaneseq
  %v1711 = vshrl.u32 %v1710, 7
  %v1712 = vsub.s32 0, %v1711
  %v1713 = vrot.slane %v1688, %v1712
  %v1715 = vadd.f32 %v1708, %v1713
  %1716 = vst.msk [vmem:[%s19] sm:$0xff] %vm66, %v1715
  // Predicated region
  $region78: #{generate.7} parent=0 // pred_check
    _
  $region79: #{generate.7} parent=0 // pred_check_branch
    %1718 = sbr.rel (0) target = $region81
  $region80: #{generate.7} parent=0 // pred_region
    _
  $region81: #{generate.7} parent=0 // pred_fallthru
    _
  // Predicated region
  $region82: #{generate.7} parent=0 // pred_check
    _
  $region83: #{generate.7} parent=0 // pred_check_branch
    %1720 = sbr.rel (0) target = $region85
  $region84: #{generate.7} parent=0 // pred_region
    _
  $region85: #{generate.7} parent=0 // pred_fallthru
    _

// kernel: generate.9
$region0: #{generate.9}
  #allocation0 [shape = 'u32[]', space=smem, size = 0x4, offset = 0x4, fixed_abs, tag = 'smem constant byte address 0x4 - core index']
  #allocation1 [shape = 'u32[144,128]{1,0:T(1,128)}', space=vmem, size = 0x12000, scoped, tag = 'internal scratch']
  #allocation2 [shape = 'f32[4,8,8]{2,1,0:T(8,128)}', space=vmem, size = 0x4000, scoped, tag = 'scratch operand']
  #allocation3 [shape = 'f32[4,8,8]{2,1,0:T(8,128)}', space=vmem, size = 0x4000, scoped, tag = 'scratch operand']
  %s0 = inlined_call_operand.smem [shape: u32[30], index: -1, kind: input, shape index: {}]
  %s1 = sld [smem:[%s0]]
  %s2 = scalar_lea.smem %s0, 1
  %s3 = sld [smem:[%s2]]
  %s4 = scalar_lea.smem %s0, 2
  %s5 = sld [smem:[%s4]]
  %s6 = scalar_lea.smem %s0, 3
  %s7 = sld [smem:[%s6]]
  %s8 = scalar_lea.smem %s0, 4
  %s9 = sld [smem:[%s8]]
  %s10 = scalar_lea.smem %s0, 5
  %s11 = sld [smem:[%s10]]
  %s12 = scalar_lea.smem %s0, 6
  %s13 = sld [smem:[%s12]]
  %s14 = scalar_lea.smem %s0, 7
  %s15 = sld [smem:[%s14]]
  %s16 = scalar_lea.smem %s0, 8
  %s17 = sld [smem:[%s16]]
  %s18 = scalar_lea.smem %s0, 9
  %s19 = sld [smem:[%s18]]
  %s20 = scalar_lea.smem %s0, 10
  %s21 = sld [smem:[%s20]]
  %s22 = scalar_lea.smem %s0, 11
  %s23 = sld [smem:[%s22]]
  %s24 = scalar_lea.smem %s0, 12
  %s25 = sld [smem:[%s24]]
  %s26 = scalar_lea.smem %s0, 13
  %s27 = sld [smem:[%s26]]
  %s28 = scalar_lea.smem %s0, 14
  %s29 = sld [smem:[%s28]]
  %s30 = scalar_lea.smem %s0, 15
  %s31 = sld [smem:[%s30]]
  %s32 = scalar_lea.smem %s0, 16
  %s33 = sld [smem:[%s32]]
  %s34 = scalar_lea.smem %s0, 17
  %s35 = sld [smem:[%s34]]
  %s36 = scalar_lea.smem %s0, 18
  %s37 = sld [smem:[%s36]]
  %s38 = scalar_lea.smem %s0, 19
  %s39 = sld [smem:[%s38]]
  %s40 = scalar_lea.smem %s0, 20
  %s41 = sld [smem:[%s40]]
  %s42 = scalar_lea.smem %s0, 21
  %s43 = sld [smem:[%s42]]
  %s44 = scalar_lea.smem %s0, 22
  %s45 = sld [smem:[%s44]]
  %s46 = scalar_lea.smem %s0, 23
  %s47 = sld [smem:[%s46]]
  %s48 = scalar_lea.smem %s0, 24
  %s49 = sld [smem:[%s48]]
  %s50 = scalar_lea.smem %s0, 25
  %s51 = sld [smem:[%s50]]
  %s52 = scalar_lea.smem %s0, 26
  %s53 = sld [smem:[%s52]]
  %s54 = scalar_lea.smem %s0, 27
  %s55 = sld [smem:[%s54]]
  %s56 = scalar_lea.smem %s0, 28
  %s57 = sld [smem:[%s56]]
  %s58 = scalar_lea.smem %s0, 29
  %s59 = sld [smem:[%s58]]
  %s60 = sld [smem:[#allocation0]]
  $region153: #{generate.9} parent=0
    _
  %s62 = ssub.s32 1, %s60
  %s63 = scalar_select 0, %s62, %s60
  $region1: #{generate.9} parent=0
    #allocation4 [shape = 'u8[512]{0}', space=smem, size = 0x200, scoped, tag = 'output window, operand 0, single buffered']
    #allocation5 [shape = 's32[2]{0}', space=sflag, size = 0x8, scoped, tag = 'scoped memory for generate.9']
    %64 = vsyncpa [#allocation5], 0
    loop: start=0, step=1, limit=9
    $region2: #{generate.9} parent=1 // loop_pre_header
      _
    $region3: #{generate.9} parent=1 // loop_header
      %s66 = sphi 0, %s70
      %p67 = scmp.ge.s32.totalorder %s66, 9
      %s74 = sphi 0, %s74
      %s76 = sphi 0, %s74
      %s77 = sphi 0, %s76
      %s91 = sphi 0, %s77
      %s95 = sphi 0, %s95
      %s97 = sphi 0, %s95
      %s98 = sphi 0, %s97
      %s112 = sphi 0, %s98
      %s116 = sphi 0, %s116
      %s118 = sphi 0, %s116
      %s119 = sphi 0, %s118
      %s133 = sphi 0, %s119
      %s137 = sphi 0, %s137
      %s139 = sphi 0, %s137
      %s140 = sphi 0, %s139
      %s154 = sphi 0, %s140
      %s158 = sphi 0, %s158
      %s160 = sphi 0, %s158
      %s161 = sphi 0, %s160
      %s175 = sphi 0, %s161
      %s179 = sphi 0, %s179
      %s181 = sphi 0, %s179
      %s182 = sphi 0, %s181
      %s196 = sphi 0, %s182
      %s200 = sphi 0, %s200
      %s202 = sphi 0, %s200
      %s203 = sphi 0, %s202
      %s217 = sphi 0, %s203
      %s221 = sphi 0, %s221
      %s223 = sphi 0, %s221
      %s224 = sphi 0, %s223
      %s238 = sphi 0, %s224
      %s242 = sphi 0, %s242
      %s244 = sphi 0, %s242
      %s245 = sphi 0, %s244
      %s259 = sphi 0, %s245
      %s263 = sphi 0, %s263
      %s265 = sphi 0, %s263
      %s266 = sphi 0, %s265
      %s280 = sphi 0, %s266
      %s284 = sphi 0, %s284
      %s286 = sphi 0, %s284
      %s287 = sphi 0, %s286
      %s301 = sphi 0, %s287
      %s305 = sphi 0, %s305
      %s307 = sphi 0, %s305
      %s308 = sphi 0, %s307
      %s322 = sphi 0, %s308
      %s326 = sphi 0, %s326
      %s328 = sphi 0, %s326
      %s329 = sphi 0, %s328
      %s343 = sphi 0, %s329
      %s347 = sphi 0, %s347
      %s349 = sphi 0, %s347
      %s350 = sphi 0, %s349
      %s364 = sphi 0, %s350
      %s368 = sphi 0, %s368
      %s370 = sphi 0, %s368
      %s371 = sphi 0, %s370
      %s385 = sphi 0, %s371
      %s389 = sphi 0, %s389
      %s391 = sphi 0, %s389
      %s392 = sphi 0, %s391
      %s406 = sphi 0, %s392
      %s410 = sphi 0, %s410
      %s412 = sphi 0, %s410
      %s413 = sphi 0, %s412
      %s427 = sphi 0, %s413
      %s431 = sphi 0, %s431
      %s433 = sphi 0, %s431
      %s434 = sphi 0, %s433
      %s448 = sphi 0, %s434
      %s452 = sphi 0, %s452
      %s454 = sphi 0, %s452
      %s455 = sphi 0, %s454
      %s469 = sphi 0, %s455
      %s473 = sphi 0, %s473
      %s475 = sphi 0, %s473
      %s476 = sphi 0, %s475
      %s490 = sphi 0, %s476
      %s494 = sphi 0, %s494
      %s496 = sphi 0, %s494
      %s497 = sphi 0, %s496
      %s511 = sphi 0, %s497
      %s515 = sphi 0, %s515
      %s517 = sphi 0, %s515
      %s518 = sphi 0, %s517
      %s532 = sphi 0, %s518
      %s536 = sphi 0, %s536
      %s538 = sphi 0, %s536
      %s539 = sphi 0, %s538
      %s553 = sphi 0, %s539
      %s557 = sphi 0, %s557
      %s559 = sphi 0, %s557
      %s560 = sphi 0, %s559
      %s574 = sphi 0, %s560
      %s578 = sphi 0, %s578
      %s580 = sphi 0, %s578
      %s581 = sphi 0, %s580
      %s595 = sphi 0, %s581
      %s599 = sphi 0, %s599
      %s601 = sphi 0, %s599
      %s602 = sphi 0, %s601
      %s616 = sphi 0, %s602
      %s620 = sphi 0, %s620
      %s622 = sphi 0, %s620
      %s623 = sphi 0, %s622
      %s637 = sphi 0, %s623
      %s641 = sphi 0, %s641
      %s643 = sphi 0, %s641
      %s644 = sphi 0, %s643
      %s658 = sphi 0, %s644
      %s662 = sphi 0, %s662
      %s664 = sphi 0, %s662
      %s665 = sphi 0, %s664
      %s679 = sphi 0, %s665
      %s683 = sphi 0, %s683
      %s685 = sphi 0, %s683
      %s686 = sphi 0, %s685
      %s700 = sphi 0, %s686
    $region4: #{generate.9} parent=1 // loop_header_branch
      %69 = sbr.rel (%p67) target = $region8
    $region5: #{generate.9} parent=1 // loop_body
      %s71 = ssub.s32 %s66, 1
      %s72 = ssub.s32 %s66, 2
      %s73 = sadd.s32 %s66, 1
      %s75 = sadd.s32 %s74, 1
      %p78 = scmp.eq.s32.totalorder %s66, 6
      %p79 = scmp.ne.s32.totalorder %s74, %s76
      %p80 = scmp.eq.s32.totalorder %s66, 0
      %p81 = por %p79, %p80
      %p82 = scmp.ne.s32.totalorder %s74, %s76
      %p83 = scmp.eq.s32.totalorder %s71, 6
      %p84 = por %p82, %p83
      %p85 = scmp.ne.s32.totalorder %s76, %s77
      %p86 = scmp.eq.s32.totalorder %s71, 0
      %p87 = por %p85, %p86
      %p88 = scmp.ne.s32.totalorder %s76, %s77
      %p89 = scmp.eq.s32.totalorder %s72, 6
      %p90 = por %p88, %p89
      %p92 = scmp.ne.s32.totalorder %s77, %s91
      %p93 = scmp.eq.s32.totalorder %s72, 0
      %p94 = por %p92, %p93
      %s96 = sadd.s32 %s95, 1
      %p99 = scmp.eq.s32.totalorder %s66, 6
      %p100 = scmp.ne.s32.totalorder %s95, %s97
      %p101 = scmp.eq.s32.totalorder %s66, 0
      %p102 = por %p100, %p101
      %p103 = scmp.ne.s32.totalorder %s95, %s97
      %p104 = scmp.eq.s32.totalorder %s71, 6
      %p105 = por %p103, %p104
      %p106 = scmp.ne.s32.totalorder %s97, %s98
      %p107 = scmp.eq.s32.totalorder %s71, 0
      %p108 = por %p106, %p107
      %p109 = scmp.ne.s32.totalorder %s97, %s98
      %p110 = scmp.eq.s32.totalorder %s72, 6
      %p111 = por %p109, %p110
      %p113 = scmp.ne.s32.totalorder %s98, %s112
      %p114 = scmp.eq.s32.totalorder %s72, 0
      %p115 = por %p113, %p114
      %s117 = sadd.s32 %s116, 1
      %p120 = scmp.eq.s32.totalorder %s66, 6
      %p121 = scmp.ne.s32.totalorder %s116, %s118
      %p122 = scmp.eq.s32.totalorder %s66, 0
      %p123 = por %p121, %p122
      %p124 = scmp.ne.s32.totalorder %s116, %s118
      %p125 = scmp.eq.s32.totalorder %s71, 6
      %p126 = por %p124, %p125
      %p127 = scmp.ne.s32.totalorder %s118, %s119
      %p128 = scmp.eq.s32.totalorder %s71, 0
      %p129 = por %p127, %p128
      %p130 = scmp.ne.s32.totalorder %s118, %s119
      %p131 = scmp.eq.s32.totalorder %s72, 6
      %p132 = por %p130, %p131
      %p134 = scmp.ne.s32.totalorder %s119, %s133
      %p135 = scmp.eq.s32.totalorder %s72, 0
      %p136 = por %p134, %p135
      %s138 = sadd.s32 %s137, 1
      %p141 = scmp.eq.s32.totalorder %s66, 6
      %p142 = scmp.ne.s32.totalorder %s137, %s139
      %p143 = scmp.eq.s32.totalorder %s66, 0
      %p144 = por %p142, %p143
      %p145 = scmp.ne.s32.totalorder %s137, %s139
      %p146 = scmp.eq.s32.totalorder %s71, 6
      %p147 = por %p145, %p146
      %p148 = scmp.ne.s32.totalorder %s139, %s140
      %p149 = scmp.eq.s32.totalorder %s71, 0
      %p150 = por %p148, %p149
      %p151 = scmp.ne.s32.totalorder %s139, %s140
      %p152 = scmp.eq.s32.totalorder %s72, 6
      %p153 = por %p151, %p152
      %p155 = scmp.ne.s32.totalorder %s140, %s154
      %p156 = scmp.eq.s32.totalorder %s72, 0
      %p157 = por %p155, %p156
      %s159 = sadd.s32 %s158, 1
      %p162 = scmp.eq.s32.totalorder %s66, 6
      %p163 = scmp.ne.s32.totalorder %s158, %s160
      %p164 = scmp.eq.s32.totalorder %s66, 0
      %p165 = por %p163, %p164
      %p166 = scmp.ne.s32.totalorder %s158, %s160
      %p167 = scmp.eq.s32.totalorder %s71, 6
      %p168 = por %p166, %p167
      %p169 = scmp.ne.s32.totalorder %s160, %s161
      %p170 = scmp.eq.s32.totalorder %s71, 0
      %p171 = por %p169, %p170
      %p172 = scmp.ne.s32.totalorder %s160, %s161
      %p173 = scmp.eq.s32.totalorder %s72, 6
      %p174 = por %p172, %p173
      %p176 = scmp.ne.s32.totalorder %s161, %s175
      %p177 = scmp.eq.s32.totalorder %s72, 0
      %p178 = por %p176, %p177
      %s180 = sadd.s32 %s179, 1
      %p183 = scmp.eq.s32.totalorder %s66, 6
      %p184 = scmp.ne.s32.totalorder %s179, %s181
      %p185 = scmp.eq.s32.totalorder %s66, 0
      %p186 = por %p184, %p185
      %p187 = scmp.ne.s32.totalorder %s179, %s181
      %p188 = scmp.eq.s32.totalorder %s71, 6
      %p189 = por %p187, %p188
      %p190 = scmp.ne.s32.totalorder %s181, %s182
      %p191 = scmp.eq.s32.totalorder %s71, 0
      %p192 = por %p190, %p191
      %p193 = scmp.ne.s32.totalorder %s181, %s182
      %p194 = scmp.eq.s32.totalorder %s72, 6
      %p195 = por %p193, %p194
      %p197 = scmp.ne.s32.totalorder %s182, %s196
      %p198 = scmp.eq.s32.totalorder %s72, 0
      %p199 = por %p197, %p198
      %s201 = sadd.s32 %s200, 1
      %p204 = scmp.eq.s32.totalorder %s66, 6
      %p205 = scmp.ne.s32.totalorder %s200, %s202
      %p206 = scmp.eq.s32.totalorder %s66, 0
      %p207 = por %p205, %p206
      %p208 = scmp.ne.s32.totalorder %s200, %s202
      %p209 = scmp.eq.s32.totalorder %s71, 6
      %p210 = por %p208, %p209
      %p211 = scmp.ne.s32.totalorder %s202, %s203
      %p212 = scmp.eq.s32.totalorder %s71, 0
      %p213 = por %p211, %p212
      %p214 = scmp.ne.s32.totalorder %s202, %s203
      %p215 = scmp.eq.s32.totalorder %s72, 6
      %p216 = por %p214, %p215
      %p218 = scmp.ne.s32.totalorder %s203, %s217
      %p219 = scmp.eq.s32.totalorder %s72, 0
      %p220 = por %p218, %p219
      %s222 = sadd.s32 %s221, 1
      %p225 = scmp.eq.s32.totalorder %s66, 6
      %p226 = scmp.ne.s32.totalorder %s221, %s223
      %p227 = scmp.eq.s32.totalorder %s66, 0
      %p228 = por %p226, %p227
      %p229 = scmp.ne.s32.totalorder %s221, %s223
      %p230 = scmp.eq.s32.totalorder %s71, 6
      %p231 = por %p229, %p230
      %p232 = scmp.ne.s32.totalorder %s223, %s224
      %p233 = scmp.eq.s32.totalorder %s71, 0
      %p234 = por %p232, %p233
      %p235 = scmp.ne.s32.totalorder %s223, %s224
      %p236 = scmp.eq.s32.totalorder %s72, 6
      %p237 = por %p235, %p236
      %p239 = scmp.ne.s32.totalorder %s224, %s238
      %p240 = scmp.eq.s32.totalorder %s72, 0
      %p241 = por %p239, %p240
      %s243 = sadd.s32 %s242, 1
      %p246 = scmp.eq.s32.totalorder %s66, 6
      %p247 = scmp.ne.s32.totalorder %s242, %s244
      %p248 = scmp.eq.s32.totalorder %s66, 0
      %p249 = por %p247, %p248
      %p250 = scmp.ne.s32.totalorder %s242, %s244
      %p251 = scmp.eq.s32.totalorder %s71, 6
      %p252 = por %p250, %p251
      %p253 = scmp.ne.s32.totalorder %s244, %s245
      %p254 = scmp.eq.s32.totalorder %s71, 0
      %p255 = por %p253, %p254
      %p256 = scmp.ne.s32.totalorder %s244, %s245
      %p257 = scmp.eq.s32.totalorder %s72, 6
      %p258 = por %p256, %p257
      %p260 = scmp.ne.s32.totalorder %s245, %s259
      %p261 = scmp.eq.s32.totalorder %s72, 0
      %p262 = por %p260, %p261
      %s264 = sadd.s32 %s263, 1
      %p267 = scmp.eq.s32.totalorder %s66, 6
      %p268 = scmp.ne.s32.totalorder %s263, %s265
      %p269 = scmp.eq.s32.totalorder %s66, 0
      %p270 = por %p268, %p269
      %p271 = scmp.ne.s32.totalorder %s263, %s265
      %p272 = scmp.eq.s32.totalorder %s71, 6
      %p273 = por %p271, %p272
      %p274 = scmp.ne.s32.totalorder %s265, %s266
      %p275 = scmp.eq.s32.totalorder %s71, 0
      %p276 = por %p274, %p275
      %p277 = scmp.ne.s32.totalorder %s265, %s266
      %p278 = scmp.eq.s32.totalorder %s72, 6
      %p279 = por %p277, %p278
      %p281 = scmp.ne.s32.totalorder %s266, %s280
      %p282 = scmp.eq.s32.totalorder %s72, 0
      %p283 = por %p281, %p282
      %s285 = sadd.s32 %s284, 1
      %p288 = scmp.eq.s32.totalorder %s66, 6
      %p289 = scmp.ne.s32.totalorder %s284, %s286
      %p290 = scmp.eq.s32.totalorder %s66, 0
      %p291 = por %p289, %p290
      %p292 = scmp.ne.s32.totalorder %s284, %s286
      %p293 = scmp.eq.s32.totalorder %s71, 6
      %p294 = por %p292, %p293
      %p295 = scmp.ne.s32.totalorder %s286, %s287
      %p296 = scmp.eq.s32.totalorder %s71, 0
      %p297 = por %p295, %p296
      %p298 = scmp.ne.s32.totalorder %s286, %s287
      %p299 = scmp.eq.s32.totalorder %s72, 6
      %p300 = por %p298, %p299
      %p302 = scmp.ne.s32.totalorder %s287, %s301
      %p303 = scmp.eq.s32.totalorder %s72, 0
      %p304 = por %p302, %p303
      %s306 = sadd.s32 %s305, 1
      %p309 = scmp.eq.s32.totalorder %s66, 6
      %p310 = scmp.ne.s32.totalorder %s305, %s307
      %p311 = scmp.eq.s32.totalorder %s66, 0
      %p312 = por %p310, %p311
      %p313 = scmp.ne.s32.totalorder %s305, %s307
      %p314 = scmp.eq.s32.totalorder %s71, 6
      %p315 = por %p313, %p314
      %p316 = scmp.ne.s32.totalorder %s307, %s308
      %p317 = scmp.eq.s32.totalorder %s71, 0
      %p318 = por %p316, %p317
      %p319 = scmp.ne.s32.totalorder %s307, %s308
      %p320 = scmp.eq.s32.totalorder %s72, 6
      %p321 = por %p319, %p320
      %p323 = scmp.ne.s32.totalorder %s308, %s322
      %p324 = scmp.eq.s32.totalorder %s72, 0
      %p325 = por %p323, %p324
      %s327 = sadd.s32 %s326, 1
      %p330 = scmp.eq.s32.totalorder %s66, 6
      %p331 = scmp.ne.s32.totalorder %s326, %s328
      %p332 = scmp.eq.s32.totalorder %s66, 0
      %p333 = por %p331, %p332
      %p334 = scmp.ne.s32.totalorder %s326, %s328
      %p335 = scmp.eq.s32.totalorder %s71, 6
      %p336 = por %p334, %p335
      %p337 = scmp.ne.s32.totalorder %s328, %s329
      %p338 = scmp.eq.s32.totalorder %s71, 0
      %p339 = por %p337, %p338
      %p340 = scmp.ne.s32.totalorder %s328, %s329
      %p341 = scmp.eq.s32.totalorder %s72, 6
      %p342 = por %p340, %p341
      %p344 = scmp.ne.s32.totalorder %s329, %s343
      %p345 = scmp.eq.s32.totalorder %s72, 0
      %p346 = por %p344, %p345
      %s348 = sadd.s32 %s347, 1
      %p351 = scmp.eq.s32.totalorder %s66, 6
      %p352 = scmp.ne.s32.totalorder %s347, %s349
      %p353 = scmp.eq.s32.totalorder %s66, 0
      %p354 = por %p352, %p353
      %p355 = scmp.ne.s32.totalorder %s347, %s349
      %p356 = scmp.eq.s32.totalorder %s71, 6
      %p357 = por %p355, %p356
      %p358 = scmp.ne.s32.totalorder %s349, %s350
      %p359 = scmp.eq.s32.totalorder %s71, 0
      %p360 = por %p358, %p359
      %p361 = scmp.ne.s32.totalorder %s349, %s350
      %p362 = scmp.eq.s32.totalorder %s72, 6
      %p363 = por %p361, %p362
      %p365 = scmp.ne.s32.totalorder %s350, %s364
      %p366 = scmp.eq.s32.totalorder %s72, 0
      %p367 = por %p365, %p366
      %s369 = sadd.s32 %s368, 1
      %p372 = scmp.eq.s32.totalorder %s66, 6
      %p373 = scmp.ne.s32.totalorder %s368, %s370
      %p374 = scmp.eq.s32.totalorder %s66, 0
      %p375 = por %p373, %p374
      %p376 = scmp.ne.s32.totalorder %s368, %s370
      %p377 = scmp.eq.s32.totalorder %s71, 6
      %p378 = por %p376, %p377
      %p379 = scmp.ne.s32.totalorder %s370, %s371
      %p380 = scmp.eq.s32.totalorder %s71, 0
      %p381 = por %p379, %p380
      %p382 = scmp.ne.s32.totalorder %s370, %s371
      %p383 = scmp.eq.s32.totalorder %s72, 6
      %p384 = por %p382, %p383
      %p386 = scmp.ne.s32.totalorder %s371, %s385
      %p387 = scmp.eq.s32.totalorder %s72, 0
      %p388 = por %p386, %p387
      %s390 = sadd.s32 %s389, 1
      %p393 = scmp.eq.s32.totalorder %s66, 6
      %p394 = scmp.ne.s32.totalorder %s389, %s391
      %p395 = scmp.eq.s32.totalorder %s66, 0
      %p396 = por %p394, %p395
      %p397 = scmp.ne.s32.totalorder %s389, %s391
      %p398 = scmp.eq.s32.totalorder %s71, 6
      %p399 = por %p397, %p398
      %p400 = scmp.ne.s32.totalorder %s391, %s392
      %p401 = scmp.eq.s32.totalorder %s71, 0
      %p402 = por %p400, %p401
      %p403 = scmp.ne.s32.totalorder %s391, %s392
      %p404 = scmp.eq.s32.totalorder %s72, 6
      %p405 = por %p403, %p404
      %p407 = scmp.ne.s32.totalorder %s392, %s406
      %p408 = scmp.eq.s32.totalorder %s72, 0
      %p409 = por %p407, %p408
      %s411 = sadd.s32 %s410, 1
      %p414 = scmp.eq.s32.totalorder %s66, 6
      %p415 = scmp.ne.s32.totalorder %s410, %s412
      %p416 = scmp.eq.s32.totalorder %s66, 0
      %p417 = por %p415, %p416
      %p418 = scmp.ne.s32.totalorder %s410, %s412
      %p419 = scmp.eq.s32.totalorder %s71, 6
      %p420 = por %p418, %p419
      %p421 = scmp.ne.s32.totalorder %s412, %s413
      %p422 = scmp.eq.s32.totalorder %s71, 0
      %p423 = por %p421, %p422
      %p424 = scmp.ne.s32.totalorder %s412, %s413
      %p425 = scmp.eq.s32.totalorder %s72, 6
      %p426 = por %p424, %p425
      %p428 = scmp.ne.s32.totalorder %s413, %s427
      %p429 = scmp.eq.s32.totalorder %s72, 0
      %p430 = por %p428, %p429
      %s432 = sadd.s32 %s431, 1
      %p435 = scmp.eq.s32.totalorder %s66, 6
      %p436 = scmp.ne.s32.totalorder %s431, %s433
      %p437 = scmp.eq.s32.totalorder %s66, 0
      %p438 = por %p436, %p437
      %p439 = scmp.ne.s32.totalorder %s431, %s433
      %p440 = scmp.eq.s32.totalorder %s71, 6
      %p441 = por %p439, %p440
      %p442 = scmp.ne.s32.totalorder %s433, %s434
      %p443 = scmp.eq.s32.totalorder %s71, 0
      %p444 = por %p442, %p443
      %p445 = scmp.ne.s32.totalorder %s433, %s434
      %p446 = scmp.eq.s32.totalorder %s72, 6
      %p447 = por %p445, %p446
      %p449 = scmp.ne.s32.totalorder %s434, %s448
      %p450 = scmp.eq.s32.totalorder %s72, 0
      %p451 = por %p449, %p450
      %s453 = sadd.s32 %s452, 1
      %p456 = scmp.eq.s32.totalorder %s66, 6
      %p457 = scmp.ne.s32.totalorder %s452, %s454
      %p458 = scmp.eq.s32.totalorder %s66, 0
      %p459 = por %p457, %p458
      %p460 = scmp.ne.s32.totalorder %s452, %s454
      %p461 = scmp.eq.s32.totalorder %s71, 6
      %p462 = por %p460, %p461
      %p463 = scmp.ne.s32.totalorder %s454, %s455
      %p464 = scmp.eq.s32.totalorder %s71, 0
      %p465 = por %p463, %p464
      %p466 = scmp.ne.s32.totalorder %s454, %s455
      %p467 = scmp.eq.s32.totalorder %s72, 6
      %p468 = por %p466, %p467
      %p470 = scmp.ne.s32.totalorder %s455, %s469
      %p471 = scmp.eq.s32.totalorder %s72, 0
      %p472 = por %p470, %p471
      %s474 = sadd.s32 %s473, 1
      %p477 = scmp.eq.s32.totalorder %s66, 6
      %p478 = scmp.ne.s32.totalorder %s473, %s475
      %p479 = scmp.eq.s32.totalorder %s66, 0
      %p480 = por %p478, %p479
      %p481 = scmp.ne.s32.totalorder %s473, %s475
      %p482 = scmp.eq.s32.totalorder %s71, 6
      %p483 = por %p481, %p482
      %p484 = scmp.ne.s32.totalorder %s475, %s476
      %p485 = scmp.eq.s32.totalorder %s71, 0
      %p486 = por %p484, %p485
      %p487 = scmp.ne.s32.totalorder %s475, %s476
      %p488 = scmp.eq.s32.totalorder %s72, 6
      %p489 = por %p487, %p488
      %p491 = scmp.ne.s32.totalorder %s476, %s490
      %p492 = scmp.eq.s32.totalorder %s72, 0
      %p493 = por %p491, %p492
      %s495 = sadd.s32 %s494, 1
      %p498 = scmp.eq.s32.totalorder %s66, 6
      %p499 = scmp.ne.s32.totalorder %s494, %s496
      %p500 = scmp.eq.s32.totalorder %s66, 0
      %p501 = por %p499, %p500
      %p502 = scmp.ne.s32.totalorder %s494, %s496
      %p503 = scmp.eq.s32.totalorder %s71, 6
      %p504 = por %p502, %p503
      %p505 = scmp.ne.s32.totalorder %s496, %s497
      %p506 = scmp.eq.s32.totalorder %s71, 0
      %p507 = por %p505, %p506
      %p508 = scmp.ne.s32.totalorder %s496, %s497
      %p509 = scmp.eq.s32.totalorder %s72, 6
      %p510 = por %p508, %p509
      %p512 = scmp.ne.s32.totalorder %s497, %s511
      %p513 = scmp.eq.s32.totalorder %s72, 0
      %p514 = por %p512, %p513
      %s516 = sadd.s32 %s515, 1
      %p519 = scmp.eq.s32.totalorder %s66, 6
      %p520 = scmp.ne.s32.totalorder %s515, %s517
      %p521 = scmp.eq.s32.totalorder %s66, 0
      %p522 = por %p520, %p521
      %p523 = scmp.ne.s32.totalorder %s515, %s517
      %p524 = scmp.eq.s32.totalorder %s71, 6
      %p525 = por %p523, %p524
      %p526 = scmp.ne.s32.totalorder %s517, %s518
      %p527 = scmp.eq.s32.totalorder %s71, 0
      %p528 = por %p526, %p527
      %p529 = scmp.ne.s32.totalorder %s517, %s518
      %p530 = scmp.eq.s32.totalorder %s72, 6
      %p531 = por %p529, %p530
      %p533 = scmp.ne.s32.totalorder %s518, %s532
      %p534 = scmp.eq.s32.totalorder %s72, 0
      %p535 = por %p533, %p534
      %s537 = sadd.s32 %s536, 1
      %p540 = scmp.eq.s32.totalorder %s66, 6
      %p541 = scmp.ne.s32.totalorder %s536, %s538
      %p542 = scmp.eq.s32.totalorder %s66, 0
      %p543 = por %p541, %p542
      %p544 = scmp.ne.s32.totalorder %s536, %s538
      %p545 = scmp.eq.s32.totalorder %s71, 6
      %p546 = por %p544, %p545
      %p547 = scmp.ne.s32.totalorder %s538, %s539
      %p548 = scmp.eq.s32.totalorder %s71, 0
      %p549 = por %p547, %p548
      %p550 = scmp.ne.s32.totalorder %s538, %s539
      %p551 = scmp.eq.s32.totalorder %s72, 6
      %p552 = por %p550, %p551
      %p554 = scmp.ne.s32.totalorder %s539, %s553
      %p555 = scmp.eq.s32.totalorder %s72, 0
      %p556 = por %p554, %p555
      %s558 = sadd.s32 %s557, 1
      %p561 = scmp.eq.s32.totalorder %s66, 6
      %p562 = scmp.ne.s32.totalorder %s557, %s559
      %p563 = scmp.eq.s32.totalorder %s66, 0
      %p564 = por %p562, %p563
      %p565 = scmp.ne.s32.totalorder %s557, %s559
      %p566 = scmp.eq.s32.totalorder %s71, 6
      %p567 = por %p565, %p566
      %p568 = scmp.ne.s32.totalorder %s559, %s560
      %p569 = scmp.eq.s32.totalorder %s71, 0
      %p570 = por %p568, %p569
      %p571 = scmp.ne.s32.totalorder %s559, %s560
      %p572 = scmp.eq.s32.totalorder %s72, 6
      %p573 = por %p571, %p572
      %p575 = scmp.ne.s32.totalorder %s560, %s574
      %p576 = scmp.eq.s32.totalorder %s72, 0
      %p577 = por %p575, %p576
      %s579 = sadd.s32 %s578, 1
      %p582 = scmp.eq.s32.totalorder %s66, 6
      %p583 = scmp.ne.s32.totalorder %s578, %s580
      %p584 = scmp.eq.s32.totalorder %s66, 0
      %p585 = por %p583, %p584
      %p586 = scmp.ne.s32.totalorder %s578, %s580
      %p587 = scmp.eq.s32.totalorder %s71, 6
      %p588 = por %p586, %p587
      %p589 = scmp.ne.s32.totalorder %s580, %s581
      %p590 = scmp.eq.s32.totalorder %s71, 0
      %p591 = por %p589, %p590
      %p592 = scmp.ne.s32.totalorder %s580, %s581
      %p593 = scmp.eq.s32.totalorder %s72, 6
      %p594 = por %p592, %p593
      %p596 = scmp.ne.s32.totalorder %s581, %s595
      %p597 = scmp.eq.s32.totalorder %s72, 0
      %p598 = por %p596, %p597
      %s600 = sadd.s32 %s599, 1
      %p603 = scmp.eq.s32.totalorder %s66, 6
      %p604 = scmp.ne.s32.totalorder %s599, %s601
      %p605 = scmp.eq.s32.totalorder %s66, 0
      %p606 = por %p604, %p605
      %p607 = scmp.ne.s32.totalorder %s599, %s601
      %p608 = scmp.eq.s32.totalorder %s71, 6
      %p609 = por %p607, %p608
      %p610 = scmp.ne.s32.totalorder %s601, %s602
      %p611 = scmp.eq.s32.totalorder %s71, 0
      %p612 = por %p610, %p611
      %p613 = scmp.ne.s32.totalorder %s601, %s602
      %p614 = scmp.eq.s32.totalorder %s72, 6
      %p615 = por %p613, %p614
      %p617 = scmp.ne.s32.totalorder %s602, %s616
      %p618 = scmp.eq.s32.totalorder %s72, 0
      %p619 = por %p617, %p618
      %s621 = sadd.s32 %s620, 1
      %p624 = scmp.eq.s32.totalorder %s66, 6
      %p625 = scmp.ne.s32.totalorder %s620, %s622
      %p626 = scmp.eq.s32.totalorder %s66, 0
      %p627 = por %p625, %p626
      %p628 = scmp.ne.s32.totalorder %s620, %s622
      %p629 = scmp.eq.s32.totalorder %s71, 6
      %p630 = por %p628, %p629
      %p631 = scmp.ne.s32.totalorder %s622, %s623
      %p632 = scmp.eq.s32.totalorder %s71, 0
      %p633 = por %p631, %p632
      %p634 = scmp.ne.s32.totalorder %s622, %s623
      %p635 = scmp.eq.s32.totalorder %s72, 6
      %p636 = por %p634, %p635
      %p638 = scmp.ne.s32.totalorder %s623, %s637
      %p639 = scmp.eq.s32.totalorder %s72, 0
      %p640 = por %p638, %p639
      %s642 = sadd.s32 %s641, 1
      %p645 = scmp.eq.s32.totalorder %s66, 6
      %p646 = scmp.ne.s32.totalorder %s641, %s643
      %p647 = scmp.eq.s32.totalorder %s66, 0
      %p648 = por %p646, %p647
      %p649 = scmp.ne.s32.totalorder %s641, %s643
      %p650 = scmp.eq.s32.totalorder %s71, 6
      %p651 = por %p649, %p650
      %p652 = scmp.ne.s32.totalorder %s643, %s644
      %p653 = scmp.eq.s32.totalorder %s71, 0
      %p654 = por %p652, %p653
      %p655 = scmp.ne.s32.totalorder %s643, %s644
      %p656 = scmp.eq.s32.totalorder %s72, 6
      %p657 = por %p655, %p656
      %p659 = scmp.ne.s32.totalorder %s644, %s658
      %p660 = scmp.eq.s32.totalorder %s72, 0
      %p661 = por %p659, %p660
      %s663 = sadd.s32 %s662, 1
      %p666 = scmp.eq.s32.totalorder %s66, 6
      %p667 = scmp.ne.s32.totalorder %s662, %s664
      %p668 = scmp.eq.s32.totalorder %s66, 0
      %p669 = por %p667, %p668
      %p670 = scmp.ne.s32.totalorder %s662, %s664
      %p671 = scmp.eq.s32.totalorder %s71, 6
      %p672 = por %p670, %p671
      %p673 = scmp.ne.s32.totalorder %s664, %s665
      %p674 = scmp.eq.s32.totalorder %s71, 0
      %p675 = por %p673, %p674
      %p676 = scmp.ne.s32.totalorder %s664, %s665
      %p677 = scmp.eq.s32.totalorder %s72, 6
      %p678 = por %p676, %p677
      %p680 = scmp.ne.s32.totalorder %s665, %s679
      %p681 = scmp.eq.s32.totalorder %s72, 0
      %p682 = por %p680, %p681
      %s684 = sadd.s32 %s683, 1
      %p687 = scmp.eq.s32.totalorder %s66, 6
      %p688 = scmp.ne.s32.totalorder %s683, %s685
      %p689 = scmp.eq.s32.totalorder %s66, 0
      %p690 = por %p688, %p689
      %p691 = scmp.ne.s32.totalorder %s683, %s685
      %p692 = scmp.eq.s32.totalorder %s71, 6
      %p693 = por %p691, %p692
      %p694 = scmp.ne.s32.totalorder %s685, %s686
      %p695 = scmp.eq.s32.totalorder %s71, 0
      %p696 = por %p694, %p695
      %p697 = scmp.ne.s32.totalorder %s685, %s686
      %p698 = scmp.eq.s32.totalorder %s72, 6
      %p699 = por %p697, %p698
      %p701 = scmp.ne.s32.totalorder %s686, %s700
      %p702 = scmp.eq.s32.totalorder %s72, 0
      %p703 = por %p701, %p702
      %p704 = scmp.le.s32.totalorder 1, %s66
      %p705 = scmp.lt.s32.totalorder %s66, 8
      %p706 = pnand %p704, %p705
      %p707 = pneg %p706
      // Predicated region
      $region9: #{generate.9} parent=5 // pred_check
        _
      $region10: #{generate.9} parent=5 // pred_check_branch
        %709 = sbr.rel (%p706) target = $region12
      $region11: #{generate.9} parent=5 // pred_region
        %s710 = ssub.s32 %s66, 1
        // Predicated region
        $region13: #{generate.9} parent=11 // pred_check
          %p711 = pneg %p87
        $region14: #{generate.9} parent=11 // pred_check_branch
          %713 = sbr.rel (%p711) target = $region16
        $region15: #{generate.9} parent=11 // pred_region
          _
        $region16: #{generate.9} parent=11 // pred_fallthru
          _
        // Predicated region
        $region17: #{generate.9} parent=11 // pred_check
          %p714 = pneg %p108
        $region18: #{generate.9} parent=11 // pred_check_branch
          %716 = sbr.rel (%p714) target = $region20
        $region19: #{generate.9} parent=11 // pred_region
          _
        $region20: #{generate.9} parent=11 // pred_fallthru
          _
        // Predicated region
        $region21: #{generate.9} parent=11 // pred_check
          %p717 = pneg %p129
        $region22: #{generate.9} parent=11 // pred_check_branch
          %719 = sbr.rel (%p717) target = $region24
        $region23: #{generate.9} parent=11 // pred_region
          _
        $region24: #{generate.9} parent=11 // pred_fallthru
          _
        // Predicated region
        $region25: #{generate.9} parent=11 // pred_check
          %p720 = pneg %p150
        $region26: #{generate.9} parent=11 // pred_check_branch
          %722 = sbr.rel (%p720) target = $region28
        $region27: #{generate.9} parent=11 // pred_region
          _
        $region28: #{generate.9} parent=11 // pred_fallthru
          _
        // Predicated region
        $region29: #{generate.9} parent=11 // pred_check
          %p723 = pneg %p171
        $region30: #{generate.9} parent=11 // pred_check_branch
          %725 = sbr.rel (%p723) target = $region32
        $region31: #{generate.9} parent=11 // pred_region
          _
        $region32: #{generate.9} parent=11 // pred_fallthru
          _
        // Predicated region
        $region33: #{generate.9} parent=11 // pred_check
          %p726 = pneg %p192
        $region34: #{generate.9} parent=11 // pred_check_branch
          %728 = sbr.rel (%p726) target = $region36
        $region35: #{generate.9} parent=11 // pred_region
          _
        $region36: #{generate.9} parent=11 // pred_fallthru
          _
        // Predicated region
        $region37: #{generate.9} parent=11 // pred_check
          %p729 = pneg %p213
        $region38: #{generate.9} parent=11 // pred_check_branch
          %731 = sbr.rel (%p729) target = $region40
        $region39: #{generate.9} parent=11 // pred_region
          _
        $region40: #{generate.9} parent=11 // pred_fallthru
          _
        // Predicated region
        $region41: #{generate.9} parent=11 // pred_check
          %p732 = pneg %p234
        $region42: #{generate.9} parent=11 // pred_check_branch
          %734 = sbr.rel (%p732) target = $region44
        $region43: #{generate.9} parent=11 // pred_region
          _
        $region44: #{generate.9} parent=11 // pred_fallthru
          _
        // Predicated region
        $region45: #{generate.9} parent=11 // pred_check
          %p735 = pneg %p255
        $region46: #{generate.9} parent=11 // pred_check_branch
          %737 = sbr.rel (%p735) target = $region48
        $region47: #{generate.9} parent=11 // pred_region
          _
        $region48: #{generate.9} parent=11 // pred_fallthru
          _
        // Predicated region
        $region49: #{generate.9} parent=11 // pred_check
          %p738 = pneg %p276
        $region50: #{generate.9} parent=11 // pred_check_branch
          %740 = sbr.rel (%p738) target = $region52
        $region51: #{generate.9} parent=11 // pred_region
          _
        $region52: #{generate.9} parent=11 // pred_fallthru
          _
        // Predicated region
        $region53: #{generate.9} parent=11 // pred_check
          %p741 = pneg %p297
        $region54: #{generate.9} parent=11 // pred_check_branch
          %743 = sbr.rel (%p741) target = $region56
        $region55: #{generate.9} parent=11 // pred_region
          _
        $region56: #{generate.9} parent=11 // pred_fallthru
          _
        // Predicated region
        $region57: #{generate.9} parent=11 // pred_check
          %p744 = pneg %p318
        $region58: #{generate.9} parent=11 // pred_check_branch
          %746 = sbr.rel (%p744) target = $region60
        $region59: #{generate.9} parent=11 // pred_region
          _
        $region60: #{generate.9} parent=11 // pred_fallthru
          _
        // Predicated region
        $region61: #{generate.9} parent=11 // pred_check
          %p747 = pneg %p339
        $region62: #{generate.9} parent=11 // pred_check_branch
          %749 = sbr.rel (%p747) target = $region64
        $region63: #{generate.9} parent=11 // pred_region
          _
        $region64: #{generate.9} parent=11 // pred_fallthru
          _
        // Predicated region
        $region65: #{generate.9} parent=11 // pred_check
          %p750 = pneg %p360
        $region66: #{generate.9} parent=11 // pred_check_branch
          %752 = sbr.rel (%p750) target = $region68
        $region67: #{generate.9} parent=11 // pred_region
          _
        $region68: #{generate.9} parent=11 // pred_fallthru
          _
        // Predicated region
        $region69: #{generate.9} parent=11 // pred_check
          %p753 = pneg %p381
        $region70: #{generate.9} parent=11 // pred_check_branch
          %755 = sbr.rel (%p753) target = $region72
        $region71: #{generate.9} parent=11 // pred_region
          _
        $region72: #{generate.9} parent=11 // pred_fallthru
          _
        // Predicated region
        $region73: #{generate.9} parent=11 // pred_check
          %p756 = pneg %p402
        $region74: #{generate.9} parent=11 // pred_check_branch
          %758 = sbr.rel (%p756) target = $region76
        $region75: #{generate.9} parent=11 // pred_region
          _
        $region76: #{generate.9} parent=11 // pred_fallthru
          _
        // Predicated region
        $region77: #{generate.9} parent=11 // pred_check
          %p759 = pneg %p423
        $region78: #{generate.9} parent=11 // pred_check_branch
          %761 = sbr.rel (%p759) target = $region80
        $region79: #{generate.9} parent=11 // pred_region
          _
        $region80: #{generate.9} parent=11 // pred_fallthru
          _
        // Predicated region
        $region81: #{generate.9} parent=11 // pred_check
          %p762 = pneg %p444
        $region82: #{generate.9} parent=11 // pred_check_branch
          %764 = sbr.rel (%p762) target = $region84
        $region83: #{generate.9} parent=11 // pred_region
          _
        $region84: #{generate.9} parent=11 // pred_fallthru
          _
        // Predicated region
        $region85: #{generate.9} parent=11 // pred_check
          %p765 = pneg %p465
        $region86: #{generate.9} parent=11 // pred_check_branch
          %767 = sbr.rel (%p765) target = $region88
        $region87: #{generate.9} parent=11 // pred_region
          _
        $region88: #{generate.9} parent=11 // pred_fallthru
          _
        // Predicated region
        $region89: #{generate.9} parent=11 // pred_check
          %p768 = pneg %p486
        $region90: #{generate.9} parent=11 // pred_check_branch
          %770 = sbr.rel (%p768) target = $region92
        $region91: #{generate.9} parent=11 // pred_region
          _
        $region92: #{generate.9} parent=11 // pred_fallthru
          _
        // Predicated region
        $region93: #{generate.9} parent=11 // pred_check
          %p771 = pneg %p507
        $region94: #{generate.9} parent=11 // pred_check_branch
          %773 = sbr.rel (%p771) target = $region96
        $region95: #{generate.9} parent=11 // pred_region
          _
        $region96: #{generate.9} parent=11 // pred_fallthru
          _
        // Predicated region
        $region97: #{generate.9} parent=11 // pred_check
          %p774 = pneg %p528
        $region98: #{generate.9} parent=11 // pred_check_branch
          %776 = sbr.rel (%p774) target = $region100
        $region99: #{generate.9} parent=11 // pred_region
          _
        $region100: #{generate.9} parent=11 // pred_fallthru
          _
        // Predicated region
        $region101: #{generate.9} parent=11 // pred_check
          %p777 = pneg %p549
        $region102: #{generate.9} parent=11 // pred_check_branch
          %779 = sbr.rel (%p777) target = $region104
        $region103: #{generate.9} parent=11 // pred_region
          _
        $region104: #{generate.9} parent=11 // pred_fallthru
          _
        // Predicated region
        $region105: #{generate.9} parent=11 // pred_check
          %p780 = pneg %p570
        $region106: #{generate.9} parent=11 // pred_check_branch
          %782 = sbr.rel (%p780) target = $region108
        $region107: #{generate.9} parent=11 // pred_region
          _
        $region108: #{generate.9} parent=11 // pred_fallthru
          _
        // Predicated region
        $region109: #{generate.9} parent=11 // pred_check
          %p783 = pneg %p591
        $region110: #{generate.9} parent=11 // pred_check_branch
          %785 = sbr.rel (%p783) target = $region112
        $region111: #{generate.9} parent=11 // pred_region
          _
        $region112: #{generate.9} parent=11 // pred_fallthru
          _
        // Predicated region
        $region113: #{generate.9} parent=11 // pred_check
          %p786 = pneg %p612
        $region114: #{generate.9} parent=11 // pred_check_branch
          %788 = sbr.rel (%p786) target = $region116
        $region115: #{generate.9} parent=11 // pred_region
          _
        $region116: #{generate.9} parent=11 // pred_fallthru
          _
        // Predicated region
        $region117: #{generate.9} parent=11 // pred_check
          %p789 = pneg %p633
        $region118: #{generate.9} parent=11 // pred_check_branch
          %791 = sbr.rel (%p789) target = $region120
        $region119: #{generate.9} parent=11 // pred_region
          _
        $region120: #{generate.9} parent=11 // pred_fallthru
          _
        // Predicated region
        $region121: #{generate.9} parent=11 // pred_check
          %p792 = pneg %p654
        $region122: #{generate.9} parent=11 // pred_check_branch
          %794 = sbr.rel (%p792) target = $region124
        $region123: #{generate.9} parent=11 // pred_region
          _
        $region124: #{generate.9} parent=11 // pred_fallthru
          _
        // Predicated region
        $region125: #{generate.9} parent=11 // pred_check
          %p795 = pneg %p675
        $region126: #{generate.9} parent=11 // pred_check_branch
          %797 = sbr.rel (%p795) target = $region128
        $region127: #{generate.9} parent=11 // pred_region
          _
        $region128: #{generate.9} parent=11 // pred_fallthru
          _
      $region12: #{generate.9} parent=5 // pred_fallthru
        _
      %p798 = scmp.lt.s32.totalorder %s66, 7
      // Predicated region
      $region129: #{generate.9} parent=5 // pred_check
        %p799 = pneg %p798
      $region130: #{generate.9} parent=5 // pred_check_branch
        %801 = sbr.rel (%p799) target = $region132
      $region131: #{generate.9} parent=5 // pred_region
        _
      $region132: #{generate.9} parent=5 // pred_fallthru
        _
      %p802 = scmp.le.s32.totalorder 1, %s66
      %p803 = scmp.lt.s32.totalorder %s66, 8
      %p804 = pnand %p802, %p803
      %p805 = pneg %p804
      // Predicated region
      $region133: #{generate.9} parent=5 // pred_check
        _
      $region134: #{generate.9} parent=5 // pred_check_branch
        %807 = sbr.rel (%p804) target = $region136
      $region135: #{generate.9} parent=5 // pred_region
        %s808 = ssub.s32 %s66, 1
        %p809 = pneg %p87
        %p810 = pneg %p84
        %p811 = pneg %p108
        %p812 = pneg %p105
        %p813 = pneg %p129
        %p814 = pneg %p126
        %p815 = pneg %p150
        %p816 = pneg %p147
        %p817 = pneg %p171
        %p818 = pneg %p168
        %p819 = pneg %p192
        %p820 = pneg %p189
        %p821 = pneg %p213
        %p822 = pneg %p210
        %p823 = pneg %p234
        %p824 = pneg %p231
        %p825 = pneg %p255
        %p826 = pneg %p252
        %p827 = pneg %p276
        %p828 = pneg %p273
        %p829 = pneg %p297
        %p830 = pneg %p294
        %p831 = pneg %p318
        %p832 = pneg %p315
        %p833 = pneg %p339
        %p834 = pneg %p336
        %p835 = pneg %p360
        %p836 = pneg %p357
        %p837 = pneg %p381
        %p838 = pneg %p378
        %p839 = pneg %p402
        %p840 = pneg %p399
        %p841 = pneg %p423
        %p842 = pneg %p420
        %p843 = pneg %p444
        %p844 = pneg %p441
        %p845 = pneg %p465
        %p846 = pneg %p462
        %p847 = pneg %p486
        %p848 = pneg %p483
        %p849 = pneg %p507
        %p850 = pneg %p504
        %p851 = pneg %p528
        %p852 = pneg %p525
        %p853 = pneg %p549
        %p854 = pneg %p546
        %p855 = pneg %p570
        %p856 = pneg %p567
        %p857 = pneg %p591
        %p858 = pneg %p588
        %p859 = pneg %p612
        %p860 = pneg %p609
        %p861 = pneg %p633
        %p862 = pneg %p630
        %p863 = pneg %p654
        %p864 = pneg %p651
        %p865 = pneg %p675
        %p866 = pneg %p672
        %p867 = pneg %p696
        %p868 = pneg %p693
        %p870 = scmp.eq.s32.totalorder %s71, 0
        // Predicated region
        $region137: #{generate.9} parent=135 // pred_check
          %p871 = pneg %p870
        $region138: #{generate.9} parent=135 // pred_check_branch
          %873 = sbr.rel (%p871) target = $region140
        $region139: #{generate.9} parent=135 // pred_region
          %s874 = scalar_lea.smem [#allocation4], 0
          %875 = sst [smem:[%s874]] 0
          %vm876 = vcmask 64512
          %877 = vst.msk [vmem:[#allocation2] sm:$0xff] %vm876, 0.0
          %878 = vst.msk [vmem:[#allocation2 + $0x8] sm:$0xff] %vm876, 0.0
          %879 = vst.msk [vmem:[#allocation2 + $0x10] sm:$0xff] %vm876, 0.0
          %880 = vst.msk [vmem:[#allocation2 + $0x18] sm:$0xff] %vm876, 0.0
          %881 = vst.msk [vmem:[#allocation3] sm:$0xff] %vm876, 0.0
          %882 = vst.msk [vmem:[#allocation3 + $0x8] sm:$0xff] %vm876, 0.0
          %883 = vst.msk [vmem:[#allocation3 + $0x10] sm:$0xff] %vm876, 0.0
          %884 = vst.msk [vmem:[#allocation3 + $0x18] sm:$0xff] %vm876, 0.0
        $region140: #{generate.9} parent=135 // pred_fallthru
          _
        %s885 = sld [smem:[#allocation4 + %s71]]
        %s886 = scalar_lea.vmem %s3, %s885
        %v887 = vld [vmem:[%s886] sm:$0x1]
        %s888 = scalar_lea.vmem %s1, %s71
        %v889 = vld [vmem:[%s888] sm:$0x1]
        %v890 = vadd.f32 %v887, %v889
        %v891 = vld [vmem:[%s11] sm:$0x1]
        %v892 = vld [vmem:[%s13] sm:$0x1]
        %vm893 = vcmask 253952
        %v894 = vsel %vm893, %v890, 0.0
        %895 = vadd.xlane.f32.xlu0 %v894
        %v896 = vpop.xlane.xlu0 %895
        %v897 = vrcp.pop 32.0
        %v898 = vmul.f32 %v896, %v897
        %v899 = vsub.f32 %v890, %v898
        %v900 = vmul.f32 %v899, %v899
        %v901 = vsel %vm893, %v900, 0.0
        %902 = vadd.xlane.f32.xlu0 %v901
        %v903 = vpop.xlane.xlu0 %902
        %v904 = vmul.f32 %v903, %v897
        %v905 = vadd.f32 %v904, 1e-05
        %v906 = vrsqrt.pop %v905
        %v907 = vmul.f32 %v899, %v906
        %v908 = vmul.f32 %v907, %v891
        %v909 = vadd.f32 %v908, %v892
        %v910 = vpack.c.bf16 %v909, %v909
        %v911 = vld [vmem:[%s15] sm:$0xf]
        %v912 = vld [vmem:[%s15 + $0x4] sm:$0xf]
        %v913 = vld [vmem:[%s15 + $0x8] sm:$0xf]
        %v914 = vld [vmem:[%s15 + $0xc] sm:$0xf]
        %v915 = vld [vmem:[%s15 + $0x10] sm:$0xf]
        %v916 = vld [vmem:[%s15 + $0x14] sm:$0xf]
        %v917 = vld [vmem:[%s15 + $0x18] sm:$0xf]
        %v918 = vld [vmem:[%s15 + $0x1c] sm:$0xf]
        %v919 = vld [vmem:[%s15 + $0x20] sm:$0xf]
        %v920 = vld [vmem:[%s15 + $0x24] sm:$0xf]
        %v921 = vld [vmem:[%s15 + $0x28] sm:$0xf]
        %v922 = vld [vmem:[%s15 + $0x2c] sm:$0xf]
        %v923 = vld [vmem:[%s15 + $0x30] sm:$0xf]
        %v924 = vld [vmem:[%s15 + $0x34] sm:$0xf]
        %v925 = vld [vmem:[%s15 + $0x38] sm:$0xf]
        %v926 = vld [vmem:[%s15 + $0x3c] sm:$0xf]
        %v927 = vld [vmem:[%s17] sm:$0x1]
        %v928 = vld [vmem:[%s17 + $0x1] sm:$0x1]
        %v929 = vld [vmem:[%s17 + $0x2] sm:$0x1]
        %v930 = vld [vmem:[%s17 + $0x3] sm:$0x1]
        %v935 = vunpack.c.l.b16 %v911
        %v936 = vunpack.c.l.b16 %v912
        %v937 = vunpack.c.l.b16 %v913
        %v938 = vunpack.c.l.b16 %v914
        %v939 = vpack.c.b16 %v936, %v935
        %v940 = vpack.c.b16 %v938, %v937
        %vm943 = vcmask 261120
        %v945 = vsel %vm943, %v910, 0
        %947 = vmatprep.subr.bf16.mxu0 0
        %948 = vmatpush1.bf16.msra.mxu0 0
        %949 = vmatprep.subr.bf16.mxu0 0
        %950 = vmatpush1.bf16.msra.mxu0 0
        %951 = vmatprep.subr.bf16.mxu0 0
        %952 = vmatpush1.bf16.msra.mxu0 0
        %953 = vmatprep.subr.bf16.mxu0 0
        %954 = vmatpush1.bf16.msra.mxu0 0
        %955 = vmatprep.subr.bf16.mxu0 0
        %956 = vmatpush1.bf16.msra.mxu0 0
        %957 = vmatprep.subr.bf16.mxu0 0
        %958 = vmatpush1.bf16.msra.mxu0 0
        %959 = vmatprep.subr.bf16.mxu0 0
        %960 = vmatpush1.bf16.msra.mxu0 %v940
        %961 = vmatprep.subr.bf16.mxu0 0
        %962 = vmatpush1.bf16.msra.mxu0 %v939
        %963 = vmatprep.subr.bf16.mxu0 0
        %964 = vmatpush2.bf16.msra.mxu0 0
        %965 = vmatprep.subr.bf16.mxu0 0
        %966 = vmatpush2.bf16.msra.mxu0 0
        %967 = vmatprep.subr.bf16.mxu0 0
        %968 = vmatpush2.bf16.msra.mxu0 0
        %969 = vmatprep.subr.bf16.mxu0 0
        %970 = vmatpush2.bf16.msra.mxu0 0
        %971 = vmatprep.subr.bf16.mxu0 0
        %972 = vmatpush2.bf16.msra.mxu0 0
        %973 = vmatprep.subr.bf16.mxu0 0
        %974 = vmatpush2.bf16.msra.mxu0 0
        %975 = vmatprep.subr.bf16.mxu0 0
        %976 = vmatpush2.bf16.msra.mxu0 0
        %977 = vmatprep.subr.bf16.mxu0 0
        %978 = vmatpush2.bf16.msra.mxu0 0
        %979 = vmatprep.mubr.bf16.mxu0 0
        %980 = vmatmul.mubr.bf16.gmra.mxu0 %v945
        %v981 = vpop.f32.mrf.mxu0
        %v982 = vadd.f32 %v927, %v981
        %v983 = vpop.f32.mrf.mxu0
        %v984 = vpop.f32.mrf.mxu0
        %v985 = vpop.f32.mrf.mxu0
        %986 = vdwg.mxu0
        %v991 = vunpack.c.l.b16 %v915
        %v992 = vunpack.c.l.b16 %v916
        %v993 = vunpack.c.l.b16 %v917
        %v994 = vunpack.c.l.b16 %v918
        %v995 = vpack.c.b16 %v992, %v991
        %v996 = vpack.c.b16 %v994, %v993
        %999 = vmatprep.subr.bf16.mxu0 0
        %1000 = vmatpush1.bf16.msra.mxu0 0
        %1001 = vmatprep.subr.bf16.mxu0 0
        %1002 = vmatpush1.bf16.msra.mxu0 0
        %1003 = vmatprep.subr.bf16.mxu0 0
        %1004 = vmatpush1.bf16.msra.mxu0 0
        %1005 = vmatprep.subr.bf16.mxu0 0
        %1006 = vmatpush1.bf16.msra.mxu0 0
        %1007 = vmatprep.subr.bf16.mxu0 0
        %1008 = vmatpush1.bf16.msra.mxu0 0
        %1009 = vmatprep.subr.bf16.mxu0 0
        %1010 = vmatpush1.bf16.msra.mxu0 0
        %1011 = vmatprep.subr.bf16.mxu0 0
        %1012 = vmatpush1.bf16.msra.mxu0 %v996
        %1013 = vmatprep.subr.bf16.mxu0 0
        %1014 = vmatpush1.bf16.msra.mxu0 %v995
        %1015 = vmatprep.subr.bf16.mxu0 0
        %1016 = vmatpush2.bf16.msra.mxu0 0
        %1017 = vmatprep.subr.bf16.mxu0 0
        %1018 = vmatpush2.bf16.msra.mxu0 0
        %1019 = vmatprep.subr.bf16.mxu0 0
        %1020 = vmatpush2.bf16.msra.mxu0 0
        %1021 = vmatprep.subr.bf16.mxu0 0
        %1022 = vmatpush2.bf16.msra.mxu0 0
        %1023 = vmatprep.subr.bf16.mxu0 0
        %1024 = vmatpush2.bf16.msra.mxu0 0
        %1025 = vmatprep.subr.bf16.mxu0 0
        %1026 = vmatpush2.bf16.msra.mxu0 0
        %1027 = vmatprep.subr.bf16.mxu0 0
        %1028 = vmatpush2.bf16.msra.mxu0 0
        %1029 = vmatprep.subr.bf16.mxu0 0
        %1030 = vmatpush2.bf16.msra.mxu0 0
        %1031 = vmatprep.mubr.bf16.mxu0 0
        %1032 = vmatmul.mubr.bf16.gmra.mxu0 %v945
        %v1033 = vpop.f32.mrf.mxu0
        %v1034 = vadd.f32 %v928, %v1033
        %v1035 = vpop.f32.mrf.mxu0
        %v1036 = vpop.f32.mrf.mxu0
        %v1037 = vpop.f32.mrf.mxu0
        %1038 = vdwg.mxu0
        %v1043 = vunpack.c.l.b16 %v919
        %v1044 = vunpack.c.l.b16 %v920
        %v1045 = vunpack.c.l.b16 %v921
        %v1046 = vunpack.c.l.b16 %v922
        %v1047 = vpack.c.b16 %v1044, %v1043
        %v1048 = vpack.c.b16 %v1046, %v1045
        %1051 = vmatprep.subr.bf16.mxu0 0
        %1052 = vmatpush1.bf16.msra.mxu0 0
        %1053 = vmatprep.subr.bf16.mxu0 0
        %1054 = vmatpush1.bf16.msra.mxu0 0
        %1055 = vmatprep.subr.bf16.mxu0 0
        %1056 = vmatpush1.bf16.msra.mxu0 0
        %1057 = vmatprep.subr.bf16.mxu0 0
        %1058 = vmatpush1.bf16.msra.mxu0 0
        %1059 = vmatprep.subr.bf16.mxu0 0
        %1060 = vmatpush1.bf16.msra.mxu0 0
        %1061 = vmatprep.subr.bf16.mxu0 0
        %1062 = vmatpush1.bf16.msra.mxu0 0
        %1063 = vmatprep.subr.bf16.mxu0 0
        %1064 = vmatpush1.bf16.msra.mxu0 %v1048
        %1065 = vmatprep.subr.bf16.mxu0 0
        %1066 = vmatpush1.bf16.msra.mxu0 %v1047
        %1067 = vmatprep.subr.bf16.mxu0 0
        %1068 = vmatpush2.bf16.msra.mxu0 0
        %1069 = vmatprep.subr.bf16.mxu0 0
        %1070 = vmatpush2.bf16.msra.mxu0 0
        %1071 = vmatprep.subr.bf16.mxu0 0
        %1072 = vmatpush2.bf16.msra.mxu0 0
        %1073 = vmatprep.subr.bf16.mxu0 0
        %1074 = vmatpush2.bf16.msra.mxu0 0
        %1075 = vmatprep.subr.bf16.mxu0 0
        %1076 = vmatpush2.bf16.msra.mxu0 0
        %1077 = vmatprep.subr.bf16.mxu0 0
        %1078 = vmatpush2.bf16.msra.mxu0 0
        %1079 = vmatprep.subr.bf16.mxu0 0
        %1080 = vmatpush2.bf16.msra.mxu0 0
        %1081 = vmatprep.subr.bf16.mxu0 0
        %1082 = vmatpush2.bf16.msra.mxu0 0
        %1083 = vmatprep.mubr.bf16.mxu0 0
        %1084 = vmatmul.mubr.bf16.gmra.mxu0 %v945
        %v1085 = vpop.f32.mrf.mxu0
        %v1086 = vadd.f32 %v929, %v1085
        %v1087 = vpop.f32.mrf.mxu0
        %v1088 = vpop.f32.mrf.mxu0
        %v1089 = vpop.f32.mrf.mxu0
        %1090 = vdwg.mxu0
        %v1095 = vunpack.c.l.b16 %v923
        %v1096 = vunpack.c.l.b16 %v924
        %v1097 = vunpack.c.l.b16 %v925
        %v1098 = vunpack.c.l.b16 %v926
        %v1099 = vpack.c.b16 %v1096, %v1095
        %v1100 = vpack.c.b16 %v1098, %v1097
        %1103 = vmatprep.subr.bf16.mxu0 0
        %1104 = vmatpush1.bf16.msra.mxu0 0
        %1105 = vmatprep.subr.bf16.mxu0 0
        %1106 = vmatpush1.bf16.msra.mxu0 0
        %1107 = vmatprep.subr.bf16.mxu0 0
        %1108 = vmatpush1.bf16.msra.mxu0 0
        %1109 = vmatprep.subr.bf16.mxu0 0
        %1110 = vmatpush1.bf16.msra.mxu0 0
        %1111 = vmatprep.subr.bf16.mxu0 0
        %1112 = vmatpush1.bf16.msra.mxu0 0
        %1113 = vmatprep.subr.bf16.mxu0 0
        %1114 = vmatpush1.bf16.msra.mxu0 0
        %1115 = vmatprep.subr.bf16.mxu0 0
        %1116 = vmatpush1.bf16.msra.mxu0 %v1100
        %1117 = vmatprep.subr.bf16.mxu0 0
        %1118 = vmatpush1.bf16.msra.mxu0 %v1099
        %1119 = vmatprep.subr.bf16.mxu0 0
        %1120 = vmatpush2.bf16.msra.mxu0 0
        %1121 = vmatprep.subr.bf16.mxu0 0
        %1122 = vmatpush2.bf16.msra.mxu0 0
        %1123 = vmatprep.subr.bf16.mxu0 0
        %1124 = vmatpush2.bf16.msra.mxu0 0
        %1125 = vmatprep.subr.bf16.mxu0 0
        %1126 = vmatpush2.bf16.msra.mxu0 0
        %1127 = vmatprep.subr.bf16.mxu0 0
        %1128 = vmatpush2.bf16.msra.mxu0 0
        %1129 = vmatprep.subr.bf16.mxu0 0
        %1130 = vmatpush2.bf16.msra.mxu0 0
        %1131 = vmatprep.subr.bf16.mxu0 0
        %1132 = vmatpush2.bf16.msra.mxu0 0
        %1133 = vmatprep.subr.bf16.mxu0 0
        %1134 = vmatpush2.bf16.msra.mxu0 0
        %1135 = vmatprep.mubr.bf16.mxu0 0
        %1136 = vmatmul.mubr.bf16.gmra.mxu0 %v945
        %v1137 = vpop.f32.mrf.mxu0
        %v1138 = vadd.f32 %v930, %v1137
        %v1139 = vpop.f32.mrf.mxu0
        %v1140 = vpop.f32.mrf.mxu0
        %v1141 = vpop.f32.mrf.mxu0
        %1142 = vdwg.mxu0
        %v1143 = vld [vmem:[%s19] sm:$0xf]
        %v1144 = vld [vmem:[%s19 + $0x4] sm:$0xf]
        %v1145 = vld [vmem:[%s19 + $0x8] sm:$0xf]
        %v1146 = vld [vmem:[%s19 + $0xc] sm:$0xf]
        %v1147 = vld [vmem:[%s19 + $0x10] sm:$0xf]
        %v1148 = vld [vmem:[%s19 + $0x14] sm:$0xf]
        %v1149 = vld [vmem:[%s19 + $0x18] sm:$0xf]
        %v1150 = vld [vmem:[%s19 + $0x1c] sm:$0xf]
        %v1151 = vld [vmem:[%s19 + $0x20] sm:$0xf]
        %v1152 = vld [vmem:[%s19 + $0x24] sm:$0xf]
        %v1153 = vld [vmem:[%s19 + $0x28] sm:$0xf]
        %v1154 = vld [vmem:[%s19 + $0x2c] sm:$0xf]
        %v1155 = vld [vmem:[%s19 + $0x30] sm:$0xf]
        %v1156 = vld [vmem:[%s19 + $0x34] sm:$0xf]
        %v1157 = vld [vmem:[%s19 + $0x38] sm:$0xf]
        %v1158 = vld [vmem:[%s19 + $0x3c] sm:$0xf]
        %v1159 = vld [vmem:[%s21] sm:$0x1]
        %v1160 = vld [vmem:[%s21 + $0x1] sm:$0x1]
        %v1161 = vld [vmem:[%s21 + $0x2] sm:$0x1]
        %v1162 = vld [vmem:[%s21 + $0x3] sm:$0x1]
        %v1167 = vunpack.c.l.b16 %v1143
        %v1168 = vunpack.c.l.b16 %v1144
        %v1169 = vunpack.c.l.b16 %v1145
        %v1170 = vunpack.c.l.b16 %v1146
        %v1171 = vpack.c.b16 %v1168, %v1167
        %v1172 = vpack.c.b16 %v1170, %v1169
        %1175 = vmatprep.subr.bf16.mxu0 0
        %1176 = vmatpush1.bf16.msra.mxu0 0
        %1177 = vmatprep.subr.bf16.mxu0 0
        %1178 = vmatpush1.bf16.msra.mxu0 0
        %1179 = vmatprep.subr.bf16.mxu0 0
        %1180 = vmatpush1.bf16.msra.mxu0 0
        %1181 = vmatprep.subr.bf16.mxu0 0
        %1182 = vmatpush1.bf16.msra.mxu0 0
        %1183 = vmatprep.subr.bf16.mxu0 0
        %1184 = vmatpush1.bf16.msra.mxu0 0
        %1185 = vmatprep.subr.bf16.mxu0 0
        %1186 = vmatpush1.bf16.msra.mxu0 0
        %1187 = vmatprep.subr.bf16.mxu0 0
        %1188 = vmatpush1.bf16.msra.mxu0 %v1172
        %1189 = vmatprep.subr.bf16.mxu0 0
        %1190 = vmatpush1.bf16.msra.mxu0 %v1171
        %1191 = vmatprep.subr.bf16.mxu0 0
        %1192 = vmatpush2.bf16.msra.mxu0 0
        %1193 = vmatprep.subr.bf16.mxu0 0
        %1194 = vmatpush2.bf16.msra.mxu0 0
        %1195 = vmatprep.subr.bf16.mxu0 0
        %1196 = vmatpush2.bf16.msra.mxu0 0
        %1197 = vmatprep.subr.bf16.mxu0 0
        %1198 = vmatpush2.bf16.msra.mxu0 0
        %1199 = vmatprep.subr.bf16.mxu0 0
        %1200 = vmatpush2.bf16.msra.mxu0 0
        %1201 = vmatprep.subr.bf16.mxu0 0
        %1202 = vmatpush2.bf16.msra.mxu0 0
        %1203 = vmatprep.subr.bf16.mxu0 0
        %1204 = vmatpush2.bf16.msra.mxu0 0
        %1205 = vmatprep.subr.bf16.mxu0 0
        %1206 = vmatpush2.bf16.msra.mxu0 0
        %1207 = vmatprep.mubr.bf16.mxu0 0
        %1208 = vmatmul.mubr.bf16.gmra.mxu0 %v945
        %v1209 = vpop.f32.mrf.mxu0
        %v1210 = vadd.f32 %v1159, %v1209
        %v1211 = vpop.f32.mrf.mxu0
        %v1212 = vpop.f32.mrf.mxu0
        %v1213 = vpop.f32.mrf.mxu0
        %1214 = vdwg.mxu0
        %v1219 = vunpack.c.l.b16 %v1147
        %v1220 = vunpack.c.l.b16 %v1148
        %v1221 = vunpack.c.l.b16 %v1149
        %v1222 = vunpack.c.l.b16 %v1150
        %v1223 = vpack.c.b16 %v1220, %v1219
        %v1224 = vpack.c.b16 %v1222, %v1221
        %1227 = vmatprep.subr.bf16.mxu0 0
        %1228 = vmatpush1.bf16.msra.mxu0 0
        %1229 = vmatprep.subr.bf16.mxu0 0
        %1230 = vmatpush1.bf16.msra.mxu0 0
        %1231 = vmatprep.subr.bf16.mxu0 0
        %1232 = vmatpush1.bf16.msra.mxu0 0
        %1233 = vmatprep.subr.bf16.mxu0 0
        %1234 = vmatpush1.bf16.msra.mxu0 0
        %1235 = vmatprep.subr.bf16.mxu0 0
        %1236 = vmatpush1.bf16.msra.mxu0 0
        %1237 = vmatprep.subr.bf16.mxu0 0
        %1238 = vmatpush1.bf16.msra.mxu0 0
        %1239 = vmatprep.subr.bf16.mxu0 0
        %1240 = vmatpush1.bf16.msra.mxu0 %v1224
        %1241 = vmatprep.subr.bf16.mxu0 0
        %1242 = vmatpush1.bf16.msra.mxu0 %v1223
        %1243 = vmatprep.subr.bf16.mxu0 0
        %1244 = vmatpush2.bf16.msra.mxu0 0
        %1245 = vmatprep.subr.bf16.mxu0 0
        %1246 = vmatpush2.bf16.msra.mxu0 0
        %1247 = vmatprep.subr.bf16.mxu0 0
        %1248 = vmatpush2.bf16.msra.mxu0 0
        %1249 = vmatprep.subr.bf16.mxu0 0
        %1250 = vmatpush2.bf16.msra.mxu0 0
        %1251 = vmatprep.subr.bf16.mxu0 0
        %1252 = vmatpush2.bf16.msra.mxu0 0
        %1253 = vmatprep.subr.bf16.mxu0 0
        %1254 = vmatpush2.bf16.msra.mxu0 0
        %1255 = vmatprep.subr.bf16.mxu0 0
        %1256 = vmatpush2.bf16.msra.mxu0 0
        %1257 = vmatprep.subr.bf16.mxu0 0
        %1258 = vmatpush2.bf16.msra.mxu0 0
        %1259 = vmatprep.mubr.bf16.mxu0 0
        %1260 = vmatmul.mubr.bf16.gmra.mxu0 %v945
        %v1261 = vpop.f32.mrf.mxu0
        %v1262 = vadd.f32 %v1160, %v1261
        %v1263 = vpop.f32.mrf.mxu0
        %v1264 = vpop.f32.mrf.mxu0
        %v1265 = vpop.f32.mrf.mxu0
        %1266 = vdwg.mxu0
        %v1271 = vunpack.c.l.b16 %v1151
        %v1272 = vunpack.c.l.b16 %v1152
        %v1273 = vunpack.c.l.b16 %v1153
        %v1274 = vunpack.c.l.b16 %v1154
        %v1275 = vpack.c.b16 %v1272, %v1271
        %v1276 = vpack.c.b16 %v1274, %v1273
        %1279 = vmatprep.subr.bf16.mxu0 0
        %1280 = vmatpush1.bf16.msra.mxu0 0
        %1281 = vmatprep.subr.bf16.mxu0 0
        %1282 = vmatpush1.bf16.msra.mxu0 0
        %1283 = vmatprep.subr.bf16.mxu0 0
        %1284 = vmatpush1.bf16.msra.mxu0 0
        %1285 = vmatprep.subr.bf16.mxu0 0
        %1286 = vmatpush1.bf16.msra.mxu0 0
        %1287 = vmatprep.subr.bf16.mxu0 0
        %1288 = vmatpush1.bf16.msra.mxu0 0
        %1289 = vmatprep.subr.bf16.mxu0 0
        %1290 = vmatpush1.bf16.msra.mxu0 0
        %1291 = vmatprep.subr.bf16.mxu0 0
        %1292 = vmatpush1.bf16.msra.mxu0 %v1276
        %1293 = vmatprep.subr.bf16.mxu0 0
        %1294 = vmatpush1.bf16.msra.mxu0 %v1275
        %1295 = vmatprep.subr.bf16.mxu0 0
        %1296 = vmatpush2.bf16.msra.mxu0 0
        %1297 = vmatprep.subr.bf16.mxu0 0
        %1298 = vmatpush2.bf16.msra.mxu0 0
        %1299 = vmatprep.subr.bf16.mxu0 0
        %1300 = vmatpush2.bf16.msra.mxu0 0
        %1301 = vmatprep.subr.bf16.mxu0 0
        %1302 = vmatpush2.bf16.msra.mxu0 0
        %1303 = vmatprep.subr.bf16.mxu0 0
        %1304 = vmatpush2.bf16.msra.mxu0 0
        %1305 = vmatprep.subr.bf16.mxu0 0
        %1306 = vmatpush2.bf16.msra.mxu0 0
        %1307 = vmatprep.subr.bf16.mxu0 0
        %1308 = vmatpush2.bf16.msra.mxu0 0
        %1309 = vmatprep.subr.bf16.mxu0 0
        %1310 = vmatpush2.bf16.msra.mxu0 0
        %1311 = vmatprep.mubr.bf16.mxu0 0
        %1312 = vmatmul.mubr.bf16.gmra.mxu0 %v945
        %v1313 = vpop.f32.mrf.mxu0
        %v1314 = vadd.f32 %v1161, %v1313
        %v1315 = vpop.f32.mrf.mxu0
        %v1316 = vpop.f32.mrf.mxu0
        %v1317 = vpop.f32.mrf.mxu0
        %1318 = vdwg.mxu0
        %v1323 = vunpack.c.l.b16 %v1155
        %v1324 = vunpack.c.l.b16 %v1156
        %v1325 = vunpack.c.l.b16 %v1157
        %v1326 = vunpack.c.l.b16 %v1158
        %v1327 = vpack.c.b16 %v1324, %v1323
        %v1328 = vpack.c.b16 %v1326, %v1325
        %1331 = vmatprep.subr.bf16.mxu0 0
        %1332 = vmatpush1.bf16.msra.mxu0 0
        %1333 = vmatprep.subr.bf16.mxu0 0
        %1334 = vmatpush1.bf16.msra.mxu0 0
        %1335 = vmatprep.subr.bf16.mxu0 0
        %1336 = vmatpush1.bf16.msra.mxu0 0
        %1337 = vmatprep.subr.bf16.mxu0 0
        %1338 = vmatpush1.bf16.msra.mxu0 0
        %1339 = vmatprep.subr.bf16.mxu0 0
        %1340 = vmatpush1.bf16.msra.mxu0 0
        %1341 = vmatprep.subr.bf16.mxu0 0
        %1342 = vmatpush1.bf16.msra.mxu0 0
        %1343 = vmatprep.subr.bf16.mxu0 0
        %1344 = vmatpush1.bf16.msra.mxu0 %v1328
        %1345 = vmatprep.subr.bf16.mxu0 0
        %1346 = vmatpush1.bf16.msra.mxu0 %v1327
        %1347 = vmatprep.subr.bf16.mxu0 0
        %1348 = vmatpush2.bf16.msra.mxu0 0
        %1349 = vmatprep.subr.bf16.mxu0 0
        %1350 = vmatpush2.bf16.msra.mxu0 0
        %1351 = vmatprep.subr.bf16.mxu0 0
        %1352 = vmatpush2.bf16.msra.mxu0 0
        %1353 = vmatprep.subr.bf16.mxu0 0
        %1354 = vmatpush2.bf16.msra.mxu0 0
        %1355 = vmatprep.subr.bf16.mxu0 0
        %1356 = vmatpush2.bf16.msra.mxu0 0
        %1357 = vmatprep.subr.bf16.mxu0 0
        %1358 = vmatpush2.bf16.msra.mxu0 0
        %1359 = vmatprep.subr.bf16.mxu0 0
        %1360 = vmatpush2.bf16.msra.mxu0 0
        %1361 = vmatprep.subr.bf16.mxu0 0
        %1362 = vmatpush2.bf16.msra.mxu0 0
        %1363 = vmatprep.mubr.bf16.mxu0 0
        %1364 = vmatmul.mubr.bf16.gmra.mxu0 %v945
        %v1365 = vpop.f32.mrf.mxu0
        %v1366 = vadd.f32 %v1162, %v1365
        %v1367 = vpop.f32.mrf.mxu0
        %v1368 = vpop.f32.mrf.mxu0
        %v1369 = vpop.f32.mrf.mxu0
        %1370 = vdwg.mxu0
        %v1371 = vld [vmem:[%s23] sm:$0xf]
        %v1372 = vld [vmem:[%s23 + $0x4] sm:$0xf]
        %v1373 = vld [vmem:[%s23 + $0x8] sm:$0xf]
        %v1374 = vld [vmem:[%s23 + $0xc] sm:$0xf]
        %v1375 = vld [vmem:[%s23 + $0x10] sm:$0xf]
        %v1376 = vld [vmem:[%s23 + $0x14] sm:$0xf]
        %v1377 = vld [vmem:[%s23 + $0x18] sm:$0xf]
        %v1378 = vld [vmem:[%s23 + $0x1c] sm:$0xf]
        %v1379 = vld [vmem:[%s23 + $0x20] sm:$0xf]
        %v1380 = vld [vmem:[%s23 + $0x24] sm:$0xf]
        %v1381 = vld [vmem:[%s23 + $0x28] sm:$0xf]
        %v1382 = vld [vmem:[%s23 + $0x2c] sm:$0xf]
        %v1383 = vld [vmem:[%s23 + $0x30] sm:$0xf]
        %v1384 = vld [vmem:[%s23 + $0x34] sm:$0xf]
        %v1385 = vld [vmem:[%s23 + $0x38] sm:$0xf]
        %v1386 = vld [vmem:[%s23 + $0x3c] sm:$0xf]
        %v1387 = vld [vmem:[%s25] sm:$0x1]
        %v1388 = vld [vmem:[%s25 + $0x1] sm:$0x1]
        %v1389 = vld [vmem:[%s25 + $0x2] sm:$0x1]
        %v1390 = vld [vmem:[%s25 + $0x3] sm:$0x1]
        %v1395 = vunpack.c.l.b16 %v1371
        %v1396 = vunpack.c.l.b16 %v1372
        %v1397 = vunpack.c.l.b16 %v1373
        %v1398 = vunpack.c.l.b16 %v1374
        %v1399 = vpack.c.b16 %v1396, %v1395
        %v1400 = vpack.c.b16 %v1398, %v1397
        %1403 = vmatprep.subr.bf16.mxu0 0
        %1404 = vmatpush1.bf16.msra.mxu0 0
        %1405 = vmatprep.subr.bf16.mxu0 0
        %1406 = vmatpush1.bf16.msra.mxu0 0
        %1407 = vmatprep.subr.bf16.mxu0 0
        %1408 = vmatpush1.bf16.msra.mxu0 0
        %1409 = vmatprep.subr.bf16.mxu0 0
        %1410 = vmatpush1.bf16.msra.mxu0 0
        %1411 = vmatprep.subr.bf16.mxu0 0
        %1412 = vmatpush1.bf16.msra.mxu0 0
        %1413 = vmatprep.subr.bf16.mxu0 0
        %1414 = vmatpush1.bf16.msra.mxu0 0
        %1415 = vmatprep.subr.bf16.mxu0 0
        %1416 = vmatpush1.bf16.msra.mxu0 %v1400
        %1417 = vmatprep.subr.bf16.mxu0 0
        %1418 = vmatpush1.bf16.msra.mxu0 %v1399
        %1419 = vmatprep.subr.bf16.mxu0 0
        %1420 = vmatpush2.bf16.msra.mxu0 0
        %1421 = vmatprep.subr.bf16.mxu0 0
        %1422 = vmatpush2.bf16.msra.mxu0 0
        %1423 = vmatprep.subr.bf16.mxu0 0
        %1424 = vmatpush2.bf16.msra.mxu0 0
        %1425 = vmatprep.subr.bf16.mxu0 0
        %1426 = vmatpush2.bf16.msra.mxu0 0
        %1427 = vmatprep.subr.bf16.mxu0 0
        %1428 = vmatpush2.bf16.msra.mxu0 0
        %1429 = vmatprep.subr.bf16.mxu0 0
        %1430 = vmatpush2.bf16.msra.mxu0 0
        %1431 = vmatprep.subr.bf16.mxu0 0
        %1432 = vmatpush2.bf16.msra.mxu0 0
        %1433 = vmatprep.subr.bf16.mxu0 0
        %1434 = vmatpush2.bf16.msra.mxu0 0
        %1435 = vmatprep.mubr.bf16.mxu0 0
        %1436 = vmatmul.mubr.bf16.gmra.mxu0 %v945
        %v1437 = vpop.f32.mrf.mxu0
        %v1438 = vadd.f32 %v1387, %v1437
        %v1439 = vpop.f32.mrf.mxu0
        %v1440 = vpop.f32.mrf.mxu0
        %v1441 = vpop.f32.mrf.mxu0
        %1442 = vdwg.mxu0
        %v1447 = vunpack.c.l.b16 %v1375
        %v1448 = vunpack.c.l.b16 %v1376
        %v1449 = vunpack.c.l.b16 %v1377
        %v1450 = vunpack.c.l.b16 %v1378
        %v1451 = vpack.c.b16 %v1448, %v1447
        %v1452 = vpack.c.b16 %v1450, %v1449
        %1455 = vmatprep.subr.bf16.mxu0 0
        %1456 = vmatpush1.bf16.msra.mxu0 0
        %1457 = vmatprep.subr.bf16.mxu0 0
        %1458 = vmatpush1.bf16.msra.mxu0 0
        %1459 = vmatprep.subr.bf16.mxu0 0
        %1460 = vmatpush1.bf16.msra.mxu0 0
        %1461 = vmatprep.subr.bf16.mxu0 0
        %1462 = vmatpush1.bf16.msra.mxu0 0
        %1463 = vmatprep.subr.bf16.mxu0 0
        %1464 = vmatpush1.bf16.msra.mxu0 0
        %1465 = vmatprep.subr.bf16.mxu0 0
        %1466 = vmatpush1.bf16.msra.mxu0 0
        %1467 = vmatprep.subr.bf16.mxu0 0
        %1468 = vmatpush1.bf16.msra.mxu0 %v1452
        %1469 = vmatprep.subr.bf16.mxu0 0
        %1470 = vmatpush1.bf16.msra.mxu0 %v1451
        %1471 = vmatprep.subr.bf16.mxu0 0
        %1472 = vmatpush2.bf16.msra.mxu0 0
        %1473 = vmatprep.subr.bf16.mxu0 0
        %1474 = vmatpush2.bf16.msra.mxu0 0
        %1475 = vmatprep.subr.bf16.mxu0 0
        %1476 = vmatpush2.bf16.msra.mxu0 0
        %1477 = vmatprep.subr.bf16.mxu0 0
        %1478 = vmatpush2.bf16.msra.mxu0 0
        %1479 = vmatprep.subr.bf16.mxu0 0
        %1480 = vmatpush2.bf16.msra.mxu0 0
        %1481 = vmatprep.subr.bf16.mxu0 0
        %1482 = vmatpush2.bf16.msra.mxu0 0
        %1483 = vmatprep.subr.bf16.mxu0 0
        %1484 = vmatpush2.bf16.msra.mxu0 0
        %1485 = vmatprep.subr.bf16.mxu0 0
        %1486 = vmatpush2.bf16.msra.mxu0 0
        %1487 = vmatprep.mubr.bf16.mxu0 0
        %1488 = vmatmul.mubr.bf16.gmra.mxu0 %v945
        %v1489 = vpop.f32.mrf.mxu0
        %v1490 = vadd.f32 %v1388, %v1489
        %v1491 = vpop.f32.mrf.mxu0
        %v1492 = vpop.f32.mrf.mxu0
        %v1493 = vpop.f32.mrf.mxu0
        %1494 = vdwg.mxu0
        %v1499 = vunpack.c.l.b16 %v1379
        %v1500 = vunpack.c.l.b16 %v1380
        %v1501 = vunpack.c.l.b16 %v1381
        %v1502 = vunpack.c.l.b16 %v1382
        %v1503 = vpack.c.b16 %v1500, %v1499
        %v1504 = vpack.c.b16 %v1502, %v1501
        %1507 = vmatprep.subr.bf16.mxu0 0
        %1508 = vmatpush1.bf16.msra.mxu0 0
        %1509 = vmatprep.subr.bf16.mxu0 0
        %1510 = vmatpush1.bf16.msra.mxu0 0
        %1511 = vmatprep.subr.bf16.mxu0 0
        %1512 = vmatpush1.bf16.msra.mxu0 0
        %1513 = vmatprep.subr.bf16.mxu0 0
        %1514 = vmatpush1.bf16.msra.mxu0 0
        %1515 = vmatprep.subr.bf16.mxu0 0
        %1516 = vmatpush1.bf16.msra.mxu0 0
        %1517 = vmatprep.subr.bf16.mxu0 0
        %1518 = vmatpush1.bf16.msra.mxu0 0
        %1519 = vmatprep.subr.bf16.mxu0 0
        %1520 = vmatpush1.bf16.msra.mxu0 %v1504
        %1521 = vmatprep.subr.bf16.mxu0 0
        %1522 = vmatpush1.bf16.msra.mxu0 %v1503
        %1523 = vmatprep.subr.bf16.mxu0 0
        %1524 = vmatpush2.bf16.msra.mxu0 0
        %1525 = vmatprep.subr.bf16.mxu0 0
        %1526 = vmatpush2.bf16.msra.mxu0 0
        %1527 = vmatprep.subr.bf16.mxu0 0
        %1528 = vmatpush2.bf16.msra.mxu0 0
        %1529 = vmatprep.subr.bf16.mxu0 0
        %1530 = vmatpush2.bf16.msra.mxu0 0
        %1531 = vmatprep.subr.bf16.mxu0 0
        %1532 = vmatpush2.bf16.msra.mxu0 0
        %1533 = vmatprep.subr.bf16.mxu0 0
        %1534 = vmatpush2.bf16.msra.mxu0 0
        %1535 = vmatprep.subr.bf16.mxu0 0
        %1536 = vmatpush2.bf16.msra.mxu0 0
        %1537 = vmatprep.subr.bf16.mxu0 0
        %1538 = vmatpush2.bf16.msra.mxu0 0
        %1539 = vmatprep.mubr.bf16.mxu0 0
        %1540 = vmatmul.mubr.bf16.gmra.mxu0 %v945
        %v1541 = vpop.f32.mrf.mxu0
        %v1542 = vadd.f32 %v1389, %v1541
        %v1543 = vpop.f32.mrf.mxu0
        %v1544 = vpop.f32.mrf.mxu0
        %v1545 = vpop.f32.mrf.mxu0
        %1546 = vdwg.mxu0
        %v1551 = vunpack.c.l.b16 %v1383
        %v1552 = vunpack.c.l.b16 %v1384
        %v1553 = vunpack.c.l.b16 %v1385
        %v1554 = vunpack.c.l.b16 %v1386
        %v1555 = vpack.c.b16 %v1552, %v1551
        %v1556 = vpack.c.b16 %v1554, %v1553
        %1559 = vmatprep.subr.bf16.mxu0 0
        %1560 = vmatpush1.bf16.msra.mxu0 0
        %1561 = vmatprep.subr.bf16.mxu0 0
        %1562 = vmatpush1.bf16.msra.mxu0 0
        %1563 = vmatprep.subr.bf16.mxu0 0
        %1564 = vmatpush1.bf16.msra.mxu0 0
        %1565 = vmatprep.subr.bf16.mxu0 0
        %1566 = vmatpush1.bf16.msra.mxu0 0
        %1567 = vmatprep.subr.bf16.mxu0 0
        %1568 = vmatpush1.bf16.msra.mxu0 0
        %1569 = vmatprep.subr.bf16.mxu0 0
        %1570 = vmatpush1.bf16.msra.mxu0 0
        %1571 = vmatprep.subr.bf16.mxu0 0
        %1572 = vmatpush1.bf16.msra.mxu0 %v1556
        %1573 = vmatprep.subr.bf16.mxu0 0
        %1574 = vmatpush1.bf16.msra.mxu0 %v1555
        %1575 = vmatprep.subr.bf16.mxu0 0
        %1576 = vmatpush2.bf16.msra.mxu0 0
        %1577 = vmatprep.subr.bf16.mxu0 0
        %1578 = vmatpush2.bf16.msra.mxu0 0
        %1579 = vmatprep.subr.bf16.mxu0 0
        %1580 = vmatpush2.bf16.msra.mxu0 0
        %1581 = vmatprep.subr.bf16.mxu0 0
        %1582 = vmatpush2.bf16.msra.mxu0 0
        %1583 = vmatprep.subr.bf16.mxu0 0
        %1584 = vmatpush2.bf16.msra.mxu0 0
        %1585 = vmatprep.subr.bf16.mxu0 0
        %1586 = vmatpush2.bf16.msra.mxu0 0
        %1587 = vmatprep.subr.bf16.mxu0 0
        %1588 = vmatpush2.bf16.msra.mxu0 0
        %1589 = vmatprep.subr.bf16.mxu0 0
        %1590 = vmatpush2.bf16.msra.mxu0 0
        %1591 = vmatprep.mubr.bf16.mxu0 0
        %1592 = vmatmul.mubr.bf16.gmra.mxu0 %v945
        %v1593 = vpop.f32.mrf.mxu0
        %v1594 = vadd.f32 %v1390, %v1593
        %v1595 = vpop.f32.mrf.mxu0
        %v1596 = vpop.f32.mrf.mxu0
        %v1597 = vpop.f32.mrf.mxu0
        %1598 = vdwg.mxu0
        %s1599 = scalar_lea.vmem [#allocation2], %s71
        %vm1600 = vcmask 57344
        %1601 = vst.msk [vmem:[%s1599] sm:$0x1] %vm1600, %v1210
        %s1602 = scalar_lea.vmem [#allocation3], %s71
        %1603 = vst.msk [vmem:[%s1602] sm:$0x1] %vm1600, %v1438
        %s1604 = sadd.s32 %s71, 8
        %s1605 = scalar_lea.vmem [#allocation2], %s1604
        %1606 = vst.msk [vmem:[%s1605] sm:$0x1] %vm1600, %v1262
        %s1607 = scalar_lea.vmem [#allocation3], %s1604
        %1608 = vst.msk [vmem:[%s1607] sm:$0x1] %vm1600, %v1490
        %s1609 = sadd.s32 %s71, 16
        %s1610 = scalar_lea.vmem [#allocation2], %s1609
        %1611 = vst.msk [vmem:[%s1610] sm:$0x1] %vm1600, %v1314
        %s1612 = scalar_lea.vmem [#allocation3], %s1609
        %1613 = vst.msk [vmem:[%s1612] sm:$0x1] %vm1600, %v1542
        %s1614 = sadd.s32 %s71, 24
        %s1615 = scalar_lea.vmem [#allocation2], %s1614
        %1616 = vst.msk [vmem:[%s1615] sm:$0x1] %vm1600, %v1366
        %s1617 = scalar_lea.vmem [#allocation3], %s1614
        %1618 = vst.msk [vmem:[%s1617] sm:$0x1] %vm1600, %v1594
        %v1619 = vlaneseq
        %v1620 = vand.u32 %v1619, 127
        %v1621 = vld [vmem:[#allocation2] sm:$0xff]
        %v1622 = vld [vmem:[#allocation2 + $0x8] sm:$0xff]
        %v1623 = vld [vmem:[#allocation2 + $0x10] sm:$0xff]
        %v1624 = vld [vmem:[#allocation2 + $0x18] sm:$0xff]
        %v1625 = vld [vmem:[#allocation3] sm:$0xff]
        %v1626 = vld [vmem:[#allocation3 + $0x8] sm:$0xff]
        %v1627 = vld [vmem:[#allocation3 + $0x10] sm:$0xff]
        %v1628 = vld [vmem:[#allocation3 + $0x18] sm:$0xff]
        %v1629 = vstv %s71
        %vm1630 = vcmp.le.s32.totalorder %v1620, %v1629
        %v1631 = vpack.c.bf16 %v982, %v982
        %v1632 = vpack.c.bf16 %v1034, %v1034
        %v1633 = vpack.c.bf16 %v1086, %v1086
        %v1634 = vpack.c.bf16 %v1138, %v1138
        %v1635 = vpack.c.bf16 %v1621, %v1621
        %v1636 = vpack.c.bf16 %v1622, %v1622
        %v1637 = vpack.c.bf16 %v1623, %v1623
        %v1638 = vpack.c.bf16 %v1624, %v1624
        %vm1639 = vcmask 64512
        %v1641 = vsel %vm1639, %v1631, 0
        %v1644 = vsel %vm1639, %v1635, 0
        %1646 = vmatprep.subr.bf16.mxu0 0
        %1647 = vmatpush1.bf16.xpose.msra.mxu0 0
        %1648 = vmatprep.subr.bf16.mxu0 0
        %1649 = vmatpush1.bf16.xpose.msra.mxu0 0
        %1650 = vmatprep.subr.bf16.mxu0 0
        %1651 = vmatpush1.bf16.xpose.msra.mxu0 0
        %1652 = vmatprep.subr.bf16.mxu0 0
        %1653 = vmatpush1.bf16.xpose.msra.mxu0 0
        %1654 = vmatprep.subr.bf16.mxu0 0
        %1655 = vmatpush1.bf16.xpose.msra.mxu0 0
        %1656 = vmatprep.subr.bf16.mxu0 0
        %1657 = vmatpush1.bf16.xpose.msra.mxu0 0
        %1658 = vmatprep.subr.bf16.mxu0 0
        %1659 = vmatpush1.bf16.xpose.msra.mxu0 0
        %1660 = vmatprep.subr.bf16.mxu0 0
        %1661 = vmatpush1.bf16.xpose.msra.mxu0 %v1644
        %1662 = vmatprep.subr.bf16.mxu0 0
        %1663 = vmatpush2.bf16.xpose.msra.mxu0 0
        %1664 = vmatprep.subr.bf16.mxu0 0
        %1665 = vmatpush2.bf16.xpose.msra.mxu0 0
        %1666 = vmatprep.subr.bf16.mxu0 0
        %1667 = vmatpush2.bf16.xpose.msra.mxu0 0
        %1668 = vmatprep.subr.bf16.mxu0 0
        %1669 = vmatpush2.bf16.xpose.msra.mxu0 0
        %1670 = vmatprep.subr.bf16.mxu0 0
        %1671 = vmatpush2.bf16.xpose.msra.mxu0 0
        %1672 = vmatprep.subr.bf16.mxu0 0
        %1673 = vmatpush2.bf16.xpose.msra.mxu0 0
        %1674 = vmatprep.subr.bf16.mxu0 0
        %1675 = vmatpush2.bf16.xpose.msra.mxu0 0
        %1676 = vmatprep.subr.bf16.mxu0 0
        %1677 = vmatpush2.bf16.xpose.msra.mxu0 0
        %1678 = vmatprep.mubr.bf16.mxu0 0
        %1679 = vmatmul.mubr.bf16.gmra.mxu0 %v1641
        %v1680 = vpop.f32.mrf.mxu0
        %v1681 = vadd.f32 0.0, %v1680
        %v1682 = vpop.f32.mrf.mxu0
        %v1683 = vpop.f32.mrf.mxu0
        %v1684 = vpop.f32.mrf.mxu0
        %1685 = vdwg.mxu0
        %v1687 = vsel %vm1639, %v1632, 0
        %v1690 = vsel %vm1639, %v1636, 0
        %1692 = vmatprep.subr.bf16.mxu0 0
        %1693 = vmatpush1.bf16.xpose.msra.mxu0 0
        %1694 = vmatprep.subr.bf16.mxu0 0
        %1695 = vmatpush1.bf16.xpose.msra.mxu0 0
        %1696 = vmatprep.subr.bf16.mxu0 0
        %1697 = vmatpush1.bf16.xpose.msra.mxu0 0
        %1698 = vmatprep.subr.bf16.mxu0 0
        %1699 = vmatpush1.bf16.xpose.msra.mxu0 0
        %1700 = vmatprep.subr.bf16.mxu0 0
        %1701 = vmatpush1.bf16.xpose.msra.mxu0 0
        %1702 = vmatprep.subr.bf16.mxu0 0
        %1703 = vmatpush1.bf16.xpose.msra.mxu0 0
        %1704 = vmatprep.subr.bf16.mxu0 0
        %1705 = vmatpush1.bf16.xpose.msra.mxu0 0
        %1706 = vmatprep.subr.bf16.mxu0 0
        %1707 = vmatpush1.bf16.xpose.msra.mxu0 %v1690
        %1708 = vmatprep.subr.bf16.mxu0 0
        %1709 = vmatpush2.bf16.xpose.msra.mxu0 0
        %1710 = vmatprep.subr.bf16.mxu0 0
        %1711 = vmatpush2.bf16.xpose.msra.mxu0 0
        %1712 = vmatprep.subr.bf16.mxu0 0
        %1713 = vmatpush2.bf16.xpose.msra.mxu0 0
        %1714 = vmatprep.subr.bf16.mxu0 0
        %1715 = vmatpush2.bf16.xpose.msra.mxu0 0
        %1716 = vmatprep.subr.bf16.mxu0 0
        %1717 = vmatpush2.bf16.xpose.msra.mxu0 0
        %1718 = vmatprep.subr.bf16.mxu0 0
        %1719 = vmatpush2.bf16.xpose.msra.mxu0 0
        %1720 = vmatprep.subr.bf16.mxu0 0
        %1721 = vmatpush2.bf16.xpose.msra.mxu0 0
        %1722 = vmatprep.subr.bf16.mxu0 0
        %1723 = vmatpush2.bf16.xpose.msra.mxu0 0
        %1724 = vmatprep.mubr.bf16.mxu0 0
        %1725 = vmatmul.mubr.bf16.gmra.mxu0 %v1687
        %v1726 = vpop.f32.mrf.mxu0
        %v1727 = vadd.f32 0.0, %v1726
        %v1728 = vpop.f32.mrf.mxu0
        %v1729 = vpop.f32.mrf.mxu0
        %v1730 = vpop.f32.mrf.mxu0
        %1731 = vdwg.mxu0
        %v1733 = vsel %vm1639, %v1633, 0
        %v1736 = vsel %vm1639, %v1637, 0
        %1738 = vmatprep.subr.bf16.mxu0 0
        %1739 = vmatpush1.bf16.xpose.msra.mxu0 0
        %1740 = vmatprep.subr.bf16.mxu0 0
        %1741 = vmatpush1.bf16.xpose.msra.mxu0 0
        %1742 = vmatprep.subr.bf16.mxu0 0
        %1743 = vmatpush1.bf16.xpose.msra.mxu0 0
        %1744 = vmatprep.subr.bf16.mxu0 0
        %1745 = vmatpush1.bf16.xpose.msra.mxu0 0
        %1746 = vmatprep.subr.bf16.mxu0 0
        %1747 = vmatpush1.bf16.xpose.msra.mxu0 0
        %1748 = vmatprep.subr.bf16.mxu0 0
        %1749 = vmatpush1.bf16.xpose.msra.mxu0 0
        %1750 = vmatprep.subr.bf16.mxu0 0
        %1751 = vmatpush1.bf16.xpose.msra.mxu0 0
        %1752 = vmatprep.subr.bf16.mxu0 0
        %1753 = vmatpush1.bf16.xpose.msra.mxu0 %v1736
        %1754 = vmatprep.subr.bf16.mxu0 0
        %1755 = vmatpush2.bf16.xpose.msra.mxu0 0
        %1756 = vmatprep.subr.bf16.mxu0 0
        %1757 = vmatpush2.bf16.xpose.msra.mxu0 0
        %1758 = vmatprep.subr.bf16.mxu0 0
        %1759 = vmatpush2.bf16.xpose.msra.mxu0 0
        %1760 = vmatprep.subr.bf16.mxu0 0
        %1761 = vmatpush2.bf16.xpose.msra.mxu0 0
        %1762 = vmatprep.subr.bf16.mxu0 0
        %1763 = vmatpush2.bf16.xpose.msra.mxu0 0
        %1764 = vmatprep.subr.bf16.mxu0 0
        %1765 = vmatpush2.bf16.xpose.msra.mxu0 0
        %1766 = vmatprep.subr.bf16.mxu0 0
        %1767 = vmatpush2.bf16.xpose.msra.mxu0 0
        %1768 = vmatprep.subr.bf16.mxu0 0
        %1769 = vmatpush2.bf16.xpose.msra.mxu0 0
        %1770 = vmatprep.mubr.bf16.mxu0 0
        %1771 = vmatmul.mubr.bf16.gmra.mxu0 %v1733
        %v1772 = vpop.f32.mrf.mxu0
        %v1773 = vadd.f32 0.0, %v1772
        %v1774 = vpop.f32.mrf.mxu0
        %v1775 = vpop.f32.mrf.mxu0
        %v1776 = vpop.f32.mrf.mxu0
        %1777 = vdwg.mxu0
        %v1779 = vsel %vm1639, %v1634, 0
        %v1782 = vsel %vm1639, %v1638, 0
        %1784 = vmatprep.subr.bf16.mxu0 0
        %1785 = vmatpush1.bf16.xpose.msra.mxu0 0
        %1786 = vmatprep.subr.bf16.mxu0 0
        %1787 = vmatpush1.bf16.xpose.msra.mxu0 0
        %1788 = vmatprep.subr.bf16.mxu0 0
        %1789 = vmatpush1.bf16.xpose.msra.mxu0 0
        %1790 = vmatprep.subr.bf16.mxu0 0
        %1791 = vmatpush1.bf16.xpose.msra.mxu0 0
        %1792 = vmatprep.subr.bf16.mxu0 0
        %1793 = vmatpush1.bf16.xpose.msra.mxu0 0
        %1794 = vmatprep.subr.bf16.mxu0 0
        %1795 = vmatpush1.bf16.xpose.msra.mxu0 0
        %1796 = vmatprep.subr.bf16.mxu0 0
        %1797 = vmatpush1.bf16.xpose.msra.mxu0 0
        %1798 = vmatprep.subr.bf16.mxu0 0
        %1799 = vmatpush1.bf16.xpose.msra.mxu0 %v1782
        %1800 = vmatprep.subr.bf16.mxu0 0
        %1801 = vmatpush2.bf16.xpose.msra.mxu0 0
        %1802 = vmatprep.subr.bf16.mxu0 0
        %1803 = vmatpush2.bf16.xpose.msra.mxu0 0
        %1804 = vmatprep.subr.bf16.mxu0 0
        %1805 = vmatpush2.bf16.xpose.msra.mxu0 0
        %1806 = vmatprep.subr.bf16.mxu0 0
        %1807 = vmatpush2.bf16.xpose.msra.mxu0 0
        %1808 = vmatprep.subr.bf16.mxu0 0
        %1809 = vmatpush2.bf16.xpose.msra.mxu0 0
        %1810 = vmatprep.subr.bf16.mxu0 0
        %1811 = vmatpush2.bf16.xpose.msra.mxu0 0
        %1812 = vmatprep.subr.bf16.mxu0 0
        %1813 = vmatpush2.bf16.xpose.msra.mxu0 0
        %1814 = vmatprep.subr.bf16.mxu0 0
        %1815 = vmatpush2.bf16.xpose.msra.mxu0 0
        %1816 = vmatprep.mubr.bf16.mxu0 0
        %1817 = vmatmul.mubr.bf16.gmra.mxu0 %v1779
        %v1818 = vpop.f32.mrf.mxu0
        %v1819 = vadd.f32 0.0, %v1818
        %v1820 = vpop.f32.mrf.mxu0
        %v1821 = vpop.f32.mrf.mxu0
        %v1822 = vpop.f32.mrf.mxu0
        %1823 = vdwg.mxu0
        %v1824 = vmul.f32 %v1681, 0.35355338
        %v1825 = vmul.f32 %v1727, 0.35355338
        %v1826 = vmul.f32 %v1773, 0.35355338
        %v1827 = vmul.f32 %v1819, 0.35355338
        %v1828 = vsel %vm1630, 1, 0
        %vm1829 = vcmp.eq.s32.totalorder %v1828, 1
        %v1830 = vsel %vm1829, %v1824, -1e+30
        %v1831 = vsel %vm1829, %v1825, -1e+30
        %v1832 = vsel %vm1829, %v1826, -1e+30
        %v1833 = vsel %vm1829, %v1827, -1e+30
        %v1834 = vsel %vm1600, %v1830, -inf
        %1835 = vmax.xlane.f32.xlu0 %v1834
        %v1836 = vpop.xlane.xlu0 %1835
        %v1837 = vsel %vm1600, %v1831, -inf
        %1838 = vmax.xlane.f32.xlu0 %v1837
        %v1839 = vpop.xlane.xlu0 %1838
        %v1840 = vsel %vm1600, %v1832, -inf
        %1841 = vmax.xlane.f32.xlu0 %v1840
        %v1842 = vpop.xlane.xlu0 %1841
        %v1843 = vsel %vm1600, %v1833, -inf
        %1844 = vmax.xlane.f32.xlu0 %v1843
        %v1845 = vpop.xlane.xlu0 %1844
        %v1846 = vsub.f32 %v1830, %v1836
        %v1847 = vsub.f32 %v1831, %v1839
        %v1848 = vsub.f32 %v1832, %v1842
        %v1849 = vsub.f32 %v1833, %v1845
        %v1850 = vmul.f32 %v1846, 1.442695
        %v1851 = vpow.pop %v1850
        %v1852 = vmul.f32 %v1847, 1.442695
        %v1853 = vpow.pop %v1852
        %v1854 = vmul.f32 %v1848, 1.442695
        %v1855 = vpow.pop %v1854
        %v1856 = vmul.f32 %v1849, 1.442695
        %v1857 = vpow.pop %v1856
        %v1858 = vsel %vm1600, %v1851, 0.0
        %1859 = vadd.xlane.f32.xlu0 %v1858
        %v1860 = vpop.xlane.xlu0 %1859
        %v1861 = vsel %vm1600, %v1853, 0.0
        %1862 = vadd.xlane.f32.xlu0 %v1861
        %v1863 = vpop.xlane.xlu0 %1862
        %v1864 = vsel %vm1600, %v1855, 0.0
        %1865 = vadd.xlane.f32.xlu0 %v1864
        %v1866 = vpop.xlane.xlu0 %1865
        %v1867 = vsel %vm1600, %v1857, 0.0
        %1868 = vadd.xlane.f32.xlu0 %v1867
        %v1869 = vpop.xlane.xlu0 %1868
        %v1870 = vrcp.pop %v1860
        %v1871 = vrcp.pop %v1863
        %v1872 = vrcp.pop %v1866
        %v1873 = vrcp.pop %v1869
        %v1874 = vmul.f32 %v1851, %v1870
        %v1875 = vmul.f32 %v1853, %v1871
        %v1876 = vmul.f32 %v1855, %v1872
        %v1877 = vmul.f32 %v1857, %v1873
        %v1878 = vpack.c.bf16 %v1874, %v1874
        %v1879 = vpack.c.bf16 %v1875, %v1875
        %v1880 = vpack.c.bf16 %v1876, %v1876
        %v1881 = vpack.c.bf16 %v1877, %v1877
        %v1882 = vpack.c.bf16 %v1625, %v1625
        %v1883 = vpack.c.bf16 %v1626, %v1626
        %v1884 = vpack.c.bf16 %v1627, %v1627
        %v1885 = vpack.c.bf16 %v1628, %v1628
        %v1887 = vsel %vm1639, %v1878, 0
        %vm1889 = vcmask 1043456
        %v1891 = vsel %vm1889, %v1882, 0
        %1893 = vmatprep.subr.bf16.mxu0 0
        %1894 = vmatpush1.bf16.msra.mxu0 0
        %1895 = vmatprep.subr.bf16.mxu0 0
        %1896 = vmatpush1.bf16.msra.mxu0 0
        %1897 = vmatprep.subr.bf16.mxu0 0
        %1898 = vmatpush1.bf16.msra.mxu0 0
        %1899 = vmatprep.subr.bf16.mxu0 0
        %1900 = vmatpush1.bf16.msra.mxu0 0
        %1901 = vmatprep.subr.bf16.mxu0 0
        %1902 = vmatpush1.bf16.msra.mxu0 0
        %1903 = vmatprep.subr.bf16.mxu0 0
        %1904 = vmatpush1.bf16.msra.mxu0 0
        %1905 = vmatprep.subr.bf16.mxu0 0
        %1906 = vmatpush1.bf16.msra.mxu0 0
        %1907 = vmatprep.subr.bf16.mxu0 0
        %1908 = vmatpush1.bf16.msra.mxu0 %v1891
        %1909 = vmatprep.subr.bf16.mxu0 0
        %1910 = vmatpush2.bf16.msra.mxu0 0
        %1911 = vmatprep.subr.bf16.mxu0 0
        %1912 = vmatpush2.bf16.msra.mxu0 0
        %1913 = vmatprep.subr.bf16.mxu0 0
        %1914 = vmatpush2.bf16.msra.mxu0 0
        %1915 = vmatprep.subr.bf16.mxu0 0
        %1916 = vmatpush2.bf16.msra.mxu0 0
        %1917 = vmatprep.subr.bf16.mxu0 0
        %1918 = vmatpush2.bf16.msra.mxu0 0
        %1919 = vmatprep.subr.bf16.mxu0 0
        %1920 = vmatpush2.bf16.msra.mxu0 0
        %1921 = vmatprep.subr.bf16.mxu0 0
        %1922 = vmatpush2.bf16.msra.mxu0 0
        %1923 = vmatprep.subr.bf16.mxu0 0
        %1924 = vmatpush2.bf16.msra.mxu0 0
        %1925 = vmatprep.mubr.bf16.mxu0 0
        %1926 = vmatmul.mubr.bf16.gmra.mxu0 %v1887
        %v1927 = vpop.f32.mrf.mxu0
        %v1928 = vadd.f32 0.0, %v1927
        %v1929 = vpop.f32.mrf.mxu0
        %v1930 = vpop.f32.mrf.mxu0
        %v1931 = vpop.f32.mrf.mxu0
        %1932 = vdwg.mxu0
        %v1934 = vsel %vm1639, %v1879, 0
        %v1937 = vsel %vm1889, %v1883, 0
        %1939 = vmatprep.subr.bf16.mxu0 0
        %1940 = vmatpush1.bf16.msra.mxu0 0
        %1941 = vmatprep.subr.bf16.mxu0 0
        %1942 = vmatpush1.bf16.msra.mxu0 0
        %1943 = vmatprep.subr.bf16.mxu0 0
        %1944 = vmatpush1.bf16.msra.mxu0 0
        %1945 = vmatprep.subr.bf16.mxu0 0
        %1946 = vmatpush1.bf16.msra.mxu0 0
        %1947 = vmatprep.subr.bf16.mxu0 0
        %1948 = vmatpush1.bf16.msra.mxu0 0
        %1949 = vmatprep.subr.bf16.mxu0 0
        %1950 = vmatpush1.bf16.msra.mxu0 0
        %1951 = vmatprep.subr.bf16.mxu0 0
        %1952 = vmatpush1.bf16.msra.mxu0 0
        %1953 = vmatprep.subr.bf16.mxu0 0
        %1954 = vmatpush1.bf16.msra.mxu0 %v1937
        %1955 = vmatprep.subr.bf16.mxu0 0
        %1956 = vmatpush2.bf16.msra.mxu0 0
        %1957 = vmatprep.subr.bf16.mxu0 0
        %1958 = vmatpush2.bf16.msra.mxu0 0
        %1959 = vmatprep.subr.bf16.mxu0 0
        %1960 = vmatpush2.bf16.msra.mxu0 0
        %1961 = vmatprep.subr.bf16.mxu0 0
        %1962 = vmatpush2.bf16.msra.mxu0 0
        %1963 = vmatprep.subr.bf16.mxu0 0
        %1964 = vmatpush2.bf16.msra.mxu0 0
        %1965 = vmatprep.subr.bf16.mxu0 0
        %1966 = vmatpush2.bf16.msra.mxu0 0
        %1967 = vmatprep.subr.bf16.mxu0 0
        %1968 = vmatpush2.bf16.msra.mxu0 0
        %1969 = vmatprep.subr.bf16.mxu0 0
        %1970 = vmatpush2.bf16.msra.mxu0 0
        %1971 = vmatprep.mubr.bf16.mxu0 0
        %1972 = vmatmul.mubr.bf16.gmra.mxu0 %v1934
        %v1973 = vpop.f32.mrf.mxu0
        %v1974 = vadd.f32 0.0, %v1973
        %v1975 = vpop.f32.mrf.mxu0
        %v1976 = vpop.f32.mrf.mxu0
        %v1977 = vpop.f32.mrf.mxu0
        %1978 = vdwg.mxu0
        %v1980 = vsel %vm1639, %v1880, 0
        %v1983 = vsel %vm1889, %v1884, 0
        %1985 = vmatprep.subr.bf16.mxu0 0
        %1986 = vmatpush1.bf16.msra.mxu0 0
        %1987 = vmatprep.subr.bf16.mxu0 0
        %1988 = vmatpush1.bf16.msra.mxu0 0
        %1989 = vmatprep.subr.bf16.mxu0 0
        %1990 = vmatpush1.bf16.msra.mxu0 0
        %1991 = vmatprep.subr.bf16.mxu0 0
        %1992 = vmatpush1.bf16.msra.mxu0 0
        %1993 = vmatprep.subr.bf16.mxu0 0
        %1994 = vmatpush1.bf16.msra.mxu0 0
        %1995 = vmatprep.subr.bf16.mxu0 0
        %1996 = vmatpush1.bf16.msra.mxu0 0
        %1997 = vmatprep.subr.bf16.mxu0 0
        %1998 = vmatpush1.bf16.msra.mxu0 0
        %1999 = vmatprep.subr.bf16.mxu0 0
        %2000 = vmatpush1.bf16.msra.mxu0 %v1983
        %2001 = vmatprep.subr.bf16.mxu0 0
        %2002 = vmatpush2.bf16.msra.mxu0 0
        %2003 = vmatprep.subr.bf16.mxu0 0
        %2004 = vmatpush2.bf16.msra.mxu0 0
        %2005 = vmatprep.subr.bf16.mxu0 0
        %2006 = vmatpush2.bf16.msra.mxu0 0
        %2007 = vmatprep.subr.bf16.mxu0 0
        %2008 = vmatpush2.bf16.msra.mxu0 0
        %2009 = vmatprep.subr.bf16.mxu0 0
        %2010 = vmatpush2.bf16.msra.mxu0 0
        %2011 = vmatprep.subr.bf16.mxu0 0
        %2012 = vmatpush2.bf16.msra.mxu0 0
        %2013 = vmatprep.subr.bf16.mxu0 0
        %2014 = vmatpush2.bf16.msra.mxu0 0
        %2015 = vmatprep.subr.bf16.mxu0 0
        %2016 = vmatpush2.bf16.msra.mxu0 0
        %2017 = vmatprep.mubr.bf16.mxu0 0
        %2018 = vmatmul.mubr.bf16.gmra.mxu0 %v1980
        %v2019 = vpop.f32.mrf.mxu0
        %v2020 = vadd.f32 0.0, %v2019
        %v2021 = vpop.f32.mrf.mxu0
        %v2022 = vpop.f32.mrf.mxu0
        %v2023 = vpop.f32.mrf.mxu0
        %2024 = vdwg.mxu0
        %v2026 = vsel %vm1639, %v1881, 0
        %v2029 = vsel %vm1889, %v1885, 0
        %2031 = vmatprep.subr.bf16.mxu0 0
        %2032 = vmatpush1.bf16.msra.mxu0 0
        %2033 = vmatprep.subr.bf16.mxu0 0
        %2034 = vmatpush1.bf16.msra.mxu0 0
        %2035 = vmatprep.subr.bf16.mxu0 0
        %2036 = vmatpush1.bf16.msra.mxu0 0
        %2037 = vmatprep.subr.bf16.mxu0 0
        %2038 = vmatpush1.bf16.msra.mxu0 0
        %2039 = vmatprep.subr.bf16.mxu0 0
        %2040 = vmatpush1.bf16.msra.mxu0 0
        %2041 = vmatprep.subr.bf16.mxu0 0
        %2042 = vmatpush1.bf16.msra.mxu0 0
        %2043 = vmatprep.subr.bf16.mxu0 0
        %2044 = vmatpush1.bf16.msra.mxu0 0
        %2045 = vmatprep.subr.bf16.mxu0 0
        %2046 = vmatpush1.bf16.msra.mxu0 %v2029
        %2047 = vmatprep.subr.bf16.mxu0 0
        %2048 = vmatpush2.bf16.msra.mxu0 0
        %2049 = vmatprep.subr.bf16.mxu0 0
        %2050 = vmatpush2.bf16.msra.mxu0 0
        %2051 = vmatprep.subr.bf16.mxu0 0
        %2052 = vmatpush2.bf16.msra.mxu0 0
        %2053 = vmatprep.subr.bf16.mxu0 0
        %2054 = vmatpush2.bf16.msra.mxu0 0
        %2055 = vmatprep.subr.bf16.mxu0 0
        %2056 = vmatpush2.bf16.msra.mxu0 0
        %2057 = vmatprep.subr.bf16.mxu0 0
        %2058 = vmatpush2.bf16.msra.mxu0 0
        %2059 = vmatprep.subr.bf16.mxu0 0
        %2060 = vmatpush2.bf16.msra.mxu0 0
        %2061 = vmatprep.subr.bf16.mxu0 0
        %2062 = vmatpush2.bf16.msra.mxu0 0
        %2063 = vmatprep.mubr.bf16.mxu0 0
        %2064 = vmatmul.mubr.bf16.gmra.mxu0 %v2026
        %v2065 = vpop.f32.mrf.mxu0
        %v2066 = vadd.f32 0.0, %v2065
        %v2067 = vpop.f32.mrf.mxu0
        %v2068 = vpop.f32.mrf.mxu0
        %v2069 = vpop.f32.mrf.mxu0
        %2070 = vdwg.mxu0
        %v2071 = vld [vmem:[%s27] sm:$0xf]
        %v2072 = vld [vmem:[%s27 + $0x4] sm:$0xf]
        %v2073 = vld [vmem:[%s27 + $0x8] sm:$0xf]
        %v2074 = vld [vmem:[%s27 + $0xc] sm:$0xf]
        %v2075 = vld [vmem:[%s29] sm:$0x1]
        %v2076 = vpack.c.bf16 %v1928, %v1928
        %v2077 = vpack.c.bf16 %v1974, %v1974
        %v2078 = vpack.c.bf16 %v2020, %v2020
        %v2079 = vpack.c.bf16 %v2066, %v2066
        %v2081 = vsel %vm1639, %v2076, 0
        %v2084 = vsel %vm1889, %v2071, 0
        %2086 = vmatprep.subr.bf16.mxu0 0
        %2087 = vmatpush1.bf16.msra.mxu0 0
        %2088 = vmatprep.subr.bf16.mxu0 0
        %2089 = vmatpush1.bf16.msra.mxu0 0
        %2090 = vmatprep.subr.bf16.mxu0 0
        %2091 = vmatpush1.bf16.msra.mxu0 0
        %2092 = vmatprep.subr.bf16.mxu0 0
        %2093 = vmatpush1.bf16.msra.mxu0 0
        %2094 = vmatprep.subr.bf16.mxu0 0
        %2095 = vmatpush1.bf16.msra.mxu0 0
        %2096 = vmatprep.subr.bf16.mxu0 0
        %2097 = vmatpush1.bf16.msra.mxu0 0
        %2098 = vmatprep.subr.bf16.mxu0 0
        %2099 = vmatpush1.bf16.msra.mxu0 0
        %2100 = vmatprep.subr.bf16.mxu0 0
        %2101 = vmatpush1.bf16.msra.mxu0 %v2084
        %2102 = vmatprep.subr.bf16.mxu0 0
        %2103 = vmatpush2.bf16.msra.mxu0 0
        %2104 = vmatprep.subr.bf16.mxu0 0
        %2105 = vmatpush2.bf16.msra.mxu0 0
        %2106 = vmatprep.subr.bf16.mxu0 0
        %2107 = vmatpush2.bf16.msra.mxu0 0
        %2108 = vmatprep.subr.bf16.mxu0 0
        %2109 = vmatpush2.bf16.msra.mxu0 0
        %2110 = vmatprep.subr.bf16.mxu0 0
        %2111 = vmatpush2.bf16.msra.mxu0 0
        %2112 = vmatprep.subr.bf16.mxu0 0
        %2113 = vmatpush2.bf16.msra.mxu0 0
        %2114 = vmatprep.subr.bf16.mxu0 0
        %2115 = vmatpush2.bf16.msra.mxu0 0
        %2116 = vmatprep.subr.bf16.mxu0 0
        %2117 = vmatpush2.bf16.msra.mxu0 0
        %2118 = vmatprep.mubr.bf16.mxu0 0
        %2119 = vmatmul.mubr.bf16.gmra.mxu0 %v2081
        %v2120 = vpop.f32.mrf.mxu0
        %v2121 = vadd.f32 0.0, %v2120
        %v2122 = vpop.f32.mrf.mxu0
        %v2123 = vpop.f32.mrf.mxu0
        %v2124 = vpop.f32.mrf.mxu0
        %2125 = vdwg.mxu0
        %v2127 = vsel %vm1639, %v2077, 0
        %v2130 = vsel %vm1889, %v2072, 0
        %2132 = vmatprep.subr.bf16.mxu0 0
        %2133 = vmatpush1.bf16.msra.mxu0 0
        %2134 = vmatprep.subr.bf16.mxu0 0
        %2135 = vmatpush1.bf16.msra.mxu0 0
        %2136 = vmatprep.subr.bf16.mxu0 0
        %2137 = vmatpush1.bf16.msra.mxu0 0
        %2138 = vmatprep.subr.bf16.mxu0 0
        %2139 = vmatpush1.bf16.msra.mxu0 0
        %2140 = vmatprep.subr.bf16.mxu0 0
        %2141 = vmatpush1.bf16.msra.mxu0 0
        %2142 = vmatprep.subr.bf16.mxu0 0
        %2143 = vmatpush1.bf16.msra.mxu0 0
        %2144 = vmatprep.subr.bf16.mxu0 0
        %2145 = vmatpush1.bf16.msra.mxu0 0
        %2146 = vmatprep.subr.bf16.mxu0 0
        %2147 = vmatpush1.bf16.msra.mxu0 %v2130
        %2148 = vmatprep.subr.bf16.mxu0 0
        %2149 = vmatpush2.bf16.msra.mxu0 0
        %2150 = vmatprep.subr.bf16.mxu0 0
        %2151 = vmatpush2.bf16.msra.mxu0 0
        %2152 = vmatprep.subr.bf16.mxu0 0
        %2153 = vmatpush2.bf16.msra.mxu0 0
        %2154 = vmatprep.subr.bf16.mxu0 0
        %2155 = vmatpush2.bf16.msra.mxu0 0
        %2156 = vmatprep.subr.bf16.mxu0 0
        %2157 = vmatpush2.bf16.msra.mxu0 0
        %2158 = vmatprep.subr.bf16.mxu0 0
        %2159 = vmatpush2.bf16.msra.mxu0 0
        %2160 = vmatprep.subr.bf16.mxu0 0
        %2161 = vmatpush2.bf16.msra.mxu0 0
        %2162 = vmatprep.subr.bf16.mxu0 0
        %2163 = vmatpush2.bf16.msra.mxu0 0
        %2164 = vmatprep.mubr.bf16.mxu0 0
        %2165 = vmatmul.mubr.bf16.gmra.mxu0 %v2127
        %v2166 = vpop.f32.mrf.mxu0
        %v2167 = vadd.f32 0.0, %v2166
        %v2168 = vpop.f32.mrf.mxu0
        %v2169 = vpop.f32.mrf.mxu0
        %v2170 = vpop.f32.mrf.mxu0
        %2171 = vdwg.mxu0
        %v2173 = vsel %vm1639, %v2078, 0
        %v2176 = vsel %vm1889, %v2073, 0
        %2178 = vmatprep.subr.bf16.mxu0 0
        %2179 = vmatpush1.bf16.msra.mxu0 0
        %2180 = vmatprep.subr.bf16.mxu0 0
        %2181 = vmatpush1.bf16.msra.mxu0 0
        %2182 = vmatprep.subr.bf16.mxu0 0
        %2183 = vmatpush1.bf16.msra.mxu0 0
        %2184 = vmatprep.subr.bf16.mxu0 0
        %2185 = vmatpush1.bf16.msra.mxu0 0
        %2186 = vmatprep.subr.bf16.mxu0 0
        %2187 = vmatpush1.bf16.msra.mxu0 0
        %2188 = vmatprep.subr.bf16.mxu0 0
        %2189 = vmatpush1.bf16.msra.mxu0 0
        %2190 = vmatprep.subr.bf16.mxu0 0
        %2191 = vmatpush1.bf16.msra.mxu0 0
        %2192 = vmatprep.subr.bf16.mxu0 0
        %2193 = vmatpush1.bf16.msra.mxu0 %v2176
        %2194 = vmatprep.subr.bf16.mxu0 0
        %2195 = vmatpush2.bf16.msra.mxu0 0
        %2196 = vmatprep.subr.bf16.mxu0 0
        %2197 = vmatpush2.bf16.msra.mxu0 0
        %2198 = vmatprep.subr.bf16.mxu0 0
        %2199 = vmatpush2.bf16.msra.mxu0 0
        %2200 = vmatprep.subr.bf16.mxu0 0
        %2201 = vmatpush2.bf16.msra.mxu0 0
        %2202 = vmatprep.subr.bf16.mxu0 0
        %2203 = vmatpush2.bf16.msra.mxu0 0
        %2204 = vmatprep.subr.bf16.mxu0 0
        %2205 = vmatpush2.bf16.msra.mxu0 0
        %2206 = vmatprep.subr.bf16.mxu0 0
        %2207 = vmatpush2.bf16.msra.mxu0 0
        %2208 = vmatprep.subr.bf16.mxu0 0
        %2209 = vmatpush2.bf16.msra.mxu0 0
        %2210 = vmatprep.mubr.bf16.mxu0 0
        %2211 = vmatmul.mubr.bf16.gmra.mxu0 %v2173
        %v2212 = vpop.f32.mrf.mxu0
        %v2213 = vadd.f32 0.0, %v2212
        %v2214 = vpop.f32.mrf.mxu0
        %v2215 = vpop.f32.mrf.mxu0
        %v2216 = vpop.f32.mrf.mxu0
        %2217 = vdwg.mxu0
        %v2219 = vsel %vm1639, %v2079, 0
        %v2222 = vsel %vm1889, %v2074, 0
        %2224 = vmatprep.subr.bf16.mxu0 0
        %2225 = vmatpush1.bf16.msra.mxu0 0
        %2226 = vmatprep.subr.bf16.mxu0 0
        %2227 = vmatpush1.bf16.msra.mxu0 0
        %2228 = vmatprep.subr.bf16.mxu0 0
        %2229 = vmatpush1.bf16.msra.mxu0 0
        %2230 = vmatprep.subr.bf16.mxu0 0
        %2231 = vmatpush1.bf16.msra.mxu0 0
        %2232 = vmatprep.subr.bf16.mxu0 0
        %2233 = vmatpush1.bf16.msra.mxu0 0
        %2234 = vmatprep.subr.bf16.mxu0 0
        %2235 = vmatpush1.bf16.msra.mxu0 0
        %2236 = vmatprep.subr.bf16.mxu0 0
        %2237 = vmatpush1.bf16.msra.mxu0 0
        %2238 = vmatprep.subr.bf16.mxu0 0
        %2239 = vmatpush1.bf16.msra.mxu0 %v2222
        %2240 = vmatprep.subr.bf16.mxu0 0
        %2241 = vmatpush2.bf16.msra.mxu0 0
        %2242 = vmatprep.subr.bf16.mxu0 0
        %2243 = vmatpush2.bf16.msra.mxu0 0
        %2244 = vmatprep.subr.bf16.mxu0 0
        %2245 = vmatpush2.bf16.msra.mxu0 0
        %2246 = vmatprep.subr.bf16.mxu0 0
        %2247 = vmatpush2.bf16.msra.mxu0 0
        %2248 = vmatprep.subr.bf16.mxu0 0
        %2249 = vmatpush2.bf16.msra.mxu0 0
        %2250 = vmatprep.subr.bf16.mxu0 0
        %2251 = vmatpush2.bf16.msra.mxu0 0
        %2252 = vmatprep.subr.bf16.mxu0 0
        %2253 = vmatpush2.bf16.msra.mxu0 0
        %2254 = vmatprep.subr.bf16.mxu0 0
        %2255 = vmatpush2.bf16.msra.mxu0 0
        %2256 = vmatprep.mubr.bf16.mxu0 0
        %2257 = vmatmul.mubr.bf16.gmra.mxu0 %v2219
        %v2258 = vpop.f32.mrf.mxu0
        %v2259 = vadd.f32 0.0, %v2258
        %v2260 = vpop.f32.mrf.mxu0
        %v2261 = vpop.f32.mrf.mxu0
        %v2262 = vpop.f32.mrf.mxu0
        %2263 = vdwg.mxu0
        %v2264 = vsel %vm893, %v2121, 0.0
        %v2265 = vsel %vm893, %v2167, 0.0
        %v2266 = vadd.f32 %v2264, %v2265
        %v2267 = vsel %vm893, %v2213, 0.0
        %v2268 = vadd.f32 %v2266, %v2267
        %v2269 = vsel %vm893, %v2259, 0.0
        %v2270 = vadd.f32 %v2268, %v2269
        %v2271 = vadd.f32 %v2270, %v2075
        %v2272 = vadd.f32 %v890, %v2271
        %v2273 = vld [vmem:[%s31] sm:$0x1]
        %v2274 = vld [vmem:[%s33] sm:$0x1]
        %v2275 = vsel %vm893, %v2272, 0.0
        %2276 = vadd.xlane.f32.xlu0 %v2275
        %v2277 = vpop.xlane.xlu0 %2276
        %v2278 = vmul.f32 %v2277, %v897
        %v2279 = vsub.f32 %v2272, %v2278
        %v2280 = vmul.f32 %v2279, %v2279
        %v2281 = vsel %vm893, %v2280, 0.0
        %2282 = vadd.xlane.f32.xlu0 %v2281
        %v2283 = vpop.xlane.xlu0 %2282
        %v2284 = vmul.f32 %v2283, %v897
        %v2285 = vadd.f32 %v2284, 1e-05
        %v2286 = vrsqrt.pop %v2285
        %v2287 = vmul.f32 %v2279, %v2286
        %v2288 = vmul.f32 %v2287, %v2273
        %v2289 = vadd.f32 %v2288, %v2274
        %v2290 = vpack.c.bf16 %v2289, %v2289
        %v2291 = vld [vmem:[%s35] sm:$0xf]
        %v2292 = vld [vmem:[%s35 + $0x4] sm:$0xf]
        %v2293 = vld [vmem:[%s35 + $0x8] sm:$0xf]
        %v2294 = vld [vmem:[%s35 + $0xc] sm:$0xf]
        %v2295 = vld [vmem:[%s35 + $0x10] sm:$0xf]
        %v2296 = vld [vmem:[%s35 + $0x14] sm:$0xf]
        %v2297 = vld [vmem:[%s35 + $0x18] sm:$0xf]
        %v2298 = vld [vmem:[%s35 + $0x1c] sm:$0xf]
        %v2299 = vld [vmem:[%s35 + $0x20] sm:$0xf]
        %v2300 = vld [vmem:[%s35 + $0x24] sm:$0xf]
        %v2301 = vld [vmem:[%s35 + $0x28] sm:$0xf]
        %v2302 = vld [vmem:[%s35 + $0x2c] sm:$0xf]
        %v2303 = vld [vmem:[%s35 + $0x30] sm:$0xf]
        %v2304 = vld [vmem:[%s35 + $0x34] sm:$0xf]
        %v2305 = vld [vmem:[%s35 + $0x38] sm:$0xf]
        %v2306 = vld [vmem:[%s35 + $0x3c] sm:$0xf]
        %v2307 = vld [vmem:[%s37] sm:$0x1]
        %v2308 = vld [vmem:[%s37 + $0x1] sm:$0x1]
        %v2309 = vld [vmem:[%s37 + $0x2] sm:$0x1]
        %v2310 = vld [vmem:[%s37 + $0x3] sm:$0x1]
        %v2315 = vunpack.c.l.b16 %v2291
        %v2316 = vunpack.c.l.b16 %v2292
        %v2317 = vunpack.c.l.b16 %v2293
        %v2318 = vunpack.c.l.b16 %v2294
        %v2319 = vpack.c.b16 %v2316, %v2315
        %v2320 = vpack.c.b16 %v2318, %v2317
        %v2324 = vsel %vm943, %v2290, 0
        %2326 = vmatprep.subr.bf16.mxu0 0
        %2327 = vmatpush1.bf16.msra.mxu0 0
        %2328 = vmatprep.subr.bf16.mxu0 0
        %2329 = vmatpush1.bf16.msra.mxu0 0
        %2330 = vmatprep.subr.bf16.mxu0 0
        %2331 = vmatpush1.bf16.msra.mxu0 0
        %2332 = vmatprep.subr.bf16.mxu0 0
        %2333 = vmatpush1.bf16.msra.mxu0 0
        %2334 = vmatprep.subr.bf16.mxu0 0
        %2335 = vmatpush1.bf16.msra.mxu0 0
        %2336 = vmatprep.subr.bf16.mxu0 0
        %2337 = vmatpush1.bf16.msra.mxu0 0
        %2338 = vmatprep.subr.bf16.mxu0 0
        %2339 = vmatpush1.bf16.msra.mxu0 %v2320
        %2340 = vmatprep.subr.bf16.mxu0 0
        %2341 = vmatpush1.bf16.msra.mxu0 %v2319
        %2342 = vmatprep.subr.bf16.mxu0 0
        %2343 = vmatpush2.bf16.msra.mxu0 0
        %2344 = vmatprep.subr.bf16.mxu0 0
        %2345 = vmatpush2.bf16.msra.mxu0 0
        %2346 = vmatprep.subr.bf16.mxu0 0
        %2347 = vmatpush2.bf16.msra.mxu0 0
        %2348 = vmatprep.subr.bf16.mxu0 0
        %2349 = vmatpush2.bf16.msra.mxu0 0
        %2350 = vmatprep.subr.bf16.mxu0 0
        %2351 = vmatpush2.bf16.msra.mxu0 0
        %2352 = vmatprep.subr.bf16.mxu0 0
        %2353 = vmatpush2.bf16.msra.mxu0 0
        %2354 = vmatprep.subr.bf16.mxu0 0
        %2355 = vmatpush2.bf16.msra.mxu0 0
        %2356 = vmatprep.subr.bf16.mxu0 0
        %2357 = vmatpush2.bf16.msra.mxu0 0
        %2358 = vmatprep.mubr.bf16.mxu0 0
        %2359 = vmatmul.mubr.bf16.gmra.mxu0 %v2324
        %v2360 = vpop.f32.mrf.mxu0
        %v2361 = vadd.f32 %v2307, %v2360
        %v2362 = vpop.f32.mrf.mxu0
        %v2363 = vpop.f32.mrf.mxu0
        %v2364 = vpop.f32.mrf.mxu0
        %2365 = vdwg.mxu0
        %v2370 = vunpack.c.l.b16 %v2295
        %v2371 = vunpack.c.l.b16 %v2296
        %v2372 = vunpack.c.l.b16 %v2297
        %v2373 = vunpack.c.l.b16 %v2298
        %v2374 = vpack.c.b16 %v2371, %v2370
        %v2375 = vpack.c.b16 %v2373, %v2372
        %2378 = vmatprep.subr.bf16.mxu0 0
        %2379 = vmatpush1.bf16.msra.mxu0 0
        %2380 = vmatprep.subr.bf16.mxu0 0
        %2381 = vmatpush1.bf16.msra.mxu0 0
        %2382 = vmatprep.subr.bf16.mxu0 0
        %2383 = vmatpush1.bf16.msra.mxu0 0
        %2384 = vmatprep.subr.bf16.mxu0 0
        %2385 = vmatpush1.bf16.msra.mxu0 0
        %2386 = vmatprep.subr.bf16.mxu0 0
        %2387 = vmatpush1.bf16.msra.mxu0 0
        %2388 = vmatprep.subr.bf16.mxu0 0
        %2389 = vmatpush1.bf16.msra.mxu0 0
        %2390 = vmatprep.subr.bf16.mxu0 0
        %2391 = vmatpush1.bf16.msra.mxu0 %v2375
        %2392 = vmatprep.subr.bf16.mxu0 0
        %2393 = vmatpush1.bf16.msra.mxu0 %v2374
        %2394 = vmatprep.subr.bf16.mxu0 0
        %2395 = vmatpush2.bf16.msra.mxu0 0
        %2396 = vmatprep.subr.bf16.mxu0 0
        %2397 = vmatpush2.bf16.msra.mxu0 0
        %2398 = vmatprep.subr.bf16.mxu0 0
        %2399 = vmatpush2.bf16.msra.mxu0 0
        %2400 = vmatprep.subr.bf16.mxu0 0
        %2401 = vmatpush2.bf16.msra.mxu0 0
        %2402 = vmatprep.subr.bf16.mxu0 0
        %2403 = vmatpush2.bf16.msra.mxu0 0
        %2404 = vmatprep.subr.bf16.mxu0 0
        %2405 = vmatpush2.bf16.msra.mxu0 0
        %2406 = vmatprep.subr.bf16.mxu0 0
        %2407 = vmatpush2.bf16.msra.mxu0 0
        %2408 = vmatprep.subr.bf16.mxu0 0
        %2409 = vmatpush2.bf16.msra.mxu0 0
        %2410 = vmatprep.mubr.bf16.mxu0 0
        %2411 = vmatmul.mubr.bf16.gmra.mxu0 %v2324
        %v2412 = vpop.f32.mrf.mxu0
        %v2413 = vadd.f32 %v2308, %v2412
        %v2414 = vpop.f32.mrf.mxu0
        %v2415 = vpop.f32.mrf.mxu0
        %v2416 = vpop.f32.mrf.mxu0
        %2417 = vdwg.mxu0
        %v2422 = vunpack.c.l.b16 %v2299
        %v2423 = vunpack.c.l.b16 %v2300
        %v2424 = vunpack.c.l.b16 %v2301
        %v2425 = vunpack.c.l.b16 %v2302
        %v2426 = vpack.c.b16 %v2423, %v2422
        %v2427 = vpack.c.b16 %v2425, %v2424
        %2430 = vmatprep.subr.bf16.mxu0 0
        %2431 = vmatpush1.bf16.msra.mxu0 0
        %2432 = vmatprep.subr.bf16.mxu0 0
        %2433 = vmatpush1.bf16.msra.mxu0 0
        %2434 = vmatprep.subr.bf16.mxu0 0
        %2435 = vmatpush1.bf16.msra.mxu0 0
        %2436 = vmatprep.subr.bf16.mxu0 0
        %2437 = vmatpush1.bf16.msra.mxu0 0
        %2438 = vmatprep.subr.bf16.mxu0 0
        %2439 = vmatpush1.bf16.msra.mxu0 0
        %2440 = vmatprep.subr.bf16.mxu0 0
        %2441 = vmatpush1.bf16.msra.mxu0 0
        %2442 = vmatprep.subr.bf16.mxu0 0
        %2443 = vmatpush1.bf16.msra.mxu0 %v2427
        %2444 = vmatprep.subr.bf16.mxu0 0
        %2445 = vmatpush1.bf16.msra.mxu0 %v2426
        %2446 = vmatprep.subr.bf16.mxu0 0
        %2447 = vmatpush2.bf16.msra.mxu0 0
        %2448 = vmatprep.subr.bf16.mxu0 0
        %2449 = vmatpush2.bf16.msra.mxu0 0
        %2450 = vmatprep.subr.bf16.mxu0 0
        %2451 = vmatpush2.bf16.msra.mxu0 0
        %2452 = vmatprep.subr.bf16.mxu0 0
        %2453 = vmatpush2.bf16.msra.mxu0 0
        %2454 = vmatprep.subr.bf16.mxu0 0
        %2455 = vmatpush2.bf16.msra.mxu0 0
        %2456 = vmatprep.subr.bf16.mxu0 0
        %2457 = vmatpush2.bf16.msra.mxu0 0
        %2458 = vmatprep.subr.bf16.mxu0 0
        %2459 = vmatpush2.bf16.msra.mxu0 0
        %2460 = vmatprep.subr.bf16.mxu0 0
        %2461 = vmatpush2.bf16.msra.mxu0 0
        %2462 = vmatprep.mubr.bf16.mxu0 0
        %2463 = vmatmul.mubr.bf16.gmra.mxu0 %v2324
        %v2464 = vpop.f32.mrf.mxu0
        %v2465 = vadd.f32 %v2309, %v2464
        %v2466 = vpop.f32.mrf.mxu0
        %v2467 = vpop.f32.mrf.mxu0
        %v2468 = vpop.f32.mrf.mxu0
        %2469 = vdwg.mxu0
        %v2474 = vunpack.c.l.b16 %v2303
        %v2475 = vunpack.c.l.b16 %v2304
        %v2476 = vunpack.c.l.b16 %v2305
        %v2477 = vunpack.c.l.b16 %v2306
        %v2478 = vpack.c.b16 %v2475, %v2474
        %v2479 = vpack.c.b16 %v2477, %v2476
        %2482 = vmatprep.subr.bf16.mxu0 0
        %2483 = vmatpush1.bf16.msra.mxu0 0
        %2484 = vmatprep.subr.bf16.mxu0 0
        %2485 = vmatpush1.bf16.msra.mxu0 0
        %2486 = vmatprep.subr.bf16.mxu0 0
        %2487 = vmatpush1.bf16.msra.mxu0 0
        %2488 = vmatprep.subr.bf16.mxu0 0
        %2489 = vmatpush1.bf16.msra.mxu0 0
        %2490 = vmatprep.subr.bf16.mxu0 0
        %2491 = vmatpush1.bf16.msra.mxu0 0
        %2492 = vmatprep.subr.bf16.mxu0 0
        %2493 = vmatpush1.bf16.msra.mxu0 0
        %2494 = vmatprep.subr.bf16.mxu0 0
        %2495 = vmatpush1.bf16.msra.mxu0 %v2479
        %2496 = vmatprep.subr.bf16.mxu0 0
        %2497 = vmatpush1.bf16.msra.mxu0 %v2478
        %2498 = vmatprep.subr.bf16.mxu0 0
        %2499 = vmatpush2.bf16.msra.mxu0 0
        %2500 = vmatprep.subr.bf16.mxu0 0
        %2501 = vmatpush2.bf16.msra.mxu0 0
        %2502 = vmatprep.subr.bf16.mxu0 0
        %2503 = vmatpush2.bf16.msra.mxu0 0
        %2504 = vmatprep.subr.bf16.mxu0 0
        %2505 = vmatpush2.bf16.msra.mxu0 0
        %2506 = vmatprep.subr.bf16.mxu0 0
        %2507 = vmatpush2.bf16.msra.mxu0 0
        %2508 = vmatprep.subr.bf16.mxu0 0
        %2509 = vmatpush2.bf16.msra.mxu0 0
        %2510 = vmatprep.subr.bf16.mxu0 0
        %2511 = vmatpush2.bf16.msra.mxu0 0
        %2512 = vmatprep.subr.bf16.mxu0 0
        %2513 = vmatpush2.bf16.msra.mxu0 0
        %2514 = vmatprep.mubr.bf16.mxu0 0
        %2515 = vmatmul.mubr.bf16.gmra.mxu0 %v2324
        %v2516 = vpop.f32.mrf.mxu0
        %v2517 = vadd.f32 %v2310, %v2516
        %v2518 = vpop.f32.mrf.mxu0
        %v2519 = vpop.f32.mrf.mxu0
        %v2520 = vpop.f32.mrf.mxu0
        %2521 = vdwg.mxu0
        %v2522 = vld [vmem:[%s7] sm:$0xf]
        %v2523 = vld [vmem:[%s7 + $0x4] sm:$0xf]
        %v2524 = vld [vmem:[%s7 + $0x8] sm:$0xf]
        %v2525 = vld [vmem:[%s7 + $0xc] sm:$0xf]
        %v2526 = vld [vmem:[%s9] sm:$0xf]
        %v2527 = vld [vmem:[%s9 + $0x4] sm:$0xf]
        %v2528 = vld [vmem:[%s9 + $0x8] sm:$0xf]
        %v2529 = vld [vmem:[%s9 + $0xc] sm:$0xf]
        %v2530 = vpack.c.bf16 %v2361, %v2361
        %v2531 = vpack.c.bf16 %v2413, %v2413
        %v2532 = vpack.c.bf16 %v2465, %v2465
        %v2533 = vpack.c.bf16 %v2517, %v2517
        %v2535 = vsel %vm1639, %v2530, 0
        %v2538 = vsel %vm1639, %v2522, 0
        %2540 = vmatprep.subr.bf16.mxu0 0
        %2541 = vmatpush1.bf16.xpose.msra.mxu0 0
        %2542 = vmatprep.subr.bf16.mxu0 0
        %2543 = vmatpush1.bf16.xpose.msra.mxu0 0
        %2544 = vmatprep.subr.bf16.mxu0 0
        %2545 = vmatpush1.bf16.xpose.msra.mxu0 0
        %2546 = vmatprep.subr.bf16.mxu0 0
        %2547 = vmatpush1.bf16.xpose.msra.mxu0 0
        %2548 = vmatprep.subr.bf16.mxu0 0
        %2549 = vmatpush1.bf16.xpose.msra.mxu0 0
        %2550 = vmatprep.subr.bf16.mxu0 0
        %2551 = vmatpush1.bf16.xpose.msra.mxu0 0
        %2552 = vmatprep.subr.bf16.mxu0 0
        %2553 = vmatpush1.bf16.xpose.msra.mxu0 0
        %2554 = vmatprep.subr.bf16.mxu0 0
        %2555 = vmatpush1.bf16.xpose.msra.mxu0 %v2538
        %2556 = vmatprep.subr.bf16.mxu0 0
        %2557 = vmatpush2.bf16.xpose.msra.mxu0 0
        %2558 = vmatprep.subr.bf16.mxu0 0
        %2559 = vmatpush2.bf16.xpose.msra.mxu0 0
        %2560 = vmatprep.subr.bf16.mxu0 0
        %2561 = vmatpush2.bf16.xpose.msra.mxu0 0
        %2562 = vmatprep.subr.bf16.mxu0 0
        %2563 = vmatpush2.bf16.xpose.msra.mxu0 0
        %2564 = vmatprep.subr.bf16.mxu0 0
        %2565 = vmatpush2.bf16.xpose.msra.mxu0 0
        %2566 = vmatprep.subr.bf16.mxu0 0
        %2567 = vmatpush2.bf16.xpose.msra.mxu0 0
        %2568 = vmatprep.subr.bf16.mxu0 0
        %2569 = vmatpush2.bf16.xpose.msra.mxu0 0
        %2570 = vmatprep.subr.bf16.mxu0 0
        %2571 = vmatpush2.bf16.xpose.msra.mxu0 0
        %2572 = vmatprep.mubr.bf16.mxu0 0
        %2573 = vmatmul.mubr.bf16.gmra.mxu0 %v2535
        %v2574 = vpop.f32.mrf.mxu0
        %v2575 = vadd.f32 0.0, %v2574
        %v2576 = vpop.f32.mrf.mxu0
        %v2577 = vpop.f32.mrf.mxu0
        %v2578 = vpop.f32.mrf.mxu0
        %2579 = vdwg.mxu0
        %v2581 = vsel %vm1639, %v2531, 0
        %v2584 = vsel %vm1639, %v2523, 0
        %2586 = vmatprep.subr.bf16.mxu0 0
        %2587 = vmatpush1.bf16.xpose.msra.mxu0 0
        %2588 = vmatprep.subr.bf16.mxu0 0
        %2589 = vmatpush1.bf16.xpose.msra.mxu0 0
        %2590 = vmatprep.subr.bf16.mxu0 0
        %2591 = vmatpush1.bf16.xpose.msra.mxu0 0
        %2592 = vmatprep.subr.bf16.mxu0 0
        %2593 = vmatpush1.bf16.xpose.msra.mxu0 0
        %2594 = vmatprep.subr.bf16.mxu0 0
        %2595 = vmatpush1.bf16.xpose.msra.mxu0 0
        %2596 = vmatprep.subr.bf16.mxu0 0
        %2597 = vmatpush1.bf16.xpose.msra.mxu0 0
        %2598 = vmatprep.subr.bf16.mxu0 0
        %2599 = vmatpush1.bf16.xpose.msra.mxu0 0
        %2600 = vmatprep.subr.bf16.mxu0 0
        %2601 = vmatpush1.bf16.xpose.msra.mxu0 %v2584
        %2602 = vmatprep.subr.bf16.mxu0 0
        %2603 = vmatpush2.bf16.xpose.msra.mxu0 0
        %2604 = vmatprep.subr.bf16.mxu0 0
        %2605 = vmatpush2.bf16.xpose.msra.mxu0 0
        %2606 = vmatprep.subr.bf16.mxu0 0
        %2607 = vmatpush2.bf16.xpose.msra.mxu0 0
        %2608 = vmatprep.subr.bf16.mxu0 0
        %2609 = vmatpush2.bf16.xpose.msra.mxu0 0
        %2610 = vmatprep.subr.bf16.mxu0 0
        %2611 = vmatpush2.bf16.xpose.msra.mxu0 0
        %2612 = vmatprep.subr.bf16.mxu0 0
        %2613 = vmatpush2.bf16.xpose.msra.mxu0 0
        %2614 = vmatprep.subr.bf16.mxu0 0
        %2615 = vmatpush2.bf16.xpose.msra.mxu0 0
        %2616 = vmatprep.subr.bf16.mxu0 0
        %2617 = vmatpush2.bf16.xpose.msra.mxu0 0
        %2618 = vmatprep.mubr.bf16.mxu0 0
        %2619 = vmatmul.mubr.bf16.gmra.mxu0 %v2581
        %v2620 = vpop.f32.mrf.mxu0
        %v2621 = vadd.f32 0.0, %v2620
        %v2622 = vpop.f32.mrf.mxu0
        %v2623 = vpop.f32.mrf.mxu0
        %v2624 = vpop.f32.mrf.mxu0
        %2625 = vdwg.mxu0
        %v2627 = vsel %vm1639, %v2532, 0
        %v2630 = vsel %vm1639, %v2524, 0
        %2632 = vmatprep.subr.bf16.mxu0 0
        %2633 = vmatpush1.bf16.xpose.msra.mxu0 0
        %2634 = vmatprep.subr.bf16.mxu0 0
        %2635 = vmatpush1.bf16.xpose.msra.mxu0 0
        %2636 = vmatprep.subr.bf16.mxu0 0
        %2637 = vmatpush1.bf16.xpose.msra.mxu0 0
        %2638 = vmatprep.subr.bf16.mxu0 0
        %2639 = vmatpush1.bf16.xpose.msra.mxu0 0
        %2640 = vmatprep.subr.bf16.mxu0 0
        %2641 = vmatpush1.bf16.xpose.msra.mxu0 0
        %2642 = vmatprep.subr.bf16.mxu0 0
        %2643 = vmatpush1.bf16.xpose.msra.mxu0 0
        %2644 = vmatprep.subr.bf16.mxu0 0
        %2645 = vmatpush1.bf16.xpose.msra.mxu0 0
        %2646 = vmatprep.subr.bf16.mxu0 0
        %2647 = vmatpush1.bf16.xpose.msra.mxu0 %v2630
        %2648 = vmatprep.subr.bf16.mxu0 0
        %2649 = vmatpush2.bf16.xpose.msra.mxu0 0
        %2650 = vmatprep.subr.bf16.mxu0 0
        %2651 = vmatpush2.bf16.xpose.msra.mxu0 0
        %2652 = vmatprep.subr.bf16.mxu0 0
        %2653 = vmatpush2.bf16.xpose.msra.mxu0 0
        %2654 = vmatprep.subr.bf16.mxu0 0
        %2655 = vmatpush2.bf16.xpose.msra.mxu0 0
        %2656 = vmatprep.subr.bf16.mxu0 0
        %2657 = vmatpush2.bf16.xpose.msra.mxu0 0
        %2658 = vmatprep.subr.bf16.mxu0 0
        %2659 = vmatpush2.bf16.xpose.msra.mxu0 0
        %2660 = vmatprep.subr.bf16.mxu0 0
        %2661 = vmatpush2.bf16.xpose.msra.mxu0 0
        %2662 = vmatprep.subr.bf16.mxu0 0
        %2663 = vmatpush2.bf16.xpose.msra.mxu0 0
        %2664 = vmatprep.mubr.bf16.mxu0 0
        %2665 = vmatmul.mubr.bf16.gmra.mxu0 %v2627
        %v2666 = vpop.f32.mrf.mxu0
        %v2667 = vadd.f32 0.0, %v2666
        %v2668 = vpop.f32.mrf.mxu0
        %v2669 = vpop.f32.mrf.mxu0
        %v2670 = vpop.f32.mrf.mxu0
        %2671 = vdwg.mxu0
        %v2673 = vsel %vm1639, %v2533, 0
        %v2676 = vsel %vm1639, %v2525, 0
        %2678 = vmatprep.subr.bf16.mxu0 0
        %2679 = vmatpush1.bf16.xpose.msra.mxu0 0
        %2680 = vmatprep.subr.bf16.mxu0 0
        %2681 = vmatpush1.bf16.xpose.msra.mxu0 0
        %2682 = vmatprep.subr.bf16.mxu0 0
        %2683 = vmatpush1.bf16.xpose.msra.mxu0 0
        %2684 = vmatprep.subr.bf16.mxu0 0
        %2685 = vmatpush1.bf16.xpose.msra.mxu0 0
        %2686 = vmatprep.subr.bf16.mxu0 0
        %2687 = vmatpush1.bf16.xpose.msra.mxu0 0
        %2688 = vmatprep.subr.bf16.mxu0 0
        %2689 = vmatpush1.bf16.xpose.msra.mxu0 0
        %2690 = vmatprep.subr.bf16.mxu0 0
        %2691 = vmatpush1.bf16.xpose.msra.mxu0 0
        %2692 = vmatprep.subr.bf16.mxu0 0
        %2693 = vmatpush1.bf16.xpose.msra.mxu0 %v2676
        %2694 = vmatprep.subr.bf16.mxu0 0
        %2695 = vmatpush2.bf16.xpose.msra.mxu0 0
        %2696 = vmatprep.subr.bf16.mxu0 0
        %2697 = vmatpush2.bf16.xpose.msra.mxu0 0
        %2698 = vmatprep.subr.bf16.mxu0 0
        %2699 = vmatpush2.bf16.xpose.msra.mxu0 0
        %2700 = vmatprep.subr.bf16.mxu0 0
        %2701 = vmatpush2.bf16.xpose.msra.mxu0 0
        %2702 = vmatprep.subr.bf16.mxu0 0
        %2703 = vmatpush2.bf16.xpose.msra.mxu0 0
        %2704 = vmatprep.subr.bf16.mxu0 0
        %2705 = vmatpush2.bf16.xpose.msra.mxu0 0
        %2706 = vmatprep.subr.bf16.mxu0 0
        %2707 = vmatpush2.bf16.xpose.msra.mxu0 0
        %2708 = vmatprep.subr.bf16.mxu0 0
        %2709 = vmatpush2.bf16.xpose.msra.mxu0 0
        %2710 = vmatprep.mubr.bf16.mxu0 0
        %2711 = vmatmul.mubr.bf16.gmra.mxu0 %v2673
        %v2712 = vpop.f32.mrf.mxu0
        %v2713 = vadd.f32 0.0, %v2712
        %v2714 = vpop.f32.mrf.mxu0
        %v2715 = vpop.f32.mrf.mxu0
        %v2716 = vpop.f32.mrf.mxu0
        %2717 = vdwg.mxu0
        %v2718 = vmul.f32 %v2575, 0.35355338
        %v2719 = vmul.f32 %v2621, 0.35355338
        %v2720 = vmul.f32 %v2667, 0.35355338
        %v2721 = vmul.f32 %v2713, 0.35355338
        %v2722 = vsel %vm1600, %v2718, -inf
        %2723 = vmax.xlane.f32.xlu0 %v2722
        %v2724 = vpop.xlane.xlu0 %2723
        %v2725 = vsel %vm1600, %v2719, -inf
        %2726 = vmax.xlane.f32.xlu0 %v2725
        %v2727 = vpop.xlane.xlu0 %2726
        %v2728 = vsel %vm1600, %v2720, -inf
        %2729 = vmax.xlane.f32.xlu0 %v2728
        %v2730 = vpop.xlane.xlu0 %2729
        %v2731 = vsel %vm1600, %v2721, -inf
        %2732 = vmax.xlane.f32.xlu0 %v2731
        %v2733 = vpop.xlane.xlu0 %2732
        %v2734 = vsub.f32 %v2718, %v2724
        %v2735 = vsub.f32 %v2719, %v2727
        %v2736 = vsub.f32 %v2720, %v2730
        %v2737 = vsub.f32 %v2721, %v2733
        %v2738 = vmul.f32 %v2734, 1.442695
        %v2739 = vpow.pop %v2738
        %v2740 = vmul.f32 %v2735, 1.442695
        %v2741 = vpow.pop %v2740
        %v2742 = vmul.f32 %v2736, 1.442695
        %v2743 = vpow.pop %v2742
        %v2744 = vmul.f32 %v2737, 1.442695
        %v2745 = vpow.pop %v2744
        %v2746 = vsel %vm1600, %v2739, 0.0
        %2747 = vadd.xlane.f32.xlu0 %v2746
        %v2748 = vpop.xlane.xlu0 %2747
        %v2749 = vsel %vm1600, %v2741, 0.0
        %2750 = vadd.xlane.f32.xlu0 %v2749
        %v2751 = vpop.xlane.xlu0 %2750
        %v2752 = vsel %vm1600, %v2743, 0.0
        %2753 = vadd.xlane.f32.xlu0 %v2752
        %v2754 = vpop.xlane.xlu0 %2753
        %v2755 = vsel %vm1600, %v2745, 0.0
        %2756 = vadd.xlane.f32.xlu0 %v2755
        %v2757 = vpop.xlane.xlu0 %2756
        %v2758 = vrcp.pop %v2748
        %v2759 = vrcp.pop %v2751
        %v2760 = vrcp.pop %v2754
        %v2761 = vrcp.pop %v2757
        %v2762 = vmul.f32 %v2739, %v2758
        %v2763 = vmul.f32 %v2741, %v2759
        %v2764 = vmul.f32 %v2743, %v2760
        %v2765 = vmul.f32 %v2745, %v2761
        %v2766 = vpack.c.bf16 %v2762, %v2762
        %v2767 = vpack.c.bf16 %v2763, %v2763
        %v2768 = vpack.c.bf16 %v2764, %v2764
        %v2769 = vpack.c.bf16 %v2765, %v2765
        %v2771 = vsel %vm1639, %v2766, 0
        %v2774 = vsel %vm1889, %v2526, 0
        %2776 = vmatprep.subr.bf16.mxu0 0
        %2777 = vmatpush1.bf16.msra.mxu0 0
        %2778 = vmatprep.subr.bf16.mxu0 0
        %2779 = vmatpush1.bf16.msra.mxu0 0
        %2780 = vmatprep.subr.bf16.mxu0 0
        %2781 = vmatpush1.bf16.msra.mxu0 0
        %2782 = vmatprep.subr.bf16.mxu0 0
        %2783 = vmatpush1.bf16.msra.mxu0 0
        %2784 = vmatprep.subr.bf16.mxu0 0
        %2785 = vmatpush1.bf16.msra.mxu0 0
        %2786 = vmatprep.subr.bf16.mxu0 0
        %2787 = vmatpush1.bf16.msra.mxu0 0
        %2788 = vmatprep.subr.bf16.mxu0 0
        %2789 = vmatpush1.bf16.msra.mxu0 0
        %2790 = vmatprep.subr.bf16.mxu0 0
        %2791 = vmatpush1.bf16.msra.mxu0 %v2774
        %2792 = vmatprep.subr.bf16.mxu0 0
        %2793 = vmatpush2.bf16.msra.mxu0 0
        %2794 = vmatprep.subr.bf16.mxu0 0
        %2795 = vmatpush2.bf16.msra.mxu0 0
        %2796 = vmatprep.subr.bf16.mxu0 0
        %2797 = vmatpush2.bf16.msra.mxu0 0
        %2798 = vmatprep.subr.bf16.mxu0 0
        %2799 = vmatpush2.bf16.msra.mxu0 0
        %2800 = vmatprep.subr.bf16.mxu0 0
        %2801 = vmatpush2.bf16.msra.mxu0 0
        %2802 = vmatprep.subr.bf16.mxu0 0
        %2803 = vmatpush2.bf16.msra.mxu0 0
        %2804 = vmatprep.subr.bf16.mxu0 0
        %2805 = vmatpush2.bf16.msra.mxu0 0
        %2806 = vmatprep.subr.bf16.mxu0 0
        %2807 = vmatpush2.bf16.msra.mxu0 0
        %2808 = vmatprep.mubr.bf16.mxu0 0
        %2809 = vmatmul.mubr.bf16.gmra.mxu0 %v2771
        %v2810 = vpop.f32.mrf.mxu0
        %v2811 = vadd.f32 0.0, %v2810
        %v2812 = vpop.f32.mrf.mxu0
        %v2813 = vpop.f32.mrf.mxu0
        %v2814 = vpop.f32.mrf.mxu0
        %2815 = vdwg.mxu0
        %v2817 = vsel %vm1639, %v2767, 0
        %v2820 = vsel %vm1889, %v2527, 0
        %2822 = vmatprep.subr.bf16.mxu0 0
        %2823 = vmatpush1.bf16.msra.mxu0 0
        %2824 = vmatprep.subr.bf16.mxu0 0
        %2825 = vmatpush1.bf16.msra.mxu0 0
        %2826 = vmatprep.subr.bf16.mxu0 0
        %2827 = vmatpush1.bf16.msra.mxu0 0
        %2828 = vmatprep.subr.bf16.mxu0 0
        %2829 = vmatpush1.bf16.msra.mxu0 0
        %2830 = vmatprep.subr.bf16.mxu0 0
        %2831 = vmatpush1.bf16.msra.mxu0 0
        %2832 = vmatprep.subr.bf16.mxu0 0
        %2833 = vmatpush1.bf16.msra.mxu0 0
        %2834 = vmatprep.subr.bf16.mxu0 0
        %2835 = vmatpush1.bf16.msra.mxu0 0
        %2836 = vmatprep.subr.bf16.mxu0 0
        %2837 = vmatpush1.bf16.msra.mxu0 %v2820
        %2838 = vmatprep.subr.bf16.mxu0 0
        %2839 = vmatpush2.bf16.msra.mxu0 0
        %2840 = vmatprep.subr.bf16.mxu0 0
        %2841 = vmatpush2.bf16.msra.mxu0 0
        %2842 = vmatprep.subr.bf16.mxu0 0
        %2843 = vmatpush2.bf16.msra.mxu0 0
        %2844 = vmatprep.subr.bf16.mxu0 0
        %2845 = vmatpush2.bf16.msra.mxu0 0
        %2846 = vmatprep.subr.bf16.mxu0 0
        %2847 = vmatpush2.bf16.msra.mxu0 0
        %2848 = vmatprep.subr.bf16.mxu0 0
        %2849 = vmatpush2.bf16.msra.mxu0 0
        %2850 = vmatprep.subr.bf16.mxu0 0
        %2851 = vmatpush2.bf16.msra.mxu0 0
        %2852 = vmatprep.subr.bf16.mxu0 0
        %2853 = vmatpush2.bf16.msra.mxu0 0
        %2854 = vmatprep.mubr.bf16.mxu0 0
        %2855 = vmatmul.mubr.bf16.gmra.mxu0 %v2817
        %v2856 = vpop.f32.mrf.mxu0
        %v2857 = vadd.f32 0.0, %v2856
        %v2858 = vpop.f32.mrf.mxu0
        %v2859 = vpop.f32.mrf.mxu0
        %v2860 = vpop.f32.mrf.mxu0
        %2861 = vdwg.mxu0
        %v2863 = vsel %vm1639, %v2768, 0
        %v2866 = vsel %vm1889, %v2528, 0
        %2868 = vmatprep.subr.bf16.mxu0 0
        %2869 = vmatpush1.bf16.msra.mxu0 0
        %2870 = vmatprep.subr.bf16.mxu0 0
        %2871 = vmatpush1.bf16.msra.mxu0 0
        %2872 = vmatprep.subr.bf16.mxu0 0
        %2873 = vmatpush1.bf16.msra.mxu0 0
        %2874 = vmatprep.subr.bf16.mxu0 0
        %2875 = vmatpush1.bf16.msra.mxu0 0
        %2876 = vmatprep.subr.bf16.mxu0 0
        %2877 = vmatpush1.bf16.msra.mxu0 0
        %2878 = vmatprep.subr.bf16.mxu0 0
        %2879 = vmatpush1.bf16.msra.mxu0 0
        %2880 = vmatprep.subr.bf16.mxu0 0
        %2881 = vmatpush1.bf16.msra.mxu0 0
        %2882 = vmatprep.subr.bf16.mxu0 0
        %2883 = vmatpush1.bf16.msra.mxu0 %v2866
        %2884 = vmatprep.subr.bf16.mxu0 0
        %2885 = vmatpush2.bf16.msra.mxu0 0
        %2886 = vmatprep.subr.bf16.mxu0 0
        %2887 = vmatpush2.bf16.msra.mxu0 0
        %2888 = vmatprep.subr.bf16.mxu0 0
        %2889 = vmatpush2.bf16.msra.mxu0 0
        %2890 = vmatprep.subr.bf16.mxu0 0
        %2891 = vmatpush2.bf16.msra.mxu0 0
        %2892 = vmatprep.subr.bf16.mxu0 0
        %2893 = vmatpush2.bf16.msra.mxu0 0
        %2894 = vmatprep.subr.bf16.mxu0 0
        %2895 = vmatpush2.bf16.msra.mxu0 0
        %2896 = vmatprep.subr.bf16.mxu0 0
        %2897 = vmatpush2.bf16.msra.mxu0 0
        %2898 = vmatprep.subr.bf16.mxu0 0
        %2899 = vmatpush2.bf16.msra.mxu0 0
        %2900 = vmatprep.mubr.bf16.mxu0 0
        %2901 = vmatmul.mubr.bf16.gmra.mxu0 %v2863
        %v2902 = vpop.f32.mrf.mxu0
        %v2903 = vadd.f32 0.0, %v2902
        %v2904 = vpop.f32.mrf.mxu0
        %v2905 = vpop.f32.mrf.mxu0
        %v2906 = vpop.f32.mrf.mxu0
        %2907 = vdwg.mxu0
        %v2909 = vsel %vm1639, %v2769, 0
        %v2912 = vsel %vm1889, %v2529, 0
        %2914 = vmatprep.subr.bf16.mxu0 0
        %2915 = vmatpush1.bf16.msra.mxu0 0
        %2916 = vmatprep.subr.bf16.mxu0 0
        %2917 = vmatpush1.bf16.msra.mxu0 0
        %2918 = vmatprep.subr.bf16.mxu0 0
        %2919 = vmatpush1.bf16.msra.mxu0 0
        %2920 = vmatprep.subr.bf16.mxu0 0
        %2921 = vmatpush1.bf16.msra.mxu0 0
        %2922 = vmatprep.subr.bf16.mxu0 0
        %2923 = vmatpush1.bf16.msra.mxu0 0
        %2924 = vmatprep.subr.bf16.mxu0 0
        %2925 = vmatpush1.bf16.msra.mxu0 0
        %2926 = vmatprep.subr.bf16.mxu0 0
        %2927 = vmatpush1.bf16.msra.mxu0 0
        %2928 = vmatprep.subr.bf16.mxu0 0
        %2929 = vmatpush1.bf16.msra.mxu0 %v2912
        %2930 = vmatprep.subr.bf16.mxu0 0
        %2931 = vmatpush2.bf16.msra.mxu0 0
        %2932 = vmatprep.subr.bf16.mxu0 0
        %2933 = vmatpush2.bf16.msra.mxu0 0
        %2934 = vmatprep.subr.bf16.mxu0 0
        %2935 = vmatpush2.bf16.msra.mxu0 0
        %2936 = vmatprep.subr.bf16.mxu0 0
        %2937 = vmatpush2.bf16.msra.mxu0 0
        %2938 = vmatprep.subr.bf16.mxu0 0
        %2939 = vmatpush2.bf16.msra.mxu0 0
        %2940 = vmatprep.subr.bf16.mxu0 0
        %2941 = vmatpush2.bf16.msra.mxu0 0
        %2942 = vmatprep.subr.bf16.mxu0 0
        %2943 = vmatpush2.bf16.msra.mxu0 0
        %2944 = vmatprep.subr.bf16.mxu0 0
        %2945 = vmatpush2.bf16.msra.mxu0 0
        %2946 = vmatprep.mubr.bf16.mxu0 0
        %2947 = vmatmul.mubr.bf16.gmra.mxu0 %v2909
        %v2948 = vpop.f32.mrf.mxu0
        %v2949 = vadd.f32 0.0, %v2948
        %v2950 = vpop.f32.mrf.mxu0
        %v2951 = vpop.f32.mrf.mxu0
        %v2952 = vpop.f32.mrf.mxu0
        %2953 = vdwg.mxu0
        %v2954 = vld [vmem:[%s39] sm:$0xf]
        %v2955 = vld [vmem:[%s39 + $0x4] sm:$0xf]
        %v2956 = vld [vmem:[%s39 + $0x8] sm:$0xf]
        %v2957 = vld [vmem:[%s39 + $0xc] sm:$0xf]
        %v2958 = vld [vmem:[%s41] sm:$0x1]
        %v2959 = vpack.c.bf16 %v2811, %v2811
        %v2960 = vpack.c.bf16 %v2857, %v2857
        %v2961 = vpack.c.bf16 %v2903, %v2903
        %v2962 = vpack.c.bf16 %v2949, %v2949
        %v2964 = vsel %vm1639, %v2959, 0
        %v2967 = vsel %vm1889, %v2954, 0
        %2969 = vmatprep.subr.bf16.mxu0 0
        %2970 = vmatpush1.bf16.msra.mxu0 0
        %2971 = vmatprep.subr.bf16.mxu0 0
        %2972 = vmatpush1.bf16.msra.mxu0 0
        %2973 = vmatprep.subr.bf16.mxu0 0
        %2974 = vmatpush1.bf16.msra.mxu0 0
        %2975 = vmatprep.subr.bf16.mxu0 0
        %2976 = vmatpush1.bf16.msra.mxu0 0
        %2977 = vmatprep.subr.bf16.mxu0 0
        %2978 = vmatpush1.bf16.msra.mxu0 0
        %2979 = vmatprep.subr.bf16.mxu0 0
        %2980 = vmatpush1.bf16.msra.mxu0 0
        %2981 = vmatprep.subr.bf16.mxu0 0
        %2982 = vmatpush1.bf16.msra.mxu0 0
        %2983 = vmatprep.subr.bf16.mxu0 0
        %2984 = vmatpush1.bf16.msra.mxu0 %v2967
        %2985 = vmatprep.subr.bf16.mxu0 0
        %2986 = vmatpush2.bf16.msra.mxu0 0
        %2987 = vmatprep.subr.bf16.mxu0 0
        %2988 = vmatpush2.bf16.msra.mxu0 0
        %2989 = vmatprep.subr.bf16.mxu0 0
        %2990 = vmatpush2.bf16.msra.mxu0 0
        %2991 = vmatprep.subr.bf16.mxu0 0
        %2992 = vmatpush2.bf16.msra.mxu0 0
        %2993 = vmatprep.subr.bf16.mxu0 0
        %2994 = vmatpush2.bf16.msra.mxu0 0
        %2995 = vmatprep.subr.bf16.mxu0 0
        %2996 = vmatpush2.bf16.msra.mxu0 0
        %2997 = vmatprep.subr.bf16.mxu0 0
        %2998 = vmatpush2.bf16.msra.mxu0 0
        %2999 = vmatprep.subr.bf16.mxu0 0
        %3000 = vmatpush2.bf16.msra.mxu0 0
        %3001 = vmatprep.mubr.bf16.mxu0 0
        %3002 = vmatmul.mubr.bf16.gmra.mxu0 %v2964
        %v3003 = vpop.f32.mrf.mxu0
        %v3004 = vadd.f32 0.0, %v3003
        %v3005 = vpop.f32.mrf.mxu0
        %v3006 = vpop.f32.mrf.mxu0
        %v3007 = vpop.f32.mrf.mxu0
        %3008 = vdwg.mxu0
        %v3010 = vsel %vm1639, %v2960, 0
        %v3013 = vsel %vm1889, %v2955, 0
        %3015 = vmatprep.subr.bf16.mxu0 0
        %3016 = vmatpush1.bf16.msra.mxu0 0
        %3017 = vmatprep.subr.bf16.mxu0 0
        %3018 = vmatpush1.bf16.msra.mxu0 0
        %3019 = vmatprep.subr.bf16.mxu0 0
        %3020 = vmatpush1.bf16.msra.mxu0 0
        %3021 = vmatprep.subr.bf16.mxu0 0
        %3022 = vmatpush1.bf16.msra.mxu0 0
        %3023 = vmatprep.subr.bf16.mxu0 0
        %3024 = vmatpush1.bf16.msra.mxu0 0
        %3025 = vmatprep.subr.bf16.mxu0 0
        %3026 = vmatpush1.bf16.msra.mxu0 0
        %3027 = vmatprep.subr.bf16.mxu0 0
        %3028 = vmatpush1.bf16.msra.mxu0 0
        %3029 = vmatprep.subr.bf16.mxu0 0
        %3030 = vmatpush1.bf16.msra.mxu0 %v3013
        %3031 = vmatprep.subr.bf16.mxu0 0
        %3032 = vmatpush2.bf16.msra.mxu0 0
        %3033 = vmatprep.subr.bf16.mxu0 0
        %3034 = vmatpush2.bf16.msra.mxu0 0
        %3035 = vmatprep.subr.bf16.mxu0 0
        %3036 = vmatpush2.bf16.msra.mxu0 0
        %3037 = vmatprep.subr.bf16.mxu0 0
        %3038 = vmatpush2.bf16.msra.mxu0 0
        %3039 = vmatprep.subr.bf16.mxu0 0
        %3040 = vmatpush2.bf16.msra.mxu0 0
        %3041 = vmatprep.subr.bf16.mxu0 0
        %3042 = vmatpush2.bf16.msra.mxu0 0
        %3043 = vmatprep.subr.bf16.mxu0 0
        %3044 = vmatpush2.bf16.msra.mxu0 0
        %3045 = vmatprep.subr.bf16.mxu0 0
        %3046 = vmatpush2.bf16.msra.mxu0 0
        %3047 = vmatprep.mubr.bf16.mxu0 0
        %3048 = vmatmul.mubr.bf16.gmra.mxu0 %v3010
        %v3049 = vpop.f32.mrf.mxu0
        %v3050 = vadd.f32 0.0, %v3049
        %v3051 = vpop.f32.mrf.mxu0
        %v3052 = vpop.f32.mrf.mxu0
        %v3053 = vpop.f32.mrf.mxu0
        %3054 = vdwg.mxu0
        %v3056 = vsel %vm1639, %v2961, 0
        %v3059 = vsel %vm1889, %v2956, 0
        %3061 = vmatprep.subr.bf16.mxu0 0
        %3062 = vmatpush1.bf16.msra.mxu0 0
        %3063 = vmatprep.subr.bf16.mxu0 0
        %3064 = vmatpush1.bf16.msra.mxu0 0
        %3065 = vmatprep.subr.bf16.mxu0 0
        %3066 = vmatpush1.bf16.msra.mxu0 0
        %3067 = vmatprep.subr.bf16.mxu0 0
        %3068 = vmatpush1.bf16.msra.mxu0 0
        %3069 = vmatprep.subr.bf16.mxu0 0
        %3070 = vmatpush1.bf16.msra.mxu0 0
        %3071 = vmatprep.subr.bf16.mxu0 0
        %3072 = vmatpush1.bf16.msra.mxu0 0
        %3073 = vmatprep.subr.bf16.mxu0 0
        %3074 = vmatpush1.bf16.msra.mxu0 0
        %3075 = vmatprep.subr.bf16.mxu0 0
        %3076 = vmatpush1.bf16.msra.mxu0 %v3059
        %3077 = vmatprep.subr.bf16.mxu0 0
        %3078 = vmatpush2.bf16.msra.mxu0 0
        %3079 = vmatprep.subr.bf16.mxu0 0
        %3080 = vmatpush2.bf16.msra.mxu0 0
        %3081 = vmatprep.subr.bf16.mxu0 0
        %3082 = vmatpush2.bf16.msra.mxu0 0
        %3083 = vmatprep.subr.bf16.mxu0 0
        %3084 = vmatpush2.bf16.msra.mxu0 0
        %3085 = vmatprep.subr.bf16.mxu0 0
        %3086 = vmatpush2.bf16.msra.mxu0 0
        %3087 = vmatprep.subr.bf16.mxu0 0
        %3088 = vmatpush2.bf16.msra.mxu0 0
        %3089 = vmatprep.subr.bf16.mxu0 0
        %3090 = vmatpush2.bf16.msra.mxu0 0
        %3091 = vmatprep.subr.bf16.mxu0 0
        %3092 = vmatpush2.bf16.msra.mxu0 0
        %3093 = vmatprep.mubr.bf16.mxu0 0
        %3094 = vmatmul.mubr.bf16.gmra.mxu0 %v3056
        %v3095 = vpop.f32.mrf.mxu0
        %v3096 = vadd.f32 0.0, %v3095
        %v3097 = vpop.f32.mrf.mxu0
        %v3098 = vpop.f32.mrf.mxu0
        %v3099 = vpop.f32.mrf.mxu0
        %3100 = vdwg.mxu0
        %v3102 = vsel %vm1639, %v2962, 0
        %v3105 = vsel %vm1889, %v2957, 0
        %3107 = vmatprep.subr.bf16.mxu0 0
        %3108 = vmatpush1.bf16.msra.mxu0 0
        %3109 = vmatprep.subr.bf16.mxu0 0
        %3110 = vmatpush1.bf16.msra.mxu0 0
        %3111 = vmatprep.subr.bf16.mxu0 0
        %3112 = vmatpush1.bf16.msra.mxu0 0
        %3113 = vmatprep.subr.bf16.mxu0 0
        %3114 = vmatpush1.bf16.msra.mxu0 0
        %3115 = vmatprep.subr.bf16.mxu0 0
        %3116 = vmatpush1.bf16.msra.mxu0 0
        %3117 = vmatprep.subr.bf16.mxu0 0
        %3118 = vmatpush1.bf16.msra.mxu0 0
        %3119 = vmatprep.subr.bf16.mxu0 0
        %3120 = vmatpush1.bf16.msra.mxu0 0
        %3121 = vmatprep.subr.bf16.mxu0 0
        %3122 = vmatpush1.bf16.msra.mxu0 %v3105
        %3123 = vmatprep.subr.bf16.mxu0 0
        %3124 = vmatpush2.bf16.msra.mxu0 0
        %3125 = vmatprep.subr.bf16.mxu0 0
        %3126 = vmatpush2.bf16.msra.mxu0 0
        %3127 = vmatprep.subr.bf16.mxu0 0
        %3128 = vmatpush2.bf16.msra.mxu0 0
        %3129 = vmatprep.subr.bf16.mxu0 0
        %3130 = vmatpush2.bf16.msra.mxu0 0
        %3131 = vmatprep.subr.bf16.mxu0 0
        %3132 = vmatpush2.bf16.msra.mxu0 0
        %3133 = vmatprep.subr.bf16.mxu0 0
        %3134 = vmatpush2.bf16.msra.mxu0 0
        %3135 = vmatprep.subr.bf16.mxu0 0
        %3136 = vmatpush2.bf16.msra.mxu0 0
        %3137 = vmatprep.subr.bf16.mxu0 0
        %3138 = vmatpush2.bf16.msra.mxu0 0
        %3139 = vmatprep.mubr.bf16.mxu0 0
        %3140 = vmatmul.mubr.bf16.gmra.mxu0 %v3102
        %v3141 = vpop.f32.mrf.mxu0
        %v3142 = vadd.f32 0.0, %v3141
        %v3143 = vpop.f32.mrf.mxu0
        %v3144 = vpop.f32.mrf.mxu0
        %v3145 = vpop.f32.mrf.mxu0
        %3146 = vdwg.mxu0
        %v3147 = vsel %vm893, %v3004, 0.0
        %v3148 = vsel %vm893, %v3050, 0.0
        %v3149 = vadd.f32 %v3147, %v3148
        %v3150 = vsel %vm893, %v3096, 0.0
        %v3151 = vadd.f32 %v3149, %v3150
        %v3152 = vsel %vm893, %v3142, 0.0
        %v3153 = vadd.f32 %v3151, %v3152
        %v3154 = vadd.f32 %v3153, %v2958
        %v3155 = vadd.f32 %v2272, %v3154
        %v3156 = vld [vmem:[%s43] sm:$0x1]
        %v3157 = vld [vmem:[%s45] sm:$0x1]
        %v3158 = vsel %vm893, %v3155, 0.0
        %3159 = vadd.xlane.f32.xlu0 %v3158
        %v3160 = vpop.xlane.xlu0 %3159
        %v3161 = vmul.f32 %v3160, %v897
        %v3162 = vsub.f32 %v3155, %v3161
        %v3163 = vmul.f32 %v3162, %v3162
        %v3164 = vsel %vm893, %v3163, 0.0
        %3165 = vadd.xlane.f32.xlu0 %v3164
        %v3166 = vpop.xlane.xlu0 %3165
        %v3167 = vmul.f32 %v3166, %v897
        %v3168 = vadd.f32 %v3167, 1e-05
        %v3169 = vrsqrt.pop %v3168
        %v3170 = vmul.f32 %v3162, %v3169
        %v3171 = vmul.f32 %v3170, %v3156
        %v3172 = vadd.f32 %v3171, %v3157
        %v3173 = vpack.c.bf16 %v3172, %v3172
        %v3174 = vld [vmem:[%s47] sm:$0xf]
        %v3175 = vld [vmem:[%s47 + $0x4] sm:$0xf]
        %v3176 = vld [vmem:[%s47 + $0x8] sm:$0xf]
        %v3177 = vld [vmem:[%s47 + $0xc] sm:$0xf]
        %v3178 = vld [vmem:[%s49] sm:$0x1]
        %v3183 = vunpack.c.l.b16 %v3174
        %v3184 = vunpack.c.l.b16 %v3175
        %v3185 = vunpack.c.l.b16 %v3176
        %v3186 = vunpack.c.l.b16 %v3177
        %v3187 = vpack.c.b16 %v3184, %v3183
        %v3188 = vpack.c.b16 %v3186, %v3185
        %v3192 = vsel %vm943, %v3173, 0
        %3194 = vmatprep.subr.bf16.mxu0 0
        %3195 = vmatpush1.bf16.msra.mxu0 0
        %3196 = vmatprep.subr.bf16.mxu0 0
        %3197 = vmatpush1.bf16.msra.mxu0 0
        %3198 = vmatprep.subr.bf16.mxu0 0
        %3199 = vmatpush1.bf16.msra.mxu0 0
        %3200 = vmatprep.subr.bf16.mxu0 0
        %3201 = vmatpush1.bf16.msra.mxu0 0
        %3202 = vmatprep.subr.bf16.mxu0 0
        %3203 = vmatpush1.bf16.msra.mxu0 0
        %3204 = vmatprep.subr.bf16.mxu0 0
        %3205 = vmatpush1.bf16.msra.mxu0 0
        %3206 = vmatprep.subr.bf16.mxu0 0
        %3207 = vmatpush1.bf16.msra.mxu0 %v3188
        %3208 = vmatprep.subr.bf16.mxu0 0
        %3209 = vmatpush1.bf16.msra.mxu0 %v3187
        %3210 = vmatprep.subr.bf16.mxu0 0
        %3211 = vmatpush2.bf16.msra.mxu0 0
        %3212 = vmatprep.subr.bf16.mxu0 0
        %3213 = vmatpush2.bf16.msra.mxu0 0
        %3214 = vmatprep.subr.bf16.mxu0 0
        %3215 = vmatpush2.bf16.msra.mxu0 0
        %3216 = vmatprep.subr.bf16.mxu0 0
        %3217 = vmatpush2.bf16.msra.mxu0 0
        %3218 = vmatprep.subr.bf16.mxu0 0
        %3219 = vmatpush2.bf16.msra.mxu0 0
        %3220 = vmatprep.subr.bf16.mxu0 0
        %3221 = vmatpush2.bf16.msra.mxu0 0
        %3222 = vmatprep.subr.bf16.mxu0 0
        %3223 = vmatpush2.bf16.msra.mxu0 0
        %3224 = vmatprep.subr.bf16.mxu0 0
        %3225 = vmatpush2.bf16.msra.mxu0 0
        %3226 = vmatprep.mubr.bf16.mxu0 0
        %3227 = vmatmul.mubr.bf16.gmra.mxu0 %v3192
        %v3228 = vpop.f32.mrf.mxu0
        %v3229 = vadd.f32 %v3178, %v3228
        %v3230 = vpop.f32.mrf.mxu0
        %v3231 = vpop.f32.mrf.mxu0
        %v3232 = vpop.f32.mrf.mxu0
        %3233 = vdwg.mxu0
        %v3234 = vmul.f32 %v3229, %v3229
        %v3235 = vmul.f32 %v3229, %v3234
        %v3236 = vmul.f32 %v3235, 0.044715
        %v3237 = vadd.f32 %v3229, %v3236
        %v3238 = vmul.f32 %v3237, 0.7978846
        %v3239 = vtanh.pop %v3238
        %v3240 = vadd.f32 %v3239, 1.0
        %v3241 = vmul.f32 %v3240, 0.5
        %v3242 = vmul.f32 %v3229, %v3241
        %v3243 = vpack.c.bf16 %v3242, %v3242
        %v3244 = vld [vmem:[%s51] sm:$0xf]
        %v3245 = vld [vmem:[%s51 + $0x4] sm:$0xf]
        %v3246 = vld [vmem:[%s51 + $0x8] sm:$0xf]
        %v3247 = vld [vmem:[%s51 + $0xc] sm:$0xf]
        %v3248 = vld [vmem:[%s51 + $0x10] sm:$0xf]
        %v3249 = vld [vmem:[%s51 + $0x14] sm:$0xf]
        %v3250 = vld [vmem:[%s51 + $0x18] sm:$0xf]
        %v3251 = vld [vmem:[%s51 + $0x1c] sm:$0xf]
        %v3252 = vld [vmem:[%s53] sm:$0x1]
        %v3261 = vunpack.c.l.b16 %v3244
        %v3262 = vunpack.c.l.b16 %v3245
        %v3263 = vunpack.c.l.b16 %v3246
        %v3264 = vunpack.c.l.b16 %v3247
        %v3265 = vunpack.c.l.b16 %v3248
        %v3266 = vunpack.c.l.b16 %v3249
        %v3267 = vunpack.c.l.b16 %v3250
        %v3268 = vunpack.c.l.b16 %v3251
        %v3269 = vpack.c.b16 %v3262, %v3261
        %v3270 = vpack.c.b16 %v3264, %v3263
        %v3271 = vpack.c.b16 %v3266, %v3265
        %v3272 = vpack.c.b16 %v3268, %v3267
        %vm3277 = vcmask 523264
        %v3279 = vsel %vm3277, %v3243, 0
        %3281 = vmatprep.subr.bf16.mxu0 0
        %3282 = vmatpush1.bf16.msra.mxu0 0
        %3283 = vmatprep.subr.bf16.mxu0 0
        %3284 = vmatpush1.bf16.msra.mxu0 0
        %3285 = vmatprep.subr.bf16.mxu0 0
        %3286 = vmatpush1.bf16.msra.mxu0 0
        %3287 = vmatprep.subr.bf16.mxu0 0
        %3288 = vmatpush1.bf16.msra.mxu0 0
        %3289 = vmatprep.subr.bf16.mxu0 0
        %3290 = vmatpush1.bf16.msra.mxu0 %v3272
        %3291 = vmatprep.subr.bf16.mxu0 0
        %3292 = vmatpush1.bf16.msra.mxu0 %v3271
        %3293 = vmatprep.subr.bf16.mxu0 0
        %3294 = vmatpush1.bf16.msra.mxu0 %v3270
        %3295 = vmatprep.subr.bf16.mxu0 0
        %3296 = vmatpush1.bf16.msra.mxu0 %v3269
        %3297 = vmatprep.subr.bf16.mxu0 0
        %3298 = vmatpush2.bf16.msra.mxu0 0
        %3299 = vmatprep.subr.bf16.mxu0 0
        %3300 = vmatpush2.bf16.msra.mxu0 0
        %3301 = vmatprep.subr.bf16.mxu0 0
        %3302 = vmatpush2.bf16.msra.mxu0 0
        %3303 = vmatprep.subr.bf16.mxu0 0
        %3304 = vmatpush2.bf16.msra.mxu0 0
        %3305 = vmatprep.subr.bf16.mxu0 0
        %3306 = vmatpush2.bf16.msra.mxu0 0
        %3307 = vmatprep.subr.bf16.mxu0 0
        %3308 = vmatpush2.bf16.msra.mxu0 0
        %3309 = vmatprep.subr.bf16.mxu0 0
        %3310 = vmatpush2.bf16.msra.mxu0 0
        %3311 = vmatprep.subr.bf16.mxu0 0
        %3312 = vmatpush2.bf16.msra.mxu0 0
        %3313 = vmatprep.mubr.bf16.mxu0 0
        %3314 = vmatmul.mubr.bf16.gmra.mxu0 %v3279
        %v3315 = vpop.f32.mrf.mxu0
        %v3316 = vadd.f32 %v3252, %v3315
        %v3317 = vpop.f32.mrf.mxu0
        %v3318 = vpop.f32.mrf.mxu0
        %v3319 = vpop.f32.mrf.mxu0
        %3320 = vdwg.mxu0
        %v3321 = vadd.f32 %v3155, %v3316
        %v3322 = vld [vmem:[%s55] sm:$0x1]
        %v3323 = vld [vmem:[%s57] sm:$0x1]
        %v3324 = vsel %vm893, %v3321, 0.0
        %3325 = vadd.xlane.f32.xlu0 %v3324
        %v3326 = vpop.xlane.xlu0 %3325
        %v3327 = vmul.f32 %v3326, %v897
        %v3328 = vsub.f32 %v3321, %v3327
        %v3329 = vmul.f32 %v3328, %v3328
        %v3330 = vsel %vm893, %v3329, 0.0
        %3331 = vadd.xlane.f32.xlu0 %v3330
        %v3332 = vpop.xlane.xlu0 %3331
        %v3333 = vmul.f32 %v3332, %v897
        %v3334 = vadd.f32 %v3333, 1e-05
        %v3335 = vrsqrt.pop %v3334
        %v3336 = vmul.f32 %v3328, %v3335
        %v3337 = vmul.f32 %v3336, %v3322
        %v3338 = vadd.f32 %v3337, %v3323
        %v3339 = vpack.c.bf16 %v3338, %v3338
        %v3340 = vld [vmem:[%s5] sm:$0xf]
        %v3341 = vld [vmem:[%s5 + $0x4] sm:$0xf]
        %v3342 = vld [vmem:[%s5 + $0x8] sm:$0xf]
        %v3343 = vld [vmem:[%s5 + $0xc] sm:$0xf]
        %v3344 = vld [vmem:[%s5 + $0x10] sm:$0xf]
        %v3345 = vld [vmem:[%s5 + $0x14] sm:$0xf]
        %v3346 = vld [vmem:[%s5 + $0x18] sm:$0xf]
        %v3347 = vld [vmem:[%s5 + $0x1c] sm:$0xf]
        %v3356 = vunpack.c.l.b16 %v3340
        %v3357 = vunpack.c.l.b16 %v3341
        %v3358 = vunpack.c.l.b16 %v3342
        %v3359 = vunpack.c.l.b16 %v3343
        %v3360 = vunpack.c.l.b16 %v3344
        %v3361 = vunpack.c.l.b16 %v3345
        %v3362 = vunpack.c.l.b16 %v3346
        %v3363 = vunpack.c.l.b16 %v3347
        %v3364 = vpack.c.b16 %v3357, %v3356
        %v3365 = vpack.c.b16 %v3359, %v3358
        %v3366 = vpack.c.b16 %v3361, %v3360
        %v3367 = vpack.c.b16 %v3363, %v3362
        %v3369 = vsel %vm943, %v3339, 0
        %v3372 = vsel %vm943, %v3364, 0
        %v3375 = vsel %vm943, %v3365, 0
        %v3378 = vsel %vm943, %v3366, 0
        %v3381 = vsel %vm943, %v3367, 0
        %3383 = vmatprep.subr.bf16.mxu0 0
        %3384 = vmatpush1.bf16.xpose.msra.mxu0 0
        %3385 = vmatprep.subr.bf16.mxu0 0
        %3386 = vmatpush1.bf16.xpose.msra.mxu0 0
        %3387 = vmatprep.subr.bf16.mxu0 0
        %3388 = vmatpush1.bf16.xpose.msra.mxu0 0
        %3389 = vmatprep.subr.bf16.mxu0 0
        %3390 = vmatpush1.bf16.xpose.msra.mxu0 0
        %3391 = vmatprep.subr.bf16.mxu0 0
        %3392 = vmatpush1.bf16.xpose.msra.mxu0 %v3381
        %3393 = vmatprep.subr.bf16.mxu0 0
        %3394 = vmatpush1.bf16.xpose.msra.mxu0 %v3378
        %3395 = vmatprep.subr.bf16.mxu0 0
        %3396 = vmatpush1.bf16.xpose.msra.mxu0 %v3375
        %3397 = vmatprep.subr.bf16.mxu0 0
        %3398 = vmatpush1.bf16.xpose.msra.mxu0 %v3372
        %3399 = vmatprep.subr.bf16.mxu0 0
        %3400 = vmatpush2.bf16.xpose.msra.mxu0 0
        %3401 = vmatprep.subr.bf16.mxu0 0
        %3402 = vmatpush2.bf16.xpose.msra.mxu0 0
        %3403 = vmatprep.subr.bf16.mxu0 0
        %3404 = vmatpush2.bf16.xpose.msra.mxu0 0
        %3405 = vmatprep.subr.bf16.mxu0 0
        %3406 = vmatpush2.bf16.xpose.msra.mxu0 0
        %3407 = vmatprep.subr.bf16.mxu0 0
        %3408 = vmatpush2.bf16.xpose.msra.mxu0 0
        %3409 = vmatprep.subr.bf16.mxu0 0
        %3410 = vmatpush2.bf16.xpose.msra.mxu0 0
        %3411 = vmatprep.subr.bf16.mxu0 0
        %3412 = vmatpush2.bf16.xpose.msra.mxu0 0
        %3413 = vmatprep.subr.bf16.mxu0 0
        %3414 = vmatpush2.bf16.xpose.msra.mxu0 0
        %3415 = vmatprep.mubr.bf16.mxu0 0
        %3416 = vmatmul.mubr.bf16.gmra.mxu0 %v3369
        %v3417 = vpop.f32.mrf.mxu0
        %v3418 = vadd.f32 0.0, %v3417
        %v3419 = vpop.f32.mrf.mxu0
        %v3420 = vpop.f32.mrf.mxu0
        %v3421 = vpop.f32.mrf.mxu0
        %3422 = vdwg.mxu0
        %vm3423 = vcmask 516096
        %v3424 = vsel %vm3423, %v3418, -inf
        %3425 = vmax.xlane.f32.xlu0 %v3424
        %v3426 = vpop.xlane.xlu0 %3425
        %vm3427 = vcmp.eq.f32.partialorder %v3418, %v3426
        %v3428 = vsel %vm3427, %v1620, 64
        %v3429 = vsel %vm3423, %v3428, 2147483647
        %v3430 = vand.u32 %v3429, 65535
        %v3431 = vshra.s32 %v3429, 16
        %v3432 = vcvt.s32.f32 %v3430
        %v3433 = vcvt.s32.f32 %v3431
        %3434 = vmin.xlane.f32.xlu0 %v3433
        %v3435 = vpop.xlane.xlu0 %3434
        %vm3436 = vcmp.eq.f32.partialorder %v3433, %v3435
        %v3437 = vsel %vm3436, %v3432, inf
        %3438 = vmin.xlane.f32.xlu0 %v3437
        %v3439 = vpop.xlane.xlu0 %3438
        %v3440 = vcvt.f32.s32 %v3439
        %v3441 = vcvt.f32.s32 %v3435
        %v3442 = vshll.u32 %v3441, 16
        %v3443 = vadd.s32 %v3442, %v3440
        %v3444 = vrot.slane %v3443, 4
        %vm3445 = vcmp.lt.s32.totalorder %v3443, %v3444
        %v3446 = vsel %vm3445, %v3443, %v3444
        %v3447 = vrot.slane %v3446, 2
        %vm3448 = vcmp.lt.s32.totalorder %v3446, %v3447
        %v3449 = vsel %vm3448, %v3446, %v3447
        %v3450 = vrot.slane %v3449, 1
        %vm3451 = vcmp.lt.s32.totalorder %v3449, %v3450
        %v3452 = vsel %vm3451, %v3449, %v3450
        %s3453 = vtos %v3452
        %s3454 = sadd.s32 %s71, 1
        %s3455 = scalar_lea.smem [#allocation4], %s3454
        %3456 = sst [smem:[%s3455]] %s3453
        // Predicated region
        $region141: #{generate.9} parent=135 // pred_check
          %p3457 = pneg %p693
        $region142: #{generate.9} parent=135 // pred_check_branch
          %3459 = sbr.rel (%p3457) target = $region144
        $region143: #{generate.9} parent=135 // pred_region
          %s3461 = ssub.s32 16, 16
          %3462 = vsyncadd [#allocation5], %s3461
          %3465 = dma.smem_to_hbm [#allocation4], 16, %s59, [#allocation5]
        $region144: #{generate.9} parent=135 // pred_fallthru
          _
        // Predicated region
        $region145: #{generate.9} parent=135 // pred_check
          %p3466 = pneg %p693
        $region146: #{generate.9} parent=135 // pred_check_branch
          %3468 = sbr.rel (%p3466) target = $region148
        $region147: #{generate.9} parent=135 // pred_region
          %3469 = dma.done [#allocation5], 16
        $region148: #{generate.9} parent=135 // pred_fallthru
          _
        %3470 = sfence
      $region136: #{generate.9} parent=5 // pred_fallthru
        _
      %p3471 = scmp.le.s32.totalorder 2, %s66
      // Predicated region
      $region149: #{generate.9} parent=5 // pred_check
        %p3472 = pneg %p3471
      $region150: #{generate.9} parent=5 // pred_check_branch
        %3474 = sbr.rel (%p3472) target = $region152
      $region151: #{generate.9} parent=5 // pred_region
        %s3475 = ssub.s32 %s66, 2
      $region152: #{generate.9} parent=5 // pred_fallthru
        _
    $region6: #{generate.9} parent=1 // loop_footer
      %s70 = sadd.s32 1, %s66
    $region7: #{generate.9} parent=1 // loop_footer_branch
      %65 = sbr.rel target = $region3
    $region8: #{generate.9} parent=1 // loop_exit
      _
    %3476 = vsyncpa [#allocation5], 1
    %s3477 = scalar_lea.sflag [#allocation5], 1
    %3478 = vsyncpa %s3477, 1

</llo_original>
